<compile_context>
chip_gen: v6e
topology: v6e:2x2x1
jax: 0.10.0
libtpu: 0.0.40
codegen_flags: <defaults>
</compile_context>

<pallas_src>
import functools

import numpy as np
import jax
import jax.numpy as jnp
from jax.experimental import pallas as pl
from jax.experimental.pallas import tpu as pltpu


# ----------------------------------------------------------------------------
# Fused conv (matmul) + norm + activation (+ residual) Pallas kernel
# ----------------------------------------------------------------------------
def _fused_conv_kernel(*refs, has_bias, has_norm, affine, has_residual, act, eps):
    it = iter(refs)
    a_ref = next(it)                       # (M, K)  im2col rows
    w_ref = next(it)                       # (K, C)  weights
    bias_ref = next(it) if has_bias else None        # (1, C)
    s_ref = next(it) if has_norm else None            # (M, G) group indicator
    sts_ref = next(it) if has_norm else None          # (G, M) indicator^T / L
    gamma_ref = next(it) if affine else None          # (1, C)
    beta_ref = next(it) if affine else None           # (1, C)
    res_ref = next(it) if has_residual else None      # (M, C)
    o_ref = next(it)                                   # (M, C)

    acc = jnp.dot(a_ref[...], w_ref[...], preferred_element_type=jnp.float32)
    if has_bias:
        acc = acc + bias_ref[...]

    if has_norm:
        # Segmented (per-group) mean/var via tiny MXU matmuls:
        #   instance norm -> G = N groups of L = H*W rows
        #   batch norm    -> G = 1 group of all rows
        S = s_ref[...]                     # (M, G) binary
        STs = sts_ref[...]                 # (G, M) scaled by 1/L
        gmean = jnp.dot(STs, acc, preferred_element_type=jnp.float32)     # (G, C)
        xc = acc - jnp.dot(S, gmean, preferred_element_type=jnp.float32)  # (M, C)
        gvar = jnp.dot(STs, xc * xc, preferred_element_type=jnp.float32)  # biased
        inv = jax.lax.rsqrt(gvar + eps)                                    # (G, C)
        acc = xc * jnp.dot(S, inv, preferred_element_type=jnp.float32)

    if affine:
        acc = acc * gamma_ref[...] + beta_ref[...]

    if act == "relu":
        acc = jnp.maximum(acc, 0.0)
    elif act == "tanh":
        acc = jnp.tanh(acc)

    if has_residual:
        acc = acc + res_ref[...]

    o_ref[...] = acc


def fused_conv_matmul(a, w, *, bias=None, norm_groups=None, gamma=None,
                      beta=None, residual=None, act=None, eps=1e-5):
    """out = epilogue(A @ W): bias, per-group norm, affine, act, residual.

    A: (M, K) im2col rows, W: (K, C).  norm_groups: None (no norm), N for
    instance norm, 1 for batch norm.  Everything lives in one VMEM block.
    """
    M, K = a.shape
    K2, C = w.shape
    assert K == K2

    inputs = [a.astype(jnp.float32), w.astype(jnp.float32)]
    in_specs = [pl.BlockSpec((M, K), lambda i: (0, 0)),
                pl.BlockSpec((K, C), lambda i: (0, 0))]

    has_bias = bias is not None
    if has_bias:
        inputs.append(bias.reshape(1, C).astype(jnp.float32))
        in_specs.append(pl.BlockSpec((1, C), lambda i: (0, 0)))

    has_norm = norm_groups is not None
    if has_norm:
        G = int(norm_groups)
        L = M // G
        grp = np.arange(M) // L
        S_np = (grp[:, None] == np.arange(G)[None, :]).astype(np.float32)
        inputs.append(jnp.asarray(S_np))               # (M, G)
        inputs.append(jnp.asarray(S_np.T / float(L)))  # (G, M)
        in_specs.append(pl.BlockSpec((M, G), lambda i: (0, 0)))
        in_specs.append(pl.BlockSpec((G, M), lambda i: (0, 0)))

    affine = gamma is not None
    if affine:
        inputs.append(gamma.reshape(1, C).astype(jnp.float32))
        inputs.append(beta.reshape(1, C).astype(jnp.float32))
        in_specs.append(pl.BlockSpec((1, C), lambda i: (0, 0)))
        in_specs.append(pl.BlockSpec((1, C), lambda i: (0, 0)))

    has_residual = residual is not None
    if has_residual:
        inputs.append(residual.reshape(M, C).astype(jnp.float32))
        in_specs.append(pl.BlockSpec((M, C), lambda i: (0, 0)))

    kernel = functools.partial(
        _fused_conv_kernel, has_bias=has_bias, has_norm=has_norm,
        affine=affine, has_residual=has_residual, act=act, eps=eps)

    return pl.pallas_call(
        kernel,
        out_shape=jax.ShapeDtypeStruct((M, C), jnp.float32),
        grid=(1,),
        in_specs=in_specs,
        out_specs=pl.BlockSpec((M, C), lambda i: (0, 0)),
    )(*inputs)


# ----------------------------------------------------------------------------
# Fused bilinear resize kernel (align_corners=True), grid over (N*C) slabs
# ----------------------------------------------------------------------------
def _upsample_kernel(mh_ref, mwt_ref, x_ref, o_ref):
    t = jnp.dot(mh_ref[...], x_ref[0], preferred_element_type=jnp.float32)   # (Ht, Ws)
    o_ref[0] = jnp.dot(t, mwt_ref[...], preferred_element_type=jnp.float32)  # (Ht, Wt)


def _bilinear_matrix(dst, src):
    """align_corners=True interpolation matrix (dst, src) — UpsamplingBilinear2d."""
    M = np.zeros((dst, src), np.float32)
    if dst == 1:
        M[0, 0] = 1.0
        return M
    scale = (src - 1) / (dst - 1)
    for i in range(dst):
        s = i * scale
        i0 = min(int(np.floor(s)), src - 1)
        i1 = min(i0 + 1, src - 1)
        f = s - i0
        M[i, i0] += 1.0 - f
        M[i, i1] += f
    return M


def upsample_bilinear_nchw(x, Ht, Wt):
    """x: (N*C, Hs, Ws) -> (N*C, Ht, Wt); one pallas_call, grid over slabs."""
    G, Hs, Ws = x.shape
    Mh = jnp.asarray(_bilinear_matrix(Ht, Hs))        # (Ht, Hs) constant
    MwT = jnp.asarray(_bilinear_matrix(Wt, Ws).T)     # (Ws, Wt) constant
    return pl.pallas_call(
        _upsample_kernel,
        out_shape=jax.ShapeDtypeStruct((G, Ht, Wt), jnp.float32),
        grid=(G,),
        in_specs=[
            pl.BlockSpec((Ht, Hs), lambda g: (0, 0)),
            pl.BlockSpec((Ws, Wt), lambda g: (0, 0)),
            pl.BlockSpec((1, Hs, Ws), lambda g: (g, 0, 0)),
        ],
        out_specs=pl.BlockSpec((1, Ht, Wt), lambda g: (g, 0, 0)),
        compiler_params=pltpu.CompilerParams(dimension_semantics=("parallel",)),
    )(Mh, MwT, x.astype(jnp.float32))


# ----------------------------------------------------------------------------
# Conv / ConvTranspose / ResnetBlock in NHWC, built on the fused kernel
# ----------------------------------------------------------------------------
def conv2d_nhwc(x, w, *, bias=None, stride=1, norm_groups=None,
                gamma=None, beta=None, residual=None, act=None):
    """x: (N,H,W,Cin), w: (Cout,Cin,kh,kw) PyTorch layout. padding=0."""
    N, H, W_, Cin = x.shape
    Cout, _, kh, kw = w.shape
    Ho = (H - kh) // stride + 1
    Wo = (W_ - kw) // stride + 1
    cols = []
    for di in range(kh):
        for dj in range(kw):
            cols.append(x[:, di:di + stride * Ho:stride,
                          dj:dj + stride * Wo:stride, :])
    a = jnp.concatenate(cols, axis=-1).reshape(N * Ho * Wo, kh * kw * Cin)
    wmat = w.transpose(2, 3, 1, 0).reshape(kh * kw * Cin, Cout)  # (di,dj,cin)->cout
    out = fused_conv_matmul(a, wmat, bias=bias, norm_groups=norm_groups,
                            gamma=gamma, beta=beta, residual=residual, act=act)
    return out.reshape(N, Ho, Wo, Cout)


def conv_transpose2d_nhwc(x, w, *, stride=1, norm_groups=None, act=None):
    """x: (N,H,W,Cin), w: (Cin,Cout,kh,kw) PyTorch layout. padding=0, no bias."""
    N, H, W_, Cin = x.shape
    _, Cout, kh, kw = w.shape
    if stride > 1:
        # dilate with reshape+pad (no scatter), then trim to (H-1)*s+1
        xd = x.reshape(N, H, 1, W_, 1, Cin)
        xd = jnp.pad(xd, ((0, 0), (0, 0), (0, stride - 1),
                          (0, 0), (0, stride - 1), (0, 0)))
        xd = xd.reshape(N, H * stride, W_ * stride, Cin)
        x = xd[:, :H * stride - (stride - 1), :W_ * stride - (stride - 1), :]
    xp = jnp.pad(x, ((0, 0), (kh - 1, kh - 1), (kw - 1, kw - 1), (0, 0)))
    w_conv = jnp.flip(w, axis=(2, 3)).transpose(1, 0, 2, 3)      # (Cout,Cin,kh,kw)
    return conv2d_nhwc(xp, w_conv, bias=None, stride=1,
                       norm_groups=norm_groups, act=act)


def resnet_block_nhwc(x, p):
    """Conv(3x3, reflect pad, no bias) + BatchNorm + ReLU, again + BatchNorm, + x."""
    N, H, W_, C = x.shape
    y = jnp.pad(x, ((0, 0), (1, 1), (1, 1), (0, 0)), mode="reflect")
    y = conv2d_nhwc(y, p["w1"], norm_groups=1, gamma=p["g1"], beta=p["b1"],
                    act="relu")
    y = jnp.pad(y, ((0, 0), (1, 1), (1, 1), (0, 0)), mode="reflect")
    y = conv2d_nhwc(y, p["w2"], norm_groups=1, gamma=p["g2"], beta=p["b2"],
                    act=None, residual=x.reshape(N * H * W_, C))
    return y


# ----------------------------------------------------------------------------
# Generator
# ----------------------------------------------------------------------------
def init_params(key, gen_input_nc, image_nc):
    ks = jax.random.split(key, 16)

    def cw(k, shape):
        return 0.1 * jax.random.normal(k, shape, jnp.float32)

    params = {
        # encoder (Conv2d with bias=True)
        "e1_w": cw(ks[0], (8, gen_input_nc, 3, 3)), "e1_b": cw(ks[1], (8,)),
        "e2_w": cw(ks[2], (16, 8, 3, 3)),           "e2_b": cw(ks[3], (16,)),
        "e3_w": cw(ks[4], (32, 16, 3, 3)),          "e3_b": cw(ks[5], (32,)),
        # decoder (ConvTranspose2d, bias=False, weight layout (Cin,Cout,kh,kw))
        "d1_w": cw(ks[6], (32, 16, 3, 3)),
        "d2_w": cw(ks[7], (16, 8, 3, 3)),
        "d3_w": cw(ks[8], (8, image_nc, 6, 6)),
        "blocks": [],
    }
    bkeys = jax.random.split(ks[9], 8)
    for i in range(4):  # 4 ResnetBlock(32): Conv bias=False, BatchNorm affine 1/0
        params["blocks"].append({
            "w1": cw(bkeys[2 * i], (32, 32, 3, 3)),
            "g1": jnp.ones((32,), jnp.float32), "b1": jnp.zeros((32,), jnp.float32),
            "w2": cw(bkeys[2 * i + 1], (32, 32, 3, 3)),
            "g2": jnp.ones((32,), jnp.float32), "b2": jnp.zeros((32,), jnp.float32),
        })
    return params


def generator_forward(params, x):
    """x: (N, C, H, W) NCHW like PyTorch; internally NHWC end-to-end."""
    N, C, H, W = x.shape
    y = x.transpose(0, 2, 3, 1)  # -> NHWC (model boundary conversion)

    # encoder: conv + InstanceNorm (per-(n,c) stats, no affine) + ReLU, fused
    y = conv2d_nhwc(y, params["e1_w"], bias=params["e1_b"], stride=1,
                    norm_groups=N, act="relu")
    y = conv2d_nhwc(y, params["e2_w"], bias=params["e2_b"], stride=2,
                    norm_groups=N, act="relu")
    y = conv2d_nhwc(y, params["e3_w"], bias=params["e3_b"], stride=2,
                    norm_groups=N, act="relu")

    # bottleneck: 4 ResnetBlocks (conv+BN+ReLU, conv+BN, +x), each conv fused
    for blk in params["blocks"]:
        y = resnet_block_nhwc(y, blk)

    # decoder: convT + InstanceNorm + ReLU (fused), last convT fused with tanh
    y = conv_transpose2d_nhwc(y, params["d1_w"], stride=2,
                              norm_groups=N, act="relu")
    y = conv_transpose2d_nhwc(y, params["d2_w"], stride=2,
                              norm_groups=N, act="relu")
    y = conv_transpose2d_nhwc(y, params["d3_w"], stride=1,
                              norm_groups=None, act="tanh")

    # UpsamplingBilinear2d(size=(H, W)), align_corners=True.
    # Convert to NCHW slabs (also the required output layout) and resize per slab.
    Nn, Hs, Ws, Cc = y.shape
    y = y.transpose(0, 3, 1, 2).reshape(Nn * Cc, Hs, Ws)
    y = upsample_bilinear_nchw(y, H, W)
    return y.reshape(Nn, Cc, H, W)


if __name__ == "__main__":
    gen_input_nc, image_nc = 3, 3
    key = jax.random.PRNGKey(0)
    pkey, xkey = jax.random.split(key)

    params = init_params(pkey, gen_input_nc, image_nc)
    # NCHW input (like PyTorch); 18x18 so decoder output (20x20) is resized back.
    x = jax.random.normal(xkey, (2, gen_input_nc, 18, 18), jnp.float32)

    fwd = jax.jit(generator_forward)
    out = jax.block_until_ready(fwd(params, x))
    assert out.shape == (2, image_nc, 18, 18), out.shape
    assert bool(jnp.all(jnp.isfinite(out)))
    print("KERNEL_OK")
</pallas_src>

<mosaic_0001>
module attributes {stable_mosaic.version = 11 : i64} {
  func.func @_fused_conv_kernel(%arg0: i32, %arg1: memref<512x27xf32, #tpu.memory_space<vmem>>, %arg2: memref<27x8xf32, #tpu.memory_space<vmem>>, %arg3: memref<1x8xf32, #tpu.memory_space<vmem>>, %arg4: memref<512x2xf32, #tpu.memory_space<vmem>>, %arg5: memref<2x512xf32, #tpu.memory_space<vmem>>, %arg6: memref<512x8xf32, #tpu.memory_space<vmem>>) attributes {dimension_semantics = [#tpu.dimension_semantics<arbitrary>], iteration_bounds = array<i64: 1>, scalar_prefetch = 0 : i64, scratch_operands = 0 : i64, tpu.core_type = #tpu.core_type<tc>, window_params = [{pipeline_mode = #tpu.pipeline_mode<synchronous>, transform_indices = @transform_0, window_bounds = array<i64: 512, 27>}, {pipeline_mode = #tpu.pipeline_mode<synchronous>, transform_indices = @transform_1, window_bounds = array<i64: 27, 8>}, {pipeline_mode = #tpu.pipeline_mode<synchronous>, transform_indices = @transform_2, window_bounds = array<i64: 1, 8>}, {pipeline_mode = #tpu.pipeline_mode<synchronous>, transform_indices = @transform_3, window_bounds = array<i64: 512, 2>}, {pipeline_mode = #tpu.pipeline_mode<synchronous>, transform_indices = @transform_4, window_bounds = array<i64: 2, 512>}, {pipeline_mode = #tpu.pipeline_mode<synchronous>, transform_indices = @transform_5, window_bounds = array<i64: 512, 8>}]} {
    %c0 = arith.constant 0 : index
    %c0_0 = arith.constant 0 : index
    %0 = vector.load %arg1[%c0, %c0_0] : memref<512x27xf32, #tpu.memory_space<vmem>>, vector<512x27xf32>
    %c0_1 = arith.constant 0 : index
    %c0_2 = arith.constant 0 : index
    %1 = vector.load %arg2[%c0_1, %c0_2] : memref<27x8xf32, #tpu.memory_space<vmem>>, vector<27x8xf32>
    %cst = arith.constant dense<0.000000e+00> : vector<512x8xf32>
    %2 = tpu.matmul %0, %1, %cst {dimension_numbers = #tpu.dot_dimension_numbers<[1], [0], [0], [1], [0, 0, 1, 1], [], []>} : vector<512x27xf32>, vector<27x8xf32>, vector<512x8xf32> -> vector<512x8xf32>
    %c0_3 = arith.constant 0 : index
    %c0_4 = arith.constant 0 : index
    %3 = vector.load %arg3[%c0_3, %c0_4] : memref<1x8xf32, #tpu.memory_space<vmem>>, vector<1x8xf32>
    %4 = vector.broadcast %3 : vector<1x8xf32> to vector<512x8xf32>
    %5 = arith.addf %2, %4 : vector<512x8xf32>
    %c0_5 = arith.constant 0 : index
    %c0_6 = arith.constant 0 : index
    %6 = vector.load %arg4[%c0_5, %c0_6] : memref<512x2xf32, #tpu.memory_space<vmem>>, vector<512x2xf32>
    %c0_7 = arith.constant 0 : index
    %c0_8 = arith.constant 0 : index
    %7 = vector.load %arg5[%c0_7, %c0_8] : memref<2x512xf32, #tpu.memory_space<vmem>>, vector<2x512xf32>
    %cst_9 = arith.constant dense<0.000000e+00> : vector<2x8xf32>
    %8 = tpu.matmul %7, %5, %cst_9 {dimension_numbers = #tpu.dot_dimension_numbers<[1], [0], [0], [1], [0, 0, 1, 1], [], []>} : vector<2x512xf32>, vector<512x8xf32>, vector<2x8xf32> -> vector<2x8xf32>
    %cst_10 = arith.constant dense<0.000000e+00> : vector<512x8xf32>
    %9 = tpu.matmul %6, %8, %cst_10 {dimension_numbers = #tpu.dot_dimension_numbers<[1], [0], [0], [1], [0, 0, 1, 1], [], []>} : vector<512x2xf32>, vector<2x8xf32>, vector<512x8xf32> -> vector<512x8xf32>
    %10 = arith.subf %5, %9 : vector<512x8xf32>
    %11 = arith.mulf %10, %10 : vector<512x8xf32>
    %cst_11 = arith.constant dense<0.000000e+00> : vector<2x8xf32>
    %12 = tpu.matmul %7, %11, %cst_11 {dimension_numbers = #tpu.dot_dimension_numbers<[1], [0], [0], [1], [0, 0, 1, 1], [], []>} : vector<2x512xf32>, vector<512x8xf32>, vector<2x8xf32> -> vector<2x8xf32>
    %cst_12 = arith.constant 9.99999974E-6 : f32
    %13 = vector.broadcast %cst_12 : f32 to vector<2x8xf32>
    %14 = arith.addf %12, %13 : vector<2x8xf32>
    %15 = math.rsqrt %14 : vector<2x8xf32>
    %cst_13 = arith.constant dense<0.000000e+00> : vector<512x8xf32>
    %16 = tpu.matmul %6, %15, %cst_13 {dimension_numbers = #tpu.dot_dimension_numbers<[1], [0], [0], [1], [0, 0, 1, 1], [], []>} : vector<512x2xf32>, vector<2x8xf32>, vector<512x8xf32> -> vector<512x8xf32>
    %17 = arith.mulf %10, %16 : vector<512x8xf32>
    %cst_14 = arith.constant 0.000000e+00 : f32
    %18 = vector.broadcast %cst_14 : f32 to vector<512x8xf32>
    %19 = arith.maximumf %17, %18 : vector<512x8xf32>
    %c0_15 = arith.constant 0 : index
    %c0_16 = arith.constant 0 : index
    %20 = vector.load %arg6[%c0_15, %c0_16] : memref<512x8xf32, #tpu.memory_space<vmem>>, vector<512x8xf32>
    tpu.vector_store %arg6[%c0_15, %c0_16], %19 {strides = array<i32>} : memref<512x8xf32, #tpu.memory_space<vmem>>, vector<512x8xf32>,
    return
  }
  func.func @transform_0(%arg0: i32) -> (i32, i32) {
    %c0_i32 = arith.constant 0 : i32
    %c0_i32_0 = arith.constant 0 : i32
    %c0_i32_1 = arith.constant 0 : i32
    return %c0_i32, %c0_i32_0 : i32, i32
  }
  func.func @transform_1(%arg0: i32) -> (i32, i32) {
    %c0_i32 = arith.constant 0 : i32
    %c0_i32_0 = arith.constant 0 : i32
    %c0_i32_1 = arith.constant 0 : i32
    return %c0_i32, %c0_i32_0 : i32, i32
  }
  func.func @transform_2(%arg0: i32) -> (i32, i32) {
    %c0_i32 = arith.constant 0 : i32
    %c0_i32_0 = arith.constant 0 : i32
    %c0_i32_1 = arith.constant 0 : i32
    return %c0_i32, %c0_i32_0 : i32, i32
  }
  func.func @transform_3(%arg0: i32) -> (i32, i32) {
    %c0_i32 = arith.constant 0 : i32
    %c0_i32_0 = arith.constant 0 : i32
    %c0_i32_1 = arith.constant 0 : i32
    return %c0_i32, %c0_i32_0 : i32, i32
  }
  func.func @transform_4(%arg0: i32) -> (i32, i32) {
    %c0_i32 = arith.constant 0 : i32
    %c0_i32_0 = arith.constant 0 : i32
    %c0_i32_1 = arith.constant 0 : i32
    return %c0_i32, %c0_i32_0 : i32, i32
  }
  func.func @transform_5(%arg0: i32) -> (i32, i32) {
    %c0_i32 = arith.constant 0 : i32
    %c0_i32_0 = arith.constant 0 : i32
    %c0_i32_1 = arith.constant 0 : i32
    return %c0_i32, %c0_i32_0 : i32, i32
  }
}

module attributes {stable_mosaic.version = 11 : i64} {
  func.func @_fused_conv_kernel(%arg0: i32, %arg1: memref<98x72xf32, #tpu.memory_space<vmem>>, %arg2: memref<72x16xf32, #tpu.memory_space<vmem>>, %arg3: memref<1x16xf32, #tpu.memory_space<vmem>>, %arg4: memref<98x2xf32, #tpu.memory_space<vmem>>, %arg5: memref<2x98xf32, #tpu.memory_space<vmem>>, %arg6: memref<98x16xf32, #tpu.memory_space<vmem>>) attributes {dimension_semantics = [#tpu.dimension_semantics<arbitrary>], iteration_bounds = array<i64: 1>, scalar_prefetch = 0 : i64, scratch_operands = 0 : i64, tpu.core_type = #tpu.core_type<tc>, window_params = [{pipeline_mode = #tpu.pipeline_mode<synchronous>, transform_indices = @transform_0, window_bounds = array<i64: 98, 72>}, {pipeline_mode = #tpu.pipeline_mode<synchronous>, transform_indices = @transform_1, window_bounds = array<i64: 72, 16>}, {pipeline_mode = #tpu.pipeline_mode<synchronous>, transform_indices = @transform_2, window_bounds = array<i64: 1, 16>}, {pipeline_mode = #tpu.pipeline_mode<synchronous>, transform_indices = @transform_3, window_bounds = array<i64: 98, 2>}, {pipeline_mode = #tpu.pipeline_mode<synchronous>, transform_indices = @transform_4, window_bounds = array<i64: 2, 98>}, {pipeline_mode = #tpu.pipeline_mode<synchronous>, transform_indices = @transform_5, window_bounds = array<i64: 98, 16>}]} {
    %c0 = arith.constant 0 : index
    %c0_0 = arith.constant 0 : index
    %0 = vector.load %arg1[%c0, %c0_0] : memref<98x72xf32, #tpu.memory_space<vmem>>, vector<98x72xf32>
    %c0_1 = arith.constant 0 : index
    %c0_2 = arith.constant 0 : index
    %1 = vector.load %arg2[%c0_1, %c0_2] : memref<72x16xf32, #tpu.memory_space<vmem>>, vector<72x16xf32>
    %cst = arith.constant dense<0.000000e+00> : vector<98x16xf32>
    %2 = tpu.matmul %0, %1, %cst {dimension_numbers = #tpu.dot_dimension_numbers<[1], [0], [0], [1], [0, 0, 1, 1], [], []>} : vector<98x72xf32>, vector<72x16xf32>, vector<98x16xf32> -> vector<98x16xf32>
    %c0_3 = arith.constant 0 : index
    %c0_4 = arith.constant 0 : index
    %3 = vector.load %arg3[%c0_3, %c0_4] : memref<1x16xf32, #tpu.memory_space<vmem>>, vector<1x16xf32>
    %4 = vector.broadcast %3 : vector<1x16xf32> to vector<98x16xf32>
    %5 = arith.addf %2, %4 : vector<98x16xf32>
    %c0_5 = arith.constant 0 : index
    %c0_6 = arith.constant 0 : index
    %6 = vector.load %arg4[%c0_5, %c0_6] : memref<98x2xf32, #tpu.memory_space<vmem>>, vector<98x2xf32>
    %c0_7 = arith.constant 0 : index
    %c0_8 = arith.constant 0 : index
    %7 = vector.load %arg5[%c0_7, %c0_8] : memref<2x98xf32, #tpu.memory_space<vmem>>, vector<2x98xf32>
    %cst_9 = arith.constant dense<0.000000e+00> : vector<2x16xf32>
    %8 = tpu.matmul %7, %5, %cst_9 {dimension_numbers = #tpu.dot_dimension_numbers<[1], [0], [0], [1], [0, 0, 1, 1], [], []>} : vector<2x98xf32>, vector<98x16xf32>, vector<2x16xf32> -> vector<2x16xf32>
    %cst_10 = arith.constant dense<0.000000e+00> : vector<98x16xf32>
    %9 = tpu.matmul %6, %8, %cst_10 {dimension_numbers = #tpu.dot_dimension_numbers<[1], [0], [0], [1], [0, 0, 1, 1], [], []>} : vector<98x2xf32>, vector<2x16xf32>, vector<98x16xf32> -> vector<98x16xf32>
    %10 = arith.subf %5, %9 : vector<98x16xf32>
    %11 = arith.mulf %10, %10 : vector<98x16xf32>
    %cst_11 = arith.constant dense<0.000000e+00> : vector<2x16xf32>
    %12 = tpu.matmul %7, %11, %cst_11 {dimension_numbers = #tpu.dot_dimension_numbers<[1], [0], [0], [1], [0, 0, 1, 1], [], []>} : vector<2x98xf32>, vector<98x16xf32>, vector<2x16xf32> -> vector<2x16xf32>
    %cst_12 = arith.constant 9.99999974E-6 : f32
    %13 = vector.broadcast %cst_12 : f32 to vector<2x16xf32>
    %14 = arith.addf %12, %13 : vector<2x16xf32>
    %15 = math.rsqrt %14 : vector<2x16xf32>
    %cst_13 = arith.constant dense<0.000000e+00> : vector<98x16xf32>
    %16 = tpu.matmul %6, %15, %cst_13 {dimension_numbers = #tpu.dot_dimension_numbers<[1], [0], [0], [1], [0, 0, 1, 1], [], []>} : vector<98x2xf32>, vector<2x16xf32>, vector<98x16xf32> -> vector<98x16xf32>
    %17 = arith.mulf %10, %16 : vector<98x16xf32>
    %cst_14 = arith.constant 0.000000e+00 : f32
    %18 = vector.broadcast %cst_14 : f32 to vector<98x16xf32>
    %19 = arith.maximumf %17, %18 : vector<98x16xf32>
    %c0_15 = arith.constant 0 : index
    %c0_16 = arith.constant 0 : index
    %20 = vector.load %arg6[%c0_15, %c0_16] : memref<98x16xf32, #tpu.memory_space<vmem>>, vector<98x16xf32>
    tpu.vector_store %arg6[%c0_15, %c0_16], %19 {strides = array<i32>} : memref<98x16xf32, #tpu.memory_space<vmem>>, vector<98x16xf32>,
    return
  }
  func.func @transform_0(%arg0: i32) -> (i32, i32) {
    %c0_i32 = arith.constant 0 : i32
    %c0_i32_0 = arith.constant 0 : i32
    %c0_i32_1 = arith.constant 0 : i32
    return %c0_i32, %c0_i32_0 : i32, i32
  }
  func.func @transform_1(%arg0: i32) -> (i32, i32) {
    %c0_i32 = arith.constant 0 : i32
    %c0_i32_0 = arith.constant 0 : i32
    %c0_i32_1 = arith.constant 0 : i32
    return %c0_i32, %c0_i32_0 : i32, i32
  }
  func.func @transform_2(%arg0: i32) -> (i32, i32) {
    %c0_i32 = arith.constant 0 : i32
    %c0_i32_0 = arith.constant 0 : i32
    %c0_i32_1 = arith.constant 0 : i32
    return %c0_i32, %c0_i32_0 : i32, i32
  }
  func.func @transform_3(%arg0: i32) -> (i32, i32) {
    %c0_i32 = arith.constant 0 : i32
    %c0_i32_0 = arith.constant 0 : i32
    %c0_i32_1 = arith.constant 0 : i32
    return %c0_i32, %c0_i32_0 : i32, i32
  }
  func.func @transform_4(%arg0: i32) -> (i32, i32) {
    %c0_i32 = arith.constant 0 : i32
    %c0_i32_0 = arith.constant 0 : i32
    %c0_i32_1 = arith.constant 0 : i32
    return %c0_i32, %c0_i32_0 : i32, i32
  }
  func.func @transform_5(%arg0: i32) -> (i32, i32) {
    %c0_i32 = arith.constant 0 : i32
    %c0_i32_0 = arith.constant 0 : i32
    %c0_i32_1 = arith.constant 0 : i32
    return %c0_i32, %c0_i32_0 : i32, i32
  }
}

module attributes {stable_mosaic.version = 11 : i64} {
  func.func @_fused_conv_kernel(%arg0: i32, %arg1: memref<18x144xf32, #tpu.memory_space<vmem>>, %arg2: memref<144x32xf32, #tpu.memory_space<vmem>>, %arg3: memref<1x32xf32, #tpu.memory_space<vmem>>, %arg4: memref<18x2xf32, #tpu.memory_space<vmem>>, %arg5: memref<2x18xf32, #tpu.memory_space<vmem>>, %arg6: memref<18x32xf32, #tpu.memory_space<vmem>>) attributes {dimension_semantics = [#tpu.dimension_semantics<arbitrary>], iteration_bounds = array<i64: 1>, scalar_prefetch = 0 : i64, scratch_operands = 0 : i64, tpu.core_type = #tpu.core_type<tc>, window_params = [{pipeline_mode = #tpu.pipeline_mode<synchronous>, transform_indices = @transform_0, window_bounds = array<i64: 18, 144>}, {pipeline_mode = #tpu.pipeline_mode<synchronous>, transform_indices = @transform_1, window_bounds = array<i64: 144, 32>}, {pipeline_mode = #tpu.pipeline_mode<synchronous>, transform_indices = @transform_2, window_bounds = array<i64: 1, 32>}, {pipeline_mode = #tpu.pipeline_mode<synchronous>, transform_indices = @transform_3, window_bounds = array<i64: 18, 2>}, {pipeline_mode = #tpu.pipeline_mode<synchronous>, transform_indices = @transform_4, window_bounds = array<i64: 2, 18>}, {pipeline_mode = #tpu.pipeline_mode<synchronous>, transform_indices = @transform_5, window_bounds = array<i64: 18, 32>}]} {
    %c0 = arith.constant 0 : index
    %c0_0 = arith.constant 0 : index
    %0 = vector.load %arg1[%c0, %c0_0] : memref<18x144xf32, #tpu.memory_space<vmem>>, vector<18x144xf32>
    %c0_1 = arith.constant 0 : index
    %c0_2 = arith.constant 0 : index
    %1 = vector.load %arg2[%c0_1, %c0_2] : memref<144x32xf32, #tpu.memory_space<vmem>>, vector<144x32xf32>
    %cst = arith.constant dense<0.000000e+00> : vector<18x32xf32>
    %2 = tpu.matmul %0, %1, %cst {dimension_numbers = #tpu.dot_dimension_numbers<[1], [0], [0], [1], [0, 0, 1, 1], [], []>} : vector<18x144xf32>, vector<144x32xf32>, vector<18x32xf32> -> vector<18x32xf32>
    %c0_3 = arith.constant 0 : index
    %c0_4 = arith.constant 0 : index
    %3 = vector.load %arg3[%c0_3, %c0_4] : memref<1x32xf32, #tpu.memory_space<vmem>>, vector<1x32xf32>
    %4 = vector.broadcast %3 : vector<1x32xf32> to vector<18x32xf32>
    %5 = arith.addf %2, %4 : vector<18x32xf32>
    %c0_5 = arith.constant 0 : index
    %c0_6 = arith.constant 0 : index
    %6 = vector.load %arg4[%c0_5, %c0_6] : memref<18x2xf32, #tpu.memory_space<vmem>>, vector<18x2xf32>
    %c0_7 = arith.constant 0 : index
    %c0_8 = arith.constant 0 : index
    %7 = vector.load %arg5[%c0_7, %c0_8] : memref<2x18xf32, #tpu.memory_space<vmem>>, vector<2x18xf32>
    %cst_9 = arith.constant dense<0.000000e+00> : vector<2x32xf32>
    %8 = tpu.matmul %7, %5, %cst_9 {dimension_numbers = #tpu.dot_dimension_numbers<[1], [0], [0], [1], [0, 0, 1, 1], [], []>} : vector<2x18xf32>, vector<18x32xf32>, vector<2x32xf32> -> vector<2x32xf32>
    %cst_10 = arith.constant dense<0.000000e+00> : vector<18x32xf32>
    %9 = tpu.matmul %6, %8, %cst_10 {dimension_numbers = #tpu.dot_dimension_numbers<[1], [0], [0], [1], [0, 0, 1, 1], [], []>} : vector<18x2xf32>, vector<2x32xf32>, vector<18x32xf32> -> vector<18x32xf32>
    %10 = arith.subf %5, %9 : vector<18x32xf32>
    %11 = arith.mulf %10, %10 : vector<18x32xf32>
    %cst_11 = arith.constant dense<0.000000e+00> : vector<2x32xf32>
    %12 = tpu.matmul %7, %11, %cst_11 {dimension_numbers = #tpu.dot_dimension_numbers<[1], [0], [0], [1], [0, 0, 1, 1], [], []>} : vector<2x18xf32>, vector<18x32xf32>, vector<2x32xf32> -> vector<2x32xf32>
    %cst_12 = arith.constant 9.99999974E-6 : f32
    %13 = vector.broadcast %cst_12 : f32 to vector<2x32xf32>
    %14 = arith.addf %12, %13 : vector<2x32xf32>
    %15 = math.rsqrt %14 : vector<2x32xf32>
    %cst_13 = arith.constant dense<0.000000e+00> : vector<18x32xf32>
    %16 = tpu.matmul %6, %15, %cst_13 {dimension_numbers = #tpu.dot_dimension_numbers<[1], [0], [0], [1], [0, 0, 1, 1], [], []>} : vector<18x2xf32>, vector<2x32xf32>, vector<18x32xf32> -> vector<18x32xf32>
    %17 = arith.mulf %10, %16 : vector<18x32xf32>
    %cst_14 = arith.constant 0.000000e+00 : f32
    %18 = vector.broadcast %cst_14 : f32 to vector<18x32xf32>
    %19 = arith.maximumf %17, %18 : vector<18x32xf32>
    %c0_15 = arith.constant 0 : index
    %c0_16 = arith.constant 0 : index
    %20 = vector.load %arg6[%c0_15, %c0_16] : memref<18x32xf32, #tpu.memory_space<vmem>>, vector<18x32xf32>
    tpu.vector_store %arg6[%c0_15, %c0_16], %19 {strides = array<i32>} : memref<18x32xf32, #tpu.memory_space<vmem>>, vector<18x32xf32>,
    return
  }
  func.func @transform_0(%arg0: i32) -> (i32, i32) {
    %c0_i32 = arith.constant 0 : i32
    %c0_i32_0 = arith.constant 0 : i32
    %c0_i32_1 = arith.constant 0 : i32
    return %c0_i32, %c0_i32_0 : i32, i32
  }
  func.func @transform_1(%arg0: i32) -> (i32, i32) {
    %c0_i32 = arith.constant 0 : i32
    %c0_i32_0 = arith.constant 0 : i32
    %c0_i32_1 = arith.constant 0 : i32
    return %c0_i32, %c0_i32_0 : i32, i32
  }
  func.func @transform_2(%arg0: i32) -> (i32, i32) {
    %c0_i32 = arith.constant 0 : i32
    %c0_i32_0 = arith.constant 0 : i32
    %c0_i32_1 = arith.constant 0 : i32
    return %c0_i32, %c0_i32_0 : i32, i32
  }
  func.func @transform_3(%arg0: i32) -> (i32, i32) {
    %c0_i32 = arith.constant 0 : i32
    %c0_i32_0 = arith.constant 0 : i32
    %c0_i32_1 = arith.constant 0 : i32
    return %c0_i32, %c0_i32_0 : i32, i32
  }
  func.func @transform_4(%arg0: i32) -> (i32, i32) {
    %c0_i32 = arith.constant 0 : i32
    %c0_i32_0 = arith.constant 0 : i32
    %c0_i32_1 = arith.constant 0 : i32
    return %c0_i32, %c0_i32_0 : i32, i32
  }
  func.func @transform_5(%arg0: i32) -> (i32, i32) {
    %c0_i32 = arith.constant 0 : i32
    %c0_i32_0 = arith.constant 0 : i32
    %c0_i32_1 = arith.constant 0 : i32
    return %c0_i32, %c0_i32_0 : i32, i32
  }
}

module attributes {stable_mosaic.version = 11 : i64} {
  func.func @_fused_conv_kernel(%arg0: i32, %arg1: memref<18x288xf32, #tpu.memory_space<vmem>>, %arg2: memref<288x32xf32, #tpu.memory_space<vmem>>, %arg3: memref<18x1xf32, #tpu.memory_space<vmem>>, %arg4: memref<1x18xf32, #tpu.memory_space<vmem>>, %arg5: memref<1x32xf32, #tpu.memory_space<vmem>>, %arg6: memref<1x32xf32, #tpu.memory_space<vmem>>, %arg7: memref<18x32xf32, #tpu.memory_space<vmem>>, %arg8: memref<18x32xf32, #tpu.memory_space<vmem>>) attributes {dimension_semantics = [#tpu.dimension_semantics<arbitrary>], iteration_bounds = array<i64: 1>, scalar_prefetch = 0 : i64, scratch_operands = 0 : i64, tpu.core_type = #tpu.core_type<tc>, window_params = [{pipeline_mode = #tpu.pipeline_mode<synchronous>, transform_indices = @transform_0, window_bounds = array<i64: 18, 288>}, {pipeline_mode = #tpu.pipeline_mode<synchronous>, transform_indices = @transform_1, window_bounds = array<i64: 288, 32>}, {pipeline_mode = #tpu.pipeline_mode<synchronous>, transform_indices = @transform_2, window_bounds = array<i64: 18, 1>}, {pipeline_mode = #tpu.pipeline_mode<synchronous>, transform_indices = @transform_3, window_bounds = array<i64: 1, 18>}, {pipeline_mode = #tpu.pipeline_mode<synchronous>, transform_indices = @transform_4, window_bounds = array<i64: 1, 32>}, {pipeline_mode = #tpu.pipeline_mode<synchronous>, transform_indices = @transform_5, window_bounds = array<i64: 1, 32>}, {pipeline_mode = #tpu.pipeline_mode<synchronous>, transform_indices = @transform_6, window_bounds = array<i64: 18, 32>}, {pipeline_mode = #tpu.pipeline_mode<synchronous>, transform_indices = @transform_7, window_bounds = array<i64: 18, 32>}]} {
    %c0 = arith.constant 0 : index
    %c0_0 = arith.constant 0 : index
    %0 = vector.load %arg1[%c0, %c0_0] : memref<18x288xf32, #tpu.memory_space<vmem>>, vector<18x288xf32>
    %c0_1 = arith.constant 0 : index
    %c0_2 = arith.constant 0 : index
    %1 = vector.load %arg2[%c0_1, %c0_2] : memref<288x32xf32, #tpu.memory_space<vmem>>, vector<288x32xf32>
    %cst = arith.constant dense<0.000000e+00> : vector<18x32xf32>
    %2 = tpu.matmul %0, %1, %cst {dimension_numbers = #tpu.dot_dimension_numbers<[1], [0], [0], [1], [0, 0, 1, 1], [], []>} : vector<18x288xf32>, vector<288x32xf32>, vector<18x32xf32> -> vector<18x32xf32>
    %c0_3 = arith.constant 0 : index
    %c0_4 = arith.constant 0 : index
    %3 = vector.load %arg3[%c0_3, %c0_4] : memref<18x1xf32, #tpu.memory_space<vmem>>, vector<18x1xf32>
    %c0_5 = arith.constant 0 : index
    %c0_6 = arith.constant 0 : index
    %4 = vector.load %arg4[%c0_5, %c0_6] : memref<1x18xf32, #tpu.memory_space<vmem>>, vector<1x18xf32>
    %cst_7 = arith.constant dense<0.000000e+00> : vector<1x32xf32>
    %5 = tpu.matmul %4, %2, %cst_7 {dimension_numbers = #tpu.dot_dimension_numbers<[1], [0], [0], [1], [0, 0, 1, 1], [], []>} : vector<1x18xf32>, vector<18x32xf32>, vector<1x32xf32> -> vector<1x32xf32>
    %cst_8 = arith.constant dense<0.000000e+00> : vector<18x32xf32>
    %6 = tpu.matmul %3, %5, %cst_8 {dimension_numbers = #tpu.dot_dimension_numbers<[1], [0], [0], [1], [0, 0, 1, 1], [], []>} : vector<18x1xf32>, vector<1x32xf32>, vector<18x32xf32> -> vector<18x32xf32>
    %7 = arith.subf %2, %6 : vector<18x32xf32>
    %8 = arith.mulf %7, %7 : vector<18x32xf32>
    %cst_9 = arith.constant dense<0.000000e+00> : vector<1x32xf32>
    %9 = tpu.matmul %4, %8, %cst_9 {dimension_numbers = #tpu.dot_dimension_numbers<[1], [0], [0], [1], [0, 0, 1, 1], [], []>} : vector<1x18xf32>, vector<18x32xf32>, vector<1x32xf32> -> vector<1x32xf32>
    %cst_10 = arith.constant 9.99999974E-6 : f32
    %10 = vector.broadcast %cst_10 : f32 to vector<1x32xf32>
    %11 = arith.addf %9, %10 : vector<1x32xf32>
    %12 = math.rsqrt %11 : vector<1x32xf32>
    %cst_11 = arith.constant dense<0.000000e+00> : vector<18x32xf32>
    %13 = tpu.matmul %3, %12, %cst_11 {dimension_numbers = #tpu.dot_dimension_numbers<[1], [0], [0], [1], [0, 0, 1, 1], [], []>} : vector<18x1xf32>, vector<1x32xf32>, vector<18x32xf32> -> vector<18x32xf32>
    %14 = arith.mulf %7, %13 : vector<18x32xf32>
    %c0_12 = arith.constant 0 : index
    %c0_13 = arith.constant 0 : index
    %15 = vector.load %arg5[%c0_12, %c0_13] : memref<1x32xf32, #tpu.memory_space<vmem>>, vector<1x32xf32>
    %16 = vector.broadcast %15 : vector<1x32xf32> to vector<18x32xf32>
    %17 = arith.mulf %14, %16 : vector<18x32xf32>
    %c0_14 = arith.constant 0 : index
    %c0_15 = arith.constant 0 : index
    %18 = vector.load %arg6[%c0_14, %c0_15] : memref<1x32xf32, #tpu.memory_space<vmem>>, vector<1x32xf32>
    %19 = vector.broadcast %18 : vector<1x32xf32> to vector<18x32xf32>
    %20 = arith.addf %17, %19 : vector<18x32xf32>
    %c0_16 = arith.constant 0 : index
    %c0_17 = arith.constant 0 : index
    %21 = vector.load %arg7[%c0_16, %c0_17] : memref<18x32xf32, #tpu.memory_space<vmem>>, vector<18x32xf32>
    %22 = arith.addf %20, %21 : vector<18x32xf32>
    %c0_18 = arith.constant 0 : index
    %c0_19 = arith.constant 0 : index
    %23 = vector.load %arg8[%c0_18, %c0_19] : memref<18x32xf32, #tpu.memory_space<vmem>>, vector<18x32xf32>
    tpu.vector_store %arg8[%c0_18, %c0_19], %22 {strides = array<i32>} : memref<18x32xf32, #tpu.memory_space<vmem>>, vector<18x32xf32>,
    return
  }
  func.func @transform_0(%arg0: i32) -> (i32, i32) {
    %c0_i32 = arith.constant 0 : i32
    %c0_i32_0 = arith.constant 0 : i32
    %c0_i32_1 = arith.constant 0 : i32
    return %c0_i32, %c0_i32_0 : i32, i32
  }
  func.func @transform_1(%arg0: i32) -> (i32, i32) {
    %c0_i32 = arith.constant 0 : i32
    %c0_i32_0 = arith.constant 0 : i32
    %c0_i32_1 = arith.constant 0 : i32
    return %c0_i32, %c0_i32_0 : i32, i32
  }
  func.func @transform_2(%arg0: i32) -> (i32, i32) {
    %c0_i32 = arith.constant 0 : i32
    %c0_i32_0 = arith.constant 0 : i32
    %c0_i32_1 = arith.constant 0 : i32
    return %c0_i32, %c0_i32_0 : i32, i32
  }
  func.func @transform_3(%arg0: i32) -> (i32, i32) {
    %c0_i32 = arith.constant 0 : i32
    %c0_i32_0 = arith.constant 0 : i32
    %c0_i32_1 = arith.constant 0 : i32
    return %c0_i32, %c0_i32_0 : i32, i32
  }
  func.func @transform_4(%arg0: i32) -> (i32, i32) {
    %c0_i32 = arith.constant 0 : i32
    %c0_i32_0 = arith.constant 0 : i32
    %c0_i32_1 = arith.constant 0 : i32
    return %c0_i32, %c0_i32_0 : i32, i32
  }
  func.func @transform_5(%arg0: i32) -> (i32, i32) {
    %c0_i32 = arith.constant 0 : i32
    %c0_i32_0 = arith.constant 0 : i32
    %c0_i32_1 = arith.constant 0 : i32
    return %c0_i32, %c0_i32_0 : i32, i32
  }
  func.func @transform_6(%arg0: i32) -> (i32, i32) {
    %c0_i32 = arith.constant 0 : i32
    %c0_i32_0 = arith.constant 0 : i32
    %c0_i32_1 = arith.constant 0 : i32
    return %c0_i32, %c0_i32_0 : i32, i32
  }
  func.func @transform_7(%arg0: i32) -> (i32, i32) {
    %c0_i32 = arith.constant 0 : i32
    %c0_i32_0 = arith.constant 0 : i32
    %c0_i32_1 = arith.constant 0 : i32
    return %c0_i32, %c0_i32_0 : i32, i32
  }
}

module attributes {stable_mosaic.version = 11 : i64} {
  func.func @_fused_conv_kernel(%arg0: i32, %arg1: memref<18x288xf32, #tpu.memory_space<vmem>>, %arg2: memref<288x32xf32, #tpu.memory_space<vmem>>, %arg3: memref<18x1xf32, #tpu.memory_space<vmem>>, %arg4: memref<1x18xf32, #tpu.memory_space<vmem>>, %arg5: memref<1x32xf32, #tpu.memory_space<vmem>>, %arg6: memref<1x32xf32, #tpu.memory_space<vmem>>, %arg7: memref<18x32xf32, #tpu.memory_space<vmem>>) attributes {dimension_semantics = [#tpu.dimension_semantics<arbitrary>], iteration_bounds = array<i64: 1>, scalar_prefetch = 0 : i64, scratch_operands = 0 : i64, tpu.core_type = #tpu.core_type<tc>, window_params = [{pipeline_mode = #tpu.pipeline_mode<synchronous>, transform_indices = @transform_0, window_bounds = array<i64: 18, 288>}, {pipeline_mode = #tpu.pipeline_mode<synchronous>, transform_indices = @transform_1, window_bounds = array<i64: 288, 32>}, {pipeline_mode = #tpu.pipeline_mode<synchronous>, transform_indices = @transform_2, window_bounds = array<i64: 18, 1>}, {pipeline_mode = #tpu.pipeline_mode<synchronous>, transform_indices = @transform_3, window_bounds = array<i64: 1, 18>}, {pipeline_mode = #tpu.pipeline_mode<synchronous>, transform_indices = @transform_4, window_bounds = array<i64: 1, 32>}, {pipeline_mode = #tpu.pipeline_mode<synchronous>, transform_indices = @transform_5, window_bounds = array<i64: 1, 32>}, {pipeline_mode = #tpu.pipeline_mode<synchronous>, transform_indices = @transform_6, window_bounds = array<i64: 18, 32>}]} {
    %c0 = arith.constant 0 : index
    %c0_0 = arith.constant 0 : index
    %0 = vector.load %arg1[%c0, %c0_0] : memref<18x288xf32, #tpu.memory_space<vmem>>, vector<18x288xf32>
    %c0_1 = arith.constant 0 : index
    %c0_2 = arith.constant 0 : index
    %1 = vector.load %arg2[%c0_1, %c0_2] : memref<288x32xf32, #tpu.memory_space<vmem>>, vector<288x32xf32>
    %cst = arith.constant dense<0.000000e+00> : vector<18x32xf32>
    %2 = tpu.matmul %0, %1, %cst {dimension_numbers = #tpu.dot_dimension_numbers<[1], [0], [0], [1], [0, 0, 1, 1], [], []>} : vector<18x288xf32>, vector<288x32xf32>, vector<18x32xf32> -> vector<18x32xf32>
    %c0_3 = arith.constant 0 : index
    %c0_4 = arith.constant 0 : index
    %3 = vector.load %arg3[%c0_3, %c0_4] : memref<18x1xf32, #tpu.memory_space<vmem>>, vector<18x1xf32>
    %c0_5 = arith.constant 0 : index
    %c0_6 = arith.constant 0 : index
    %4 = vector.load %arg4[%c0_5, %c0_6] : memref<1x18xf32, #tpu.memory_space<vmem>>, vector<1x18xf32>
    %cst_7 = arith.constant dense<0.000000e+00> : vector<1x32xf32>
    %5 = tpu.matmul %4, %2, %cst_7 {dimension_numbers = #tpu.dot_dimension_numbers<[1], [0], [0], [1], [0, 0, 1, 1], [], []>} : vector<1x18xf32>, vector<18x32xf32>, vector<1x32xf32> -> vector<1x32xf32>
    %cst_8 = arith.constant dense<0.000000e+00> : vector<18x32xf32>
    %6 = tpu.matmul %3, %5, %cst_8 {dimension_numbers = #tpu.dot_dimension_numbers<[1], [0], [0], [1], [0, 0, 1, 1], [], []>} : vector<18x1xf32>, vector<1x32xf32>, vector<18x32xf32> -> vector<18x32xf32>
    %7 = arith.subf %2, %6 : vector<18x32xf32>
    %8 = arith.mulf %7, %7 : vector<18x32xf32>
    %cst_9 = arith.constant dense<0.000000e+00> : vector<1x32xf32>
    %9 = tpu.matmul %4, %8, %cst_9 {dimension_numbers = #tpu.dot_dimension_numbers<[1], [0], [0], [1], [0, 0, 1, 1], [], []>} : vector<1x18xf32>, vector<18x32xf32>, vector<1x32xf32> -> vector<1x32xf32>
    %cst_10 = arith.constant 9.99999974E-6 : f32
    %10 = vector.broadcast %cst_10 : f32 to vector<1x32xf32>
    %11 = arith.addf %9, %10 : vector<1x32xf32>
    %12 = math.rsqrt %11 : vector<1x32xf32>
    %cst_11 = arith.constant dense<0.000000e+00> : vector<18x32xf32>
    %13 = tpu.matmul %3, %12, %cst_11 {dimension_numbers = #tpu.dot_dimension_numbers<[1], [0], [0], [1], [0, 0, 1, 1], [], []>} : vector<18x1xf32>, vector<1x32xf32>, vector<18x32xf32> -> vector<18x32xf32>
    %14 = arith.mulf %7, %13 : vector<18x32xf32>
    %c0_12 = arith.constant 0 : index
    %c0_13 = arith.constant 0 : index
    %15 = vector.load %arg5[%c0_12, %c0_13] : memref<1x32xf32, #tpu.memory_space<vmem>>, vector<1x32xf32>
    %16 = vector.broadcast %15 : vector<1x32xf32> to vector<18x32xf32>
    %17 = arith.mulf %14, %16 : vector<18x32xf32>
    %c0_14 = arith.constant 0 : index
    %c0_15 = arith.constant 0 : index
    %18 = vector.load %arg6[%c0_14, %c0_15] : memref<1x32xf32, #tpu.memory_space<vmem>>, vector<1x32xf32>
    %19 = vector.broadcast %18 : vector<1x32xf32> to vector<18x32xf32>
    %20 = arith.addf %17, %19 : vector<18x32xf32>
    %cst_16 = arith.constant 0.000000e+00 : f32
    %21 = vector.broadcast %cst_16 : f32 to vector<18x32xf32>
    %22 = arith.maximumf %20, %21 : vector<18x32xf32>
    %c0_17 = arith.constant 0 : index
    %c0_18 = arith.constant 0 : index
    %23 = vector.load %arg7[%c0_17, %c0_18] : memref<18x32xf32, #tpu.memory_space<vmem>>, vector<18x32xf32>
    tpu.vector_store %arg7[%c0_17, %c0_18], %22 {strides = array<i32>} : memref<18x32xf32, #tpu.memory_space<vmem>>, vector<18x32xf32>,
    return
  }
  func.func @transform_0(%arg0: i32) -> (i32, i32) {
    %c0_i32 = arith.constant 0 : i32
    %c0_i32_0 = arith.constant 0 : i32
    %c0_i32_1 = arith.constant 0 : i32
    return %c0_i32, %c0_i32_0 : i32, i32
  }
  func.func @transform_1(%arg0: i32) -> (i32, i32) {
    %c0_i32 = arith.constant 0 : i32
    %c0_i32_0 = arith.constant 0 : i32
    %c0_i32_1 = arith.constant 0 : i32
    return %c0_i32, %c0_i32_0 : i32, i32
  }
  func.func @transform_2(%arg0: i32) -> (i32, i32) {
    %c0_i32 = arith.constant 0 : i32
    %c0_i32_0 = arith.constant 0 : i32
    %c0_i32_1 = arith.constant 0 : i32
    return %c0_i32, %c0_i32_0 : i32, i32
  }
  func.func @transform_3(%arg0: i32) -> (i32, i32) {
    %c0_i32 = arith.constant 0 : i32
    %c0_i32_0 = arith.constant 0 : i32
    %c0_i32_1 = arith.constant 0 : i32
    return %c0_i32, %c0_i32_0 : i32, i32
  }
  func.func @transform_4(%arg0: i32) -> (i32, i32) {
    %c0_i32 = arith.constant 0 : i32
    %c0_i32_0 = arith.constant 0 : i32
    %c0_i32_1 = arith.constant 0 : i32
    return %c0_i32, %c0_i32_0 : i32, i32
  }
  func.func @transform_5(%arg0: i32) -> (i32, i32) {
    %c0_i32 = arith.constant 0 : i32
    %c0_i32_0 = arith.constant 0 : i32
    %c0_i32_1 = arith.constant 0 : i32
    return %c0_i32, %c0_i32_0 : i32, i32
  }
  func.func @transform_6(%arg0: i32) -> (i32, i32) {
    %c0_i32 = arith.constant 0 : i32
    %c0_i32_0 = arith.constant 0 : i32
    %c0_i32_1 = arith.constant 0 : i32
    return %c0_i32, %c0_i32_0 : i32, i32
  }
}

module attributes {stable_mosaic.version = 11 : i64} {
  func.func @_fused_conv_kernel(%arg0: i32, %arg1: memref<18x288xf32, #tpu.memory_space<vmem>>, %arg2: memref<288x32xf32, #tpu.memory_space<vmem>>, %arg3: memref<18x1xf32, #tpu.memory_space<vmem>>, %arg4: memref<1x18xf32, #tpu.memory_space<vmem>>, %arg5: memref<1x32xf32, #tpu.memory_space<vmem>>, %arg6: memref<1x32xf32, #tpu.memory_space<vmem>>, %arg7: memref<18x32xf32, #tpu.memory_space<vmem>>) attributes {dimension_semantics = [#tpu.dimension_semantics<arbitrary>], iteration_bounds = array<i64: 1>, scalar_prefetch = 0 : i64, scratch_operands = 0 : i64, tpu.core_type = #tpu.core_type<tc>, window_params = [{pipeline_mode = #tpu.pipeline_mode<synchronous>, transform_indices = @transform_0, window_bounds = array<i64: 18, 288>}, {pipeline_mode = #tpu.pipeline_mode<synchronous>, transform_indices = @transform_1, window_bounds = array<i64: 288, 32>}, {pipeline_mode = #tpu.pipeline_mode<synchronous>, transform_indices = @transform_2, window_bounds = array<i64: 18, 1>}, {pipeline_mode = #tpu.pipeline_mode<synchronous>, transform_indices = @transform_3, window_bounds = array<i64: 1, 18>}, {pipeline_mode = #tpu.pipeline_mode<synchronous>, transform_indices = @transform_4, window_bounds = array<i64: 1, 32>}, {pipeline_mode = #tpu.pipeline_mode<synchronous>, transform_indices = @transform_5, window_bounds = array<i64: 1, 32>}, {pipeline_mode = #tpu.pipeline_mode<synchronous>, transform_indices = @transform_6, window_bounds = array<i64: 18, 32>}]} {
    %c0 = arith.constant 0 : index
    %c0_0 = arith.constant 0 : index
    %0 = vector.load %arg1[%c0, %c0_0] : memref<18x288xf32, #tpu.memory_space<vmem>>, vector<18x288xf32>
    %c0_1 = arith.constant 0 : index
    %c0_2 = arith.constant 0 : index
    %1 = vector.load %arg2[%c0_1, %c0_2] : memref<288x32xf32, #tpu.memory_space<vmem>>, vector<288x32xf32>
    %cst = arith.constant dense<0.000000e+00> : vector<18x32xf32>
    %2 = tpu.matmul %0, %1, %cst {dimension_numbers = #tpu.dot_dimension_numbers<[1], [0], [0], [1], [0, 0, 1, 1], [], []>} : vector<18x288xf32>, vector<288x32xf32>, vector<18x32xf32> -> vector<18x32xf32>
    %c0_3 = arith.constant 0 : index
    %c0_4 = arith.constant 0 : index
    %3 = vector.load %arg3[%c0_3, %c0_4] : memref<18x1xf32, #tpu.memory_space<vmem>>, vector<18x1xf32>
    %c0_5 = arith.constant 0 : index
    %c0_6 = arith.constant 0 : index
    %4 = vector.load %arg4[%c0_5, %c0_6] : memref<1x18xf32, #tpu.memory_space<vmem>>, vector<1x18xf32>
    %cst_7 = arith.constant dense<0.000000e+00> : vector<1x32xf32>
    %5 = tpu.matmul %4, %2, %cst_7 {dimension_numbers = #tpu.dot_dimension_numbers<[1], [0], [0], [1], [0, 0, 1, 1], [], []>} : vector<1x18xf32>, vector<18x32xf32>, vector<1x32xf32> -> vector<1x32xf32>
    %cst_8 = arith.constant dense<0.000000e+00> : vector<18x32xf32>
    %6 = tpu.matmul %3, %5, %cst_8 {dimension_numbers = #tpu.dot_dimension_numbers<[1], [0], [0], [1], [0, 0, 1, 1], [], []>} : vector<18x1xf32>, vector<1x32xf32>, vector<18x32xf32> -> vector<18x32xf32>
    %7 = arith.subf %2, %6 : vector<18x32xf32>
    %8 = arith.mulf %7, %7 : vector<18x32xf32>
    %cst_9 = arith.constant dense<0.000000e+00> : vector<1x32xf32>
    %9 = tpu.matmul %4, %8, %cst_9 {dimension_numbers = #tpu.dot_dimension_numbers<[1], [0], [0], [1], [0, 0, 1, 1], [], []>} : vector<1x18xf32>, vector<18x32xf32>, vector<1x32xf32> -> vector<1x32xf32>
    %cst_10 = arith.constant 9.99999974E-6 : f32
    %10 = vector.broadcast %cst_10 : f32 to vector<1x32xf32>
    %11 = arith.addf %9, %10 : vector<1x32xf32>
    %12 = math.rsqrt %11 : vector<1x32xf32>
    %cst_11 = arith.constant dense<0.000000e+00> : vector<18x32xf32>
    %13 = tpu.matmul %3, %12, %cst_11 {dimension_numbers = #tpu.dot_dimension_numbers<[1], [0], [0], [1], [0, 0, 1, 1], [], []>} : vector<18x1xf32>, vector<1x32xf32>, vector<18x32xf32> -> vector<18x32xf32>
    %14 = arith.mulf %7, %13 : vector<18x32xf32>
    %c0_12 = arith.constant 0 : index
    %c0_13 = arith.constant 0 : index
    %15 = vector.load %arg5[%c0_12, %c0_13] : memref<1x32xf32, #tpu.memory_space<vmem>>, vector<1x32xf32>
    %16 = vector.broadcast %15 : vector<1x32xf32> to vector<18x32xf32>
    %17 = arith.mulf %14, %16 : vector<18x32xf32>
    %c0_14 = arith.constant 0 : index
    %c0_15 = arith.constant 0 : index
    %18 = vector.load %arg6[%c0_14, %c0_15] : memref<1x32xf32, #tpu.memory_space<vmem>>, vector<1x32xf32>
    %19 = vector.broadcast %18 : vector<1x32xf32> to vector<18x32xf32>
    %20 = arith.addf %17, %19 : vector<18x32xf32>
    %cst_16 = arith.constant 0.000000e+00 : f32
    %21 = vector.broadcast %cst_16 : f32 to vector<18x32xf32>
    %22 = arith.maximumf %20, %21 : vector<18x32xf32>
    %c0_17 = arith.constant 0 : index
    %c0_18 = arith.constant 0 : index
    %23 = vector.load %arg7[%c0_17, %c0_18] : memref<18x32xf32, #tpu.memory_space<vmem>>, vector<18x32xf32>
    tpu.vector_store %arg7[%c0_17, %c0_18], %22 {strides = array<i32>} : memref<18x32xf32, #tpu.memory_space<vmem>>, vector<18x32xf32>,
    return
  }
  func.func @transform_0(%arg0: i32) -> (i32, i32) {
    %c0_i32 = arith.constant 0 : i32
    %c0_i32_0 = arith.constant 0 : i32
    %c0_i32_1 = arith.constant 0 : i32
    return %c0_i32, %c0_i32_0 : i32, i32
  }
  func.func @transform_1(%arg0: i32) -> (i32, i32) {
    %c0_i32 = arith.constant 0 : i32
    %c0_i32_0 = arith.constant 0 : i32
    %c0_i32_1 = arith.constant 0 : i32
    return %c0_i32, %c0_i32_0 : i32, i32
  }
  func.func @transform_2(%arg0: i32) -> (i32, i32) {
    %c0_i32 = arith.constant 0 : i32
    %c0_i32_0 = arith.constant 0 : i32
    %c0_i32_1 = arith.constant 0 : i32
    return %c0_i32, %c0_i32_0 : i32, i32
  }
  func.func @transform_3(%arg0: i32) -> (i32, i32) {
    %c0_i32 = arith.constant 0 : i32
    %c0_i32_0 = arith.constant 0 : i32
    %c0_i32_1 = arith.constant 0 : i32
    return %c0_i32, %c0_i32_0 : i32, i32
  }
  func.func @transform_4(%arg0: i32) -> (i32, i32) {
    %c0_i32 = arith.constant 0 : i32
    %c0_i32_0 = arith.constant 0 : i32
    %c0_i32_1 = arith.constant 0 : i32
    return %c0_i32, %c0_i32_0 : i32, i32
  }
  func.func @transform_5(%arg0: i32) -> (i32, i32) {
    %c0_i32 = arith.constant 0 : i32
    %c0_i32_0 = arith.constant 0 : i32
    %c0_i32_1 = arith.constant 0 : i32
    return %c0_i32, %c0_i32_0 : i32, i32
  }
  func.func @transform_6(%arg0: i32) -> (i32, i32) {
    %c0_i32 = arith.constant 0 : i32
    %c0_i32_0 = arith.constant 0 : i32
    %c0_i32_1 = arith.constant 0 : i32
    return %c0_i32, %c0_i32_0 : i32, i32
  }
}

module attributes {stable_mosaic.version = 11 : i64} {
  func.func @_fused_conv_kernel(%arg0: i32, %arg1: memref<98x288xf32, #tpu.memory_space<vmem>>, %arg2: memref<288x16xf32, #tpu.memory_space<vmem>>, %arg3: memref<98x2xf32, #tpu.memory_space<vmem>>, %arg4: memref<2x98xf32, #tpu.memory_space<vmem>>, %arg5: memref<98x16xf32, #tpu.memory_space<vmem>>) attributes {dimension_semantics = [#tpu.dimension_semantics<arbitrary>], iteration_bounds = array<i64: 1>, scalar_prefetch = 0 : i64, scratch_operands = 0 : i64, tpu.core_type = #tpu.core_type<tc>, window_params = [{pipeline_mode = #tpu.pipeline_mode<synchronous>, transform_indices = @transform_0, window_bounds = array<i64: 98, 288>}, {pipeline_mode = #tpu.pipeline_mode<synchronous>, transform_indices = @transform_1, window_bounds = array<i64: 288, 16>}, {pipeline_mode = #tpu.pipeline_mode<synchronous>, transform_indices = @transform_2, window_bounds = array<i64: 98, 2>}, {pipeline_mode = #tpu.pipeline_mode<synchronous>, transform_indices = @transform_3, window_bounds = array<i64: 2, 98>}, {pipeline_mode = #tpu.pipeline_mode<synchronous>, transform_indices = @transform_4, window_bounds = array<i64: 98, 16>}]} {
    %c0 = arith.constant 0 : index
    %c0_0 = arith.constant 0 : index
    %0 = vector.load %arg1[%c0, %c0_0] : memref<98x288xf32, #tpu.memory_space<vmem>>, vector<98x288xf32>
    %c0_1 = arith.constant 0 : index
    %c0_2 = arith.constant 0 : index
    %1 = vector.load %arg2[%c0_1, %c0_2] : memref<288x16xf32, #tpu.memory_space<vmem>>, vector<288x16xf32>
    %cst = arith.constant dense<0.000000e+00> : vector<98x16xf32>
    %2 = tpu.matmul %0, %1, %cst {dimension_numbers = #tpu.dot_dimension_numbers<[1], [0], [0], [1], [0, 0, 1, 1], [], []>} : vector<98x288xf32>, vector<288x16xf32>, vector<98x16xf32> -> vector<98x16xf32>
    %c0_3 = arith.constant 0 : index
    %c0_4 = arith.constant 0 : index
    %3 = vector.load %arg3[%c0_3, %c0_4] : memref<98x2xf32, #tpu.memory_space<vmem>>, vector<98x2xf32>
    %c0_5 = arith.constant 0 : index
    %c0_6 = arith.constant 0 : index
    %4 = vector.load %arg4[%c0_5, %c0_6] : memref<2x98xf32, #tpu.memory_space<vmem>>, vector<2x98xf32>
    %cst_7 = arith.constant dense<0.000000e+00> : vector<2x16xf32>
    %5 = tpu.matmul %4, %2, %cst_7 {dimension_numbers = #tpu.dot_dimension_numbers<[1], [0], [0], [1], [0, 0, 1, 1], [], []>} : vector<2x98xf32>, vector<98x16xf32>, vector<2x16xf32> -> vector<2x16xf32>
    %cst_8 = arith.constant dense<0.000000e+00> : vector<98x16xf32>
    %6 = tpu.matmul %3, %5, %cst_8 {dimension_numbers = #tpu.dot_dimension_numbers<[1], [0], [0], [1], [0, 0, 1, 1], [], []>} : vector<98x2xf32>, vector<2x16xf32>, vector<98x16xf32> -> vector<98x16xf32>
    %7 = arith.subf %2, %6 : vector<98x16xf32>
    %8 = arith.mulf %7, %7 : vector<98x16xf32>
    %cst_9 = arith.constant dense<0.000000e+00> : vector<2x16xf32>
    %9 = tpu.matmul %4, %8, %cst_9 {dimension_numbers = #tpu.dot_dimension_numbers<[1], [0], [0], [1], [0, 0, 1, 1], [], []>} : vector<2x98xf32>, vector<98x16xf32>, vector<2x16xf32> -> vector<2x16xf32>
    %cst_10 = arith.constant 9.99999974E-6 : f32
    %10 = vector.broadcast %cst_10 : f32 to vector<2x16xf32>
    %11 = arith.addf %9, %10 : vector<2x16xf32>
    %12 = math.rsqrt %11 : vector<2x16xf32>
    %cst_11 = arith.constant dense<0.000000e+00> : vector<98x16xf32>
    %13 = tpu.matmul %3, %12, %cst_11 {dimension_numbers = #tpu.dot_dimension_numbers<[1], [0], [0], [1], [0, 0, 1, 1], [], []>} : vector<98x2xf32>, vector<2x16xf32>, vector<98x16xf32> -> vector<98x16xf32>
    %14 = arith.mulf %7, %13 : vector<98x16xf32>
    %cst_12 = arith.constant 0.000000e+00 : f32
    %15 = vector.broadcast %cst_12 : f32 to vector<98x16xf32>
    %16 = arith.maximumf %14, %15 : vector<98x16xf32>
    %c0_13 = arith.constant 0 : index
    %c0_14 = arith.constant 0 : index
    %17 = vector.load %arg5[%c0_13, %c0_14] : memref<98x16xf32, #tpu.memory_space<vmem>>, vector<98x16xf32>
    tpu.vector_store %arg5[%c0_13, %c0_14], %16 {strides = array<i32>} : memref<98x16xf32, #tpu.memory_space<vmem>>, vector<98x16xf32>,
    return
  }
  func.func @transform_0(%arg0: i32) -> (i32, i32) {
    %c0_i32 = arith.constant 0 : i32
    %c0_i32_0 = arith.constant 0 : i32
    %c0_i32_1 = arith.constant 0 : i32
    return %c0_i32, %c0_i32_0 : i32, i32
  }
  func.func @transform_1(%arg0: i32) -> (i32, i32) {
    %c0_i32 = arith.constant 0 : i32
    %c0_i32_0 = arith.constant 0 : i32
    %c0_i32_1 = arith.constant 0 : i32
    return %c0_i32, %c0_i32_0 : i32, i32
  }
  func.func @transform_2(%arg0: i32) -> (i32, i32) {
    %c0_i32 = arith.constant 0 : i32
    %c0_i32_0 = arith.constant 0 : i32
    %c0_i32_1 = arith.constant 0 : i32
    return %c0_i32, %c0_i32_0 : i32, i32
  }
  func.func @transform_3(%arg0: i32) -> (i32, i32) {
    %c0_i32 = arith.constant 0 : i32
    %c0_i32_0 = arith.constant 0 : i32
    %c0_i32_1 = arith.constant 0 : i32
    return %c0_i32, %c0_i32_0 : i32, i32
  }
  func.func @transform_4(%arg0: i32) -> (i32, i32) {
    %c0_i32 = arith.constant 0 : i32
    %c0_i32_0 = arith.constant 0 : i32
    %c0_i32_1 = arith.constant 0 : i32
    return %c0_i32, %c0_i32_0 : i32, i32
  }
}

module attributes {stable_mosaic.version = 11 : i64} {
  func.func @_fused_conv_kernel(%arg0: i32, %arg1: memref<450x144xf32, #tpu.memory_space<vmem>>, %arg2: memref<144x8xf32, #tpu.memory_space<vmem>>, %arg3: memref<450x2xf32, #tpu.memory_space<vmem>>, %arg4: memref<2x450xf32, #tpu.memory_space<vmem>>, %arg5: memref<450x8xf32, #tpu.memory_space<vmem>>) attributes {dimension_semantics = [#tpu.dimension_semantics<arbitrary>], iteration_bounds = array<i64: 1>, scalar_prefetch = 0 : i64, scratch_operands = 0 : i64, tpu.core_type = #tpu.core_type<tc>, window_params = [{pipeline_mode = #tpu.pipeline_mode<synchronous>, transform_indices = @transform_0, window_bounds = array<i64: 450, 144>}, {pipeline_mode = #tpu.pipeline_mode<synchronous>, transform_indices = @transform_1, window_bounds = array<i64: 144, 8>}, {pipeline_mode = #tpu.pipeline_mode<synchronous>, transform_indices = @transform_2, window_bounds = array<i64: 450, 2>}, {pipeline_mode = #tpu.pipeline_mode<synchronous>, transform_indices = @transform_3, window_bounds = array<i64: 2, 450>}, {pipeline_mode = #tpu.pipeline_mode<synchronous>, transform_indices = @transform_4, window_bounds = array<i64: 450, 8>}]} {
    %c0 = arith.constant 0 : index
    %c0_0 = arith.constant 0 : index
    %0 = vector.load %arg1[%c0, %c0_0] : memref<450x144xf32, #tpu.memory_space<vmem>>, vector<450x144xf32>
    %c0_1 = arith.constant 0 : index
    %c0_2 = arith.constant 0 : index
    %1 = vector.load %arg2[%c0_1, %c0_2] : memref<144x8xf32, #tpu.memory_space<vmem>>, vector<144x8xf32>
    %cst = arith.constant dense<0.000000e+00> : vector<450x8xf32>
    %2 = tpu.matmul %0, %1, %cst {dimension_numbers = #tpu.dot_dimension_numbers<[1], [0], [0], [1], [0, 0, 1, 1], [], []>} : vector<450x144xf32>, vector<144x8xf32>, vector<450x8xf32> -> vector<450x8xf32>
    %c0_3 = arith.constant 0 : index
    %c0_4 = arith.constant 0 : index
    %3 = vector.load %arg3[%c0_3, %c0_4] : memref<450x2xf32, #tpu.memory_space<vmem>>, vector<450x2xf32>
    %c0_5 = arith.constant 0 : index
    %c0_6 = arith.constant 0 : index
    %4 = vector.load %arg4[%c0_5, %c0_6] : memref<2x450xf32, #tpu.memory_space<vmem>>, vector<2x450xf32>
    %cst_7 = arith.constant dense<0.000000e+00> : vector<2x8xf32>
    %5 = tpu.matmul %4, %2, %cst_7 {dimension_numbers = #tpu.dot_dimension_numbers<[1], [0], [0], [1], [0, 0, 1, 1], [], []>} : vector<2x450xf32>, vector<450x8xf32>, vector<2x8xf32> -> vector<2x8xf32>
    %cst_8 = arith.constant dense<0.000000e+00> : vector<450x8xf32>
    %6 = tpu.matmul %3, %5, %cst_8 {dimension_numbers = #tpu.dot_dimension_numbers<[1], [0], [0], [1], [0, 0, 1, 1], [], []>} : vector<450x2xf32>, vector<2x8xf32>, vector<450x8xf32> -> vector<450x8xf32>
    %7 = arith.subf %2, %6 : vector<450x8xf32>
    %8 = arith.mulf %7, %7 : vector<450x8xf32>
    %cst_9 = arith.constant dense<0.000000e+00> : vector<2x8xf32>
    %9 = tpu.matmul %4, %8, %cst_9 {dimension_numbers = #tpu.dot_dimension_numbers<[1], [0], [0], [1], [0, 0, 1, 1], [], []>} : vector<2x450xf32>, vector<450x8xf32>, vector<2x8xf32> -> vector<2x8xf32>
    %cst_10 = arith.constant 9.99999974E-6 : f32
    %10 = vector.broadcast %cst_10 : f32 to vector<2x8xf32>
    %11 = arith.addf %9, %10 : vector<2x8xf32>
    %12 = math.rsqrt %11 : vector<2x8xf32>
    %cst_11 = arith.constant dense<0.000000e+00> : vector<450x8xf32>
    %13 = tpu.matmul %3, %12, %cst_11 {dimension_numbers = #tpu.dot_dimension_numbers<[1], [0], [0], [1], [0, 0, 1, 1], [], []>} : vector<450x2xf32>, vector<2x8xf32>, vector<450x8xf32> -> vector<450x8xf32>
    %14 = arith.mulf %7, %13 : vector<450x8xf32>
    %cst_12 = arith.constant 0.000000e+00 : f32
    %15 = vector.broadcast %cst_12 : f32 to vector<450x8xf32>
    %16 = arith.maximumf %14, %15 : vector<450x8xf32>
    %c0_13 = arith.constant 0 : index
    %c0_14 = arith.constant 0 : index
    %17 = vector.load %arg5[%c0_13, %c0_14] : memref<450x8xf32, #tpu.memory_space<vmem>>, vector<450x8xf32>
    tpu.vector_store %arg5[%c0_13, %c0_14], %16 {strides = array<i32>} : memref<450x8xf32, #tpu.memory_space<vmem>>, vector<450x8xf32>,
    return
  }
  func.func @transform_0(%arg0: i32) -> (i32, i32) {
    %c0_i32 = arith.constant 0 : i32
    %c0_i32_0 = arith.constant 0 : i32
    %c0_i32_1 = arith.constant 0 : i32
    return %c0_i32, %c0_i32_0 : i32, i32
  }
  func.func @transform_1(%arg0: i32) -> (i32, i32) {
    %c0_i32 = arith.constant 0 : i32
    %c0_i32_0 = arith.constant 0 : i32
    %c0_i32_1 = arith.constant 0 : i32
    return %c0_i32, %c0_i32_0 : i32, i32
  }
  func.func @transform_2(%arg0: i32) -> (i32, i32) {
    %c0_i32 = arith.constant 0 : i32
    %c0_i32_0 = arith.constant 0 : i32
    %c0_i32_1 = arith.constant 0 : i32
    return %c0_i32, %c0_i32_0 : i32, i32
  }
  func.func @transform_3(%arg0: i32) -> (i32, i32) {
    %c0_i32 = arith.constant 0 : i32
    %c0_i32_0 = arith.constant 0 : i32
    %c0_i32_1 = arith.constant 0 : i32
    return %c0_i32, %c0_i32_0 : i32, i32
  }
  func.func @transform_4(%arg0: i32) -> (i32, i32) {
    %c0_i32 = arith.constant 0 : i32
    %c0_i32_0 = arith.constant 0 : i32
    %c0_i32_1 = arith.constant 0 : i32
    return %c0_i32, %c0_i32_0 : i32, i32
  }
}

module attributes {stable_mosaic.version = 11 : i64} {
  func.func @_fused_conv_kernel(%arg0: i32, %arg1: memref<800x288xf32, #tpu.memory_space<vmem>>, %arg2: memref<288x3xf32, #tpu.memory_space<vmem>>, %arg3: memref<800x3xf32, #tpu.memory_space<vmem>>) attributes {dimension_semantics = [#tpu.dimension_semantics<arbitrary>], iteration_bounds = array<i64: 1>, scalar_prefetch = 0 : i64, scratch_operands = 0 : i64, tpu.core_type = #tpu.core_type<tc>, window_params = [{pipeline_mode = #tpu.pipeline_mode<synchronous>, transform_indices = @transform_0, window_bounds = array<i64: 800, 288>}, {pipeline_mode = #tpu.pipeline_mode<synchronous>, transform_indices = @transform_1, window_bounds = array<i64: 288, 3>}, {pipeline_mode = #tpu.pipeline_mode<synchronous>, transform_indices = @transform_2, window_bounds = array<i64: 800, 3>}]} {
    %c0 = arith.constant 0 : index
    %c0_0 = arith.constant 0 : index
    %0 = vector.load %arg1[%c0, %c0_0] : memref<800x288xf32, #tpu.memory_space<vmem>>, vector<800x288xf32>
    %c0_1 = arith.constant 0 : index
    %c0_2 = arith.constant 0 : index
    %1 = vector.load %arg2[%c0_1, %c0_2] : memref<288x3xf32, #tpu.memory_space<vmem>>, vector<288x3xf32>
    %cst = arith.constant dense<0.000000e+00> : vector<800x3xf32>
    %2 = tpu.matmul %0, %1, %cst {dimension_numbers = #tpu.dot_dimension_numbers<[1], [0], [0], [1], [0, 0, 1, 1], [], []>} : vector<800x288xf32>, vector<288x3xf32>, vector<800x3xf32> -> vector<800x3xf32>
    %3 = math.tanh %2 : vector<800x3xf32>
    %c0_3 = arith.constant 0 : index
    %c0_4 = arith.constant 0 : index
    %4 = vector.load %arg3[%c0_3, %c0_4] : memref<800x3xf32, #tpu.memory_space<vmem>>, vector<800x3xf32>
    tpu.vector_store %arg3[%c0_3, %c0_4], %3 {strides = array<i32>} : memref<800x3xf32, #tpu.memory_space<vmem>>, vector<800x3xf32>,
    return
  }
  func.func @transform_0(%arg0: i32) -> (i32, i32) {
    %c0_i32 = arith.constant 0 : i32
    %c0_i32_0 = arith.constant 0 : i32
    %c0_i32_1 = arith.constant 0 : i32
    return %c0_i32, %c0_i32_0 : i32, i32
  }
  func.func @transform_1(%arg0: i32) -> (i32, i32) {
    %c0_i32 = arith.constant 0 : i32
    %c0_i32_0 = arith.constant 0 : i32
    %c0_i32_1 = arith.constant 0 : i32
    return %c0_i32, %c0_i32_0 : i32, i32
  }
  func.func @transform_2(%arg0: i32) -> (i32, i32) {
    %c0_i32 = arith.constant 0 : i32
    %c0_i32_0 = arith.constant 0 : i32
    %c0_i32_1 = arith.constant 0 : i32
    return %c0_i32, %c0_i32_0 : i32, i32
  }
}

module attributes {stable_mosaic.version = 11 : i64} {
  func.func @_upsample_kernel(%arg0: i32, %arg1: memref<18x20xf32, #tpu.memory_space<vmem>>, %arg2: memref<20x18xf32, #tpu.memory_space<vmem>>, %arg3: memref<1x20x20xf32, #tpu.memory_space<vmem>>, %arg4: memref<1x18x18xf32, #tpu.memory_space<vmem>>) attributes {dimension_semantics = [#tpu.dimension_semantics<parallel>], iteration_bounds = array<i64: 6>, scalar_prefetch = 0 : i64, scratch_operands = 0 : i64, tpu.core_type = #tpu.core_type<tc>, window_params = [{pipeline_mode = #tpu.pipeline_mode<synchronous>, transform_indices = @transform_0, window_bounds = array<i64: 18, 20>}, {pipeline_mode = #tpu.pipeline_mode<synchronous>, transform_indices = @transform_1, window_bounds = array<i64: 20, 18>}, {transform_indices = @transform_2, window_bounds = array<i64: 1, 20, 20>}, {transform_indices = @transform_3, window_bounds = array<i64: 1, 18, 18>}]} {
    %c0 = arith.constant 0 : index
    %c0_0 = arith.constant 0 : index
    %0 = vector.load %arg1[%c0, %c0_0] : memref<18x20xf32, #tpu.memory_space<vmem>>, vector<18x20xf32>
    %c0_1 = arith.constant 0 : index
    %c0_2 = arith.constant 0 : index
    %c0_3 = arith.constant 0 : index
    %1 = vector.load %arg3[%c0_1, %c0_2, %c0_3] : memref<1x20x20xf32, #tpu.memory_space<vmem>>, vector<1x20x20xf32>
    %2 = vector.shape_cast %1 : vector<1x20x20xf32> to vector<20x20xf32>
    %cst = arith.constant dense<0.000000e+00> : vector<18x20xf32>
    %3 = tpu.matmul %0, %2, %cst {dimension_numbers = #tpu.dot_dimension_numbers<[1], [0], [0], [1], [0, 0, 1, 1], [], []>} : vector<18x20xf32>, vector<20x20xf32>, vector<18x20xf32> -> vector<18x20xf32>
    %c0_4 = arith.constant 0 : index
    %c0_5 = arith.constant 0 : index
    %4 = vector.load %arg2[%c0_4, %c0_5] : memref<20x18xf32, #tpu.memory_space<vmem>>, vector<20x18xf32>
    %cst_6 = arith.constant dense<0.000000e+00> : vector<18x18xf32>
    %5 = tpu.matmul %3, %4, %cst_6 {dimension_numbers = #tpu.dot_dimension_numbers<[1], [0], [0], [1], [0, 0, 1, 1], [], []>} : vector<18x20xf32>, vector<20x18xf32>, vector<18x18xf32> -> vector<18x18xf32>
    %c0_7 = arith.constant 0 : index
    %c0_8 = arith.constant 0 : index
    %c0_9 = arith.constant 0 : index
    %6 = vector.load %arg4[%c0_7, %c0_8, %c0_9] : memref<1x18x18xf32, #tpu.memory_space<vmem>>, vector<1x18x18xf32>
    %7 = vector.shape_cast %6 : vector<1x18x18xf32> to vector<18x18xf32>
    %8 = vector.shape_cast %5 : vector<18x18xf32> to vector<1x18x18xf32>
    tpu.vector_store %arg4[%c0_7, %c0_8, %c0_9], %8 {strides = array<i32>} : memref<1x18x18xf32, #tpu.memory_space<vmem>>, vector<1x18x18xf32>,
    return
  }
  func.func @transform_0(%arg0: i32) -> (i32, i32) {
    %c0_i32 = arith.constant 0 : i32
    %c0_i32_0 = arith.constant 0 : i32
    %c0_i32_1 = arith.constant 0 : i32
    return %c0_i32, %c0_i32_0 : i32, i32
  }
  func.func @transform_1(%arg0: i32) -> (i32, i32) {
    %c0_i32 = arith.constant 0 : i32
    %c0_i32_0 = arith.constant 0 : i32
    %c0_i32_1 = arith.constant 0 : i32
    return %c0_i32, %c0_i32_0 : i32, i32
  }
  func.func @transform_2(%arg0: i32) -> (i32, i32, i32) {
    %c0_i32 = arith.constant 0 : i32
    %c0_i32_0 = arith.constant 0 : i32
    %c0_i32_1 = arith.constant 0 : i32
    return %arg0, %c0_i32, %c0_i32_0 : i32, i32, i32
  }
  func.func @transform_3(%arg0: i32) -> (i32, i32, i32) {
    %c0_i32 = arith.constant 0 : i32
    %c0_i32_0 = arith.constant 0 : i32
    %c0_i32_1 = arith.constant 0 : i32
    return %arg0, %c0_i32, %c0_i32_0 : i32, i32, i32
  }
}

</mosaic_0001>

<llo_original>
// kernel: generator_forward.16
$region0: #{generator_forward.16}
  #allocation0 [shape = 'u32[]', space=smem, size = 0x4, offset = 0x4, fixed_abs, tag = 'smem constant byte address 0x4 - core index']
  #allocation1 [shape = 'u32[144,128]{1,0:T(1,128)}', space=vmem, size = 0x12000, scoped, tag = 'internal scratch']
  %s0 = inlined_call_operand.vmem [shape: f32[98,72], index: 0, kind: input, shape index: {}]
  %s1 = inlined_call_operand.hbm [shape: f32[72,16], index: 1, kind: input, shape index: {}]
  %s2 = inlined_call_operand.hbm [shape: f32[1,16], index: 2, kind: input, shape index: {}]
  %s3 = inlined_call_operand.hbm [shape: f32[98,2], index: 3, kind: input, shape index: {}]
  %s4 = inlined_call_operand.hbm [shape: f32[2,98], index: 4, kind: input, shape index: {}]
  %s5 = inlined_call_operand.vmem [shape: f32[98,16], index: 5, kind: output, shape index: {}]
  %s6 = sld [smem:[#allocation0]]
  $region46: #{generator_forward.16} parent=0
    _
  %s8 = ssub.s32 1, %s6
  %s9 = scalar_select 0, %s8, %s6
  $region1: #{generator_forward.16} parent=0
    #allocation2 [shape = 'u8[36864]{0}', space=vmem, size = 0x9000, scoped, tag = 'input window, operand 1, single buffered']
    #allocation3 [shape = 's32[1]{0}', space=sflag, size = 0x4, scoped, tag = 'scoped memory for generator_forward.16']
    #allocation4 [shape = 'u8[512]{0}', space=vmem, size = 0x400, scoped, tag = 'input window, operand 2, single buffered']
    #allocation5 [shape = 's32[1]{0}', space=sflag, size = 0x4, scoped, tag = 'scoped memory for generator_forward.16']
    #allocation6 [shape = 'u8[53248]{0}', space=vmem, size = 0xd000, scoped, tag = 'input window, operand 3, single buffered']
    #allocation7 [shape = 'u8[1024]{0}', space=vmem, size = 0x400, scoped, tag = 'input window, operand 4, single buffered']
    #allocation8 [shape = 's32[1]{0}', space=sflag, size = 0x4, scoped, tag = 'scoped memory for generator_forward.16']
    %10 = vsyncpa [#allocation3], 0
    %11 = vsyncpa [#allocation5], 0
    %12 = vsyncpa [#allocation8], 0
    // Predicated region
    $region2: #{generator_forward.16} parent=1 // pred_check
      _
    $region3: #{generator_forward.16} parent=1 // pred_check_branch
      %14 = sbr.rel (0) target = $region5
    $region4: #{generator_forward.16} parent=1 // pred_region
      _
    $region5: #{generator_forward.16} parent=1 // pred_fallthru
      _
    // Predicated region
    $region6: #{generator_forward.16} parent=1 // pred_check
      _
    $region7: #{generator_forward.16} parent=1 // pred_check_branch
      %16 = sbr.rel (0) target = $region9
    $region8: #{generator_forward.16} parent=1 // pred_region
      %s18 = ssub.s32 1152, 1152
      %19 = vsyncadd [#allocation3], %s18
      %s20 = sshll.u32 [#allocation2], 4
      %s21 = int_to_ptr.vmem [resolvable:$true] %s20
      %26 = dma.hbm_to_vmem [thread:$0]  %s1, 1152, %s21, [#allocation3], 128, 128, 8
    $region9: #{generator_forward.16} parent=1 // pred_fallthru
      _
    // Predicated region
    $region10: #{generator_forward.16} parent=1 // pred_check
      _
    $region11: #{generator_forward.16} parent=1 // pred_check_branch
      %28 = sbr.rel (0) target = $region13
    $region12: #{generator_forward.16} parent=1 // pred_region
      %s30 = ssub.s32 16, 16
      %31 = vsyncadd [#allocation5], %s30
      %s33 = sshll.u32 [#allocation4], 4
      %s34 = int_to_ptr.vmem [resolvable:$true] %s33
      %36 = dma.hbm_to_vmem [thread:$0]  %s2, 16, %s34, [#allocation5]
    $region13: #{generator_forward.16} parent=1 // pred_fallthru
      _
    // Predicated region
    $region14: #{generator_forward.16} parent=1 // pred_check
      _
    $region15: #{generator_forward.16} parent=1 // pred_check_branch
      %38 = sbr.rel (0) target = $region17
    $region16: #{generator_forward.16} parent=1 // pred_region
      %s40 = ssub.s32 1664, 1664
      %41 = vsyncadd [#allocation5], %s40
      %s42 = sshll.u32 [#allocation6], 4
      %s43 = int_to_ptr.vmem [resolvable:$true] %s42
      %48 = dma.hbm_to_vmem [thread:$0]  %s3, 1664, %s43, [#allocation5], 128, 128, 8
    $region17: #{generator_forward.16} parent=1 // pred_fallthru
      _
    // Predicated region
    $region18: #{generator_forward.16} parent=1 // pred_check
      _
    $region19: #{generator_forward.16} parent=1 // pred_check_branch
      %50 = sbr.rel (0) target = $region21
    $region20: #{generator_forward.16} parent=1 // pred_region
      %s52 = ssub.s32 32, 32
      %53 = vsyncadd [#allocation8], %s52
      %s55 = sshll.u32 [#allocation7], 4
      %s56 = int_to_ptr.vmem [resolvable:$true] %s55
      %58 = dma.hbm_to_vmem [thread:$0]  %s4, 32, %s56, [#allocation8]
    $region21: #{generator_forward.16} parent=1 // pred_fallthru
      _
    // Predicated region
    $region22: #{generator_forward.16} parent=1 // pred_check
      _
    $region23: #{generator_forward.16} parent=1 // pred_check_branch
      %60 = sbr.rel (0) target = $region25
    $region24: #{generator_forward.16} parent=1 // pred_region
      %61 = dma.done [#allocation3], 1152
    $region25: #{generator_forward.16} parent=1 // pred_fallthru
      _
    // Predicated region
    $region26: #{generator_forward.16} parent=1 // pred_check
      _
    $region27: #{generator_forward.16} parent=1 // pred_check_branch
      %63 = sbr.rel (0) target = $region29
    $region28: #{generator_forward.16} parent=1 // pred_region
      %64 = dma.done [#allocation5], 16
    $region29: #{generator_forward.16} parent=1 // pred_fallthru
      _
    // Predicated region
    $region30: #{generator_forward.16} parent=1 // pred_check
      _
    $region31: #{generator_forward.16} parent=1 // pred_check_branch
      %66 = sbr.rel (0) target = $region33
    $region32: #{generator_forward.16} parent=1 // pred_region
      %67 = dma.done [#allocation5], 1664
    $region33: #{generator_forward.16} parent=1 // pred_fallthru
      _
    // Predicated region
    $region34: #{generator_forward.16} parent=1 // pred_check
      _
    $region35: #{generator_forward.16} parent=1 // pred_check_branch
      %69 = sbr.rel (0) target = $region37
    $region36: #{generator_forward.16} parent=1 // pred_region
      %70 = dma.done [#allocation8], 32
    $region37: #{generator_forward.16} parent=1 // pred_fallthru
      _
    %v71 = vld [vmem:[%s0] sm:$0xff]
    %v72 = vld [vmem:[%s0 + $0x8] sm:$0xff]
    %v73 = vld [vmem:[%s0 + $0x10] sm:$0xff]
    %v74 = vld [vmem:[%s0 + $0x18] sm:$0xff]
    %v75 = vld [vmem:[%s0 + $0x20] sm:$0xff]
    %v76 = vld [vmem:[%s0 + $0x28] sm:$0xff]
    %v77 = vld [vmem:[%s0 + $0x30] sm:$0xff]
    %v78 = vld [vmem:[%s0 + $0x38] sm:$0xff]
    %v79 = vld [vmem:[%s0 + $0x40] sm:$0xff]
    %v80 = vld [vmem:[%s0 + $0x48] sm:$0xff]
    %v81 = vld [vmem:[%s0 + $0x50] sm:$0xff]
    %v82 = vld [vmem:[%s0 + $0x58] sm:$0xff]
    %v83 = vld [vmem:[%s0 + $0x60] sm:$0x3]
    %v84 = vld [vmem:[#allocation2] sm:$0xff]
    %v85 = vld [vmem:[#allocation2 + $0x8] sm:$0xff]
    %v86 = vld [vmem:[#allocation2 + $0x10] sm:$0xff]
    %v87 = vld [vmem:[#allocation2 + $0x18] sm:$0xff]
    %v88 = vld [vmem:[#allocation2 + $0x20] sm:$0xff]
    %v89 = vld [vmem:[#allocation2 + $0x28] sm:$0xff]
    %v90 = vld [vmem:[#allocation2 + $0x30] sm:$0xff]
    %v91 = vld [vmem:[#allocation2 + $0x38] sm:$0xff]
    %v92 = vld [vmem:[#allocation2 + $0x40] sm:$0xff]
    %v93 = vld [vmem:[#allocation4] sm:$0x1]
    %v95 = vlaneseq
    %v96 = vshrl.u32 %v95, 7
    %v97 = vsub.s32 0, %v96
    %v98 = vrot.slane %v93, %v97
    %vm100 = vcmask 588800
    %v102 = vsel %vm100, %v71, 0
    %v105 = vsel %vm100, %v72, 0
    %v108 = vsel %vm100, %v73, 0
    %v111 = vsel %vm100, %v74, 0
    %v114 = vsel %vm100, %v75, 0
    %v117 = vsel %vm100, %v76, 0
    %v120 = vsel %vm100, %v77, 0
    %v123 = vsel %vm100, %v78, 0
    %v126 = vsel %vm100, %v79, 0
    %v129 = vsel %vm100, %v80, 0
    %v132 = vsel %vm100, %v81, 0
    %v135 = vsel %vm100, %v82, 0
    %v138 = vsel %vm100, %v83, 0
    %140 = vmatprep.subr.mxu0 0.0
    %141 = vmatpush1.msra.mxu0 0.0
    %142 = vmatprep.subr.mxu0 0.0
    %143 = vmatpush1.msra.mxu0 0.0
    %144 = vmatprep.subr.mxu0 0.0
    %145 = vmatpush1.msra.mxu0 0.0
    %146 = vmatprep.subr.mxu0 0.0
    %147 = vmatpush1.msra.mxu0 0.0
    %148 = vmatprep.subr.mxu0 0.0
    %149 = vmatpush1.msra.mxu0 0.0
    %150 = vmatprep.subr.mxu0 0.0
    %151 = vmatpush1.msra.mxu0 0.0
    %152 = vmatprep.subr.mxu0 0.0
    %153 = vmatpush1.msra.mxu0 0.0
    %154 = vmatprep.subr.mxu0 0.0
    %155 = vmatpush1.msra.mxu0 %v92
    %156 = vmatprep.subr.mxu0 0.0
    %157 = vmatpush1.msra.mxu0 %v91
    %158 = vmatprep.subr.mxu0 0.0
    %159 = vmatpush1.msra.mxu0 %v90
    %160 = vmatprep.subr.mxu0 0.0
    %161 = vmatpush1.msra.mxu0 %v89
    %162 = vmatprep.subr.mxu0 0.0
    %163 = vmatpush1.msra.mxu0 %v88
    %164 = vmatprep.subr.mxu0 0.0
    %165 = vmatpush1.msra.mxu0 %v87
    %166 = vmatprep.subr.mxu0 0.0
    %167 = vmatpush1.msra.mxu0 %v86
    %168 = vmatprep.subr.mxu0 0.0
    %169 = vmatpush1.msra.mxu0 %v85
    %170 = vmatprep.subr.mxu0 0.0
    %171 = vmatpush1.msra.mxu0 %v84
    %172 = vmatprep.subr.mxu0 0.0
    %173 = vmatpush2.msra.mxu0 0.0
    %174 = vmatprep.subr.mxu0 0.0
    %175 = vmatpush2.msra.mxu0 0.0
    %176 = vmatprep.subr.mxu0 0.0
    %177 = vmatpush2.msra.mxu0 0.0
    %178 = vmatprep.subr.mxu0 0.0
    %179 = vmatpush2.msra.mxu0 0.0
    %180 = vmatprep.subr.mxu0 0.0
    %181 = vmatpush2.msra.mxu0 0.0
    %182 = vmatprep.subr.mxu0 0.0
    %183 = vmatpush2.msra.mxu0 0.0
    %184 = vmatprep.subr.mxu0 0.0
    %185 = vmatpush2.msra.mxu0 0.0
    %186 = vmatprep.subr.mxu0 0.0
    %187 = vmatpush2.msra.mxu0 0.0
    %188 = vmatprep.subr.mxu0 0.0
    %189 = vmatpush2.msra.mxu0 0.0
    %190 = vmatprep.subr.mxu0 0.0
    %191 = vmatpush2.msra.mxu0 0.0
    %192 = vmatprep.subr.mxu0 0.0
    %193 = vmatpush2.msra.mxu0 0.0
    %194 = vmatprep.subr.mxu0 0.0
    %195 = vmatpush2.msra.mxu0 0.0
    %196 = vmatprep.subr.mxu0 0.0
    %197 = vmatpush2.msra.mxu0 0.0
    %198 = vmatprep.subr.mxu0 0.0
    %199 = vmatpush2.msra.mxu0 0.0
    %200 = vmatprep.subr.mxu0 0.0
    %201 = vmatpush2.msra.mxu0 0.0
    %202 = vmatprep.subr.mxu0 0.0
    %203 = vmatpush2.msra.mxu0 0.0
    %204 = vmatprep.mubr.f32.mxu0 0.0
    %205 = vmatmul.mubr.f32.gmra.mxu0 %v102
    %v206 = vpop.f32.mrf.mxu0
    %v207 = vadd.f32 %v98, %v206
    %v208 = vpop.f32.mrf.mxu0
    %209 = vmatprep.mubr.f32.mxu0 0.0
    %210 = vmatmul.mubr.f32.gmra.mxu0 %v105
    %v211 = vpop.f32.mrf.mxu0
    %v212 = vadd.f32 %v98, %v211
    %v213 = vpop.f32.mrf.mxu0
    %214 = vmatprep.mubr.f32.mxu0 0.0
    %215 = vmatmul.mubr.f32.gmra.mxu0 %v108
    %v216 = vpop.f32.mrf.mxu0
    %v217 = vadd.f32 %v98, %v216
    %v218 = vpop.f32.mrf.mxu0
    %219 = vmatprep.mubr.f32.mxu0 0.0
    %220 = vmatmul.mubr.f32.gmra.mxu0 %v111
    %v221 = vpop.f32.mrf.mxu0
    %v222 = vadd.f32 %v98, %v221
    %v223 = vpop.f32.mrf.mxu0
    %224 = vmatprep.mubr.f32.mxu0 0.0
    %225 = vmatmul.mubr.f32.gmra.mxu0 %v114
    %v226 = vpop.f32.mrf.mxu0
    %v227 = vadd.f32 %v98, %v226
    %v228 = vpop.f32.mrf.mxu0
    %229 = vmatprep.mubr.f32.mxu0 0.0
    %230 = vmatmul.mubr.f32.gmra.mxu0 %v117
    %v231 = vpop.f32.mrf.mxu0
    %v232 = vadd.f32 %v98, %v231
    %v233 = vpop.f32.mrf.mxu0
    %234 = vmatprep.mubr.f32.mxu0 0.0
    %235 = vmatmul.mubr.f32.gmra.mxu0 %v120
    %v236 = vpop.f32.mrf.mxu0
    %v237 = vadd.f32 %v98, %v236
    %v238 = vpop.f32.mrf.mxu0
    %239 = vmatprep.mubr.f32.mxu0 0.0
    %240 = vmatmul.mubr.f32.gmra.mxu0 %v123
    %v241 = vpop.f32.mrf.mxu0
    %v242 = vadd.f32 %v98, %v241
    %v243 = vpop.f32.mrf.mxu0
    %244 = vmatprep.mubr.f32.mxu0 0.0
    %245 = vmatmul.mubr.f32.gmra.mxu0 %v126
    %v246 = vpop.f32.mrf.mxu0
    %v247 = vadd.f32 %v98, %v246
    %v248 = vpop.f32.mrf.mxu0
    %249 = vmatprep.mubr.f32.mxu0 0.0
    %250 = vmatmul.mubr.f32.gmra.mxu0 %v129
    %v251 = vpop.f32.mrf.mxu0
    %v252 = vadd.f32 %v98, %v251
    %v253 = vpop.f32.mrf.mxu0
    %254 = vmatprep.mubr.f32.mxu0 0.0
    %255 = vmatmul.mubr.f32.gmra.mxu0 %v132
    %v256 = vpop.f32.mrf.mxu0
    %v257 = vadd.f32 %v98, %v256
    %v258 = vpop.f32.mrf.mxu0
    %259 = vmatprep.mubr.f32.mxu0 0.0
    %260 = vmatmul.mubr.f32.gmra.mxu0 %v135
    %v261 = vpop.f32.mrf.mxu0
    %v262 = vadd.f32 %v98, %v261
    %v263 = vpop.f32.mrf.mxu0
    %264 = vmatprep.mubr.f32.mxu0 0.0
    %265 = vmatmul.mubr.f32.gmra.mxu0 %v138
    %v266 = vpop.f32.mrf.mxu0
    %v267 = vadd.f32 %v98, %v266
    %v268 = vpop.f32.mrf.mxu0
    %269 = vdwg.mxu0
    %v270 = vld [vmem:[#allocation6] sm:$0xff]
    %v271 = vld [vmem:[#allocation6 + $0x8] sm:$0xff]
    %v272 = vld [vmem:[#allocation6 + $0x10] sm:$0xff]
    %v273 = vld [vmem:[#allocation6 + $0x18] sm:$0xff]
    %v274 = vld [vmem:[#allocation6 + $0x20] sm:$0xff]
    %v275 = vld [vmem:[#allocation6 + $0x28] sm:$0xff]
    %v276 = vld [vmem:[#allocation6 + $0x30] sm:$0xff]
    %v277 = vld [vmem:[#allocation6 + $0x38] sm:$0xff]
    %v278 = vld [vmem:[#allocation6 + $0x40] sm:$0xff]
    %v279 = vld [vmem:[#allocation6 + $0x48] sm:$0xff]
    %v280 = vld [vmem:[#allocation6 + $0x50] sm:$0xff]
    %v281 = vld [vmem:[#allocation6 + $0x58] sm:$0xff]
    %v282 = vld [vmem:[#allocation6 + $0x60] sm:$0x3]
    %v283 = vld [vmem:[#allocation7] sm:$0x3]
    %vm284 = vcmask 801792
    %v286 = vsel %vm284, %v283, 0
    %vm288 = vcmask 1041408
    %v290 = vsel %vm288, %v267, 0
    %292 = vmatprep.subr.mxu0 0.0
    %293 = vmatpush1.msra.mxu0 0.0
    %294 = vmatprep.subr.mxu0 0.0
    %295 = vmatpush1.msra.mxu0 0.0
    %296 = vmatprep.subr.mxu0 0.0
    %297 = vmatpush1.msra.mxu0 0.0
    %298 = vmatprep.subr.mxu0 0.0
    %299 = vmatpush1.msra.mxu0 %v290
    %300 = vmatprep.subr.mxu0 0.0
    %301 = vmatpush1.msra.mxu0 %v262
    %302 = vmatprep.subr.mxu0 0.0
    %303 = vmatpush1.msra.mxu0 %v257
    %304 = vmatprep.subr.mxu0 0.0
    %305 = vmatpush1.msra.mxu0 %v252
    %306 = vmatprep.subr.mxu0 0.0
    %307 = vmatpush1.msra.mxu0 %v247
    %308 = vmatprep.subr.mxu0 0.0
    %309 = vmatpush1.msra.mxu0 %v242
    %310 = vmatprep.subr.mxu0 0.0
    %311 = vmatpush1.msra.mxu0 %v237
    %312 = vmatprep.subr.mxu0 0.0
    %313 = vmatpush1.msra.mxu0 %v232
    %314 = vmatprep.subr.mxu0 0.0
    %315 = vmatpush1.msra.mxu0 %v227
    %316 = vmatprep.subr.mxu0 0.0
    %317 = vmatpush1.msra.mxu0 %v222
    %318 = vmatprep.subr.mxu0 0.0
    %319 = vmatpush1.msra.mxu0 %v217
    %320 = vmatprep.subr.mxu0 0.0
    %321 = vmatpush1.msra.mxu0 %v212
    %322 = vmatprep.subr.mxu0 0.0
    %323 = vmatpush1.msra.mxu0 %v207
    %324 = vmatprep.subr.mxu0 0.0
    %325 = vmatpush2.msra.mxu0 0.0
    %326 = vmatprep.subr.mxu0 0.0
    %327 = vmatpush2.msra.mxu0 0.0
    %328 = vmatprep.subr.mxu0 0.0
    %329 = vmatpush2.msra.mxu0 0.0
    %330 = vmatprep.subr.mxu0 0.0
    %331 = vmatpush2.msra.mxu0 0.0
    %332 = vmatprep.subr.mxu0 0.0
    %333 = vmatpush2.msra.mxu0 0.0
    %334 = vmatprep.subr.mxu0 0.0
    %335 = vmatpush2.msra.mxu0 0.0
    %336 = vmatprep.subr.mxu0 0.0
    %337 = vmatpush2.msra.mxu0 0.0
    %338 = vmatprep.subr.mxu0 0.0
    %339 = vmatpush2.msra.mxu0 0.0
    %340 = vmatprep.subr.mxu0 0.0
    %341 = vmatpush2.msra.mxu0 0.0
    %342 = vmatprep.subr.mxu0 0.0
    %343 = vmatpush2.msra.mxu0 0.0
    %344 = vmatprep.subr.mxu0 0.0
    %345 = vmatpush2.msra.mxu0 0.0
    %346 = vmatprep.subr.mxu0 0.0
    %347 = vmatpush2.msra.mxu0 0.0
    %348 = vmatprep.subr.mxu0 0.0
    %349 = vmatpush2.msra.mxu0 0.0
    %350 = vmatprep.subr.mxu0 0.0
    %351 = vmatpush2.msra.mxu0 0.0
    %352 = vmatprep.subr.mxu0 0.0
    %353 = vmatpush2.msra.mxu0 0.0
    %354 = vmatprep.subr.mxu0 0.0
    %355 = vmatpush2.msra.mxu0 0.0
    %356 = vmatprep.mubr.f32.mxu0 0.0
    %357 = vmatmul.mubr.f32.gmra.mxu0 %v286
    %v358 = vpop.f32.mrf.mxu0
    %v359 = vadd.f32 0.0, %v358
    %v360 = vpop.f32.mrf.mxu0
    %361 = vdwg.mxu0
    %vm362 = vcmask 15360
    %v364 = vsel %vm362, %v270, 0
    %v367 = vsel %vm362, %v271, 0
    %v370 = vsel %vm362, %v272, 0
    %v373 = vsel %vm362, %v273, 0
    %v376 = vsel %vm362, %v274, 0
    %v379 = vsel %vm362, %v275, 0
    %v382 = vsel %vm362, %v276, 0
    %v385 = vsel %vm362, %v277, 0
    %v388 = vsel %vm362, %v278, 0
    %v391 = vsel %vm362, %v279, 0
    %v394 = vsel %vm362, %v280, 0
    %v397 = vsel %vm362, %v281, 0
    %v400 = vsel %vm362, %v282, 0
    %v403 = vsel %vm288, %v359, 0
    %405 = vmatprep.subr.mxu0 0.0
    %406 = vmatpush1.msra.mxu0 0.0
    %407 = vmatprep.subr.mxu0 0.0
    %408 = vmatpush1.msra.mxu0 0.0
    %409 = vmatprep.subr.mxu0 0.0
    %410 = vmatpush1.msra.mxu0 0.0
    %411 = vmatprep.subr.mxu0 0.0
    %412 = vmatpush1.msra.mxu0 0.0
    %413 = vmatprep.subr.mxu0 0.0
    %414 = vmatpush1.msra.mxu0 0.0
    %415 = vmatprep.subr.mxu0 0.0
    %416 = vmatpush1.msra.mxu0 0.0
    %417 = vmatprep.subr.mxu0 0.0
    %418 = vmatpush1.msra.mxu0 0.0
    %419 = vmatprep.subr.mxu0 0.0
    %420 = vmatpush1.msra.mxu0 0.0
    %421 = vmatprep.subr.mxu0 0.0
    %422 = vmatpush1.msra.mxu0 0.0
    %423 = vmatprep.subr.mxu0 0.0
    %424 = vmatpush1.msra.mxu0 0.0
    %425 = vmatprep.subr.mxu0 0.0
    %426 = vmatpush1.msra.mxu0 0.0
    %427 = vmatprep.subr.mxu0 0.0
    %428 = vmatpush1.msra.mxu0 0.0
    %429 = vmatprep.subr.mxu0 0.0
    %430 = vmatpush1.msra.mxu0 0.0
    %431 = vmatprep.subr.mxu0 0.0
    %432 = vmatpush1.msra.mxu0 0.0
    %433 = vmatprep.subr.mxu0 0.0
    %434 = vmatpush1.msra.mxu0 0.0
    %435 = vmatprep.subr.mxu0 0.0
    %436 = vmatpush1.msra.mxu0 %v403
    %437 = vmatprep.subr.mxu0 0.0
    %438 = vmatpush2.msra.mxu0 0.0
    %439 = vmatprep.subr.mxu0 0.0
    %440 = vmatpush2.msra.mxu0 0.0
    %441 = vmatprep.subr.mxu0 0.0
    %442 = vmatpush2.msra.mxu0 0.0
    %443 = vmatprep.subr.mxu0 0.0
    %444 = vmatpush2.msra.mxu0 0.0
    %445 = vmatprep.subr.mxu0 0.0
    %446 = vmatpush2.msra.mxu0 0.0
    %447 = vmatprep.subr.mxu0 0.0
    %448 = vmatpush2.msra.mxu0 0.0
    %449 = vmatprep.subr.mxu0 0.0
    %450 = vmatpush2.msra.mxu0 0.0
    %451 = vmatprep.subr.mxu0 0.0
    %452 = vmatpush2.msra.mxu0 0.0
    %453 = vmatprep.subr.mxu0 0.0
    %454 = vmatpush2.msra.mxu0 0.0
    %455 = vmatprep.subr.mxu0 0.0
    %456 = vmatpush2.msra.mxu0 0.0
    %457 = vmatprep.subr.mxu0 0.0
    %458 = vmatpush2.msra.mxu0 0.0
    %459 = vmatprep.subr.mxu0 0.0
    %460 = vmatpush2.msra.mxu0 0.0
    %461 = vmatprep.subr.mxu0 0.0
    %462 = vmatpush2.msra.mxu0 0.0
    %463 = vmatprep.subr.mxu0 0.0
    %464 = vmatpush2.msra.mxu0 0.0
    %465 = vmatprep.subr.mxu0 0.0
    %466 = vmatpush2.msra.mxu0 0.0
    %467 = vmatprep.subr.mxu0 0.0
    %468 = vmatpush2.msra.mxu0 0.0
    %469 = vmatprep.mubr.f32.mxu0 0.0
    %470 = vmatmul.mubr.f32.gmra.mxu0 %v364
    %v471 = vpop.f32.mrf.mxu0
    %v472 = vadd.f32 0.0, %v471
    %v473 = vpop.f32.mrf.mxu0
    %474 = vmatprep.mubr.f32.mxu0 0.0
    %475 = vmatmul.mubr.f32.gmra.mxu0 %v367
    %v476 = vpop.f32.mrf.mxu0
    %v477 = vadd.f32 0.0, %v476
    %v478 = vpop.f32.mrf.mxu0
    %479 = vmatprep.mubr.f32.mxu0 0.0
    %480 = vmatmul.mubr.f32.gmra.mxu0 %v370
    %v481 = vpop.f32.mrf.mxu0
    %v482 = vadd.f32 0.0, %v481
    %v483 = vpop.f32.mrf.mxu0
    %484 = vmatprep.mubr.f32.mxu0 0.0
    %485 = vmatmul.mubr.f32.gmra.mxu0 %v373
    %v486 = vpop.f32.mrf.mxu0
    %v487 = vadd.f32 0.0, %v486
    %v488 = vpop.f32.mrf.mxu0
    %489 = vmatprep.mubr.f32.mxu0 0.0
    %490 = vmatmul.mubr.f32.gmra.mxu0 %v376
    %v491 = vpop.f32.mrf.mxu0
    %v492 = vadd.f32 0.0, %v491
    %v493 = vpop.f32.mrf.mxu0
    %494 = vmatprep.mubr.f32.mxu0 0.0
    %495 = vmatmul.mubr.f32.gmra.mxu0 %v379
    %v496 = vpop.f32.mrf.mxu0
    %v497 = vadd.f32 0.0, %v496
    %v498 = vpop.f32.mrf.mxu0
    %499 = vmatprep.mubr.f32.mxu0 0.0
    %500 = vmatmul.mubr.f32.gmra.mxu0 %v382
    %v501 = vpop.f32.mrf.mxu0
    %v502 = vadd.f32 0.0, %v501
    %v503 = vpop.f32.mrf.mxu0
    %504 = vmatprep.mubr.f32.mxu0 0.0
    %505 = vmatmul.mubr.f32.gmra.mxu0 %v385
    %v506 = vpop.f32.mrf.mxu0
    %v507 = vadd.f32 0.0, %v506
    %v508 = vpop.f32.mrf.mxu0
    %509 = vmatprep.mubr.f32.mxu0 0.0
    %510 = vmatmul.mubr.f32.gmra.mxu0 %v388
    %v511 = vpop.f32.mrf.mxu0
    %v512 = vadd.f32 0.0, %v511
    %v513 = vpop.f32.mrf.mxu0
    %514 = vmatprep.mubr.f32.mxu0 0.0
    %515 = vmatmul.mubr.f32.gmra.mxu0 %v391
    %v516 = vpop.f32.mrf.mxu0
    %v517 = vadd.f32 0.0, %v516
    %v518 = vpop.f32.mrf.mxu0
    %519 = vmatprep.mubr.f32.mxu0 0.0
    %520 = vmatmul.mubr.f32.gmra.mxu0 %v394
    %v521 = vpop.f32.mrf.mxu0
    %v522 = vadd.f32 0.0, %v521
    %v523 = vpop.f32.mrf.mxu0
    %524 = vmatprep.mubr.f32.mxu0 0.0
    %525 = vmatmul.mubr.f32.gmra.mxu0 %v397
    %v526 = vpop.f32.mrf.mxu0
    %v527 = vadd.f32 0.0, %v526
    %v528 = vpop.f32.mrf.mxu0
    %529 = vmatprep.mubr.f32.mxu0 0.0
    %530 = vmatmul.mubr.f32.gmra.mxu0 %v400
    %v531 = vpop.f32.mrf.mxu0
    %v532 = vadd.f32 0.0, %v531
    %v533 = vpop.f32.mrf.mxu0
    %534 = vdwg.mxu0
    %v535 = vsub.f32 %v207, %v472
    %v536 = vsub.f32 %v212, %v477
    %v537 = vsub.f32 %v217, %v482
    %v538 = vsub.f32 %v222, %v487
    %v539 = vsub.f32 %v227, %v492
    %v540 = vsub.f32 %v232, %v497
    %v541 = vsub.f32 %v237, %v502
    %v542 = vsub.f32 %v242, %v507
    %v543 = vsub.f32 %v247, %v512
    %v544 = vsub.f32 %v252, %v517
    %v545 = vsub.f32 %v257, %v522
    %v546 = vsub.f32 %v262, %v527
    %v547 = vsub.f32 %v267, %v532
    %v548 = vmul.f32 %v535, %v535
    %v549 = vmul.f32 %v536, %v536
    %v550 = vmul.f32 %v537, %v537
    %v551 = vmul.f32 %v538, %v538
    %v552 = vmul.f32 %v539, %v539
    %v553 = vmul.f32 %v540, %v540
    %v554 = vmul.f32 %v541, %v541
    %v555 = vmul.f32 %v542, %v542
    %v556 = vmul.f32 %v543, %v543
    %v557 = vmul.f32 %v544, %v544
    %v558 = vmul.f32 %v545, %v545
    %v559 = vmul.f32 %v546, %v546
    %v560 = vmul.f32 %v547, %v547
    %v562 = vsel %vm288, %v560, 0
    %564 = vmatprep.subr.mxu0 0.0
    %565 = vmatpush1.msra.mxu0 0.0
    %566 = vmatprep.subr.mxu0 0.0
    %567 = vmatpush1.msra.mxu0 0.0
    %568 = vmatprep.subr.mxu0 0.0
    %569 = vmatpush1.msra.mxu0 0.0
    %570 = vmatprep.subr.mxu0 0.0
    %571 = vmatpush1.msra.mxu0 %v562
    %572 = vmatprep.subr.mxu0 0.0
    %573 = vmatpush1.msra.mxu0 %v559
    %574 = vmatprep.subr.mxu0 0.0
    %575 = vmatpush1.msra.mxu0 %v558
    %576 = vmatprep.subr.mxu0 0.0
    %577 = vmatpush1.msra.mxu0 %v557
    %578 = vmatprep.subr.mxu0 0.0
    %579 = vmatpush1.msra.mxu0 %v556
    %580 = vmatprep.subr.mxu0 0.0
    %581 = vmatpush1.msra.mxu0 %v555
    %582 = vmatprep.subr.mxu0 0.0
    %583 = vmatpush1.msra.mxu0 %v554
    %584 = vmatprep.subr.mxu0 0.0
    %585 = vmatpush1.msra.mxu0 %v553
    %586 = vmatprep.subr.mxu0 0.0
    %587 = vmatpush1.msra.mxu0 %v552
    %588 = vmatprep.subr.mxu0 0.0
    %589 = vmatpush1.msra.mxu0 %v551
    %590 = vmatprep.subr.mxu0 0.0
    %591 = vmatpush1.msra.mxu0 %v550
    %592 = vmatprep.subr.mxu0 0.0
    %593 = vmatpush1.msra.mxu0 %v549
    %594 = vmatprep.subr.mxu0 0.0
    %595 = vmatpush1.msra.mxu0 %v548
    %596 = vmatprep.subr.mxu0 0.0
    %597 = vmatpush2.msra.mxu0 0.0
    %598 = vmatprep.subr.mxu0 0.0
    %599 = vmatpush2.msra.mxu0 0.0
    %600 = vmatprep.subr.mxu0 0.0
    %601 = vmatpush2.msra.mxu0 0.0
    %602 = vmatprep.subr.mxu0 0.0
    %603 = vmatpush2.msra.mxu0 0.0
    %604 = vmatprep.subr.mxu0 0.0
    %605 = vmatpush2.msra.mxu0 0.0
    %606 = vmatprep.subr.mxu0 0.0
    %607 = vmatpush2.msra.mxu0 0.0
    %608 = vmatprep.subr.mxu0 0.0
    %609 = vmatpush2.msra.mxu0 0.0
    %610 = vmatprep.subr.mxu0 0.0
    %611 = vmatpush2.msra.mxu0 0.0
    %612 = vmatprep.subr.mxu0 0.0
    %613 = vmatpush2.msra.mxu0 0.0
    %614 = vmatprep.subr.mxu0 0.0
    %615 = vmatpush2.msra.mxu0 0.0
    %616 = vmatprep.subr.mxu0 0.0
    %617 = vmatpush2.msra.mxu0 0.0
    %618 = vmatprep.subr.mxu0 0.0
    %619 = vmatpush2.msra.mxu0 0.0
    %620 = vmatprep.subr.mxu0 0.0
    %621 = vmatpush2.msra.mxu0 0.0
    %622 = vmatprep.subr.mxu0 0.0
    %623 = vmatpush2.msra.mxu0 0.0
    %624 = vmatprep.subr.mxu0 0.0
    %625 = vmatpush2.msra.mxu0 0.0
    %626 = vmatprep.subr.mxu0 0.0
    %627 = vmatpush2.msra.mxu0 0.0
    %628 = vmatprep.mubr.f32.mxu0 0.0
    %629 = vmatmul.mubr.f32.gmra.mxu0 %v286
    %v630 = vpop.f32.mrf.mxu0
    %v631 = vadd.f32 1e-05, %v630
    %v632 = vpop.f32.mrf.mxu0
    %633 = vdwg.mxu0
    %v634 = vrsqrt.pop %v631
    %v636 = vsel %vm288, %v634, 0
    %638 = vmatprep.subr.mxu0 0.0
    %639 = vmatpush1.msra.mxu0 0.0
    %640 = vmatprep.subr.mxu0 0.0
    %641 = vmatpush1.msra.mxu0 0.0
    %642 = vmatprep.subr.mxu0 0.0
    %643 = vmatpush1.msra.mxu0 0.0
    %644 = vmatprep.subr.mxu0 0.0
    %645 = vmatpush1.msra.mxu0 0.0
    %646 = vmatprep.subr.mxu0 0.0
    %647 = vmatpush1.msra.mxu0 0.0
    %648 = vmatprep.subr.mxu0 0.0
    %649 = vmatpush1.msra.mxu0 0.0
    %650 = vmatprep.subr.mxu0 0.0
    %651 = vmatpush1.msra.mxu0 0.0
    %652 = vmatprep.subr.mxu0 0.0
    %653 = vmatpush1.msra.mxu0 0.0
    %654 = vmatprep.subr.mxu0 0.0
    %655 = vmatpush1.msra.mxu0 0.0
    %656 = vmatprep.subr.mxu0 0.0
    %657 = vmatpush1.msra.mxu0 0.0
    %658 = vmatprep.subr.mxu0 0.0
    %659 = vmatpush1.msra.mxu0 0.0
    %660 = vmatprep.subr.mxu0 0.0
    %661 = vmatpush1.msra.mxu0 0.0
    %662 = vmatprep.subr.mxu0 0.0
    %663 = vmatpush1.msra.mxu0 0.0
    %664 = vmatprep.subr.mxu0 0.0
    %665 = vmatpush1.msra.mxu0 0.0
    %666 = vmatprep.subr.mxu0 0.0
    %667 = vmatpush1.msra.mxu0 0.0
    %668 = vmatprep.subr.mxu0 0.0
    %669 = vmatpush1.msra.mxu0 %v636
    %670 = vmatprep.subr.mxu0 0.0
    %671 = vmatpush2.msra.mxu0 0.0
    %672 = vmatprep.subr.mxu0 0.0
    %673 = vmatpush2.msra.mxu0 0.0
    %674 = vmatprep.subr.mxu0 0.0
    %675 = vmatpush2.msra.mxu0 0.0
    %676 = vmatprep.subr.mxu0 0.0
    %677 = vmatpush2.msra.mxu0 0.0
    %678 = vmatprep.subr.mxu0 0.0
    %679 = vmatpush2.msra.mxu0 0.0
    %680 = vmatprep.subr.mxu0 0.0
    %681 = vmatpush2.msra.mxu0 0.0
    %682 = vmatprep.subr.mxu0 0.0
    %683 = vmatpush2.msra.mxu0 0.0
    %684 = vmatprep.subr.mxu0 0.0
    %685 = vmatpush2.msra.mxu0 0.0
    %686 = vmatprep.subr.mxu0 0.0
    %687 = vmatpush2.msra.mxu0 0.0
    %688 = vmatprep.subr.mxu0 0.0
    %689 = vmatpush2.msra.mxu0 0.0
    %690 = vmatprep.subr.mxu0 0.0
    %691 = vmatpush2.msra.mxu0 0.0
    %692 = vmatprep.subr.mxu0 0.0
    %693 = vmatpush2.msra.mxu0 0.0
    %694 = vmatprep.subr.mxu0 0.0
    %695 = vmatpush2.msra.mxu0 0.0
    %696 = vmatprep.subr.mxu0 0.0
    %697 = vmatpush2.msra.mxu0 0.0
    %698 = vmatprep.subr.mxu0 0.0
    %699 = vmatpush2.msra.mxu0 0.0
    %700 = vmatprep.subr.mxu0 0.0
    %701 = vmatpush2.msra.mxu0 0.0
    %702 = vmatprep.mubr.f32.mxu0 0.0
    %703 = vmatmul.mubr.f32.gmra.mxu0 %v364
    %v704 = vpop.f32.mrf.mxu0
    %v705 = vadd.f32 0.0, %v704
    %v706 = vpop.f32.mrf.mxu0
    %707 = vmatprep.mubr.f32.mxu0 0.0
    %708 = vmatmul.mubr.f32.gmra.mxu0 %v367
    %v709 = vpop.f32.mrf.mxu0
    %v710 = vadd.f32 0.0, %v709
    %v711 = vpop.f32.mrf.mxu0
    %712 = vmatprep.mubr.f32.mxu0 0.0
    %713 = vmatmul.mubr.f32.gmra.mxu0 %v370
    %v714 = vpop.f32.mrf.mxu0
    %v715 = vadd.f32 0.0, %v714
    %v716 = vpop.f32.mrf.mxu0
    %717 = vmatprep.mubr.f32.mxu0 0.0
    %718 = vmatmul.mubr.f32.gmra.mxu0 %v373
    %v719 = vpop.f32.mrf.mxu0
    %v720 = vadd.f32 0.0, %v719
    %v721 = vpop.f32.mrf.mxu0
    %722 = vmatprep.mubr.f32.mxu0 0.0
    %723 = vmatmul.mubr.f32.gmra.mxu0 %v376
    %v724 = vpop.f32.mrf.mxu0
    %v725 = vadd.f32 0.0, %v724
    %v726 = vpop.f32.mrf.mxu0
    %727 = vmatprep.mubr.f32.mxu0 0.0
    %728 = vmatmul.mubr.f32.gmra.mxu0 %v379
    %v729 = vpop.f32.mrf.mxu0
    %v730 = vadd.f32 0.0, %v729
    %v731 = vpop.f32.mrf.mxu0
    %732 = vmatprep.mubr.f32.mxu0 0.0
    %733 = vmatmul.mubr.f32.gmra.mxu0 %v382
    %v734 = vpop.f32.mrf.mxu0
    %v735 = vadd.f32 0.0, %v734
    %v736 = vpop.f32.mrf.mxu0
    %737 = vmatprep.mubr.f32.mxu0 0.0
    %738 = vmatmul.mubr.f32.gmra.mxu0 %v385
    %v739 = vpop.f32.mrf.mxu0
    %v740 = vadd.f32 0.0, %v739
    %v741 = vpop.f32.mrf.mxu0
    %742 = vmatprep.mubr.f32.mxu0 0.0
    %743 = vmatmul.mubr.f32.gmra.mxu0 %v388
    %v744 = vpop.f32.mrf.mxu0
    %v745 = vadd.f32 0.0, %v744
    %v746 = vpop.f32.mrf.mxu0
    %747 = vmatprep.mubr.f32.mxu0 0.0
    %748 = vmatmul.mubr.f32.gmra.mxu0 %v391
    %v749 = vpop.f32.mrf.mxu0
    %v750 = vadd.f32 0.0, %v749
    %v751 = vpop.f32.mrf.mxu0
    %752 = vmatprep.mubr.f32.mxu0 0.0
    %753 = vmatmul.mubr.f32.gmra.mxu0 %v394
    %v754 = vpop.f32.mrf.mxu0
    %v755 = vadd.f32 0.0, %v754
    %v756 = vpop.f32.mrf.mxu0
    %757 = vmatprep.mubr.f32.mxu0 0.0
    %758 = vmatmul.mubr.f32.gmra.mxu0 %v397
    %v759 = vpop.f32.mrf.mxu0
    %v760 = vadd.f32 0.0, %v759
    %v761 = vpop.f32.mrf.mxu0
    %762 = vmatprep.mubr.f32.mxu0 0.0
    %763 = vmatmul.mubr.f32.gmra.mxu0 %v400
    %v764 = vpop.f32.mrf.mxu0
    %v765 = vadd.f32 0.0, %v764
    %v766 = vpop.f32.mrf.mxu0
    %767 = vdwg.mxu0
    %v768 = vmul.f32 %v535, %v705
    %v769 = vmul.f32 %v536, %v710
    %v770 = vmul.f32 %v537, %v715
    %v771 = vmul.f32 %v538, %v720
    %v772 = vmul.f32 %v539, %v725
    %v773 = vmul.f32 %v540, %v730
    %v774 = vmul.f32 %v541, %v735
    %v775 = vmul.f32 %v542, %v740
    %v776 = vmul.f32 %v543, %v745
    %v777 = vmul.f32 %v544, %v750
    %v778 = vmul.f32 %v545, %v755
    %v779 = vmul.f32 %v546, %v760
    %v780 = vmul.f32 %v547, %v765
    %v781 = vmax.f32 %v768, 0.0
    %v782 = vmax.f32 %v769, 0.0
    %v783 = vmax.f32 %v770, 0.0
    %v784 = vmax.f32 %v771, 0.0
    %v785 = vmax.f32 %v772, 0.0
    %v786 = vmax.f32 %v773, 0.0
    %v787 = vmax.f32 %v774, 0.0
    %v788 = vmax.f32 %v775, 0.0
    %v789 = vmax.f32 %v776, 0.0
    %v790 = vmax.f32 %v777, 0.0
    %v791 = vmax.f32 %v778, 0.0
    %v792 = vmax.f32 %v779, 0.0
    %v793 = vmax.f32 %v780, 0.0
    %vm794 = vcmask 130048
    %795 = vst.msk [vmem:[%s5] sm:$0xff] %vm794, %v781
    %796 = vst.msk [vmem:[%s5 + $0x8] sm:$0xff] %vm794, %v782
    %797 = vst.msk [vmem:[%s5 + $0x10] sm:$0xff] %vm794, %v783
    %798 = vst.msk [vmem:[%s5 + $0x18] sm:$0xff] %vm794, %v784
    %799 = vst.msk [vmem:[%s5 + $0x20] sm:$0xff] %vm794, %v785
    %800 = vst.msk [vmem:[%s5 + $0x28] sm:$0xff] %vm794, %v786
    %801 = vst.msk [vmem:[%s5 + $0x30] sm:$0xff] %vm794, %v787
    %802 = vst.msk [vmem:[%s5 + $0x38] sm:$0xff] %vm794, %v788
    %803 = vst.msk [vmem:[%s5 + $0x40] sm:$0xff] %vm794, %v789
    %804 = vst.msk [vmem:[%s5 + $0x48] sm:$0xff] %vm794, %v790
    %805 = vst.msk [vmem:[%s5 + $0x50] sm:$0xff] %vm794, %v791
    %806 = vst.msk [vmem:[%s5 + $0x58] sm:$0xff] %vm794, %v792
    %vm807 = vcmask 123904
    %808 = vst.msk [vmem:[%s5 + $0x60] sm:$0x3] %vm807, %v793
    // Predicated region
    $region38: #{generator_forward.16} parent=1 // pred_check
      _
    $region39: #{generator_forward.16} parent=1 // pred_check_branch
      %810 = sbr.rel (0) target = $region41
    $region40: #{generator_forward.16} parent=1 // pred_region
      _
    $region41: #{generator_forward.16} parent=1 // pred_fallthru
      _
    // Predicated region
    $region42: #{generator_forward.16} parent=1 // pred_check
      _
    $region43: #{generator_forward.16} parent=1 // pred_check_branch
      %812 = sbr.rel (0) target = $region45
    $region44: #{generator_forward.16} parent=1 // pred_region
      _
    $region45: #{generator_forward.16} parent=1 // pred_fallthru
      _
    %813 = vsyncpa [#allocation3], 1
    %814 = vsyncpa [#allocation5], 1
    %815 = vsyncpa [#allocation8], 1

// kernel: generator_forward.15
$region0: #{generator_forward.15}
  #allocation0 [shape = 'u32[]', space=smem, size = 0x4, offset = 0x4, fixed_abs, tag = 'smem constant byte address 0x4 - core index']
  #allocation1 [shape = 'u32[144,128]{1,0:T(1,128)}', space=vmem, size = 0x12000, scoped, tag = 'internal scratch']
  %s0 = inlined_call_operand.vmem [shape: f32[512,27], index: 0, kind: input, shape index: {}]
  %s1 = inlined_call_operand.vmem [shape: f32[27,8], index: 1, kind: input, shape index: {}]
  %s2 = inlined_call_operand.hbm [shape: f32[1,8], index: 2, kind: input, shape index: {}]
  %s3 = inlined_call_operand.hbm [shape: f32[512,2], index: 3, kind: input, shape index: {}]
  %s4 = inlined_call_operand.hbm [shape: f32[2,512], index: 4, kind: input, shape index: {}]
  %s5 = inlined_call_operand.vmem [shape: f32[512,8], index: 5, kind: output, shape index: {}]
  %s6 = sld [smem:[#allocation0]]
  $region42: #{generator_forward.15} parent=0
    _
  %s8 = ssub.s32 1, %s6
  %s9 = scalar_select 0, %s8, %s6
  $region1: #{generator_forward.15} parent=0
    #allocation2 [shape = 'u8[512]{0}', space=vmem, size = 0x400, scoped, tag = 'input window, operand 2, single buffered']
    #allocation3 [shape = 's32[1]{0}', space=sflag, size = 0x4, scoped, tag = 'scoped memory for generator_forward.15']
    #allocation4 [shape = 'u8[262144]{0}', space=vmem, size = 0x40000, scoped, tag = 'input window, operand 3, single buffered']
    #allocation5 [shape = 's32[1]{0}', space=sflag, size = 0x4, scoped, tag = 'scoped memory for generator_forward.15']
    #allocation6 [shape = 'u8[4096]{0}', space=vmem, size = 0x1000, scoped, tag = 'input window, operand 4, single buffered']
    %10 = vsyncpa [#allocation3], 0
    %11 = vsyncpa [#allocation5], 0
    // Predicated region
    $region2: #{generator_forward.15} parent=1 // pred_check
      _
    $region3: #{generator_forward.15} parent=1 // pred_check_branch
      %13 = sbr.rel (0) target = $region5
    $region4: #{generator_forward.15} parent=1 // pred_region
      _
    $region5: #{generator_forward.15} parent=1 // pred_fallthru
      _
    // Predicated region
    $region6: #{generator_forward.15} parent=1 // pred_check
      _
    $region7: #{generator_forward.15} parent=1 // pred_check_branch
      %15 = sbr.rel (0) target = $region9
    $region8: #{generator_forward.15} parent=1 // pred_region
      _
    $region9: #{generator_forward.15} parent=1 // pred_fallthru
      _
    // Predicated region
    $region10: #{generator_forward.15} parent=1 // pred_check
      _
    $region11: #{generator_forward.15} parent=1 // pred_check_branch
      %17 = sbr.rel (0) target = $region13
    $region12: #{generator_forward.15} parent=1 // pred_region
      %s19 = ssub.s32 16, 16
      %20 = vsyncadd [#allocation3], %s19
      %s22 = sshll.u32 [#allocation2], 4
      %s23 = int_to_ptr.vmem [resolvable:$true] %s22
      %25 = dma.hbm_to_vmem [thread:$0]  %s2, 16, %s23, [#allocation3]
    $region13: #{generator_forward.15} parent=1 // pred_fallthru
      _
    // Predicated region
    $region14: #{generator_forward.15} parent=1 // pred_check
      _
    $region15: #{generator_forward.15} parent=1 // pred_check_branch
      %27 = sbr.rel (0) target = $region17
    $region16: #{generator_forward.15} parent=1 // pred_region
      %s29 = ssub.s32 8192, 8192
      %30 = vsyncadd [#allocation5], %s29
      %s31 = sshll.u32 [#allocation4], 4
      %s32 = int_to_ptr.vmem [resolvable:$true] %s31
      %37 = dma.hbm_to_vmem [thread:$0]  %s3, 8192, %s32, [#allocation5], 128, 128, 8
    $region17: #{generator_forward.15} parent=1 // pred_fallthru
      _
    // Predicated region
    $region18: #{generator_forward.15} parent=1 // pred_check
      _
    $region19: #{generator_forward.15} parent=1 // pred_check_branch
      %39 = sbr.rel (0) target = $region21
    $region20: #{generator_forward.15} parent=1 // pred_region
      %s41 = ssub.s32 128, 128
      %42 = vsyncadd [#allocation5], %s41
      %s44 = sshll.u32 [#allocation6], 4
      %s45 = int_to_ptr.vmem [resolvable:$true] %s44
      %47 = dma.hbm_to_vmem [thread:$0]  %s4, 128, %s45, [#allocation5]
    $region21: #{generator_forward.15} parent=1 // pred_fallthru
      _
    // Predicated region
    $region22: #{generator_forward.15} parent=1 // pred_check
      _
    $region23: #{generator_forward.15} parent=1 // pred_check_branch
      %49 = sbr.rel (0) target = $region25
    $region24: #{generator_forward.15} parent=1 // pred_region
      %50 = dma.done [#allocation3], 16
    $region25: #{generator_forward.15} parent=1 // pred_fallthru
      _
    // Predicated region
    $region26: #{generator_forward.15} parent=1 // pred_check
      _
    $region27: #{generator_forward.15} parent=1 // pred_check_branch
      %52 = sbr.rel (0) target = $region29
    $region28: #{generator_forward.15} parent=1 // pred_region
      %53 = dma.done [#allocation5], 8192
    $region29: #{generator_forward.15} parent=1 // pred_fallthru
      _
    // Predicated region
    $region30: #{generator_forward.15} parent=1 // pred_check
      _
    $region31: #{generator_forward.15} parent=1 // pred_check_branch
      %55 = sbr.rel (0) target = $region33
    $region32: #{generator_forward.15} parent=1 // pred_region
      %56 = dma.done [#allocation5], 128
    $region33: #{generator_forward.15} parent=1 // pred_fallthru
      _
    %v57 = vld [vmem:[%s0] sm:$0xff]
    %v58 = vld [vmem:[%s0 + $0x8] sm:$0xff]
    %v59 = vld [vmem:[%s0 + $0x10] sm:$0xff]
    %v60 = vld [vmem:[%s0 + $0x18] sm:$0xff]
    %v61 = vld [vmem:[%s0 + $0x20] sm:$0xff]
    %v62 = vld [vmem:[%s0 + $0x28] sm:$0xff]
    %v63 = vld [vmem:[%s0 + $0x30] sm:$0xff]
    %v64 = vld [vmem:[%s0 + $0x38] sm:$0xff]
    %v65 = vld [vmem:[%s0 + $0x40] sm:$0xff]
    %v66 = vld [vmem:[%s0 + $0x48] sm:$0xff]
    %v67 = vld [vmem:[%s0 + $0x50] sm:$0xff]
    %v68 = vld [vmem:[%s0 + $0x58] sm:$0xff]
    %v69 = vld [vmem:[%s0 + $0x60] sm:$0xff]
    %v70 = vld [vmem:[%s0 + $0x68] sm:$0xff]
    %v71 = vld [vmem:[%s0 + $0x70] sm:$0xff]
    %v72 = vld [vmem:[%s0 + $0x78] sm:$0xff]
    %v73 = vld [vmem:[%s0 + $0x80] sm:$0xff]
    %v74 = vld [vmem:[%s0 + $0x88] sm:$0xff]
    %v75 = vld [vmem:[%s0 + $0x90] sm:$0xff]
    %v76 = vld [vmem:[%s0 + $0x98] sm:$0xff]
    %v77 = vld [vmem:[%s0 + $0xa0] sm:$0xff]
    %v78 = vld [vmem:[%s0 + $0xa8] sm:$0xff]
    %v79 = vld [vmem:[%s0 + $0xb0] sm:$0xff]
    %v80 = vld [vmem:[%s0 + $0xb8] sm:$0xff]
    %v81 = vld [vmem:[%s0 + $0xc0] sm:$0xff]
    %v82 = vld [vmem:[%s0 + $0xc8] sm:$0xff]
    %v83 = vld [vmem:[%s0 + $0xd0] sm:$0xff]
    %v84 = vld [vmem:[%s0 + $0xd8] sm:$0xff]
    %v85 = vld [vmem:[%s0 + $0xe0] sm:$0xff]
    %v86 = vld [vmem:[%s0 + $0xe8] sm:$0xff]
    %v87 = vld [vmem:[%s0 + $0xf0] sm:$0xff]
    %v88 = vld [vmem:[%s0 + $0xf8] sm:$0xff]
    %v89 = vld [vmem:[%s0 + $0x100] sm:$0xff]
    %v90 = vld [vmem:[%s0 + $0x108] sm:$0xff]
    %v91 = vld [vmem:[%s0 + $0x110] sm:$0xff]
    %v92 = vld [vmem:[%s0 + $0x118] sm:$0xff]
    %v93 = vld [vmem:[%s0 + $0x120] sm:$0xff]
    %v94 = vld [vmem:[%s0 + $0x128] sm:$0xff]
    %v95 = vld [vmem:[%s0 + $0x130] sm:$0xff]
    %v96 = vld [vmem:[%s0 + $0x138] sm:$0xff]
    %v97 = vld [vmem:[%s0 + $0x140] sm:$0xff]
    %v98 = vld [vmem:[%s0 + $0x148] sm:$0xff]
    %v99 = vld [vmem:[%s0 + $0x150] sm:$0xff]
    %v100 = vld [vmem:[%s0 + $0x158] sm:$0xff]
    %v101 = vld [vmem:[%s0 + $0x160] sm:$0xff]
    %v102 = vld [vmem:[%s0 + $0x168] sm:$0xff]
    %v103 = vld [vmem:[%s0 + $0x170] sm:$0xff]
    %v104 = vld [vmem:[%s0 + $0x178] sm:$0xff]
    %v105 = vld [vmem:[%s0 + $0x180] sm:$0xff]
    %v106 = vld [vmem:[%s0 + $0x188] sm:$0xff]
    %v107 = vld [vmem:[%s0 + $0x190] sm:$0xff]
    %v108 = vld [vmem:[%s0 + $0x198] sm:$0xff]
    %v109 = vld [vmem:[%s0 + $0x1a0] sm:$0xff]
    %v110 = vld [vmem:[%s0 + $0x1a8] sm:$0xff]
    %v111 = vld [vmem:[%s0 + $0x1b0] sm:$0xff]
    %v112 = vld [vmem:[%s0 + $0x1b8] sm:$0xff]
    %v113 = vld [vmem:[%s0 + $0x1c0] sm:$0xff]
    %v114 = vld [vmem:[%s0 + $0x1c8] sm:$0xff]
    %v115 = vld [vmem:[%s0 + $0x1d0] sm:$0xff]
    %v116 = vld [vmem:[%s0 + $0x1d8] sm:$0xff]
    %v117 = vld [vmem:[%s0 + $0x1e0] sm:$0xff]
    %v118 = vld [vmem:[%s0 + $0x1e8] sm:$0xff]
    %v119 = vld [vmem:[%s0 + $0x1f0] sm:$0xff]
    %v120 = vld [vmem:[%s0 + $0x1f8] sm:$0xff]
    %v121 = vld [vmem:[%s1] sm:$0xff]
    %v122 = vld [vmem:[%s1 + $0x8] sm:$0xff]
    %v123 = vld [vmem:[%s1 + $0x10] sm:$0xff]
    %v124 = vld [vmem:[%s1 + $0x18] sm:$0x7]
    %v125 = vld [vmem:[#allocation2] sm:$0x1]
    %v127 = vlaneseq
    %v128 = vshrl.u32 %v127, 7
    %v129 = vsub.s32 0, %v128
    %v130 = vrot.slane %v125, %v129
    %vm132 = vcmask 220160
    %v134 = vsel %vm132, %v57, 0
    %v137 = vsel %vm132, %v58, 0
    %v140 = vsel %vm132, %v59, 0
    %v143 = vsel %vm132, %v60, 0
    %v146 = vsel %vm132, %v61, 0
    %v149 = vsel %vm132, %v62, 0
    %v152 = vsel %vm132, %v63, 0
    %v155 = vsel %vm132, %v64, 0
    %v158 = vsel %vm132, %v65, 0
    %v161 = vsel %vm132, %v66, 0
    %v164 = vsel %vm132, %v67, 0
    %v167 = vsel %vm132, %v68, 0
    %v170 = vsel %vm132, %v69, 0
    %v173 = vsel %vm132, %v70, 0
    %v176 = vsel %vm132, %v71, 0
    %v179 = vsel %vm132, %v72, 0
    %v182 = vsel %vm132, %v73, 0
    %v185 = vsel %vm132, %v74, 0
    %v188 = vsel %vm132, %v75, 0
    %v191 = vsel %vm132, %v76, 0
    %v194 = vsel %vm132, %v77, 0
    %v197 = vsel %vm132, %v78, 0
    %v200 = vsel %vm132, %v79, 0
    %v203 = vsel %vm132, %v80, 0
    %v206 = vsel %vm132, %v81, 0
    %v209 = vsel %vm132, %v82, 0
    %v212 = vsel %vm132, %v83, 0
    %v215 = vsel %vm132, %v84, 0
    %v218 = vsel %vm132, %v85, 0
    %v221 = vsel %vm132, %v86, 0
    %v224 = vsel %vm132, %v87, 0
    %v227 = vsel %vm132, %v88, 0
    %v230 = vsel %vm132, %v89, 0
    %v233 = vsel %vm132, %v90, 0
    %v236 = vsel %vm132, %v91, 0
    %v239 = vsel %vm132, %v92, 0
    %v242 = vsel %vm132, %v93, 0
    %v245 = vsel %vm132, %v94, 0
    %v248 = vsel %vm132, %v95, 0
    %v251 = vsel %vm132, %v96, 0
    %v254 = vsel %vm132, %v97, 0
    %v257 = vsel %vm132, %v98, 0
    %v260 = vsel %vm132, %v99, 0
    %v263 = vsel %vm132, %v100, 0
    %v266 = vsel %vm132, %v101, 0
    %v269 = vsel %vm132, %v102, 0
    %v272 = vsel %vm132, %v103, 0
    %v275 = vsel %vm132, %v104, 0
    %v278 = vsel %vm132, %v105, 0
    %v281 = vsel %vm132, %v106, 0
    %v284 = vsel %vm132, %v107, 0
    %v287 = vsel %vm132, %v108, 0
    %v290 = vsel %vm132, %v109, 0
    %v293 = vsel %vm132, %v110, 0
    %v296 = vsel %vm132, %v111, 0
    %v299 = vsel %vm132, %v112, 0
    %v302 = vsel %vm132, %v113, 0
    %v305 = vsel %vm132, %v114, 0
    %v308 = vsel %vm132, %v115, 0
    %v311 = vsel %vm132, %v116, 0
    %v314 = vsel %vm132, %v117, 0
    %v317 = vsel %vm132, %v118, 0
    %v320 = vsel %vm132, %v119, 0
    %v323 = vsel %vm132, %v120, 0
    %vm325 = vcmask 1042432
    %v327 = vsel %vm325, %v124, 0
    %329 = vmatprep.subr.mxu0 0.0
    %330 = vmatpush1.msra.mxu0 0.0
    %331 = vmatprep.subr.mxu0 0.0
    %332 = vmatpush1.msra.mxu0 0.0
    %333 = vmatprep.subr.mxu0 0.0
    %334 = vmatpush1.msra.mxu0 0.0
    %335 = vmatprep.subr.mxu0 0.0
    %336 = vmatpush1.msra.mxu0 0.0
    %337 = vmatprep.subr.mxu0 0.0
    %338 = vmatpush1.msra.mxu0 0.0
    %339 = vmatprep.subr.mxu0 0.0
    %340 = vmatpush1.msra.mxu0 0.0
    %341 = vmatprep.subr.mxu0 0.0
    %342 = vmatpush1.msra.mxu0 0.0
    %343 = vmatprep.subr.mxu0 0.0
    %344 = vmatpush1.msra.mxu0 0.0
    %345 = vmatprep.subr.mxu0 0.0
    %346 = vmatpush1.msra.mxu0 0.0
    %347 = vmatprep.subr.mxu0 0.0
    %348 = vmatpush1.msra.mxu0 0.0
    %349 = vmatprep.subr.mxu0 0.0
    %350 = vmatpush1.msra.mxu0 0.0
    %351 = vmatprep.subr.mxu0 0.0
    %352 = vmatpush1.msra.mxu0 0.0
    %353 = vmatprep.subr.mxu0 0.0
    %354 = vmatpush1.msra.mxu0 %v327
    %355 = vmatprep.subr.mxu0 0.0
    %356 = vmatpush1.msra.mxu0 %v123
    %357 = vmatprep.subr.mxu0 0.0
    %358 = vmatpush1.msra.mxu0 %v122
    %359 = vmatprep.subr.mxu0 0.0
    %360 = vmatpush1.msra.mxu0 %v121
    %361 = vmatprep.subr.mxu0 0.0
    %362 = vmatpush2.msra.mxu0 0.0
    %363 = vmatprep.subr.mxu0 0.0
    %364 = vmatpush2.msra.mxu0 0.0
    %365 = vmatprep.subr.mxu0 0.0
    %366 = vmatpush2.msra.mxu0 0.0
    %367 = vmatprep.subr.mxu0 0.0
    %368 = vmatpush2.msra.mxu0 0.0
    %369 = vmatprep.subr.mxu0 0.0
    %370 = vmatpush2.msra.mxu0 0.0
    %371 = vmatprep.subr.mxu0 0.0
    %372 = vmatpush2.msra.mxu0 0.0
    %373 = vmatprep.subr.mxu0 0.0
    %374 = vmatpush2.msra.mxu0 0.0
    %375 = vmatprep.subr.mxu0 0.0
    %376 = vmatpush2.msra.mxu0 0.0
    %377 = vmatprep.subr.mxu0 0.0
    %378 = vmatpush2.msra.mxu0 0.0
    %379 = vmatprep.subr.mxu0 0.0
    %380 = vmatpush2.msra.mxu0 0.0
    %381 = vmatprep.subr.mxu0 0.0
    %382 = vmatpush2.msra.mxu0 0.0
    %383 = vmatprep.subr.mxu0 0.0
    %384 = vmatpush2.msra.mxu0 0.0
    %385 = vmatprep.subr.mxu0 0.0
    %386 = vmatpush2.msra.mxu0 0.0
    %387 = vmatprep.subr.mxu0 0.0
    %388 = vmatpush2.msra.mxu0 0.0
    %389 = vmatprep.subr.mxu0 0.0
    %390 = vmatpush2.msra.mxu0 0.0
    %391 = vmatprep.subr.mxu0 0.0
    %392 = vmatpush2.msra.mxu0 0.0
    %393 = vmatprep.mubr.f32.mxu0 0.0
    %394 = vmatmul.mubr.f32.gmra.mxu0 %v134
    %v395 = vpop.f32.mrf.mxu0
    %v396 = vadd.f32 %v130, %v395
    %v397 = vpop.f32.mrf.mxu0
    %398 = vmatprep.mubr.f32.mxu0 0.0
    %399 = vmatmul.mubr.f32.gmra.mxu0 %v137
    %v400 = vpop.f32.mrf.mxu0
    %v401 = vadd.f32 %v130, %v400
    %v402 = vpop.f32.mrf.mxu0
    %403 = vmatprep.mubr.f32.mxu0 0.0
    %404 = vmatmul.mubr.f32.gmra.mxu0 %v140
    %v405 = vpop.f32.mrf.mxu0
    %v406 = vadd.f32 %v130, %v405
    %v407 = vpop.f32.mrf.mxu0
    %408 = vmatprep.mubr.f32.mxu0 0.0
    %409 = vmatmul.mubr.f32.gmra.mxu0 %v143
    %v410 = vpop.f32.mrf.mxu0
    %v411 = vadd.f32 %v130, %v410
    %v412 = vpop.f32.mrf.mxu0
    %413 = vmatprep.mubr.f32.mxu0 0.0
    %414 = vmatmul.mubr.f32.gmra.mxu0 %v146
    %v415 = vpop.f32.mrf.mxu0
    %v416 = vadd.f32 %v130, %v415
    %v417 = vpop.f32.mrf.mxu0
    %418 = vmatprep.mubr.f32.mxu0 0.0
    %419 = vmatmul.mubr.f32.gmra.mxu0 %v149
    %v420 = vpop.f32.mrf.mxu0
    %v421 = vadd.f32 %v130, %v420
    %v422 = vpop.f32.mrf.mxu0
    %423 = vmatprep.mubr.f32.mxu0 0.0
    %424 = vmatmul.mubr.f32.gmra.mxu0 %v152
    %v425 = vpop.f32.mrf.mxu0
    %v426 = vadd.f32 %v130, %v425
    %v427 = vpop.f32.mrf.mxu0
    %428 = vmatprep.mubr.f32.mxu0 0.0
    %429 = vmatmul.mubr.f32.gmra.mxu0 %v155
    %v430 = vpop.f32.mrf.mxu0
    %v431 = vadd.f32 %v130, %v430
    %v432 = vpop.f32.mrf.mxu0
    %433 = vmatprep.mubr.f32.mxu0 0.0
    %434 = vmatmul.mubr.f32.gmra.mxu0 %v158
    %v435 = vpop.f32.mrf.mxu0
    %v436 = vadd.f32 %v130, %v435
    %v437 = vpop.f32.mrf.mxu0
    %438 = vmatprep.mubr.f32.mxu0 0.0
    %439 = vmatmul.mubr.f32.gmra.mxu0 %v161
    %v440 = vpop.f32.mrf.mxu0
    %v441 = vadd.f32 %v130, %v440
    %v442 = vpop.f32.mrf.mxu0
    %443 = vmatprep.mubr.f32.mxu0 0.0
    %444 = vmatmul.mubr.f32.gmra.mxu0 %v164
    %v445 = vpop.f32.mrf.mxu0
    %v446 = vadd.f32 %v130, %v445
    %v447 = vpop.f32.mrf.mxu0
    %448 = vmatprep.mubr.f32.mxu0 0.0
    %449 = vmatmul.mubr.f32.gmra.mxu0 %v167
    %v450 = vpop.f32.mrf.mxu0
    %v451 = vadd.f32 %v130, %v450
    %v452 = vpop.f32.mrf.mxu0
    %453 = vmatprep.mubr.f32.mxu0 0.0
    %454 = vmatmul.mubr.f32.gmra.mxu0 %v170
    %v455 = vpop.f32.mrf.mxu0
    %v456 = vadd.f32 %v130, %v455
    %v457 = vpop.f32.mrf.mxu0
    %458 = vmatprep.mubr.f32.mxu0 0.0
    %459 = vmatmul.mubr.f32.gmra.mxu0 %v173
    %v460 = vpop.f32.mrf.mxu0
    %v461 = vadd.f32 %v130, %v460
    %v462 = vpop.f32.mrf.mxu0
    %463 = vmatprep.mubr.f32.mxu0 0.0
    %464 = vmatmul.mubr.f32.gmra.mxu0 %v176
    %v465 = vpop.f32.mrf.mxu0
    %v466 = vadd.f32 %v130, %v465
    %v467 = vpop.f32.mrf.mxu0
    %468 = vmatprep.mubr.f32.mxu0 0.0
    %469 = vmatmul.mubr.f32.gmra.mxu0 %v179
    %v470 = vpop.f32.mrf.mxu0
    %v471 = vadd.f32 %v130, %v470
    %v472 = vpop.f32.mrf.mxu0
    %473 = vmatprep.mubr.f32.mxu0 0.0
    %474 = vmatmul.mubr.f32.gmra.mxu0 %v182
    %v475 = vpop.f32.mrf.mxu0
    %v476 = vadd.f32 %v130, %v475
    %v477 = vpop.f32.mrf.mxu0
    %478 = vmatprep.mubr.f32.mxu0 0.0
    %479 = vmatmul.mubr.f32.gmra.mxu0 %v185
    %v480 = vpop.f32.mrf.mxu0
    %v481 = vadd.f32 %v130, %v480
    %v482 = vpop.f32.mrf.mxu0
    %483 = vmatprep.mubr.f32.mxu0 0.0
    %484 = vmatmul.mubr.f32.gmra.mxu0 %v188
    %v485 = vpop.f32.mrf.mxu0
    %v486 = vadd.f32 %v130, %v485
    %v487 = vpop.f32.mrf.mxu0
    %488 = vmatprep.mubr.f32.mxu0 0.0
    %489 = vmatmul.mubr.f32.gmra.mxu0 %v191
    %v490 = vpop.f32.mrf.mxu0
    %v491 = vadd.f32 %v130, %v490
    %v492 = vpop.f32.mrf.mxu0
    %493 = vmatprep.mubr.f32.mxu0 0.0
    %494 = vmatmul.mubr.f32.gmra.mxu0 %v194
    %v495 = vpop.f32.mrf.mxu0
    %v496 = vadd.f32 %v130, %v495
    %v497 = vpop.f32.mrf.mxu0
    %498 = vmatprep.mubr.f32.mxu0 0.0
    %499 = vmatmul.mubr.f32.gmra.mxu0 %v197
    %v500 = vpop.f32.mrf.mxu0
    %v501 = vadd.f32 %v130, %v500
    %v502 = vpop.f32.mrf.mxu0
    %503 = vmatprep.mubr.f32.mxu0 0.0
    %504 = vmatmul.mubr.f32.gmra.mxu0 %v200
    %v505 = vpop.f32.mrf.mxu0
    %v506 = vadd.f32 %v130, %v505
    %v507 = vpop.f32.mrf.mxu0
    %508 = vmatprep.mubr.f32.mxu0 0.0
    %509 = vmatmul.mubr.f32.gmra.mxu0 %v203
    %v510 = vpop.f32.mrf.mxu0
    %v511 = vadd.f32 %v130, %v510
    %v512 = vpop.f32.mrf.mxu0
    %513 = vmatprep.mubr.f32.mxu0 0.0
    %514 = vmatmul.mubr.f32.gmra.mxu0 %v206
    %v515 = vpop.f32.mrf.mxu0
    %v516 = vadd.f32 %v130, %v515
    %v517 = vpop.f32.mrf.mxu0
    %518 = vmatprep.mubr.f32.mxu0 0.0
    %519 = vmatmul.mubr.f32.gmra.mxu0 %v209
    %v520 = vpop.f32.mrf.mxu0
    %v521 = vadd.f32 %v130, %v520
    %v522 = vpop.f32.mrf.mxu0
    %523 = vmatprep.mubr.f32.mxu0 0.0
    %524 = vmatmul.mubr.f32.gmra.mxu0 %v212
    %v525 = vpop.f32.mrf.mxu0
    %v526 = vadd.f32 %v130, %v525
    %v527 = vpop.f32.mrf.mxu0
    %528 = vmatprep.mubr.f32.mxu0 0.0
    %529 = vmatmul.mubr.f32.gmra.mxu0 %v215
    %v530 = vpop.f32.mrf.mxu0
    %v531 = vadd.f32 %v130, %v530
    %v532 = vpop.f32.mrf.mxu0
    %533 = vmatprep.mubr.f32.mxu0 0.0
    %534 = vmatmul.mubr.f32.gmra.mxu0 %v218
    %v535 = vpop.f32.mrf.mxu0
    %v536 = vadd.f32 %v130, %v535
    %v537 = vpop.f32.mrf.mxu0
    %538 = vmatprep.mubr.f32.mxu0 0.0
    %539 = vmatmul.mubr.f32.gmra.mxu0 %v221
    %v540 = vpop.f32.mrf.mxu0
    %v541 = vadd.f32 %v130, %v540
    %v542 = vpop.f32.mrf.mxu0
    %543 = vmatprep.mubr.f32.mxu0 0.0
    %544 = vmatmul.mubr.f32.gmra.mxu0 %v224
    %v545 = vpop.f32.mrf.mxu0
    %v546 = vadd.f32 %v130, %v545
    %v547 = vpop.f32.mrf.mxu0
    %548 = vmatprep.mubr.f32.mxu0 0.0
    %549 = vmatmul.mubr.f32.gmra.mxu0 %v227
    %v550 = vpop.f32.mrf.mxu0
    %v551 = vadd.f32 %v130, %v550
    %v552 = vpop.f32.mrf.mxu0
    %553 = vmatprep.mubr.f32.mxu0 0.0
    %554 = vmatmul.mubr.f32.gmra.mxu0 %v230
    %v555 = vpop.f32.mrf.mxu0
    %v556 = vadd.f32 %v130, %v555
    %v557 = vpop.f32.mrf.mxu0
    %558 = vmatprep.mubr.f32.mxu0 0.0
    %559 = vmatmul.mubr.f32.gmra.mxu0 %v233
    %v560 = vpop.f32.mrf.mxu0
    %v561 = vadd.f32 %v130, %v560
    %v562 = vpop.f32.mrf.mxu0
    %563 = vmatprep.mubr.f32.mxu0 0.0
    %564 = vmatmul.mubr.f32.gmra.mxu0 %v236
    %v565 = vpop.f32.mrf.mxu0
    %v566 = vadd.f32 %v130, %v565
    %v567 = vpop.f32.mrf.mxu0
    %568 = vmatprep.mubr.f32.mxu0 0.0
    %569 = vmatmul.mubr.f32.gmra.mxu0 %v239
    %v570 = vpop.f32.mrf.mxu0
    %v571 = vadd.f32 %v130, %v570
    %v572 = vpop.f32.mrf.mxu0
    %573 = vmatprep.mubr.f32.mxu0 0.0
    %574 = vmatmul.mubr.f32.gmra.mxu0 %v242
    %v575 = vpop.f32.mrf.mxu0
    %v576 = vadd.f32 %v130, %v575
    %v577 = vpop.f32.mrf.mxu0
    %578 = vmatprep.mubr.f32.mxu0 0.0
    %579 = vmatmul.mubr.f32.gmra.mxu0 %v245
    %v580 = vpop.f32.mrf.mxu0
    %v581 = vadd.f32 %v130, %v580
    %v582 = vpop.f32.mrf.mxu0
    %583 = vmatprep.mubr.f32.mxu0 0.0
    %584 = vmatmul.mubr.f32.gmra.mxu0 %v248
    %v585 = vpop.f32.mrf.mxu0
    %v586 = vadd.f32 %v130, %v585
    %v587 = vpop.f32.mrf.mxu0
    %588 = vmatprep.mubr.f32.mxu0 0.0
    %589 = vmatmul.mubr.f32.gmra.mxu0 %v251
    %v590 = vpop.f32.mrf.mxu0
    %v591 = vadd.f32 %v130, %v590
    %v592 = vpop.f32.mrf.mxu0
    %593 = vmatprep.mubr.f32.mxu0 0.0
    %594 = vmatmul.mubr.f32.gmra.mxu0 %v254
    %v595 = vpop.f32.mrf.mxu0
    %v596 = vadd.f32 %v130, %v595
    %v597 = vpop.f32.mrf.mxu0
    %598 = vmatprep.mubr.f32.mxu0 0.0
    %599 = vmatmul.mubr.f32.gmra.mxu0 %v257
    %v600 = vpop.f32.mrf.mxu0
    %v601 = vadd.f32 %v130, %v600
    %v602 = vpop.f32.mrf.mxu0
    %603 = vmatprep.mubr.f32.mxu0 0.0
    %604 = vmatmul.mubr.f32.gmra.mxu0 %v260
    %v605 = vpop.f32.mrf.mxu0
    %v606 = vadd.f32 %v130, %v605
    %v607 = vpop.f32.mrf.mxu0
    %608 = vmatprep.mubr.f32.mxu0 0.0
    %609 = vmatmul.mubr.f32.gmra.mxu0 %v263
    %v610 = vpop.f32.mrf.mxu0
    %v611 = vadd.f32 %v130, %v610
    %v612 = vpop.f32.mrf.mxu0
    %613 = vmatprep.mubr.f32.mxu0 0.0
    %614 = vmatmul.mubr.f32.gmra.mxu0 %v266
    %v615 = vpop.f32.mrf.mxu0
    %v616 = vadd.f32 %v130, %v615
    %v617 = vpop.f32.mrf.mxu0
    %618 = vmatprep.mubr.f32.mxu0 0.0
    %619 = vmatmul.mubr.f32.gmra.mxu0 %v269
    %v620 = vpop.f32.mrf.mxu0
    %v621 = vadd.f32 %v130, %v620
    %v622 = vpop.f32.mrf.mxu0
    %623 = vmatprep.mubr.f32.mxu0 0.0
    %624 = vmatmul.mubr.f32.gmra.mxu0 %v272
    %v625 = vpop.f32.mrf.mxu0
    %v626 = vadd.f32 %v130, %v625
    %v627 = vpop.f32.mrf.mxu0
    %628 = vmatprep.mubr.f32.mxu0 0.0
    %629 = vmatmul.mubr.f32.gmra.mxu0 %v275
    %v630 = vpop.f32.mrf.mxu0
    %v631 = vadd.f32 %v130, %v630
    %v632 = vpop.f32.mrf.mxu0
    %633 = vmatprep.mubr.f32.mxu0 0.0
    %634 = vmatmul.mubr.f32.gmra.mxu0 %v278
    %v635 = vpop.f32.mrf.mxu0
    %v636 = vadd.f32 %v130, %v635
    %v637 = vpop.f32.mrf.mxu0
    %638 = vmatprep.mubr.f32.mxu0 0.0
    %639 = vmatmul.mubr.f32.gmra.mxu0 %v281
    %v640 = vpop.f32.mrf.mxu0
    %v641 = vadd.f32 %v130, %v640
    %v642 = vpop.f32.mrf.mxu0
    %643 = vmatprep.mubr.f32.mxu0 0.0
    %644 = vmatmul.mubr.f32.gmra.mxu0 %v284
    %v645 = vpop.f32.mrf.mxu0
    %v646 = vadd.f32 %v130, %v645
    %v647 = vpop.f32.mrf.mxu0
    %648 = vmatprep.mubr.f32.mxu0 0.0
    %649 = vmatmul.mubr.f32.gmra.mxu0 %v287
    %v650 = vpop.f32.mrf.mxu0
    %v651 = vadd.f32 %v130, %v650
    %v652 = vpop.f32.mrf.mxu0
    %653 = vmatprep.mubr.f32.mxu0 0.0
    %654 = vmatmul.mubr.f32.gmra.mxu0 %v290
    %v655 = vpop.f32.mrf.mxu0
    %v656 = vadd.f32 %v130, %v655
    %v657 = vpop.f32.mrf.mxu0
    %658 = vmatprep.mubr.f32.mxu0 0.0
    %659 = vmatmul.mubr.f32.gmra.mxu0 %v293
    %v660 = vpop.f32.mrf.mxu0
    %v661 = vadd.f32 %v130, %v660
    %v662 = vpop.f32.mrf.mxu0
    %663 = vmatprep.mubr.f32.mxu0 0.0
    %664 = vmatmul.mubr.f32.gmra.mxu0 %v296
    %v665 = vpop.f32.mrf.mxu0
    %v666 = vadd.f32 %v130, %v665
    %v667 = vpop.f32.mrf.mxu0
    %668 = vmatprep.mubr.f32.mxu0 0.0
    %669 = vmatmul.mubr.f32.gmra.mxu0 %v299
    %v670 = vpop.f32.mrf.mxu0
    %v671 = vadd.f32 %v130, %v670
    %v672 = vpop.f32.mrf.mxu0
    %673 = vmatprep.mubr.f32.mxu0 0.0
    %674 = vmatmul.mubr.f32.gmra.mxu0 %v302
    %v675 = vpop.f32.mrf.mxu0
    %v676 = vadd.f32 %v130, %v675
    %v677 = vpop.f32.mrf.mxu0
    %678 = vmatprep.mubr.f32.mxu0 0.0
    %679 = vmatmul.mubr.f32.gmra.mxu0 %v305
    %v680 = vpop.f32.mrf.mxu0
    %v681 = vadd.f32 %v130, %v680
    %v682 = vpop.f32.mrf.mxu0
    %683 = vmatprep.mubr.f32.mxu0 0.0
    %684 = vmatmul.mubr.f32.gmra.mxu0 %v308
    %v685 = vpop.f32.mrf.mxu0
    %v686 = vadd.f32 %v130, %v685
    %v687 = vpop.f32.mrf.mxu0
    %688 = vmatprep.mubr.f32.mxu0 0.0
    %689 = vmatmul.mubr.f32.gmra.mxu0 %v311
    %v690 = vpop.f32.mrf.mxu0
    %v691 = vadd.f32 %v130, %v690
    %v692 = vpop.f32.mrf.mxu0
    %693 = vmatprep.mubr.f32.mxu0 0.0
    %694 = vmatmul.mubr.f32.gmra.mxu0 %v314
    %v695 = vpop.f32.mrf.mxu0
    %v696 = vadd.f32 %v130, %v695
    %v697 = vpop.f32.mrf.mxu0
    %698 = vmatprep.mubr.f32.mxu0 0.0
    %699 = vmatmul.mubr.f32.gmra.mxu0 %v317
    %v700 = vpop.f32.mrf.mxu0
    %v701 = vadd.f32 %v130, %v700
    %v702 = vpop.f32.mrf.mxu0
    %703 = vmatprep.mubr.f32.mxu0 0.0
    %704 = vmatmul.mubr.f32.gmra.mxu0 %v320
    %v705 = vpop.f32.mrf.mxu0
    %v706 = vadd.f32 %v130, %v705
    %v707 = vpop.f32.mrf.mxu0
    %708 = vmatprep.mubr.f32.mxu0 0.0
    %709 = vmatmul.mubr.f32.gmra.mxu0 %v323
    %v710 = vpop.f32.mrf.mxu0
    %v711 = vadd.f32 %v130, %v710
    %v712 = vpop.f32.mrf.mxu0
    %713 = vdwg.mxu0
    %v714 = vld [vmem:[#allocation4] sm:$0xff]
    %v715 = vld [vmem:[#allocation4 + $0x8] sm:$0xff]
    %v716 = vld [vmem:[#allocation4 + $0x10] sm:$0xff]
    %v717 = vld [vmem:[#allocation4 + $0x18] sm:$0xff]
    %v718 = vld [vmem:[#allocation4 + $0x20] sm:$0xff]
    %v719 = vld [vmem:[#allocation4 + $0x28] sm:$0xff]
    %v720 = vld [vmem:[#allocation4 + $0x30] sm:$0xff]
    %v721 = vld [vmem:[#allocation4 + $0x38] sm:$0xff]
    %v722 = vld [vmem:[#allocation4 + $0x40] sm:$0xff]
    %v723 = vld [vmem:[#allocation4 + $0x48] sm:$0xff]
    %v724 = vld [vmem:[#allocation4 + $0x50] sm:$0xff]
    %v725 = vld [vmem:[#allocation4 + $0x58] sm:$0xff]
    %v726 = vld [vmem:[#allocation4 + $0x60] sm:$0xff]
    %v727 = vld [vmem:[#allocation4 + $0x68] sm:$0xff]
    %v728 = vld [vmem:[#allocation4 + $0x70] sm:$0xff]
    %v729 = vld [vmem:[#allocation4 + $0x78] sm:$0xff]
    %v730 = vld [vmem:[#allocation4 + $0x80] sm:$0xff]
    %v731 = vld [vmem:[#allocation4 + $0x88] sm:$0xff]
    %v732 = vld [vmem:[#allocation4 + $0x90] sm:$0xff]
    %v733 = vld [vmem:[#allocation4 + $0x98] sm:$0xff]
    %v734 = vld [vmem:[#allocation4 + $0xa0] sm:$0xff]
    %v735 = vld [vmem:[#allocation4 + $0xa8] sm:$0xff]
    %v736 = vld [vmem:[#allocation4 + $0xb0] sm:$0xff]
    %v737 = vld [vmem:[#allocation4 + $0xb8] sm:$0xff]
    %v738 = vld [vmem:[#allocation4 + $0xc0] sm:$0xff]
    %v739 = vld [vmem:[#allocation4 + $0xc8] sm:$0xff]
    %v740 = vld [vmem:[#allocation4 + $0xd0] sm:$0xff]
    %v741 = vld [vmem:[#allocation4 + $0xd8] sm:$0xff]
    %v742 = vld [vmem:[#allocation4 + $0xe0] sm:$0xff]
    %v743 = vld [vmem:[#allocation4 + $0xe8] sm:$0xff]
    %v744 = vld [vmem:[#allocation4 + $0xf0] sm:$0xff]
    %v745 = vld [vmem:[#allocation4 + $0xf8] sm:$0xff]
    %v746 = vld [vmem:[#allocation4 + $0x100] sm:$0xff]
    %v747 = vld [vmem:[#allocation4 + $0x108] sm:$0xff]
    %v748 = vld [vmem:[#allocation4 + $0x110] sm:$0xff]
    %v749 = vld [vmem:[#allocation4 + $0x118] sm:$0xff]
    %v750 = vld [vmem:[#allocation4 + $0x120] sm:$0xff]
    %v751 = vld [vmem:[#allocation4 + $0x128] sm:$0xff]
    %v752 = vld [vmem:[#allocation4 + $0x130] sm:$0xff]
    %v753 = vld [vmem:[#allocation4 + $0x138] sm:$0xff]
    %v754 = vld [vmem:[#allocation4 + $0x140] sm:$0xff]
    %v755 = vld [vmem:[#allocation4 + $0x148] sm:$0xff]
    %v756 = vld [vmem:[#allocation4 + $0x150] sm:$0xff]
    %v757 = vld [vmem:[#allocation4 + $0x158] sm:$0xff]
    %v758 = vld [vmem:[#allocation4 + $0x160] sm:$0xff]
    %v759 = vld [vmem:[#allocation4 + $0x168] sm:$0xff]
    %v760 = vld [vmem:[#allocation4 + $0x170] sm:$0xff]
    %v761 = vld [vmem:[#allocation4 + $0x178] sm:$0xff]
    %v762 = vld [vmem:[#allocation4 + $0x180] sm:$0xff]
    %v763 = vld [vmem:[#allocation4 + $0x188] sm:$0xff]
    %v764 = vld [vmem:[#allocation4 + $0x190] sm:$0xff]
    %v765 = vld [vmem:[#allocation4 + $0x198] sm:$0xff]
    %v766 = vld [vmem:[#allocation4 + $0x1a0] sm:$0xff]
    %v767 = vld [vmem:[#allocation4 + $0x1a8] sm:$0xff]
    %v768 = vld [vmem:[#allocation4 + $0x1b0] sm:$0xff]
    %v769 = vld [vmem:[#allocation4 + $0x1b8] sm:$0xff]
    %v770 = vld [vmem:[#allocation4 + $0x1c0] sm:$0xff]
    %v771 = vld [vmem:[#allocation4 + $0x1c8] sm:$0xff]
    %v772 = vld [vmem:[#allocation4 + $0x1d0] sm:$0xff]
    %v773 = vld [vmem:[#allocation4 + $0x1d8] sm:$0xff]
    %v774 = vld [vmem:[#allocation4 + $0x1e0] sm:$0xff]
    %v775 = vld [vmem:[#allocation4 + $0x1e8] sm:$0xff]
    %v776 = vld [vmem:[#allocation4 + $0x1f0] sm:$0xff]
    %v777 = vld [vmem:[#allocation4 + $0x1f8] sm:$0xff]
    %v778 = vld [vmem:[#allocation6] sm:$0xff]
    %v780 = vcombine.high %v778, %v778
    %v782 = vunpack.c.l.s4 1983009808
    %v783 = vunpack.c.0.s8 %v782
    %v784 = vlaneseq
    %v785 = vshrl.u32 %v784, 7
    %v786 = vsub.s32 %v783, %v785
    %v787 = vrot.slane %v778, %v786
    %v789 = vunpack.c.l.s4 1983009808
    %v790 = vunpack.c.0.s8 %v789
    %v791 = vlaneseq
    %v792 = vshrl.u32 %v791, 7
    %v793 = vsub.s32 %v790, %v792
    %v794 = vrot.slane %v780, %v793
    %v795 = vcombine.high %v787, %v787
    %v796 = vcombine.high %v794, %v794
    %801 = vmatprep.subr.mxu0 0.0
    %802 = vmatpush1.msra.mxu0 %v471
    %803 = vmatprep.subr.mxu0 0.0
    %804 = vmatpush1.msra.mxu0 %v466
    %805 = vmatprep.subr.mxu0 0.0
    %806 = vmatpush1.msra.mxu0 %v461
    %807 = vmatprep.subr.mxu0 0.0
    %808 = vmatpush1.msra.mxu0 %v456
    %809 = vmatprep.subr.mxu0 0.0
    %810 = vmatpush1.msra.mxu0 %v451
    %811 = vmatprep.subr.mxu0 0.0
    %812 = vmatpush1.msra.mxu0 %v446
    %813 = vmatprep.subr.mxu0 0.0
    %814 = vmatpush1.msra.mxu0 %v441
    %815 = vmatprep.subr.mxu0 0.0
    %816 = vmatpush1.msra.mxu0 %v436
    %817 = vmatprep.subr.mxu0 0.0
    %818 = vmatpush1.msra.mxu0 %v431
    %819 = vmatprep.subr.mxu0 0.0
    %820 = vmatpush1.msra.mxu0 %v426
    %821 = vmatprep.subr.mxu0 0.0
    %822 = vmatpush1.msra.mxu0 %v421
    %823 = vmatprep.subr.mxu0 0.0
    %824 = vmatpush1.msra.mxu0 %v416
    %825 = vmatprep.subr.mxu0 0.0
    %826 = vmatpush1.msra.mxu0 %v411
    %827 = vmatprep.subr.mxu0 0.0
    %828 = vmatpush1.msra.mxu0 %v406
    %829 = vmatprep.subr.mxu0 0.0
    %830 = vmatpush1.msra.mxu0 %v401
    %831 = vmatprep.subr.mxu0 0.0
    %832 = vmatpush1.msra.mxu0 %v396
    %833 = vmatprep.subr.mxu0 0.0
    %834 = vmatpush2.msra.mxu0 %v551
    %835 = vmatprep.subr.mxu0 0.0
    %836 = vmatpush2.msra.mxu0 %v546
    %837 = vmatprep.subr.mxu0 0.0
    %838 = vmatpush2.msra.mxu0 %v541
    %839 = vmatprep.subr.mxu0 0.0
    %840 = vmatpush2.msra.mxu0 %v536
    %841 = vmatprep.subr.mxu0 0.0
    %842 = vmatpush2.msra.mxu0 %v531
    %843 = vmatprep.subr.mxu0 0.0
    %844 = vmatpush2.msra.mxu0 %v526
    %845 = vmatprep.subr.mxu0 0.0
    %846 = vmatpush2.msra.mxu0 %v521
    %847 = vmatprep.subr.mxu0 0.0
    %848 = vmatpush2.msra.mxu0 %v516
    %849 = vmatprep.subr.mxu0 0.0
    %850 = vmatpush2.msra.mxu0 %v511
    %851 = vmatprep.subr.mxu0 0.0
    %852 = vmatpush2.msra.mxu0 %v506
    %853 = vmatprep.subr.mxu0 0.0
    %854 = vmatpush2.msra.mxu0 %v501
    %855 = vmatprep.subr.mxu0 0.0
    %856 = vmatpush2.msra.mxu0 %v496
    %857 = vmatprep.subr.mxu0 0.0
    %858 = vmatpush2.msra.mxu0 %v491
    %859 = vmatprep.subr.mxu0 0.0
    %860 = vmatpush2.msra.mxu0 %v486
    %861 = vmatprep.subr.mxu0 0.0
    %862 = vmatpush2.msra.mxu0 %v481
    %863 = vmatprep.subr.mxu0 0.0
    %864 = vmatpush2.msra.mxu0 %v476
    %865 = vmatprep.mubr.f32.mxu0 %v795
    %866 = vmatmul.mubr.f32.gmra.mxu0 %v787
    %v867 = vpop.f32.mrf.mxu0
    %v868 = vadd.f32 0.0, %v867
    %v869 = vpop.f32.mrf.mxu0
    %870 = vdwg.mxu0
    %871 = vmatprep.subr.mxu0 0.0
    %872 = vmatpush1.msra.mxu0 %v631
    %873 = vmatprep.subr.mxu0 0.0
    %874 = vmatpush1.msra.mxu0 %v626
    %875 = vmatprep.subr.mxu0 0.0
    %876 = vmatpush1.msra.mxu0 %v621
    %877 = vmatprep.subr.mxu0 0.0
    %878 = vmatpush1.msra.mxu0 %v616
    %879 = vmatprep.subr.mxu0 0.0
    %880 = vmatpush1.msra.mxu0 %v611
    %881 = vmatprep.subr.mxu0 0.0
    %882 = vmatpush1.msra.mxu0 %v606
    %883 = vmatprep.subr.mxu0 0.0
    %884 = vmatpush1.msra.mxu0 %v601
    %885 = vmatprep.subr.mxu0 0.0
    %886 = vmatpush1.msra.mxu0 %v596
    %887 = vmatprep.subr.mxu0 0.0
    %888 = vmatpush1.msra.mxu0 %v591
    %889 = vmatprep.subr.mxu0 0.0
    %890 = vmatpush1.msra.mxu0 %v586
    %891 = vmatprep.subr.mxu0 0.0
    %892 = vmatpush1.msra.mxu0 %v581
    %893 = vmatprep.subr.mxu0 0.0
    %894 = vmatpush1.msra.mxu0 %v576
    %895 = vmatprep.subr.mxu0 0.0
    %896 = vmatpush1.msra.mxu0 %v571
    %897 = vmatprep.subr.mxu0 0.0
    %898 = vmatpush1.msra.mxu0 %v566
    %899 = vmatprep.subr.mxu0 0.0
    %900 = vmatpush1.msra.mxu0 %v561
    %901 = vmatprep.subr.mxu0 0.0
    %902 = vmatpush1.msra.mxu0 %v556
    %903 = vmatprep.subr.mxu0 0.0
    %904 = vmatpush2.msra.mxu0 %v711
    %905 = vmatprep.subr.mxu0 0.0
    %906 = vmatpush2.msra.mxu0 %v706
    %907 = vmatprep.subr.mxu0 0.0
    %908 = vmatpush2.msra.mxu0 %v701
    %909 = vmatprep.subr.mxu0 0.0
    %910 = vmatpush2.msra.mxu0 %v696
    %911 = vmatprep.subr.mxu0 0.0
    %912 = vmatpush2.msra.mxu0 %v691
    %913 = vmatprep.subr.mxu0 0.0
    %914 = vmatpush2.msra.mxu0 %v686
    %915 = vmatprep.subr.mxu0 0.0
    %916 = vmatpush2.msra.mxu0 %v681
    %917 = vmatprep.subr.mxu0 0.0
    %918 = vmatpush2.msra.mxu0 %v676
    %919 = vmatprep.subr.mxu0 0.0
    %920 = vmatpush2.msra.mxu0 %v671
    %921 = vmatprep.subr.mxu0 0.0
    %922 = vmatpush2.msra.mxu0 %v666
    %923 = vmatprep.subr.mxu0 0.0
    %924 = vmatpush2.msra.mxu0 %v661
    %925 = vmatprep.subr.mxu0 0.0
    %926 = vmatpush2.msra.mxu0 %v656
    %927 = vmatprep.subr.mxu0 0.0
    %928 = vmatpush2.msra.mxu0 %v651
    %929 = vmatprep.subr.mxu0 0.0
    %930 = vmatpush2.msra.mxu0 %v646
    %931 = vmatprep.subr.mxu0 0.0
    %932 = vmatpush2.msra.mxu0 %v641
    %933 = vmatprep.subr.mxu0 0.0
    %934 = vmatpush2.msra.mxu0 %v636
    %935 = vmatprep.mubr.f32.mxu0 %v796
    %936 = vmatmul.mubr.f32.gmra.mxu0 %v794
    %v937 = vpop.f32.mrf.mxu0
    %v938 = vadd.f32 %v868, %v937
    %v939 = vpop.f32.mrf.mxu0
    %940 = vdwg.mxu0
    %vm941 = vcmask 15360
    %v943 = vsel %vm941, %v714, 0
    %v946 = vsel %vm941, %v715, 0
    %v949 = vsel %vm941, %v716, 0
    %v952 = vsel %vm941, %v717, 0
    %v955 = vsel %vm941, %v718, 0
    %v958 = vsel %vm941, %v719, 0
    %v961 = vsel %vm941, %v720, 0
    %v964 = vsel %vm941, %v721, 0
    %v967 = vsel %vm941, %v722, 0
    %v970 = vsel %vm941, %v723, 0
    %v973 = vsel %vm941, %v724, 0
    %v976 = vsel %vm941, %v725, 0
    %v979 = vsel %vm941, %v726, 0
    %v982 = vsel %vm941, %v727, 0
    %v985 = vsel %vm941, %v728, 0
    %v988 = vsel %vm941, %v729, 0
    %v991 = vsel %vm941, %v730, 0
    %v994 = vsel %vm941, %v731, 0
    %v997 = vsel %vm941, %v732, 0
    %v1000 = vsel %vm941, %v733, 0
    %v1003 = vsel %vm941, %v734, 0
    %v1006 = vsel %vm941, %v735, 0
    %v1009 = vsel %vm941, %v736, 0
    %v1012 = vsel %vm941, %v737, 0
    %v1015 = vsel %vm941, %v738, 0
    %v1018 = vsel %vm941, %v739, 0
    %v1021 = vsel %vm941, %v740, 0
    %v1024 = vsel %vm941, %v741, 0
    %v1027 = vsel %vm941, %v742, 0
    %v1030 = vsel %vm941, %v743, 0
    %v1033 = vsel %vm941, %v744, 0
    %v1036 = vsel %vm941, %v745, 0
    %v1039 = vsel %vm941, %v746, 0
    %v1042 = vsel %vm941, %v747, 0
    %v1045 = vsel %vm941, %v748, 0
    %v1048 = vsel %vm941, %v749, 0
    %v1051 = vsel %vm941, %v750, 0
    %v1054 = vsel %vm941, %v751, 0
    %v1057 = vsel %vm941, %v752, 0
    %v1060 = vsel %vm941, %v753, 0
    %v1063 = vsel %vm941, %v754, 0
    %v1066 = vsel %vm941, %v755, 0
    %v1069 = vsel %vm941, %v756, 0
    %v1072 = vsel %vm941, %v757, 0
    %v1075 = vsel %vm941, %v758, 0
    %v1078 = vsel %vm941, %v759, 0
    %v1081 = vsel %vm941, %v760, 0
    %v1084 = vsel %vm941, %v761, 0
    %v1087 = vsel %vm941, %v762, 0
    %v1090 = vsel %vm941, %v763, 0
    %v1093 = vsel %vm941, %v764, 0
    %v1096 = vsel %vm941, %v765, 0
    %v1099 = vsel %vm941, %v766, 0
    %v1102 = vsel %vm941, %v767, 0
    %v1105 = vsel %vm941, %v768, 0
    %v1108 = vsel %vm941, %v769, 0
    %v1111 = vsel %vm941, %v770, 0
    %v1114 = vsel %vm941, %v771, 0
    %v1117 = vsel %vm941, %v772, 0
    %v1120 = vsel %vm941, %v773, 0
    %v1123 = vsel %vm941, %v774, 0
    %v1126 = vsel %vm941, %v775, 0
    %v1129 = vsel %vm941, %v776, 0
    %v1132 = vsel %vm941, %v777, 0
    %vm1134 = vcmask 1041408
    %v1136 = vsel %vm1134, %v938, 0
    %1138 = vmatprep.subr.mxu0 0.0
    %1139 = vmatpush1.msra.mxu0 0.0
    %1140 = vmatprep.subr.mxu0 0.0
    %1141 = vmatpush1.msra.mxu0 0.0
    %1142 = vmatprep.subr.mxu0 0.0
    %1143 = vmatpush1.msra.mxu0 0.0
    %1144 = vmatprep.subr.mxu0 0.0
    %1145 = vmatpush1.msra.mxu0 0.0
    %1146 = vmatprep.subr.mxu0 0.0
    %1147 = vmatpush1.msra.mxu0 0.0
    %1148 = vmatprep.subr.mxu0 0.0
    %1149 = vmatpush1.msra.mxu0 0.0
    %1150 = vmatprep.subr.mxu0 0.0
    %1151 = vmatpush1.msra.mxu0 0.0
    %1152 = vmatprep.subr.mxu0 0.0
    %1153 = vmatpush1.msra.mxu0 0.0
    %1154 = vmatprep.subr.mxu0 0.0
    %1155 = vmatpush1.msra.mxu0 0.0
    %1156 = vmatprep.subr.mxu0 0.0
    %1157 = vmatpush1.msra.mxu0 0.0
    %1158 = vmatprep.subr.mxu0 0.0
    %1159 = vmatpush1.msra.mxu0 0.0
    %1160 = vmatprep.subr.mxu0 0.0
    %1161 = vmatpush1.msra.mxu0 0.0
    %1162 = vmatprep.subr.mxu0 0.0
    %1163 = vmatpush1.msra.mxu0 0.0
    %1164 = vmatprep.subr.mxu0 0.0
    %1165 = vmatpush1.msra.mxu0 0.0
    %1166 = vmatprep.subr.mxu0 0.0
    %1167 = vmatpush1.msra.mxu0 0.0
    %1168 = vmatprep.subr.mxu0 0.0
    %1169 = vmatpush1.msra.mxu0 %v1136
    %1170 = vmatprep.subr.mxu0 0.0
    %1171 = vmatpush2.msra.mxu0 0.0
    %1172 = vmatprep.subr.mxu0 0.0
    %1173 = vmatpush2.msra.mxu0 0.0
    %1174 = vmatprep.subr.mxu0 0.0
    %1175 = vmatpush2.msra.mxu0 0.0
    %1176 = vmatprep.subr.mxu0 0.0
    %1177 = vmatpush2.msra.mxu0 0.0
    %1178 = vmatprep.subr.mxu0 0.0
    %1179 = vmatpush2.msra.mxu0 0.0
    %1180 = vmatprep.subr.mxu0 0.0
    %1181 = vmatpush2.msra.mxu0 0.0
    %1182 = vmatprep.subr.mxu0 0.0
    %1183 = vmatpush2.msra.mxu0 0.0
    %1184 = vmatprep.subr.mxu0 0.0
    %1185 = vmatpush2.msra.mxu0 0.0
    %1186 = vmatprep.subr.mxu0 0.0
    %1187 = vmatpush2.msra.mxu0 0.0
    %1188 = vmatprep.subr.mxu0 0.0
    %1189 = vmatpush2.msra.mxu0 0.0
    %1190 = vmatprep.subr.mxu0 0.0
    %1191 = vmatpush2.msra.mxu0 0.0
    %1192 = vmatprep.subr.mxu0 0.0
    %1193 = vmatpush2.msra.mxu0 0.0
    %1194 = vmatprep.subr.mxu0 0.0
    %1195 = vmatpush2.msra.mxu0 0.0
    %1196 = vmatprep.subr.mxu0 0.0
    %1197 = vmatpush2.msra.mxu0 0.0
    %1198 = vmatprep.subr.mxu0 0.0
    %1199 = vmatpush2.msra.mxu0 0.0
    %1200 = vmatprep.subr.mxu0 0.0
    %1201 = vmatpush2.msra.mxu0 0.0
    %1202 = vmatprep.mubr.f32.mxu0 0.0
    %1203 = vmatmul.mubr.f32.gmra.mxu0 %v943
    %v1204 = vpop.f32.mrf.mxu0
    %v1205 = vadd.f32 0.0, %v1204
    %v1206 = vpop.f32.mrf.mxu0
    %1207 = vmatprep.mubr.f32.mxu0 0.0
    %1208 = vmatmul.mubr.f32.gmra.mxu0 %v946
    %v1209 = vpop.f32.mrf.mxu0
    %v1210 = vadd.f32 0.0, %v1209
    %v1211 = vpop.f32.mrf.mxu0
    %1212 = vmatprep.mubr.f32.mxu0 0.0
    %1213 = vmatmul.mubr.f32.gmra.mxu0 %v949
    %v1214 = vpop.f32.mrf.mxu0
    %v1215 = vadd.f32 0.0, %v1214
    %v1216 = vpop.f32.mrf.mxu0
    %1217 = vmatprep.mubr.f32.mxu0 0.0
    %1218 = vmatmul.mubr.f32.gmra.mxu0 %v952
    %v1219 = vpop.f32.mrf.mxu0
    %v1220 = vadd.f32 0.0, %v1219
    %v1221 = vpop.f32.mrf.mxu0
    %1222 = vmatprep.mubr.f32.mxu0 0.0
    %1223 = vmatmul.mubr.f32.gmra.mxu0 %v955
    %v1224 = vpop.f32.mrf.mxu0
    %v1225 = vadd.f32 0.0, %v1224
    %v1226 = vpop.f32.mrf.mxu0
    %1227 = vmatprep.mubr.f32.mxu0 0.0
    %1228 = vmatmul.mubr.f32.gmra.mxu0 %v958
    %v1229 = vpop.f32.mrf.mxu0
    %v1230 = vadd.f32 0.0, %v1229
    %v1231 = vpop.f32.mrf.mxu0
    %1232 = vmatprep.mubr.f32.mxu0 0.0
    %1233 = vmatmul.mubr.f32.gmra.mxu0 %v961
    %v1234 = vpop.f32.mrf.mxu0
    %v1235 = vadd.f32 0.0, %v1234
    %v1236 = vpop.f32.mrf.mxu0
    %1237 = vmatprep.mubr.f32.mxu0 0.0
    %1238 = vmatmul.mubr.f32.gmra.mxu0 %v964
    %v1239 = vpop.f32.mrf.mxu0
    %v1240 = vadd.f32 0.0, %v1239
    %v1241 = vpop.f32.mrf.mxu0
    %1242 = vmatprep.mubr.f32.mxu0 0.0
    %1243 = vmatmul.mubr.f32.gmra.mxu0 %v967
    %v1244 = vpop.f32.mrf.mxu0
    %v1245 = vadd.f32 0.0, %v1244
    %v1246 = vpop.f32.mrf.mxu0
    %1247 = vmatprep.mubr.f32.mxu0 0.0
    %1248 = vmatmul.mubr.f32.gmra.mxu0 %v970
    %v1249 = vpop.f32.mrf.mxu0
    %v1250 = vadd.f32 0.0, %v1249
    %v1251 = vpop.f32.mrf.mxu0
    %1252 = vmatprep.mubr.f32.mxu0 0.0
    %1253 = vmatmul.mubr.f32.gmra.mxu0 %v973
    %v1254 = vpop.f32.mrf.mxu0
    %v1255 = vadd.f32 0.0, %v1254
    %v1256 = vpop.f32.mrf.mxu0
    %1257 = vmatprep.mubr.f32.mxu0 0.0
    %1258 = vmatmul.mubr.f32.gmra.mxu0 %v976
    %v1259 = vpop.f32.mrf.mxu0
    %v1260 = vadd.f32 0.0, %v1259
    %v1261 = vpop.f32.mrf.mxu0
    %1262 = vmatprep.mubr.f32.mxu0 0.0
    %1263 = vmatmul.mubr.f32.gmra.mxu0 %v979
    %v1264 = vpop.f32.mrf.mxu0
    %v1265 = vadd.f32 0.0, %v1264
    %v1266 = vpop.f32.mrf.mxu0
    %1267 = vmatprep.mubr.f32.mxu0 0.0
    %1268 = vmatmul.mubr.f32.gmra.mxu0 %v982
    %v1269 = vpop.f32.mrf.mxu0
    %v1270 = vadd.f32 0.0, %v1269
    %v1271 = vpop.f32.mrf.mxu0
    %1272 = vmatprep.mubr.f32.mxu0 0.0
    %1273 = vmatmul.mubr.f32.gmra.mxu0 %v985
    %v1274 = vpop.f32.mrf.mxu0
    %v1275 = vadd.f32 0.0, %v1274
    %v1276 = vpop.f32.mrf.mxu0
    %1277 = vmatprep.mubr.f32.mxu0 0.0
    %1278 = vmatmul.mubr.f32.gmra.mxu0 %v988
    %v1279 = vpop.f32.mrf.mxu0
    %v1280 = vadd.f32 0.0, %v1279
    %v1281 = vpop.f32.mrf.mxu0
    %1282 = vmatprep.mubr.f32.mxu0 0.0
    %1283 = vmatmul.mubr.f32.gmra.mxu0 %v991
    %v1284 = vpop.f32.mrf.mxu0
    %v1285 = vadd.f32 0.0, %v1284
    %v1286 = vpop.f32.mrf.mxu0
    %1287 = vmatprep.mubr.f32.mxu0 0.0
    %1288 = vmatmul.mubr.f32.gmra.mxu0 %v994
    %v1289 = vpop.f32.mrf.mxu0
    %v1290 = vadd.f32 0.0, %v1289
    %v1291 = vpop.f32.mrf.mxu0
    %1292 = vmatprep.mubr.f32.mxu0 0.0
    %1293 = vmatmul.mubr.f32.gmra.mxu0 %v997
    %v1294 = vpop.f32.mrf.mxu0
    %v1295 = vadd.f32 0.0, %v1294
    %v1296 = vpop.f32.mrf.mxu0
    %1297 = vmatprep.mubr.f32.mxu0 0.0
    %1298 = vmatmul.mubr.f32.gmra.mxu0 %v1000
    %v1299 = vpop.f32.mrf.mxu0
    %v1300 = vadd.f32 0.0, %v1299
    %v1301 = vpop.f32.mrf.mxu0
    %1302 = vmatprep.mubr.f32.mxu0 0.0
    %1303 = vmatmul.mubr.f32.gmra.mxu0 %v1003
    %v1304 = vpop.f32.mrf.mxu0
    %v1305 = vadd.f32 0.0, %v1304
    %v1306 = vpop.f32.mrf.mxu0
    %1307 = vmatprep.mubr.f32.mxu0 0.0
    %1308 = vmatmul.mubr.f32.gmra.mxu0 %v1006
    %v1309 = vpop.f32.mrf.mxu0
    %v1310 = vadd.f32 0.0, %v1309
    %v1311 = vpop.f32.mrf.mxu0
    %1312 = vmatprep.mubr.f32.mxu0 0.0
    %1313 = vmatmul.mubr.f32.gmra.mxu0 %v1009
    %v1314 = vpop.f32.mrf.mxu0
    %v1315 = vadd.f32 0.0, %v1314
    %v1316 = vpop.f32.mrf.mxu0
    %1317 = vmatprep.mubr.f32.mxu0 0.0
    %1318 = vmatmul.mubr.f32.gmra.mxu0 %v1012
    %v1319 = vpop.f32.mrf.mxu0
    %v1320 = vadd.f32 0.0, %v1319
    %v1321 = vpop.f32.mrf.mxu0
    %1322 = vmatprep.mubr.f32.mxu0 0.0
    %1323 = vmatmul.mubr.f32.gmra.mxu0 %v1015
    %v1324 = vpop.f32.mrf.mxu0
    %v1325 = vadd.f32 0.0, %v1324
    %v1326 = vpop.f32.mrf.mxu0
    %1327 = vmatprep.mubr.f32.mxu0 0.0
    %1328 = vmatmul.mubr.f32.gmra.mxu0 %v1018
    %v1329 = vpop.f32.mrf.mxu0
    %v1330 = vadd.f32 0.0, %v1329
    %v1331 = vpop.f32.mrf.mxu0
    %1332 = vmatprep.mubr.f32.mxu0 0.0
    %1333 = vmatmul.mubr.f32.gmra.mxu0 %v1021
    %v1334 = vpop.f32.mrf.mxu0
    %v1335 = vadd.f32 0.0, %v1334
    %v1336 = vpop.f32.mrf.mxu0
    %1337 = vmatprep.mubr.f32.mxu0 0.0
    %1338 = vmatmul.mubr.f32.gmra.mxu0 %v1024
    %v1339 = vpop.f32.mrf.mxu0
    %v1340 = vadd.f32 0.0, %v1339
    %v1341 = vpop.f32.mrf.mxu0
    %1342 = vmatprep.mubr.f32.mxu0 0.0
    %1343 = vmatmul.mubr.f32.gmra.mxu0 %v1027
    %v1344 = vpop.f32.mrf.mxu0
    %v1345 = vadd.f32 0.0, %v1344
    %v1346 = vpop.f32.mrf.mxu0
    %1347 = vmatprep.mubr.f32.mxu0 0.0
    %1348 = vmatmul.mubr.f32.gmra.mxu0 %v1030
    %v1349 = vpop.f32.mrf.mxu0
    %v1350 = vadd.f32 0.0, %v1349
    %v1351 = vpop.f32.mrf.mxu0
    %1352 = vmatprep.mubr.f32.mxu0 0.0
    %1353 = vmatmul.mubr.f32.gmra.mxu0 %v1033
    %v1354 = vpop.f32.mrf.mxu0
    %v1355 = vadd.f32 0.0, %v1354
    %v1356 = vpop.f32.mrf.mxu0
    %1357 = vmatprep.mubr.f32.mxu0 0.0
    %1358 = vmatmul.mubr.f32.gmra.mxu0 %v1036
    %v1359 = vpop.f32.mrf.mxu0
    %v1360 = vadd.f32 0.0, %v1359
    %v1361 = vpop.f32.mrf.mxu0
    %1362 = vmatprep.mubr.f32.mxu0 0.0
    %1363 = vmatmul.mubr.f32.gmra.mxu0 %v1039
    %v1364 = vpop.f32.mrf.mxu0
    %v1365 = vadd.f32 0.0, %v1364
    %v1366 = vpop.f32.mrf.mxu0
    %1367 = vmatprep.mubr.f32.mxu0 0.0
    %1368 = vmatmul.mubr.f32.gmra.mxu0 %v1042
    %v1369 = vpop.f32.mrf.mxu0
    %v1370 = vadd.f32 0.0, %v1369
    %v1371 = vpop.f32.mrf.mxu0
    %1372 = vmatprep.mubr.f32.mxu0 0.0
    %1373 = vmatmul.mubr.f32.gmra.mxu0 %v1045
    %v1374 = vpop.f32.mrf.mxu0
    %v1375 = vadd.f32 0.0, %v1374
    %v1376 = vpop.f32.mrf.mxu0
    %1377 = vmatprep.mubr.f32.mxu0 0.0
    %1378 = vmatmul.mubr.f32.gmra.mxu0 %v1048
    %v1379 = vpop.f32.mrf.mxu0
    %v1380 = vadd.f32 0.0, %v1379
    %v1381 = vpop.f32.mrf.mxu0
    %1382 = vmatprep.mubr.f32.mxu0 0.0
    %1383 = vmatmul.mubr.f32.gmra.mxu0 %v1051
    %v1384 = vpop.f32.mrf.mxu0
    %v1385 = vadd.f32 0.0, %v1384
    %v1386 = vpop.f32.mrf.mxu0
    %1387 = vmatprep.mubr.f32.mxu0 0.0
    %1388 = vmatmul.mubr.f32.gmra.mxu0 %v1054
    %v1389 = vpop.f32.mrf.mxu0
    %v1390 = vadd.f32 0.0, %v1389
    %v1391 = vpop.f32.mrf.mxu0
    %1392 = vmatprep.mubr.f32.mxu0 0.0
    %1393 = vmatmul.mubr.f32.gmra.mxu0 %v1057
    %v1394 = vpop.f32.mrf.mxu0
    %v1395 = vadd.f32 0.0, %v1394
    %v1396 = vpop.f32.mrf.mxu0
    %1397 = vmatprep.mubr.f32.mxu0 0.0
    %1398 = vmatmul.mubr.f32.gmra.mxu0 %v1060
    %v1399 = vpop.f32.mrf.mxu0
    %v1400 = vadd.f32 0.0, %v1399
    %v1401 = vpop.f32.mrf.mxu0
    %1402 = vmatprep.mubr.f32.mxu0 0.0
    %1403 = vmatmul.mubr.f32.gmra.mxu0 %v1063
    %v1404 = vpop.f32.mrf.mxu0
    %v1405 = vadd.f32 0.0, %v1404
    %v1406 = vpop.f32.mrf.mxu0
    %1407 = vmatprep.mubr.f32.mxu0 0.0
    %1408 = vmatmul.mubr.f32.gmra.mxu0 %v1066
    %v1409 = vpop.f32.mrf.mxu0
    %v1410 = vadd.f32 0.0, %v1409
    %v1411 = vpop.f32.mrf.mxu0
    %1412 = vmatprep.mubr.f32.mxu0 0.0
    %1413 = vmatmul.mubr.f32.gmra.mxu0 %v1069
    %v1414 = vpop.f32.mrf.mxu0
    %v1415 = vadd.f32 0.0, %v1414
    %v1416 = vpop.f32.mrf.mxu0
    %1417 = vmatprep.mubr.f32.mxu0 0.0
    %1418 = vmatmul.mubr.f32.gmra.mxu0 %v1072
    %v1419 = vpop.f32.mrf.mxu0
    %v1420 = vadd.f32 0.0, %v1419
    %v1421 = vpop.f32.mrf.mxu0
    %1422 = vmatprep.mubr.f32.mxu0 0.0
    %1423 = vmatmul.mubr.f32.gmra.mxu0 %v1075
    %v1424 = vpop.f32.mrf.mxu0
    %v1425 = vadd.f32 0.0, %v1424
    %v1426 = vpop.f32.mrf.mxu0
    %1427 = vmatprep.mubr.f32.mxu0 0.0
    %1428 = vmatmul.mubr.f32.gmra.mxu0 %v1078
    %v1429 = vpop.f32.mrf.mxu0
    %v1430 = vadd.f32 0.0, %v1429
    %v1431 = vpop.f32.mrf.mxu0
    %1432 = vmatprep.mubr.f32.mxu0 0.0
    %1433 = vmatmul.mubr.f32.gmra.mxu0 %v1081
    %v1434 = vpop.f32.mrf.mxu0
    %v1435 = vadd.f32 0.0, %v1434
    %v1436 = vpop.f32.mrf.mxu0
    %1437 = vmatprep.mubr.f32.mxu0 0.0
    %1438 = vmatmul.mubr.f32.gmra.mxu0 %v1084
    %v1439 = vpop.f32.mrf.mxu0
    %v1440 = vadd.f32 0.0, %v1439
    %v1441 = vpop.f32.mrf.mxu0
    %1442 = vmatprep.mubr.f32.mxu0 0.0
    %1443 = vmatmul.mubr.f32.gmra.mxu0 %v1087
    %v1444 = vpop.f32.mrf.mxu0
    %v1445 = vadd.f32 0.0, %v1444
    %v1446 = vpop.f32.mrf.mxu0
    %1447 = vmatprep.mubr.f32.mxu0 0.0
    %1448 = vmatmul.mubr.f32.gmra.mxu0 %v1090
    %v1449 = vpop.f32.mrf.mxu0
    %v1450 = vadd.f32 0.0, %v1449
    %v1451 = vpop.f32.mrf.mxu0
    %1452 = vmatprep.mubr.f32.mxu0 0.0
    %1453 = vmatmul.mubr.f32.gmra.mxu0 %v1093
    %v1454 = vpop.f32.mrf.mxu0
    %v1455 = vadd.f32 0.0, %v1454
    %v1456 = vpop.f32.mrf.mxu0
    %1457 = vmatprep.mubr.f32.mxu0 0.0
    %1458 = vmatmul.mubr.f32.gmra.mxu0 %v1096
    %v1459 = vpop.f32.mrf.mxu0
    %v1460 = vadd.f32 0.0, %v1459
    %v1461 = vpop.f32.mrf.mxu0
    %1462 = vmatprep.mubr.f32.mxu0 0.0
    %1463 = vmatmul.mubr.f32.gmra.mxu0 %v1099
    %v1464 = vpop.f32.mrf.mxu0
    %v1465 = vadd.f32 0.0, %v1464
    %v1466 = vpop.f32.mrf.mxu0
    %1467 = vmatprep.mubr.f32.mxu0 0.0
    %1468 = vmatmul.mubr.f32.gmra.mxu0 %v1102
    %v1469 = vpop.f32.mrf.mxu0
    %v1470 = vadd.f32 0.0, %v1469
    %v1471 = vpop.f32.mrf.mxu0
    %1472 = vmatprep.mubr.f32.mxu0 0.0
    %1473 = vmatmul.mubr.f32.gmra.mxu0 %v1105
    %v1474 = vpop.f32.mrf.mxu0
    %v1475 = vadd.f32 0.0, %v1474
    %v1476 = vpop.f32.mrf.mxu0
    %1477 = vmatprep.mubr.f32.mxu0 0.0
    %1478 = vmatmul.mubr.f32.gmra.mxu0 %v1108
    %v1479 = vpop.f32.mrf.mxu0
    %v1480 = vadd.f32 0.0, %v1479
    %v1481 = vpop.f32.mrf.mxu0
    %1482 = vmatprep.mubr.f32.mxu0 0.0
    %1483 = vmatmul.mubr.f32.gmra.mxu0 %v1111
    %v1484 = vpop.f32.mrf.mxu0
    %v1485 = vadd.f32 0.0, %v1484
    %v1486 = vpop.f32.mrf.mxu0
    %1487 = vmatprep.mubr.f32.mxu0 0.0
    %1488 = vmatmul.mubr.f32.gmra.mxu0 %v1114
    %v1489 = vpop.f32.mrf.mxu0
    %v1490 = vadd.f32 0.0, %v1489
    %v1491 = vpop.f32.mrf.mxu0
    %1492 = vmatprep.mubr.f32.mxu0 0.0
    %1493 = vmatmul.mubr.f32.gmra.mxu0 %v1117
    %v1494 = vpop.f32.mrf.mxu0
    %v1495 = vadd.f32 0.0, %v1494
    %v1496 = vpop.f32.mrf.mxu0
    %1497 = vmatprep.mubr.f32.mxu0 0.0
    %1498 = vmatmul.mubr.f32.gmra.mxu0 %v1120
    %v1499 = vpop.f32.mrf.mxu0
    %v1500 = vadd.f32 0.0, %v1499
    %v1501 = vpop.f32.mrf.mxu0
    %1502 = vmatprep.mubr.f32.mxu0 0.0
    %1503 = vmatmul.mubr.f32.gmra.mxu0 %v1123
    %v1504 = vpop.f32.mrf.mxu0
    %v1505 = vadd.f32 0.0, %v1504
    %v1506 = vpop.f32.mrf.mxu0
    %1507 = vmatprep.mubr.f32.mxu0 0.0
    %1508 = vmatmul.mubr.f32.gmra.mxu0 %v1126
    %v1509 = vpop.f32.mrf.mxu0
    %v1510 = vadd.f32 0.0, %v1509
    %v1511 = vpop.f32.mrf.mxu0
    %1512 = vmatprep.mubr.f32.mxu0 0.0
    %1513 = vmatmul.mubr.f32.gmra.mxu0 %v1129
    %v1514 = vpop.f32.mrf.mxu0
    %v1515 = vadd.f32 0.0, %v1514
    %v1516 = vpop.f32.mrf.mxu0
    %1517 = vmatprep.mubr.f32.mxu0 0.0
    %1518 = vmatmul.mubr.f32.gmra.mxu0 %v1132
    %v1519 = vpop.f32.mrf.mxu0
    %v1520 = vadd.f32 0.0, %v1519
    %v1521 = vpop.f32.mrf.mxu0
    %1522 = vdwg.mxu0
    %v1523 = vsub.f32 %v396, %v1205
    %v1524 = vsub.f32 %v401, %v1210
    %v1525 = vsub.f32 %v406, %v1215
    %v1526 = vsub.f32 %v411, %v1220
    %v1527 = vsub.f32 %v416, %v1225
    %v1528 = vsub.f32 %v421, %v1230
    %v1529 = vsub.f32 %v426, %v1235
    %v1530 = vsub.f32 %v431, %v1240
    %v1531 = vsub.f32 %v436, %v1245
    %v1532 = vsub.f32 %v441, %v1250
    %v1533 = vsub.f32 %v446, %v1255
    %v1534 = vsub.f32 %v451, %v1260
    %v1535 = vsub.f32 %v456, %v1265
    %v1536 = vsub.f32 %v461, %v1270
    %v1537 = vsub.f32 %v466, %v1275
    %v1538 = vsub.f32 %v471, %v1280
    %v1539 = vsub.f32 %v476, %v1285
    %v1540 = vsub.f32 %v481, %v1290
    %v1541 = vsub.f32 %v486, %v1295
    %v1542 = vsub.f32 %v491, %v1300
    %v1543 = vsub.f32 %v496, %v1305
    %v1544 = vsub.f32 %v501, %v1310
    %v1545 = vsub.f32 %v506, %v1315
    %v1546 = vsub.f32 %v511, %v1320
    %v1547 = vsub.f32 %v516, %v1325
    %v1548 = vsub.f32 %v521, %v1330
    %v1549 = vsub.f32 %v526, %v1335
    %v1550 = vsub.f32 %v531, %v1340
    %v1551 = vsub.f32 %v536, %v1345
    %v1552 = vsub.f32 %v541, %v1350
    %v1553 = vsub.f32 %v546, %v1355
    %v1554 = vsub.f32 %v551, %v1360
    %v1555 = vsub.f32 %v556, %v1365
    %v1556 = vsub.f32 %v561, %v1370
    %v1557 = vsub.f32 %v566, %v1375
    %v1558 = vsub.f32 %v571, %v1380
    %v1559 = vsub.f32 %v576, %v1385
    %v1560 = vsub.f32 %v581, %v1390
    %v1561 = vsub.f32 %v586, %v1395
    %v1562 = vsub.f32 %v591, %v1400
    %v1563 = vsub.f32 %v596, %v1405
    %v1564 = vsub.f32 %v601, %v1410
    %v1565 = vsub.f32 %v606, %v1415
    %v1566 = vsub.f32 %v611, %v1420
    %v1567 = vsub.f32 %v616, %v1425
    %v1568 = vsub.f32 %v621, %v1430
    %v1569 = vsub.f32 %v626, %v1435
    %v1570 = vsub.f32 %v631, %v1440
    %v1571 = vsub.f32 %v636, %v1445
    %v1572 = vsub.f32 %v641, %v1450
    %v1573 = vsub.f32 %v646, %v1455
    %v1574 = vsub.f32 %v651, %v1460
    %v1575 = vsub.f32 %v656, %v1465
    %v1576 = vsub.f32 %v661, %v1470
    %v1577 = vsub.f32 %v666, %v1475
    %v1578 = vsub.f32 %v671, %v1480
    %v1579 = vsub.f32 %v676, %v1485
    %v1580 = vsub.f32 %v681, %v1490
    %v1581 = vsub.f32 %v686, %v1495
    %v1582 = vsub.f32 %v691, %v1500
    %v1583 = vsub.f32 %v696, %v1505
    %v1584 = vsub.f32 %v701, %v1510
    %v1585 = vsub.f32 %v706, %v1515
    %v1586 = vsub.f32 %v711, %v1520
    %v1587 = vmul.f32 %v1523, %v1523
    %v1588 = vmul.f32 %v1524, %v1524
    %v1589 = vmul.f32 %v1525, %v1525
    %v1590 = vmul.f32 %v1526, %v1526
    %v1591 = vmul.f32 %v1527, %v1527
    %v1592 = vmul.f32 %v1528, %v1528
    %v1593 = vmul.f32 %v1529, %v1529
    %v1594 = vmul.f32 %v1530, %v1530
    %v1595 = vmul.f32 %v1531, %v1531
    %v1596 = vmul.f32 %v1532, %v1532
    %v1597 = vmul.f32 %v1533, %v1533
    %v1598 = vmul.f32 %v1534, %v1534
    %v1599 = vmul.f32 %v1535, %v1535
    %v1600 = vmul.f32 %v1536, %v1536
    %v1601 = vmul.f32 %v1537, %v1537
    %v1602 = vmul.f32 %v1538, %v1538
    %v1603 = vmul.f32 %v1539, %v1539
    %v1604 = vmul.f32 %v1540, %v1540
    %v1605 = vmul.f32 %v1541, %v1541
    %v1606 = vmul.f32 %v1542, %v1542
    %v1607 = vmul.f32 %v1543, %v1543
    %v1608 = vmul.f32 %v1544, %v1544
    %v1609 = vmul.f32 %v1545, %v1545
    %v1610 = vmul.f32 %v1546, %v1546
    %v1611 = vmul.f32 %v1547, %v1547
    %v1612 = vmul.f32 %v1548, %v1548
    %v1613 = vmul.f32 %v1549, %v1549
    %v1614 = vmul.f32 %v1550, %v1550
    %v1615 = vmul.f32 %v1551, %v1551
    %v1616 = vmul.f32 %v1552, %v1552
    %v1617 = vmul.f32 %v1553, %v1553
    %v1618 = vmul.f32 %v1554, %v1554
    %v1619 = vmul.f32 %v1555, %v1555
    %v1620 = vmul.f32 %v1556, %v1556
    %v1621 = vmul.f32 %v1557, %v1557
    %v1622 = vmul.f32 %v1558, %v1558
    %v1623 = vmul.f32 %v1559, %v1559
    %v1624 = vmul.f32 %v1560, %v1560
    %v1625 = vmul.f32 %v1561, %v1561
    %v1626 = vmul.f32 %v1562, %v1562
    %v1627 = vmul.f32 %v1563, %v1563
    %v1628 = vmul.f32 %v1564, %v1564
    %v1629 = vmul.f32 %v1565, %v1565
    %v1630 = vmul.f32 %v1566, %v1566
    %v1631 = vmul.f32 %v1567, %v1567
    %v1632 = vmul.f32 %v1568, %v1568
    %v1633 = vmul.f32 %v1569, %v1569
    %v1634 = vmul.f32 %v1570, %v1570
    %v1635 = vmul.f32 %v1571, %v1571
    %v1636 = vmul.f32 %v1572, %v1572
    %v1637 = vmul.f32 %v1573, %v1573
    %v1638 = vmul.f32 %v1574, %v1574
    %v1639 = vmul.f32 %v1575, %v1575
    %v1640 = vmul.f32 %v1576, %v1576
    %v1641 = vmul.f32 %v1577, %v1577
    %v1642 = vmul.f32 %v1578, %v1578
    %v1643 = vmul.f32 %v1579, %v1579
    %v1644 = vmul.f32 %v1580, %v1580
    %v1645 = vmul.f32 %v1581, %v1581
    %v1646 = vmul.f32 %v1582, %v1582
    %v1647 = vmul.f32 %v1583, %v1583
    %v1648 = vmul.f32 %v1584, %v1584
    %v1649 = vmul.f32 %v1585, %v1585
    %v1650 = vmul.f32 %v1586, %v1586
    %1651 = vmatprep.subr.mxu0 0.0
    %1652 = vmatpush1.msra.mxu0 %v1602
    %1653 = vmatprep.subr.mxu0 0.0
    %1654 = vmatpush1.msra.mxu0 %v1601
    %1655 = vmatprep.subr.mxu0 0.0
    %1656 = vmatpush1.msra.mxu0 %v1600
    %1657 = vmatprep.subr.mxu0 0.0
    %1658 = vmatpush1.msra.mxu0 %v1599
    %1659 = vmatprep.subr.mxu0 0.0
    %1660 = vmatpush1.msra.mxu0 %v1598
    %1661 = vmatprep.subr.mxu0 0.0
    %1662 = vmatpush1.msra.mxu0 %v1597
    %1663 = vmatprep.subr.mxu0 0.0
    %1664 = vmatpush1.msra.mxu0 %v1596
    %1665 = vmatprep.subr.mxu0 0.0
    %1666 = vmatpush1.msra.mxu0 %v1595
    %1667 = vmatprep.subr.mxu0 0.0
    %1668 = vmatpush1.msra.mxu0 %v1594
    %1669 = vmatprep.subr.mxu0 0.0
    %1670 = vmatpush1.msra.mxu0 %v1593
    %1671 = vmatprep.subr.mxu0 0.0
    %1672 = vmatpush1.msra.mxu0 %v1592
    %1673 = vmatprep.subr.mxu0 0.0
    %1674 = vmatpush1.msra.mxu0 %v1591
    %1675 = vmatprep.subr.mxu0 0.0
    %1676 = vmatpush1.msra.mxu0 %v1590
    %1677 = vmatprep.subr.mxu0 0.0
    %1678 = vmatpush1.msra.mxu0 %v1589
    %1679 = vmatprep.subr.mxu0 0.0
    %1680 = vmatpush1.msra.mxu0 %v1588
    %1681 = vmatprep.subr.mxu0 0.0
    %1682 = vmatpush1.msra.mxu0 %v1587
    %1683 = vmatprep.subr.mxu0 0.0
    %1684 = vmatpush2.msra.mxu0 %v1618
    %1685 = vmatprep.subr.mxu0 0.0
    %1686 = vmatpush2.msra.mxu0 %v1617
    %1687 = vmatprep.subr.mxu0 0.0
    %1688 = vmatpush2.msra.mxu0 %v1616
    %1689 = vmatprep.subr.mxu0 0.0
    %1690 = vmatpush2.msra.mxu0 %v1615
    %1691 = vmatprep.subr.mxu0 0.0
    %1692 = vmatpush2.msra.mxu0 %v1614
    %1693 = vmatprep.subr.mxu0 0.0
    %1694 = vmatpush2.msra.mxu0 %v1613
    %1695 = vmatprep.subr.mxu0 0.0
    %1696 = vmatpush2.msra.mxu0 %v1612
    %1697 = vmatprep.subr.mxu0 0.0
    %1698 = vmatpush2.msra.mxu0 %v1611
    %1699 = vmatprep.subr.mxu0 0.0
    %1700 = vmatpush2.msra.mxu0 %v1610
    %1701 = vmatprep.subr.mxu0 0.0
    %1702 = vmatpush2.msra.mxu0 %v1609
    %1703 = vmatprep.subr.mxu0 0.0
    %1704 = vmatpush2.msra.mxu0 %v1608
    %1705 = vmatprep.subr.mxu0 0.0
    %1706 = vmatpush2.msra.mxu0 %v1607
    %1707 = vmatprep.subr.mxu0 0.0
    %1708 = vmatpush2.msra.mxu0 %v1606
    %1709 = vmatprep.subr.mxu0 0.0
    %1710 = vmatpush2.msra.mxu0 %v1605
    %1711 = vmatprep.subr.mxu0 0.0
    %1712 = vmatpush2.msra.mxu0 %v1604
    %1713 = vmatprep.subr.mxu0 0.0
    %1714 = vmatpush2.msra.mxu0 %v1603
    %1715 = vmatprep.mubr.f32.mxu0 %v795
    %1716 = vmatmul.mubr.f32.gmra.mxu0 %v787
    %v1717 = vpop.f32.mrf.mxu0
    %v1718 = vadd.f32 1e-05, %v1717
    %v1719 = vpop.f32.mrf.mxu0
    %1720 = vdwg.mxu0
    %1721 = vmatprep.subr.mxu0 0.0
    %1722 = vmatpush1.msra.mxu0 %v1634
    %1723 = vmatprep.subr.mxu0 0.0
    %1724 = vmatpush1.msra.mxu0 %v1633
    %1725 = vmatprep.subr.mxu0 0.0
    %1726 = vmatpush1.msra.mxu0 %v1632
    %1727 = vmatprep.subr.mxu0 0.0
    %1728 = vmatpush1.msra.mxu0 %v1631
    %1729 = vmatprep.subr.mxu0 0.0
    %1730 = vmatpush1.msra.mxu0 %v1630
    %1731 = vmatprep.subr.mxu0 0.0
    %1732 = vmatpush1.msra.mxu0 %v1629
    %1733 = vmatprep.subr.mxu0 0.0
    %1734 = vmatpush1.msra.mxu0 %v1628
    %1735 = vmatprep.subr.mxu0 0.0
    %1736 = vmatpush1.msra.mxu0 %v1627
    %1737 = vmatprep.subr.mxu0 0.0
    %1738 = vmatpush1.msra.mxu0 %v1626
    %1739 = vmatprep.subr.mxu0 0.0
    %1740 = vmatpush1.msra.mxu0 %v1625
    %1741 = vmatprep.subr.mxu0 0.0
    %1742 = vmatpush1.msra.mxu0 %v1624
    %1743 = vmatprep.subr.mxu0 0.0
    %1744 = vmatpush1.msra.mxu0 %v1623
    %1745 = vmatprep.subr.mxu0 0.0
    %1746 = vmatpush1.msra.mxu0 %v1622
    %1747 = vmatprep.subr.mxu0 0.0
    %1748 = vmatpush1.msra.mxu0 %v1621
    %1749 = vmatprep.subr.mxu0 0.0
    %1750 = vmatpush1.msra.mxu0 %v1620
    %1751 = vmatprep.subr.mxu0 0.0
    %1752 = vmatpush1.msra.mxu0 %v1619
    %1753 = vmatprep.subr.mxu0 0.0
    %1754 = vmatpush2.msra.mxu0 %v1650
    %1755 = vmatprep.subr.mxu0 0.0
    %1756 = vmatpush2.msra.mxu0 %v1649
    %1757 = vmatprep.subr.mxu0 0.0
    %1758 = vmatpush2.msra.mxu0 %v1648
    %1759 = vmatprep.subr.mxu0 0.0
    %1760 = vmatpush2.msra.mxu0 %v1647
    %1761 = vmatprep.subr.mxu0 0.0
    %1762 = vmatpush2.msra.mxu0 %v1646
    %1763 = vmatprep.subr.mxu0 0.0
    %1764 = vmatpush2.msra.mxu0 %v1645
    %1765 = vmatprep.subr.mxu0 0.0
    %1766 = vmatpush2.msra.mxu0 %v1644
    %1767 = vmatprep.subr.mxu0 0.0
    %1768 = vmatpush2.msra.mxu0 %v1643
    %1769 = vmatprep.subr.mxu0 0.0
    %1770 = vmatpush2.msra.mxu0 %v1642
    %1771 = vmatprep.subr.mxu0 0.0
    %1772 = vmatpush2.msra.mxu0 %v1641
    %1773 = vmatprep.subr.mxu0 0.0
    %1774 = vmatpush2.msra.mxu0 %v1640
    %1775 = vmatprep.subr.mxu0 0.0
    %1776 = vmatpush2.msra.mxu0 %v1639
    %1777 = vmatprep.subr.mxu0 0.0
    %1778 = vmatpush2.msra.mxu0 %v1638
    %1779 = vmatprep.subr.mxu0 0.0
    %1780 = vmatpush2.msra.mxu0 %v1637
    %1781 = vmatprep.subr.mxu0 0.0
    %1782 = vmatpush2.msra.mxu0 %v1636
    %1783 = vmatprep.subr.mxu0 0.0
    %1784 = vmatpush2.msra.mxu0 %v1635
    %1785 = vmatprep.mubr.f32.mxu0 %v796
    %1786 = vmatmul.mubr.f32.gmra.mxu0 %v794
    %v1787 = vpop.f32.mrf.mxu0
    %v1788 = vadd.f32 %v1718, %v1787
    %v1789 = vpop.f32.mrf.mxu0
    %1790 = vdwg.mxu0
    %v1791 = vrsqrt.pop %v1788
    %v1793 = vsel %vm1134, %v1791, 0
    %1795 = vmatprep.subr.mxu0 0.0
    %1796 = vmatpush1.msra.mxu0 0.0
    %1797 = vmatprep.subr.mxu0 0.0
    %1798 = vmatpush1.msra.mxu0 0.0
    %1799 = vmatprep.subr.mxu0 0.0
    %1800 = vmatpush1.msra.mxu0 0.0
    %1801 = vmatprep.subr.mxu0 0.0
    %1802 = vmatpush1.msra.mxu0 0.0
    %1803 = vmatprep.subr.mxu0 0.0
    %1804 = vmatpush1.msra.mxu0 0.0
    %1805 = vmatprep.subr.mxu0 0.0
    %1806 = vmatpush1.msra.mxu0 0.0
    %1807 = vmatprep.subr.mxu0 0.0
    %1808 = vmatpush1.msra.mxu0 0.0
    %1809 = vmatprep.subr.mxu0 0.0
    %1810 = vmatpush1.msra.mxu0 0.0
    %1811 = vmatprep.subr.mxu0 0.0
    %1812 = vmatpush1.msra.mxu0 0.0
    %1813 = vmatprep.subr.mxu0 0.0
    %1814 = vmatpush1.msra.mxu0 0.0
    %1815 = vmatprep.subr.mxu0 0.0
    %1816 = vmatpush1.msra.mxu0 0.0
    %1817 = vmatprep.subr.mxu0 0.0
    %1818 = vmatpush1.msra.mxu0 0.0
    %1819 = vmatprep.subr.mxu0 0.0
    %1820 = vmatpush1.msra.mxu0 0.0
    %1821 = vmatprep.subr.mxu0 0.0
    %1822 = vmatpush1.msra.mxu0 0.0
    %1823 = vmatprep.subr.mxu0 0.0
    %1824 = vmatpush1.msra.mxu0 0.0
    %1825 = vmatprep.subr.mxu0 0.0
    %1826 = vmatpush1.msra.mxu0 %v1793
    %1827 = vmatprep.subr.mxu0 0.0
    %1828 = vmatpush2.msra.mxu0 0.0
    %1829 = vmatprep.subr.mxu0 0.0
    %1830 = vmatpush2.msra.mxu0 0.0
    %1831 = vmatprep.subr.mxu0 0.0
    %1832 = vmatpush2.msra.mxu0 0.0
    %1833 = vmatprep.subr.mxu0 0.0
    %1834 = vmatpush2.msra.mxu0 0.0
    %1835 = vmatprep.subr.mxu0 0.0
    %1836 = vmatpush2.msra.mxu0 0.0
    %1837 = vmatprep.subr.mxu0 0.0
    %1838 = vmatpush2.msra.mxu0 0.0
    %1839 = vmatprep.subr.mxu0 0.0
    %1840 = vmatpush2.msra.mxu0 0.0
    %1841 = vmatprep.subr.mxu0 0.0
    %1842 = vmatpush2.msra.mxu0 0.0
    %1843 = vmatprep.subr.mxu0 0.0
    %1844 = vmatpush2.msra.mxu0 0.0
    %1845 = vmatprep.subr.mxu0 0.0
    %1846 = vmatpush2.msra.mxu0 0.0
    %1847 = vmatprep.subr.mxu0 0.0
    %1848 = vmatpush2.msra.mxu0 0.0
    %1849 = vmatprep.subr.mxu0 0.0
    %1850 = vmatpush2.msra.mxu0 0.0
    %1851 = vmatprep.subr.mxu0 0.0
    %1852 = vmatpush2.msra.mxu0 0.0
    %1853 = vmatprep.subr.mxu0 0.0
    %1854 = vmatpush2.msra.mxu0 0.0
    %1855 = vmatprep.subr.mxu0 0.0
    %1856 = vmatpush2.msra.mxu0 0.0
    %1857 = vmatprep.subr.mxu0 0.0
    %1858 = vmatpush2.msra.mxu0 0.0
    %1859 = vmatprep.mubr.f32.mxu0 0.0
    %1860 = vmatmul.mubr.f32.gmra.mxu0 %v943
    %v1861 = vpop.f32.mrf.mxu0
    %v1862 = vadd.f32 0.0, %v1861
    %v1863 = vpop.f32.mrf.mxu0
    %1864 = vmatprep.mubr.f32.mxu0 0.0
    %1865 = vmatmul.mubr.f32.gmra.mxu0 %v946
    %v1866 = vpop.f32.mrf.mxu0
    %v1867 = vadd.f32 0.0, %v1866
    %v1868 = vpop.f32.mrf.mxu0
    %1869 = vmatprep.mubr.f32.mxu0 0.0
    %1870 = vmatmul.mubr.f32.gmra.mxu0 %v949
    %v1871 = vpop.f32.mrf.mxu0
    %v1872 = vadd.f32 0.0, %v1871
    %v1873 = vpop.f32.mrf.mxu0
    %1874 = vmatprep.mubr.f32.mxu0 0.0
    %1875 = vmatmul.mubr.f32.gmra.mxu0 %v952
    %v1876 = vpop.f32.mrf.mxu0
    %v1877 = vadd.f32 0.0, %v1876
    %v1878 = vpop.f32.mrf.mxu0
    %1879 = vmatprep.mubr.f32.mxu0 0.0
    %1880 = vmatmul.mubr.f32.gmra.mxu0 %v955
    %v1881 = vpop.f32.mrf.mxu0
    %v1882 = vadd.f32 0.0, %v1881
    %v1883 = vpop.f32.mrf.mxu0
    %1884 = vmatprep.mubr.f32.mxu0 0.0
    %1885 = vmatmul.mubr.f32.gmra.mxu0 %v958
    %v1886 = vpop.f32.mrf.mxu0
    %v1887 = vadd.f32 0.0, %v1886
    %v1888 = vpop.f32.mrf.mxu0
    %1889 = vmatprep.mubr.f32.mxu0 0.0
    %1890 = vmatmul.mubr.f32.gmra.mxu0 %v961
    %v1891 = vpop.f32.mrf.mxu0
    %v1892 = vadd.f32 0.0, %v1891
    %v1893 = vpop.f32.mrf.mxu0
    %1894 = vmatprep.mubr.f32.mxu0 0.0
    %1895 = vmatmul.mubr.f32.gmra.mxu0 %v964
    %v1896 = vpop.f32.mrf.mxu0
    %v1897 = vadd.f32 0.0, %v1896
    %v1898 = vpop.f32.mrf.mxu0
    %1899 = vmatprep.mubr.f32.mxu0 0.0
    %1900 = vmatmul.mubr.f32.gmra.mxu0 %v967
    %v1901 = vpop.f32.mrf.mxu0
    %v1902 = vadd.f32 0.0, %v1901
    %v1903 = vpop.f32.mrf.mxu0
    %1904 = vmatprep.mubr.f32.mxu0 0.0
    %1905 = vmatmul.mubr.f32.gmra.mxu0 %v970
    %v1906 = vpop.f32.mrf.mxu0
    %v1907 = vadd.f32 0.0, %v1906
    %v1908 = vpop.f32.mrf.mxu0
    %1909 = vmatprep.mubr.f32.mxu0 0.0
    %1910 = vmatmul.mubr.f32.gmra.mxu0 %v973
    %v1911 = vpop.f32.mrf.mxu0
    %v1912 = vadd.f32 0.0, %v1911
    %v1913 = vpop.f32.mrf.mxu0
    %1914 = vmatprep.mubr.f32.mxu0 0.0
    %1915 = vmatmul.mubr.f32.gmra.mxu0 %v976
    %v1916 = vpop.f32.mrf.mxu0
    %v1917 = vadd.f32 0.0, %v1916
    %v1918 = vpop.f32.mrf.mxu0
    %1919 = vmatprep.mubr.f32.mxu0 0.0
    %1920 = vmatmul.mubr.f32.gmra.mxu0 %v979
    %v1921 = vpop.f32.mrf.mxu0
    %v1922 = vadd.f32 0.0, %v1921
    %v1923 = vpop.f32.mrf.mxu0
    %1924 = vmatprep.mubr.f32.mxu0 0.0
    %1925 = vmatmul.mubr.f32.gmra.mxu0 %v982
    %v1926 = vpop.f32.mrf.mxu0
    %v1927 = vadd.f32 0.0, %v1926
    %v1928 = vpop.f32.mrf.mxu0
    %1929 = vmatprep.mubr.f32.mxu0 0.0
    %1930 = vmatmul.mubr.f32.gmra.mxu0 %v985
    %v1931 = vpop.f32.mrf.mxu0
    %v1932 = vadd.f32 0.0, %v1931
    %v1933 = vpop.f32.mrf.mxu0
    %1934 = vmatprep.mubr.f32.mxu0 0.0
    %1935 = vmatmul.mubr.f32.gmra.mxu0 %v988
    %v1936 = vpop.f32.mrf.mxu0
    %v1937 = vadd.f32 0.0, %v1936
    %v1938 = vpop.f32.mrf.mxu0
    %1939 = vmatprep.mubr.f32.mxu0 0.0
    %1940 = vmatmul.mubr.f32.gmra.mxu0 %v991
    %v1941 = vpop.f32.mrf.mxu0
    %v1942 = vadd.f32 0.0, %v1941
    %v1943 = vpop.f32.mrf.mxu0
    %1944 = vmatprep.mubr.f32.mxu0 0.0
    %1945 = vmatmul.mubr.f32.gmra.mxu0 %v994
    %v1946 = vpop.f32.mrf.mxu0
    %v1947 = vadd.f32 0.0, %v1946
    %v1948 = vpop.f32.mrf.mxu0
    %1949 = vmatprep.mubr.f32.mxu0 0.0
    %1950 = vmatmul.mubr.f32.gmra.mxu0 %v997
    %v1951 = vpop.f32.mrf.mxu0
    %v1952 = vadd.f32 0.0, %v1951
    %v1953 = vpop.f32.mrf.mxu0
    %1954 = vmatprep.mubr.f32.mxu0 0.0
    %1955 = vmatmul.mubr.f32.gmra.mxu0 %v1000
    %v1956 = vpop.f32.mrf.mxu0
    %v1957 = vadd.f32 0.0, %v1956
    %v1958 = vpop.f32.mrf.mxu0
    %1959 = vmatprep.mubr.f32.mxu0 0.0
    %1960 = vmatmul.mubr.f32.gmra.mxu0 %v1003
    %v1961 = vpop.f32.mrf.mxu0
    %v1962 = vadd.f32 0.0, %v1961
    %v1963 = vpop.f32.mrf.mxu0
    %1964 = vmatprep.mubr.f32.mxu0 0.0
    %1965 = vmatmul.mubr.f32.gmra.mxu0 %v1006
    %v1966 = vpop.f32.mrf.mxu0
    %v1967 = vadd.f32 0.0, %v1966
    %v1968 = vpop.f32.mrf.mxu0
    %1969 = vmatprep.mubr.f32.mxu0 0.0
    %1970 = vmatmul.mubr.f32.gmra.mxu0 %v1009
    %v1971 = vpop.f32.mrf.mxu0
    %v1972 = vadd.f32 0.0, %v1971
    %v1973 = vpop.f32.mrf.mxu0
    %1974 = vmatprep.mubr.f32.mxu0 0.0
    %1975 = vmatmul.mubr.f32.gmra.mxu0 %v1012
    %v1976 = vpop.f32.mrf.mxu0
    %v1977 = vadd.f32 0.0, %v1976
    %v1978 = vpop.f32.mrf.mxu0
    %1979 = vmatprep.mubr.f32.mxu0 0.0
    %1980 = vmatmul.mubr.f32.gmra.mxu0 %v1015
    %v1981 = vpop.f32.mrf.mxu0
    %v1982 = vadd.f32 0.0, %v1981
    %v1983 = vpop.f32.mrf.mxu0
    %1984 = vmatprep.mubr.f32.mxu0 0.0
    %1985 = vmatmul.mubr.f32.gmra.mxu0 %v1018
    %v1986 = vpop.f32.mrf.mxu0
    %v1987 = vadd.f32 0.0, %v1986
    %v1988 = vpop.f32.mrf.mxu0
    %1989 = vmatprep.mubr.f32.mxu0 0.0
    %1990 = vmatmul.mubr.f32.gmra.mxu0 %v1021
    %v1991 = vpop.f32.mrf.mxu0
    %v1992 = vadd.f32 0.0, %v1991
    %v1993 = vpop.f32.mrf.mxu0
    %1994 = vmatprep.mubr.f32.mxu0 0.0
    %1995 = vmatmul.mubr.f32.gmra.mxu0 %v1024
    %v1996 = vpop.f32.mrf.mxu0
    %v1997 = vadd.f32 0.0, %v1996
    %v1998 = vpop.f32.mrf.mxu0
    %1999 = vmatprep.mubr.f32.mxu0 0.0
    %2000 = vmatmul.mubr.f32.gmra.mxu0 %v1027
    %v2001 = vpop.f32.mrf.mxu0
    %v2002 = vadd.f32 0.0, %v2001
    %v2003 = vpop.f32.mrf.mxu0
    %2004 = vmatprep.mubr.f32.mxu0 0.0
    %2005 = vmatmul.mubr.f32.gmra.mxu0 %v1030
    %v2006 = vpop.f32.mrf.mxu0
    %v2007 = vadd.f32 0.0, %v2006
    %v2008 = vpop.f32.mrf.mxu0
    %2009 = vmatprep.mubr.f32.mxu0 0.0
    %2010 = vmatmul.mubr.f32.gmra.mxu0 %v1033
    %v2011 = vpop.f32.mrf.mxu0
    %v2012 = vadd.f32 0.0, %v2011
    %v2013 = vpop.f32.mrf.mxu0
    %2014 = vmatprep.mubr.f32.mxu0 0.0
    %2015 = vmatmul.mubr.f32.gmra.mxu0 %v1036
    %v2016 = vpop.f32.mrf.mxu0
    %v2017 = vadd.f32 0.0, %v2016
    %v2018 = vpop.f32.mrf.mxu0
    %2019 = vmatprep.mubr.f32.mxu0 0.0
    %2020 = vmatmul.mubr.f32.gmra.mxu0 %v1039
    %v2021 = vpop.f32.mrf.mxu0
    %v2022 = vadd.f32 0.0, %v2021
    %v2023 = vpop.f32.mrf.mxu0
    %2024 = vmatprep.mubr.f32.mxu0 0.0
    %2025 = vmatmul.mubr.f32.gmra.mxu0 %v1042
    %v2026 = vpop.f32.mrf.mxu0
    %v2027 = vadd.f32 0.0, %v2026
    %v2028 = vpop.f32.mrf.mxu0
    %2029 = vmatprep.mubr.f32.mxu0 0.0
    %2030 = vmatmul.mubr.f32.gmra.mxu0 %v1045
    %v2031 = vpop.f32.mrf.mxu0
    %v2032 = vadd.f32 0.0, %v2031
    %v2033 = vpop.f32.mrf.mxu0
    %2034 = vmatprep.mubr.f32.mxu0 0.0
    %2035 = vmatmul.mubr.f32.gmra.mxu0 %v1048
    %v2036 = vpop.f32.mrf.mxu0
    %v2037 = vadd.f32 0.0, %v2036
    %v2038 = vpop.f32.mrf.mxu0
    %2039 = vmatprep.mubr.f32.mxu0 0.0
    %2040 = vmatmul.mubr.f32.gmra.mxu0 %v1051
    %v2041 = vpop.f32.mrf.mxu0
    %v2042 = vadd.f32 0.0, %v2041
    %v2043 = vpop.f32.mrf.mxu0
    %2044 = vmatprep.mubr.f32.mxu0 0.0
    %2045 = vmatmul.mubr.f32.gmra.mxu0 %v1054
    %v2046 = vpop.f32.mrf.mxu0
    %v2047 = vadd.f32 0.0, %v2046
    %v2048 = vpop.f32.mrf.mxu0
    %2049 = vmatprep.mubr.f32.mxu0 0.0
    %2050 = vmatmul.mubr.f32.gmra.mxu0 %v1057
    %v2051 = vpop.f32.mrf.mxu0
    %v2052 = vadd.f32 0.0, %v2051
    %v2053 = vpop.f32.mrf.mxu0
    %2054 = vmatprep.mubr.f32.mxu0 0.0
    %2055 = vmatmul.mubr.f32.gmra.mxu0 %v1060
    %v2056 = vpop.f32.mrf.mxu0
    %v2057 = vadd.f32 0.0, %v2056
    %v2058 = vpop.f32.mrf.mxu0
    %2059 = vmatprep.mubr.f32.mxu0 0.0
    %2060 = vmatmul.mubr.f32.gmra.mxu0 %v1063
    %v2061 = vpop.f32.mrf.mxu0
    %v2062 = vadd.f32 0.0, %v2061
    %v2063 = vpop.f32.mrf.mxu0
    %2064 = vmatprep.mubr.f32.mxu0 0.0
    %2065 = vmatmul.mubr.f32.gmra.mxu0 %v1066
    %v2066 = vpop.f32.mrf.mxu0
    %v2067 = vadd.f32 0.0, %v2066
    %v2068 = vpop.f32.mrf.mxu0
    %2069 = vmatprep.mubr.f32.mxu0 0.0
    %2070 = vmatmul.mubr.f32.gmra.mxu0 %v1069
    %v2071 = vpop.f32.mrf.mxu0
    %v2072 = vadd.f32 0.0, %v2071
    %v2073 = vpop.f32.mrf.mxu0
    %2074 = vmatprep.mubr.f32.mxu0 0.0
    %2075 = vmatmul.mubr.f32.gmra.mxu0 %v1072
    %v2076 = vpop.f32.mrf.mxu0
    %v2077 = vadd.f32 0.0, %v2076
    %v2078 = vpop.f32.mrf.mxu0
    %2079 = vmatprep.mubr.f32.mxu0 0.0
    %2080 = vmatmul.mubr.f32.gmra.mxu0 %v1075
    %v2081 = vpop.f32.mrf.mxu0
    %v2082 = vadd.f32 0.0, %v2081
    %v2083 = vpop.f32.mrf.mxu0
    %2084 = vmatprep.mubr.f32.mxu0 0.0
    %2085 = vmatmul.mubr.f32.gmra.mxu0 %v1078
    %v2086 = vpop.f32.mrf.mxu0
    %v2087 = vadd.f32 0.0, %v2086
    %v2088 = vpop.f32.mrf.mxu0
    %2089 = vmatprep.mubr.f32.mxu0 0.0
    %2090 = vmatmul.mubr.f32.gmra.mxu0 %v1081
    %v2091 = vpop.f32.mrf.mxu0
    %v2092 = vadd.f32 0.0, %v2091
    %v2093 = vpop.f32.mrf.mxu0
    %2094 = vmatprep.mubr.f32.mxu0 0.0
    %2095 = vmatmul.mubr.f32.gmra.mxu0 %v1084
    %v2096 = vpop.f32.mrf.mxu0
    %v2097 = vadd.f32 0.0, %v2096
    %v2098 = vpop.f32.mrf.mxu0
    %2099 = vmatprep.mubr.f32.mxu0 0.0
    %2100 = vmatmul.mubr.f32.gmra.mxu0 %v1087
    %v2101 = vpop.f32.mrf.mxu0
    %v2102 = vadd.f32 0.0, %v2101
    %v2103 = vpop.f32.mrf.mxu0
    %2104 = vmatprep.mubr.f32.mxu0 0.0
    %2105 = vmatmul.mubr.f32.gmra.mxu0 %v1090
    %v2106 = vpop.f32.mrf.mxu0
    %v2107 = vadd.f32 0.0, %v2106
    %v2108 = vpop.f32.mrf.mxu0
    %2109 = vmatprep.mubr.f32.mxu0 0.0
    %2110 = vmatmul.mubr.f32.gmra.mxu0 %v1093
    %v2111 = vpop.f32.mrf.mxu0
    %v2112 = vadd.f32 0.0, %v2111
    %v2113 = vpop.f32.mrf.mxu0
    %2114 = vmatprep.mubr.f32.mxu0 0.0
    %2115 = vmatmul.mubr.f32.gmra.mxu0 %v1096
    %v2116 = vpop.f32.mrf.mxu0
    %v2117 = vadd.f32 0.0, %v2116
    %v2118 = vpop.f32.mrf.mxu0
    %2119 = vmatprep.mubr.f32.mxu0 0.0
    %2120 = vmatmul.mubr.f32.gmra.mxu0 %v1099
    %v2121 = vpop.f32.mrf.mxu0
    %v2122 = vadd.f32 0.0, %v2121
    %v2123 = vpop.f32.mrf.mxu0
    %2124 = vmatprep.mubr.f32.mxu0 0.0
    %2125 = vmatmul.mubr.f32.gmra.mxu0 %v1102
    %v2126 = vpop.f32.mrf.mxu0
    %v2127 = vadd.f32 0.0, %v2126
    %v2128 = vpop.f32.mrf.mxu0
    %2129 = vmatprep.mubr.f32.mxu0 0.0
    %2130 = vmatmul.mubr.f32.gmra.mxu0 %v1105
    %v2131 = vpop.f32.mrf.mxu0
    %v2132 = vadd.f32 0.0, %v2131
    %v2133 = vpop.f32.mrf.mxu0
    %2134 = vmatprep.mubr.f32.mxu0 0.0
    %2135 = vmatmul.mubr.f32.gmra.mxu0 %v1108
    %v2136 = vpop.f32.mrf.mxu0
    %v2137 = vadd.f32 0.0, %v2136
    %v2138 = vpop.f32.mrf.mxu0
    %2139 = vmatprep.mubr.f32.mxu0 0.0
    %2140 = vmatmul.mubr.f32.gmra.mxu0 %v1111
    %v2141 = vpop.f32.mrf.mxu0
    %v2142 = vadd.f32 0.0, %v2141
    %v2143 = vpop.f32.mrf.mxu0
    %2144 = vmatprep.mubr.f32.mxu0 0.0
    %2145 = vmatmul.mubr.f32.gmra.mxu0 %v1114
    %v2146 = vpop.f32.mrf.mxu0
    %v2147 = vadd.f32 0.0, %v2146
    %v2148 = vpop.f32.mrf.mxu0
    %2149 = vmatprep.mubr.f32.mxu0 0.0
    %2150 = vmatmul.mubr.f32.gmra.mxu0 %v1117
    %v2151 = vpop.f32.mrf.mxu0
    %v2152 = vadd.f32 0.0, %v2151
    %v2153 = vpop.f32.mrf.mxu0
    %2154 = vmatprep.mubr.f32.mxu0 0.0
    %2155 = vmatmul.mubr.f32.gmra.mxu0 %v1120
    %v2156 = vpop.f32.mrf.mxu0
    %v2157 = vadd.f32 0.0, %v2156
    %v2158 = vpop.f32.mrf.mxu0
    %2159 = vmatprep.mubr.f32.mxu0 0.0
    %2160 = vmatmul.mubr.f32.gmra.mxu0 %v1123
    %v2161 = vpop.f32.mrf.mxu0
    %v2162 = vadd.f32 0.0, %v2161
    %v2163 = vpop.f32.mrf.mxu0
    %2164 = vmatprep.mubr.f32.mxu0 0.0
    %2165 = vmatmul.mubr.f32.gmra.mxu0 %v1126
    %v2166 = vpop.f32.mrf.mxu0
    %v2167 = vadd.f32 0.0, %v2166
    %v2168 = vpop.f32.mrf.mxu0
    %2169 = vmatprep.mubr.f32.mxu0 0.0
    %2170 = vmatmul.mubr.f32.gmra.mxu0 %v1129
    %v2171 = vpop.f32.mrf.mxu0
    %v2172 = vadd.f32 0.0, %v2171
    %v2173 = vpop.f32.mrf.mxu0
    %2174 = vmatprep.mubr.f32.mxu0 0.0
    %2175 = vmatmul.mubr.f32.gmra.mxu0 %v1132
    %v2176 = vpop.f32.mrf.mxu0
    %v2177 = vadd.f32 0.0, %v2176
    %v2178 = vpop.f32.mrf.mxu0
    %2179 = vdwg.mxu0
    %v2180 = vmul.f32 %v1523, %v1862
    %v2181 = vmul.f32 %v1524, %v1867
    %v2182 = vmul.f32 %v1525, %v1872
    %v2183 = vmul.f32 %v1526, %v1877
    %v2184 = vmul.f32 %v1527, %v1882
    %v2185 = vmul.f32 %v1528, %v1887
    %v2186 = vmul.f32 %v1529, %v1892
    %v2187 = vmul.f32 %v1530, %v1897
    %v2188 = vmul.f32 %v1531, %v1902
    %v2189 = vmul.f32 %v1532, %v1907
    %v2190 = vmul.f32 %v1533, %v1912
    %v2191 = vmul.f32 %v1534, %v1917
    %v2192 = vmul.f32 %v1535, %v1922
    %v2193 = vmul.f32 %v1536, %v1927
    %v2194 = vmul.f32 %v1537, %v1932
    %v2195 = vmul.f32 %v1538, %v1937
    %v2196 = vmul.f32 %v1539, %v1942
    %v2197 = vmul.f32 %v1540, %v1947
    %v2198 = vmul.f32 %v1541, %v1952
    %v2199 = vmul.f32 %v1542, %v1957
    %v2200 = vmul.f32 %v1543, %v1962
    %v2201 = vmul.f32 %v1544, %v1967
    %v2202 = vmul.f32 %v1545, %v1972
    %v2203 = vmul.f32 %v1546, %v1977
    %v2204 = vmul.f32 %v1547, %v1982
    %v2205 = vmul.f32 %v1548, %v1987
    %v2206 = vmul.f32 %v1549, %v1992
    %v2207 = vmul.f32 %v1550, %v1997
    %v2208 = vmul.f32 %v1551, %v2002
    %v2209 = vmul.f32 %v1552, %v2007
    %v2210 = vmul.f32 %v1553, %v2012
    %v2211 = vmul.f32 %v1554, %v2017
    %v2212 = vmul.f32 %v1555, %v2022
    %v2213 = vmul.f32 %v1556, %v2027
    %v2214 = vmul.f32 %v1557, %v2032
    %v2215 = vmul.f32 %v1558, %v2037
    %v2216 = vmul.f32 %v1559, %v2042
    %v2217 = vmul.f32 %v1560, %v2047
    %v2218 = vmul.f32 %v1561, %v2052
    %v2219 = vmul.f32 %v1562, %v2057
    %v2220 = vmul.f32 %v1563, %v2062
    %v2221 = vmul.f32 %v1564, %v2067
    %v2222 = vmul.f32 %v1565, %v2072
    %v2223 = vmul.f32 %v1566, %v2077
    %v2224 = vmul.f32 %v1567, %v2082
    %v2225 = vmul.f32 %v1568, %v2087
    %v2226 = vmul.f32 %v1569, %v2092
    %v2227 = vmul.f32 %v1570, %v2097
    %v2228 = vmul.f32 %v1571, %v2102
    %v2229 = vmul.f32 %v1572, %v2107
    %v2230 = vmul.f32 %v1573, %v2112
    %v2231 = vmul.f32 %v1574, %v2117
    %v2232 = vmul.f32 %v1575, %v2122
    %v2233 = vmul.f32 %v1576, %v2127
    %v2234 = vmul.f32 %v1577, %v2132
    %v2235 = vmul.f32 %v1578, %v2137
    %v2236 = vmul.f32 %v1579, %v2142
    %v2237 = vmul.f32 %v1580, %v2147
    %v2238 = vmul.f32 %v1581, %v2152
    %v2239 = vmul.f32 %v1582, %v2157
    %v2240 = vmul.f32 %v1583, %v2162
    %v2241 = vmul.f32 %v1584, %v2167
    %v2242 = vmul.f32 %v1585, %v2172
    %v2243 = vmul.f32 %v1586, %v2177
    %v2244 = vmax.f32 %v2180, 0.0
    %v2245 = vmax.f32 %v2181, 0.0
    %v2246 = vmax.f32 %v2182, 0.0
    %v2247 = vmax.f32 %v2183, 0.0
    %v2248 = vmax.f32 %v2184, 0.0
    %v2249 = vmax.f32 %v2185, 0.0
    %v2250 = vmax.f32 %v2186, 0.0
    %v2251 = vmax.f32 %v2187, 0.0
    %v2252 = vmax.f32 %v2188, 0.0
    %v2253 = vmax.f32 %v2189, 0.0
    %v2254 = vmax.f32 %v2190, 0.0
    %v2255 = vmax.f32 %v2191, 0.0
    %v2256 = vmax.f32 %v2192, 0.0
    %v2257 = vmax.f32 %v2193, 0.0
    %v2258 = vmax.f32 %v2194, 0.0
    %v2259 = vmax.f32 %v2195, 0.0
    %v2260 = vmax.f32 %v2196, 0.0
    %v2261 = vmax.f32 %v2197, 0.0
    %v2262 = vmax.f32 %v2198, 0.0
    %v2263 = vmax.f32 %v2199, 0.0
    %v2264 = vmax.f32 %v2200, 0.0
    %v2265 = vmax.f32 %v2201, 0.0
    %v2266 = vmax.f32 %v2202, 0.0
    %v2267 = vmax.f32 %v2203, 0.0
    %v2268 = vmax.f32 %v2204, 0.0
    %v2269 = vmax.f32 %v2205, 0.0
    %v2270 = vmax.f32 %v2206, 0.0
    %v2271 = vmax.f32 %v2207, 0.0
    %v2272 = vmax.f32 %v2208, 0.0
    %v2273 = vmax.f32 %v2209, 0.0
    %v2274 = vmax.f32 %v2210, 0.0
    %v2275 = vmax.f32 %v2211, 0.0
    %v2276 = vmax.f32 %v2212, 0.0
    %v2277 = vmax.f32 %v2213, 0.0
    %v2278 = vmax.f32 %v2214, 0.0
    %v2279 = vmax.f32 %v2215, 0.0
    %v2280 = vmax.f32 %v2216, 0.0
    %v2281 = vmax.f32 %v2217, 0.0
    %v2282 = vmax.f32 %v2218, 0.0
    %v2283 = vmax.f32 %v2219, 0.0
    %v2284 = vmax.f32 %v2220, 0.0
    %v2285 = vmax.f32 %v2221, 0.0
    %v2286 = vmax.f32 %v2222, 0.0
    %v2287 = vmax.f32 %v2223, 0.0
    %v2288 = vmax.f32 %v2224, 0.0
    %v2289 = vmax.f32 %v2225, 0.0
    %v2290 = vmax.f32 %v2226, 0.0
    %v2291 = vmax.f32 %v2227, 0.0
    %v2292 = vmax.f32 %v2228, 0.0
    %v2293 = vmax.f32 %v2229, 0.0
    %v2294 = vmax.f32 %v2230, 0.0
    %v2295 = vmax.f32 %v2231, 0.0
    %v2296 = vmax.f32 %v2232, 0.0
    %v2297 = vmax.f32 %v2233, 0.0
    %v2298 = vmax.f32 %v2234, 0.0
    %v2299 = vmax.f32 %v2235, 0.0
    %v2300 = vmax.f32 %v2236, 0.0
    %v2301 = vmax.f32 %v2237, 0.0
    %v2302 = vmax.f32 %v2238, 0.0
    %v2303 = vmax.f32 %v2239, 0.0
    %v2304 = vmax.f32 %v2240, 0.0
    %v2305 = vmax.f32 %v2241, 0.0
    %v2306 = vmax.f32 %v2242, 0.0
    %v2307 = vmax.f32 %v2243, 0.0
    %vm2308 = vcmask 64512
    %2309 = vst.msk [vmem:[%s5] sm:$0xff] %vm2308, %v2244
    %2310 = vst.msk [vmem:[%s5 + $0x8] sm:$0xff] %vm2308, %v2245
    %2311 = vst.msk [vmem:[%s5 + $0x10] sm:$0xff] %vm2308, %v2246
    %2312 = vst.msk [vmem:[%s5 + $0x18] sm:$0xff] %vm2308, %v2247
    %2313 = vst.msk [vmem:[%s5 + $0x20] sm:$0xff] %vm2308, %v2248
    %2314 = vst.msk [vmem:[%s5 + $0x28] sm:$0xff] %vm2308, %v2249
    %2315 = vst.msk [vmem:[%s5 + $0x30] sm:$0xff] %vm2308, %v2250
    %2316 = vst.msk [vmem:[%s5 + $0x38] sm:$0xff] %vm2308, %v2251
    %2317 = vst.msk [vmem:[%s5 + $0x40] sm:$0xff] %vm2308, %v2252
    %2318 = vst.msk [vmem:[%s5 + $0x48] sm:$0xff] %vm2308, %v2253
    %2319 = vst.msk [vmem:[%s5 + $0x50] sm:$0xff] %vm2308, %v2254
    %2320 = vst.msk [vmem:[%s5 + $0x58] sm:$0xff] %vm2308, %v2255
    %2321 = vst.msk [vmem:[%s5 + $0x60] sm:$0xff] %vm2308, %v2256
    %2322 = vst.msk [vmem:[%s5 + $0x68] sm:$0xff] %vm2308, %v2257
    %2323 = vst.msk [vmem:[%s5 + $0x70] sm:$0xff] %vm2308, %v2258
    %2324 = vst.msk [vmem:[%s5 + $0x78] sm:$0xff] %vm2308, %v2259
    %2325 = vst.msk [vmem:[%s5 + $0x80] sm:$0xff] %vm2308, %v2260
    %2326 = vst.msk [vmem:[%s5 + $0x88] sm:$0xff] %vm2308, %v2261
    %2327 = vst.msk [vmem:[%s5 + $0x90] sm:$0xff] %vm2308, %v2262
    %2328 = vst.msk [vmem:[%s5 + $0x98] sm:$0xff] %vm2308, %v2263
    %2329 = vst.msk [vmem:[%s5 + $0xa0] sm:$0xff] %vm2308, %v2264
    %2330 = vst.msk [vmem:[%s5 + $0xa8] sm:$0xff] %vm2308, %v2265
    %2331 = vst.msk [vmem:[%s5 + $0xb0] sm:$0xff] %vm2308, %v2266
    %2332 = vst.msk [vmem:[%s5 + $0xb8] sm:$0xff] %vm2308, %v2267
    %2333 = vst.msk [vmem:[%s5 + $0xc0] sm:$0xff] %vm2308, %v2268
    %2334 = vst.msk [vmem:[%s5 + $0xc8] sm:$0xff] %vm2308, %v2269
    %2335 = vst.msk [vmem:[%s5 + $0xd0] sm:$0xff] %vm2308, %v2270
    %2336 = vst.msk [vmem:[%s5 + $0xd8] sm:$0xff] %vm2308, %v2271
    %2337 = vst.msk [vmem:[%s5 + $0xe0] sm:$0xff] %vm2308, %v2272
    %2338 = vst.msk [vmem:[%s5 + $0xe8] sm:$0xff] %vm2308, %v2273
    %2339 = vst.msk [vmem:[%s5 + $0xf0] sm:$0xff] %vm2308, %v2274
    %2340 = vst.msk [vmem:[%s5 + $0xf8] sm:$0xff] %vm2308, %v2275
    %2341 = vst.msk [vmem:[%s5 + $0x100] sm:$0xff] %vm2308, %v2276
    %2342 = vst.msk [vmem:[%s5 + $0x108] sm:$0xff] %vm2308, %v2277
    %2343 = vst.msk [vmem:[%s5 + $0x110] sm:$0xff] %vm2308, %v2278
    %2344 = vst.msk [vmem:[%s5 + $0x118] sm:$0xff] %vm2308, %v2279
    %2345 = vst.msk [vmem:[%s5 + $0x120] sm:$0xff] %vm2308, %v2280
    %2346 = vst.msk [vmem:[%s5 + $0x128] sm:$0xff] %vm2308, %v2281
    %2347 = vst.msk [vmem:[%s5 + $0x130] sm:$0xff] %vm2308, %v2282
    %2348 = vst.msk [vmem:[%s5 + $0x138] sm:$0xff] %vm2308, %v2283
    %2349 = vst.msk [vmem:[%s5 + $0x140] sm:$0xff] %vm2308, %v2284
    %2350 = vst.msk [vmem:[%s5 + $0x148] sm:$0xff] %vm2308, %v2285
    %2351 = vst.msk [vmem:[%s5 + $0x150] sm:$0xff] %vm2308, %v2286
    %2352 = vst.msk [vmem:[%s5 + $0x158] sm:$0xff] %vm2308, %v2287
    %2353 = vst.msk [vmem:[%s5 + $0x160] sm:$0xff] %vm2308, %v2288
    %2354 = vst.msk [vmem:[%s5 + $0x168] sm:$0xff] %vm2308, %v2289
    %2355 = vst.msk [vmem:[%s5 + $0x170] sm:$0xff] %vm2308, %v2290
    %2356 = vst.msk [vmem:[%s5 + $0x178] sm:$0xff] %vm2308, %v2291
    %2357 = vst.msk [vmem:[%s5 + $0x180] sm:$0xff] %vm2308, %v2292
    %2358 = vst.msk [vmem:[%s5 + $0x188] sm:$0xff] %vm2308, %v2293
    %2359 = vst.msk [vmem:[%s5 + $0x190] sm:$0xff] %vm2308, %v2294
    %2360 = vst.msk [vmem:[%s5 + $0x198] sm:$0xff] %vm2308, %v2295
    %2361 = vst.msk [vmem:[%s5 + $0x1a0] sm:$0xff] %vm2308, %v2296
    %2362 = vst.msk [vmem:[%s5 + $0x1a8] sm:$0xff] %vm2308, %v2297
    %2363 = vst.msk [vmem:[%s5 + $0x1b0] sm:$0xff] %vm2308, %v2298
    %2364 = vst.msk [vmem:[%s5 + $0x1b8] sm:$0xff] %vm2308, %v2299
    %2365 = vst.msk [vmem:[%s5 + $0x1c0] sm:$0xff] %vm2308, %v2300
    %2366 = vst.msk [vmem:[%s5 + $0x1c8] sm:$0xff] %vm2308, %v2301
    %2367 = vst.msk [vmem:[%s5 + $0x1d0] sm:$0xff] %vm2308, %v2302
    %2368 = vst.msk [vmem:[%s5 + $0x1d8] sm:$0xff] %vm2308, %v2303
    %2369 = vst.msk [vmem:[%s5 + $0x1e0] sm:$0xff] %vm2308, %v2304
    %2370 = vst.msk [vmem:[%s5 + $0x1e8] sm:$0xff] %vm2308, %v2305
    %2371 = vst.msk [vmem:[%s5 + $0x1f0] sm:$0xff] %vm2308, %v2306
    %2372 = vst.msk [vmem:[%s5 + $0x1f8] sm:$0xff] %vm2308, %v2307
    // Predicated region
    $region34: #{generator_forward.15} parent=1 // pred_check
      _
    $region35: #{generator_forward.15} parent=1 // pred_check_branch
      %2374 = sbr.rel (0) target = $region37
    $region36: #{generator_forward.15} parent=1 // pred_region
      _
    $region37: #{generator_forward.15} parent=1 // pred_fallthru
      _
    // Predicated region
    $region38: #{generator_forward.15} parent=1 // pred_check
      _
    $region39: #{generator_forward.15} parent=1 // pred_check_branch
      %2376 = sbr.rel (0) target = $region41
    $region40: #{generator_forward.15} parent=1 // pred_region
      _
    $region41: #{generator_forward.15} parent=1 // pred_fallthru
      _
    %2377 = vsyncpa [#allocation3], 1
    %2378 = vsyncpa [#allocation5], 1

// kernel: generator_forward.17
$region0: #{generator_forward.17}
  #allocation0 [shape = 'u32[]', space=smem, size = 0x4, offset = 0x4, fixed_abs, tag = 'smem constant byte address 0x4 - core index']
  #allocation1 [shape = 'u32[144,128]{1,0:T(1,128)}', space=vmem, size = 0x12000, scoped, tag = 'internal scratch']
  %s0 = inlined_call_operand.vmem [shape: f32[18,144], index: 0, kind: input, shape index: {}]
  %s1 = inlined_call_operand.hbm [shape: f32[144,32], index: 1, kind: input, shape index: {}]
  %s2 = inlined_call_operand.hbm [shape: f32[1,32], index: 2, kind: input, shape index: {}]
  %s3 = inlined_call_operand.hbm [shape: f32[18,2], index: 3, kind: input, shape index: {}]
  %s4 = inlined_call_operand.hbm [shape: f32[2,18], index: 4, kind: input, shape index: {}]
  %s5 = inlined_call_operand.vmem [shape: f32[18,32], index: 5, kind: output, shape index: {}]
  %s6 = sld [smem:[#allocation0]]
  $region46: #{generator_forward.17} parent=0
    _
  %s8 = ssub.s32 1, %s6
  %s9 = scalar_select 0, %s8, %s6
  $region1: #{generator_forward.17} parent=0
    #allocation2 [shape = 'u8[73728]{0}', space=vmem, size = 0x12000, scoped, tag = 'input window, operand 1, single buffered']
    #allocation3 [shape = 's32[1]{0}', space=sflag, size = 0x4, scoped, tag = 'scoped memory for generator_forward.17']
    #allocation4 [shape = 'u8[512]{0}', space=vmem, size = 0x400, scoped, tag = 'input window, operand 2, single buffered']
    #allocation5 [shape = 's32[1]{0}', space=sflag, size = 0x4, scoped, tag = 'scoped memory for generator_forward.17']
    #allocation6 [shape = 'u8[12288]{0}', space=vmem, size = 0x3000, scoped, tag = 'input window, operand 3, single buffered']
    #allocation7 [shape = 'u8[1024]{0}', space=vmem, size = 0x400, scoped, tag = 'input window, operand 4, single buffered']
    #allocation8 [shape = 's32[1]{0}', space=sflag, size = 0x4, scoped, tag = 'scoped memory for generator_forward.17']
    %10 = vsyncpa [#allocation3], 0
    %11 = vsyncpa [#allocation5], 0
    %12 = vsyncpa [#allocation8], 0
    // Predicated region
    $region2: #{generator_forward.17} parent=1 // pred_check
      _
    $region3: #{generator_forward.17} parent=1 // pred_check_branch
      %14 = sbr.rel (0) target = $region5
    $region4: #{generator_forward.17} parent=1 // pred_region
      _
    $region5: #{generator_forward.17} parent=1 // pred_fallthru
      _
    // Predicated region
    $region6: #{generator_forward.17} parent=1 // pred_check
      _
    $region7: #{generator_forward.17} parent=1 // pred_check_branch
      %16 = sbr.rel (0) target = $region9
    $region8: #{generator_forward.17} parent=1 // pred_region
      %s18 = ssub.s32 2304, 2304
      %19 = vsyncadd [#allocation3], %s18
      %s20 = sshll.u32 [#allocation2], 4
      %s21 = int_to_ptr.vmem [resolvable:$true] %s20
      %26 = dma.hbm_to_vmem [thread:$0]  %s1, 2304, %s21, [#allocation3], 128, 128, 8
    $region9: #{generator_forward.17} parent=1 // pred_fallthru
      _
    // Predicated region
    $region10: #{generator_forward.17} parent=1 // pred_check
      _
    $region11: #{generator_forward.17} parent=1 // pred_check_branch
      %28 = sbr.rel (0) target = $region13
    $region12: #{generator_forward.17} parent=1 // pred_region
      %s30 = ssub.s32 16, 16
      %31 = vsyncadd [#allocation5], %s30
      %s33 = sshll.u32 [#allocation4], 4
      %s34 = int_to_ptr.vmem [resolvable:$true] %s33
      %36 = dma.hbm_to_vmem [thread:$0]  %s2, 16, %s34, [#allocation5]
    $region13: #{generator_forward.17} parent=1 // pred_fallthru
      _
    // Predicated region
    $region14: #{generator_forward.17} parent=1 // pred_check
      _
    $region15: #{generator_forward.17} parent=1 // pred_check_branch
      %38 = sbr.rel (0) target = $region17
    $region16: #{generator_forward.17} parent=1 // pred_region
      %s40 = ssub.s32 384, 384
      %41 = vsyncadd [#allocation5], %s40
      %s42 = sshll.u32 [#allocation6], 4
      %s43 = int_to_ptr.vmem [resolvable:$true] %s42
      %48 = dma.hbm_to_vmem [thread:$0]  %s3, 384, %s43, [#allocation5], 128, 128, 8
    $region17: #{generator_forward.17} parent=1 // pred_fallthru
      _
    // Predicated region
    $region18: #{generator_forward.17} parent=1 // pred_check
      _
    $region19: #{generator_forward.17} parent=1 // pred_check_branch
      %50 = sbr.rel (0) target = $region21
    $region20: #{generator_forward.17} parent=1 // pred_region
      %s52 = ssub.s32 32, 32
      %53 = vsyncadd [#allocation8], %s52
      %s55 = sshll.u32 [#allocation7], 4
      %s56 = int_to_ptr.vmem [resolvable:$true] %s55
      %58 = dma.hbm_to_vmem [thread:$0]  %s4, 32, %s56, [#allocation8]
    $region21: #{generator_forward.17} parent=1 // pred_fallthru
      _
    // Predicated region
    $region22: #{generator_forward.17} parent=1 // pred_check
      _
    $region23: #{generator_forward.17} parent=1 // pred_check_branch
      %60 = sbr.rel (0) target = $region25
    $region24: #{generator_forward.17} parent=1 // pred_region
      %61 = dma.done [#allocation3], 2304
    $region25: #{generator_forward.17} parent=1 // pred_fallthru
      _
    // Predicated region
    $region26: #{generator_forward.17} parent=1 // pred_check
      _
    $region27: #{generator_forward.17} parent=1 // pred_check_branch
      %63 = sbr.rel (0) target = $region29
    $region28: #{generator_forward.17} parent=1 // pred_region
      %64 = dma.done [#allocation5], 16
    $region29: #{generator_forward.17} parent=1 // pred_fallthru
      _
    // Predicated region
    $region30: #{generator_forward.17} parent=1 // pred_check
      _
    $region31: #{generator_forward.17} parent=1 // pred_check_branch
      %66 = sbr.rel (0) target = $region33
    $region32: #{generator_forward.17} parent=1 // pred_region
      %67 = dma.done [#allocation5], 384
    $region33: #{generator_forward.17} parent=1 // pred_fallthru
      _
    // Predicated region
    $region34: #{generator_forward.17} parent=1 // pred_check
      _
    $region35: #{generator_forward.17} parent=1 // pred_check_branch
      %69 = sbr.rel (0) target = $region37
    $region36: #{generator_forward.17} parent=1 // pred_region
      %70 = dma.done [#allocation8], 32
    $region37: #{generator_forward.17} parent=1 // pred_fallthru
      _
    %v71 = vld [vmem:[%s0] sm:$0xff]
    %v72 = vld [vmem:[%s0 + $0x8] sm:$0xff]
    %v73 = vld [vmem:[%s0 + $0x10] sm:$0xff]
    %v74 = vld [vmem:[%s0 + $0x18] sm:$0xff]
    %v75 = vld [vmem:[%s0 + $0x20] sm:$0x3]
    %v76 = vld [vmem:[%s0 + $0x28] sm:$0x3]
    %v77 = vld [vmem:[#allocation2] sm:$0xff]
    %v78 = vld [vmem:[#allocation2 + $0x8] sm:$0xff]
    %v79 = vld [vmem:[#allocation2 + $0x10] sm:$0xff]
    %v80 = vld [vmem:[#allocation2 + $0x18] sm:$0xff]
    %v81 = vld [vmem:[#allocation2 + $0x20] sm:$0xff]
    %v82 = vld [vmem:[#allocation2 + $0x28] sm:$0xff]
    %v83 = vld [vmem:[#allocation2 + $0x30] sm:$0xff]
    %v84 = vld [vmem:[#allocation2 + $0x38] sm:$0xff]
    %v85 = vld [vmem:[#allocation2 + $0x40] sm:$0xff]
    %v86 = vld [vmem:[#allocation2 + $0x48] sm:$0xff]
    %v87 = vld [vmem:[#allocation2 + $0x50] sm:$0xff]
    %v88 = vld [vmem:[#allocation2 + $0x58] sm:$0xff]
    %v89 = vld [vmem:[#allocation2 + $0x60] sm:$0xff]
    %v90 = vld [vmem:[#allocation2 + $0x68] sm:$0xff]
    %v91 = vld [vmem:[#allocation2 + $0x70] sm:$0xff]
    %v92 = vld [vmem:[#allocation2 + $0x78] sm:$0xff]
    %v93 = vld [vmem:[#allocation2 + $0x80] sm:$0xff]
    %v94 = vld [vmem:[#allocation2 + $0x88] sm:$0xff]
    %v95 = vld [vmem:[#allocation4] sm:$0x1]
    %v97 = vlaneseq
    %v98 = vshrl.u32 %v97, 7
    %v99 = vsub.s32 0, %v98
    %v100 = vrot.slane %v95, %v99
    %vm102 = vcmask 130048
    %v104 = vsel %vm102, %v72, 0
    %v107 = vsel %vm102, %v74, 0
    %v110 = vsel %vm102, %v76, 0
    %112 = vmatprep.subr.mxu0 0.0
    %113 = vmatpush1.msra.mxu0 %v92
    %114 = vmatprep.subr.mxu0 0.0
    %115 = vmatpush1.msra.mxu0 %v91
    %116 = vmatprep.subr.mxu0 0.0
    %117 = vmatpush1.msra.mxu0 %v90
    %118 = vmatprep.subr.mxu0 0.0
    %119 = vmatpush1.msra.mxu0 %v89
    %120 = vmatprep.subr.mxu0 0.0
    %121 = vmatpush1.msra.mxu0 %v88
    %122 = vmatprep.subr.mxu0 0.0
    %123 = vmatpush1.msra.mxu0 %v87
    %124 = vmatprep.subr.mxu0 0.0
    %125 = vmatpush1.msra.mxu0 %v86
    %126 = vmatprep.subr.mxu0 0.0
    %127 = vmatpush1.msra.mxu0 %v85
    %128 = vmatprep.subr.mxu0 0.0
    %129 = vmatpush1.msra.mxu0 %v84
    %130 = vmatprep.subr.mxu0 0.0
    %131 = vmatpush1.msra.mxu0 %v83
    %132 = vmatprep.subr.mxu0 0.0
    %133 = vmatpush1.msra.mxu0 %v82
    %134 = vmatprep.subr.mxu0 0.0
    %135 = vmatpush1.msra.mxu0 %v81
    %136 = vmatprep.subr.mxu0 0.0
    %137 = vmatpush1.msra.mxu0 %v80
    %138 = vmatprep.subr.mxu0 0.0
    %139 = vmatpush1.msra.mxu0 %v79
    %140 = vmatprep.subr.mxu0 0.0
    %141 = vmatpush1.msra.mxu0 %v78
    %142 = vmatprep.subr.mxu0 0.0
    %143 = vmatpush1.msra.mxu0 %v77
    %144 = vmatprep.subr.mxu0 0.0
    %145 = vmatpush2.msra.mxu0 0.0
    %146 = vmatprep.subr.mxu0 0.0
    %147 = vmatpush2.msra.mxu0 0.0
    %148 = vmatprep.subr.mxu0 0.0
    %149 = vmatpush2.msra.mxu0 0.0
    %150 = vmatprep.subr.mxu0 0.0
    %151 = vmatpush2.msra.mxu0 0.0
    %152 = vmatprep.subr.mxu0 0.0
    %153 = vmatpush2.msra.mxu0 0.0
    %154 = vmatprep.subr.mxu0 0.0
    %155 = vmatpush2.msra.mxu0 0.0
    %156 = vmatprep.subr.mxu0 0.0
    %157 = vmatpush2.msra.mxu0 0.0
    %158 = vmatprep.subr.mxu0 0.0
    %159 = vmatpush2.msra.mxu0 0.0
    %160 = vmatprep.subr.mxu0 0.0
    %161 = vmatpush2.msra.mxu0 0.0
    %162 = vmatprep.subr.mxu0 0.0
    %163 = vmatpush2.msra.mxu0 0.0
    %164 = vmatprep.subr.mxu0 0.0
    %165 = vmatpush2.msra.mxu0 0.0
    %166 = vmatprep.subr.mxu0 0.0
    %167 = vmatpush2.msra.mxu0 0.0
    %168 = vmatprep.subr.mxu0 0.0
    %169 = vmatpush2.msra.mxu0 0.0
    %170 = vmatprep.subr.mxu0 0.0
    %171 = vmatpush2.msra.mxu0 0.0
    %172 = vmatprep.subr.mxu0 0.0
    %173 = vmatpush2.msra.mxu0 %v94
    %174 = vmatprep.subr.mxu0 0.0
    %175 = vmatpush2.msra.mxu0 %v93
    %176 = vmatprep.mubr.f32.mxu0 %v104
    %177 = vmatmul.mubr.f32.gmra.mxu0 %v71
    %v178 = vpop.f32.mrf.mxu0
    %v179 = vadd.f32 %v100, %v178
    %v180 = vpop.f32.mrf.mxu0
    %181 = vmatprep.mubr.f32.mxu0 %v107
    %182 = vmatmul.mubr.f32.gmra.mxu0 %v73
    %v183 = vpop.f32.mrf.mxu0
    %v184 = vadd.f32 %v100, %v183
    %v185 = vpop.f32.mrf.mxu0
    %186 = vmatprep.mubr.f32.mxu0 %v110
    %187 = vmatmul.mubr.f32.gmra.mxu0 %v75
    %v188 = vpop.f32.mrf.mxu0
    %v189 = vadd.f32 %v100, %v188
    %v190 = vpop.f32.mrf.mxu0
    %191 = vdwg.mxu0
    %v192 = vld [vmem:[#allocation6] sm:$0xff]
    %v193 = vld [vmem:[#allocation6 + $0x8] sm:$0xff]
    %v194 = vld [vmem:[#allocation6 + $0x10] sm:$0x3]
    %v195 = vld [vmem:[#allocation7] sm:$0x3]
    %vm196 = vcmask 146432
    %v198 = vsel %vm196, %v195, 0
    %vm200 = vcmask 1041408
    %v202 = vsel %vm200, %v189, 0
    %204 = vmatprep.subr.mxu0 0.0
    %205 = vmatpush1.msra.mxu0 0.0
    %206 = vmatprep.subr.mxu0 0.0
    %207 = vmatpush1.msra.mxu0 0.0
    %208 = vmatprep.subr.mxu0 0.0
    %209 = vmatpush1.msra.mxu0 0.0
    %210 = vmatprep.subr.mxu0 0.0
    %211 = vmatpush1.msra.mxu0 0.0
    %212 = vmatprep.subr.mxu0 0.0
    %213 = vmatpush1.msra.mxu0 0.0
    %214 = vmatprep.subr.mxu0 0.0
    %215 = vmatpush1.msra.mxu0 0.0
    %216 = vmatprep.subr.mxu0 0.0
    %217 = vmatpush1.msra.mxu0 0.0
    %218 = vmatprep.subr.mxu0 0.0
    %219 = vmatpush1.msra.mxu0 0.0
    %220 = vmatprep.subr.mxu0 0.0
    %221 = vmatpush1.msra.mxu0 0.0
    %222 = vmatprep.subr.mxu0 0.0
    %223 = vmatpush1.msra.mxu0 0.0
    %224 = vmatprep.subr.mxu0 0.0
    %225 = vmatpush1.msra.mxu0 0.0
    %226 = vmatprep.subr.mxu0 0.0
    %227 = vmatpush1.msra.mxu0 0.0
    %228 = vmatprep.subr.mxu0 0.0
    %229 = vmatpush1.msra.mxu0 0.0
    %230 = vmatprep.subr.mxu0 0.0
    %231 = vmatpush1.msra.mxu0 %v202
    %232 = vmatprep.subr.mxu0 0.0
    %233 = vmatpush1.msra.mxu0 %v184
    %234 = vmatprep.subr.mxu0 0.0
    %235 = vmatpush1.msra.mxu0 %v179
    %236 = vmatprep.subr.mxu0 0.0
    %237 = vmatpush2.msra.mxu0 0.0
    %238 = vmatprep.subr.mxu0 0.0
    %239 = vmatpush2.msra.mxu0 0.0
    %240 = vmatprep.subr.mxu0 0.0
    %241 = vmatpush2.msra.mxu0 0.0
    %242 = vmatprep.subr.mxu0 0.0
    %243 = vmatpush2.msra.mxu0 0.0
    %244 = vmatprep.subr.mxu0 0.0
    %245 = vmatpush2.msra.mxu0 0.0
    %246 = vmatprep.subr.mxu0 0.0
    %247 = vmatpush2.msra.mxu0 0.0
    %248 = vmatprep.subr.mxu0 0.0
    %249 = vmatpush2.msra.mxu0 0.0
    %250 = vmatprep.subr.mxu0 0.0
    %251 = vmatpush2.msra.mxu0 0.0
    %252 = vmatprep.subr.mxu0 0.0
    %253 = vmatpush2.msra.mxu0 0.0
    %254 = vmatprep.subr.mxu0 0.0
    %255 = vmatpush2.msra.mxu0 0.0
    %256 = vmatprep.subr.mxu0 0.0
    %257 = vmatpush2.msra.mxu0 0.0
    %258 = vmatprep.subr.mxu0 0.0
    %259 = vmatpush2.msra.mxu0 0.0
    %260 = vmatprep.subr.mxu0 0.0
    %261 = vmatpush2.msra.mxu0 0.0
    %262 = vmatprep.subr.mxu0 0.0
    %263 = vmatpush2.msra.mxu0 0.0
    %264 = vmatprep.subr.mxu0 0.0
    %265 = vmatpush2.msra.mxu0 0.0
    %266 = vmatprep.subr.mxu0 0.0
    %267 = vmatpush2.msra.mxu0 0.0
    %268 = vmatprep.mubr.f32.mxu0 0.0
    %269 = vmatmul.mubr.f32.gmra.mxu0 %v198
    %v270 = vpop.f32.mrf.mxu0
    %v271 = vadd.f32 0.0, %v270
    %v272 = vpop.f32.mrf.mxu0
    %273 = vdwg.mxu0
    %vm274 = vcmask 15360
    %v276 = vsel %vm274, %v192, 0
    %v279 = vsel %vm274, %v193, 0
    %v282 = vsel %vm274, %v194, 0
    %v285 = vsel %vm200, %v271, 0
    %287 = vmatprep.subr.mxu0 0.0
    %288 = vmatpush1.msra.mxu0 0.0
    %289 = vmatprep.subr.mxu0 0.0
    %290 = vmatpush1.msra.mxu0 0.0
    %291 = vmatprep.subr.mxu0 0.0
    %292 = vmatpush1.msra.mxu0 0.0
    %293 = vmatprep.subr.mxu0 0.0
    %294 = vmatpush1.msra.mxu0 0.0
    %295 = vmatprep.subr.mxu0 0.0
    %296 = vmatpush1.msra.mxu0 0.0
    %297 = vmatprep.subr.mxu0 0.0
    %298 = vmatpush1.msra.mxu0 0.0
    %299 = vmatprep.subr.mxu0 0.0
    %300 = vmatpush1.msra.mxu0 0.0
    %301 = vmatprep.subr.mxu0 0.0
    %302 = vmatpush1.msra.mxu0 0.0
    %303 = vmatprep.subr.mxu0 0.0
    %304 = vmatpush1.msra.mxu0 0.0
    %305 = vmatprep.subr.mxu0 0.0
    %306 = vmatpush1.msra.mxu0 0.0
    %307 = vmatprep.subr.mxu0 0.0
    %308 = vmatpush1.msra.mxu0 0.0
    %309 = vmatprep.subr.mxu0 0.0
    %310 = vmatpush1.msra.mxu0 0.0
    %311 = vmatprep.subr.mxu0 0.0
    %312 = vmatpush1.msra.mxu0 0.0
    %313 = vmatprep.subr.mxu0 0.0
    %314 = vmatpush1.msra.mxu0 0.0
    %315 = vmatprep.subr.mxu0 0.0
    %316 = vmatpush1.msra.mxu0 0.0
    %317 = vmatprep.subr.mxu0 0.0
    %318 = vmatpush1.msra.mxu0 %v285
    %319 = vmatprep.subr.mxu0 0.0
    %320 = vmatpush2.msra.mxu0 0.0
    %321 = vmatprep.subr.mxu0 0.0
    %322 = vmatpush2.msra.mxu0 0.0
    %323 = vmatprep.subr.mxu0 0.0
    %324 = vmatpush2.msra.mxu0 0.0
    %325 = vmatprep.subr.mxu0 0.0
    %326 = vmatpush2.msra.mxu0 0.0
    %327 = vmatprep.subr.mxu0 0.0
    %328 = vmatpush2.msra.mxu0 0.0
    %329 = vmatprep.subr.mxu0 0.0
    %330 = vmatpush2.msra.mxu0 0.0
    %331 = vmatprep.subr.mxu0 0.0
    %332 = vmatpush2.msra.mxu0 0.0
    %333 = vmatprep.subr.mxu0 0.0
    %334 = vmatpush2.msra.mxu0 0.0
    %335 = vmatprep.subr.mxu0 0.0
    %336 = vmatpush2.msra.mxu0 0.0
    %337 = vmatprep.subr.mxu0 0.0
    %338 = vmatpush2.msra.mxu0 0.0
    %339 = vmatprep.subr.mxu0 0.0
    %340 = vmatpush2.msra.mxu0 0.0
    %341 = vmatprep.subr.mxu0 0.0
    %342 = vmatpush2.msra.mxu0 0.0
    %343 = vmatprep.subr.mxu0 0.0
    %344 = vmatpush2.msra.mxu0 0.0
    %345 = vmatprep.subr.mxu0 0.0
    %346 = vmatpush2.msra.mxu0 0.0
    %347 = vmatprep.subr.mxu0 0.0
    %348 = vmatpush2.msra.mxu0 0.0
    %349 = vmatprep.subr.mxu0 0.0
    %350 = vmatpush2.msra.mxu0 0.0
    %351 = vmatprep.mubr.f32.mxu0 0.0
    %352 = vmatmul.mubr.f32.gmra.mxu0 %v276
    %v353 = vpop.f32.mrf.mxu0
    %v354 = vadd.f32 0.0, %v353
    %v355 = vpop.f32.mrf.mxu0
    %356 = vmatprep.mubr.f32.mxu0 0.0
    %357 = vmatmul.mubr.f32.gmra.mxu0 %v279
    %v358 = vpop.f32.mrf.mxu0
    %v359 = vadd.f32 0.0, %v358
    %v360 = vpop.f32.mrf.mxu0
    %361 = vmatprep.mubr.f32.mxu0 0.0
    %362 = vmatmul.mubr.f32.gmra.mxu0 %v282
    %v363 = vpop.f32.mrf.mxu0
    %v364 = vadd.f32 0.0, %v363
    %v365 = vpop.f32.mrf.mxu0
    %366 = vdwg.mxu0
    %v367 = vsub.f32 %v179, %v354
    %v368 = vsub.f32 %v184, %v359
    %v369 = vsub.f32 %v189, %v364
    %v370 = vmul.f32 %v367, %v367
    %v371 = vmul.f32 %v368, %v368
    %v372 = vmul.f32 %v369, %v369
    %v374 = vsel %vm200, %v372, 0
    %376 = vmatprep.subr.mxu0 0.0
    %377 = vmatpush1.msra.mxu0 0.0
    %378 = vmatprep.subr.mxu0 0.0
    %379 = vmatpush1.msra.mxu0 0.0
    %380 = vmatprep.subr.mxu0 0.0
    %381 = vmatpush1.msra.mxu0 0.0
    %382 = vmatprep.subr.mxu0 0.0
    %383 = vmatpush1.msra.mxu0 0.0
    %384 = vmatprep.subr.mxu0 0.0
    %385 = vmatpush1.msra.mxu0 0.0
    %386 = vmatprep.subr.mxu0 0.0
    %387 = vmatpush1.msra.mxu0 0.0
    %388 = vmatprep.subr.mxu0 0.0
    %389 = vmatpush1.msra.mxu0 0.0
    %390 = vmatprep.subr.mxu0 0.0
    %391 = vmatpush1.msra.mxu0 0.0
    %392 = vmatprep.subr.mxu0 0.0
    %393 = vmatpush1.msra.mxu0 0.0
    %394 = vmatprep.subr.mxu0 0.0
    %395 = vmatpush1.msra.mxu0 0.0
    %396 = vmatprep.subr.mxu0 0.0
    %397 = vmatpush1.msra.mxu0 0.0
    %398 = vmatprep.subr.mxu0 0.0
    %399 = vmatpush1.msra.mxu0 0.0
    %400 = vmatprep.subr.mxu0 0.0
    %401 = vmatpush1.msra.mxu0 0.0
    %402 = vmatprep.subr.mxu0 0.0
    %403 = vmatpush1.msra.mxu0 %v374
    %404 = vmatprep.subr.mxu0 0.0
    %405 = vmatpush1.msra.mxu0 %v371
    %406 = vmatprep.subr.mxu0 0.0
    %407 = vmatpush1.msra.mxu0 %v370
    %408 = vmatprep.subr.mxu0 0.0
    %409 = vmatpush2.msra.mxu0 0.0
    %410 = vmatprep.subr.mxu0 0.0
    %411 = vmatpush2.msra.mxu0 0.0
    %412 = vmatprep.subr.mxu0 0.0
    %413 = vmatpush2.msra.mxu0 0.0
    %414 = vmatprep.subr.mxu0 0.0
    %415 = vmatpush2.msra.mxu0 0.0
    %416 = vmatprep.subr.mxu0 0.0
    %417 = vmatpush2.msra.mxu0 0.0
    %418 = vmatprep.subr.mxu0 0.0
    %419 = vmatpush2.msra.mxu0 0.0
    %420 = vmatprep.subr.mxu0 0.0
    %421 = vmatpush2.msra.mxu0 0.0
    %422 = vmatprep.subr.mxu0 0.0
    %423 = vmatpush2.msra.mxu0 0.0
    %424 = vmatprep.subr.mxu0 0.0
    %425 = vmatpush2.msra.mxu0 0.0
    %426 = vmatprep.subr.mxu0 0.0
    %427 = vmatpush2.msra.mxu0 0.0
    %428 = vmatprep.subr.mxu0 0.0
    %429 = vmatpush2.msra.mxu0 0.0
    %430 = vmatprep.subr.mxu0 0.0
    %431 = vmatpush2.msra.mxu0 0.0
    %432 = vmatprep.subr.mxu0 0.0
    %433 = vmatpush2.msra.mxu0 0.0
    %434 = vmatprep.subr.mxu0 0.0
    %435 = vmatpush2.msra.mxu0 0.0
    %436 = vmatprep.subr.mxu0 0.0
    %437 = vmatpush2.msra.mxu0 0.0
    %438 = vmatprep.subr.mxu0 0.0
    %439 = vmatpush2.msra.mxu0 0.0
    %440 = vmatprep.mubr.f32.mxu0 0.0
    %441 = vmatmul.mubr.f32.gmra.mxu0 %v198
    %v442 = vpop.f32.mrf.mxu0
    %v443 = vadd.f32 1e-05, %v442
    %v444 = vpop.f32.mrf.mxu0
    %445 = vdwg.mxu0
    %v446 = vrsqrt.pop %v443
    %v448 = vsel %vm200, %v446, 0
    %450 = vmatprep.subr.mxu0 0.0
    %451 = vmatpush1.msra.mxu0 0.0
    %452 = vmatprep.subr.mxu0 0.0
    %453 = vmatpush1.msra.mxu0 0.0
    %454 = vmatprep.subr.mxu0 0.0
    %455 = vmatpush1.msra.mxu0 0.0
    %456 = vmatprep.subr.mxu0 0.0
    %457 = vmatpush1.msra.mxu0 0.0
    %458 = vmatprep.subr.mxu0 0.0
    %459 = vmatpush1.msra.mxu0 0.0
    %460 = vmatprep.subr.mxu0 0.0
    %461 = vmatpush1.msra.mxu0 0.0
    %462 = vmatprep.subr.mxu0 0.0
    %463 = vmatpush1.msra.mxu0 0.0
    %464 = vmatprep.subr.mxu0 0.0
    %465 = vmatpush1.msra.mxu0 0.0
    %466 = vmatprep.subr.mxu0 0.0
    %467 = vmatpush1.msra.mxu0 0.0
    %468 = vmatprep.subr.mxu0 0.0
    %469 = vmatpush1.msra.mxu0 0.0
    %470 = vmatprep.subr.mxu0 0.0
    %471 = vmatpush1.msra.mxu0 0.0
    %472 = vmatprep.subr.mxu0 0.0
    %473 = vmatpush1.msra.mxu0 0.0
    %474 = vmatprep.subr.mxu0 0.0
    %475 = vmatpush1.msra.mxu0 0.0
    %476 = vmatprep.subr.mxu0 0.0
    %477 = vmatpush1.msra.mxu0 0.0
    %478 = vmatprep.subr.mxu0 0.0
    %479 = vmatpush1.msra.mxu0 0.0
    %480 = vmatprep.subr.mxu0 0.0
    %481 = vmatpush1.msra.mxu0 %v448
    %482 = vmatprep.subr.mxu0 0.0
    %483 = vmatpush2.msra.mxu0 0.0
    %484 = vmatprep.subr.mxu0 0.0
    %485 = vmatpush2.msra.mxu0 0.0
    %486 = vmatprep.subr.mxu0 0.0
    %487 = vmatpush2.msra.mxu0 0.0
    %488 = vmatprep.subr.mxu0 0.0
    %489 = vmatpush2.msra.mxu0 0.0
    %490 = vmatprep.subr.mxu0 0.0
    %491 = vmatpush2.msra.mxu0 0.0
    %492 = vmatprep.subr.mxu0 0.0
    %493 = vmatpush2.msra.mxu0 0.0
    %494 = vmatprep.subr.mxu0 0.0
    %495 = vmatpush2.msra.mxu0 0.0
    %496 = vmatprep.subr.mxu0 0.0
    %497 = vmatpush2.msra.mxu0 0.0
    %498 = vmatprep.subr.mxu0 0.0
    %499 = vmatpush2.msra.mxu0 0.0
    %500 = vmatprep.subr.mxu0 0.0
    %501 = vmatpush2.msra.mxu0 0.0
    %502 = vmatprep.subr.mxu0 0.0
    %503 = vmatpush2.msra.mxu0 0.0
    %504 = vmatprep.subr.mxu0 0.0
    %505 = vmatpush2.msra.mxu0 0.0
    %506 = vmatprep.subr.mxu0 0.0
    %507 = vmatpush2.msra.mxu0 0.0
    %508 = vmatprep.subr.mxu0 0.0
    %509 = vmatpush2.msra.mxu0 0.0
    %510 = vmatprep.subr.mxu0 0.0
    %511 = vmatpush2.msra.mxu0 0.0
    %512 = vmatprep.subr.mxu0 0.0
    %513 = vmatpush2.msra.mxu0 0.0
    %514 = vmatprep.mubr.f32.mxu0 0.0
    %515 = vmatmul.mubr.f32.gmra.mxu0 %v276
    %v516 = vpop.f32.mrf.mxu0
    %v517 = vadd.f32 0.0, %v516
    %v518 = vpop.f32.mrf.mxu0
    %519 = vmatprep.mubr.f32.mxu0 0.0
    %520 = vmatmul.mubr.f32.gmra.mxu0 %v279
    %v521 = vpop.f32.mrf.mxu0
    %v522 = vadd.f32 0.0, %v521
    %v523 = vpop.f32.mrf.mxu0
    %524 = vmatprep.mubr.f32.mxu0 0.0
    %525 = vmatmul.mubr.f32.gmra.mxu0 %v282
    %v526 = vpop.f32.mrf.mxu0
    %v527 = vadd.f32 0.0, %v526
    %v528 = vpop.f32.mrf.mxu0
    %529 = vdwg.mxu0
    %v530 = vmul.f32 %v367, %v517
    %v531 = vmul.f32 %v368, %v522
    %v532 = vmul.f32 %v369, %v527
    %v533 = vmax.f32 %v530, 0.0
    %v534 = vmax.f32 %v531, 0.0
    %v535 = vmax.f32 %v532, 0.0
    %vm536 = vcmask 261120
    %537 = vst.msk [vmem:[%s5] sm:$0xff] %vm536, %v533
    %538 = vst.msk [vmem:[%s5 + $0x8] sm:$0xff] %vm536, %v534
    %vm539 = vcmask 254976
    %540 = vst.msk [vmem:[%s5 + $0x10] sm:$0x3] %vm539, %v535
    // Predicated region
    $region38: #{generator_forward.17} parent=1 // pred_check
      _
    $region39: #{generator_forward.17} parent=1 // pred_check_branch
      %542 = sbr.rel (0) target = $region41
    $region40: #{generator_forward.17} parent=1 // pred_region
      _
    $region41: #{generator_forward.17} parent=1 // pred_fallthru
      _
    // Predicated region
    $region42: #{generator_forward.17} parent=1 // pred_check
      _
    $region43: #{generator_forward.17} parent=1 // pred_check_branch
      %544 = sbr.rel (0) target = $region45
    $region44: #{generator_forward.17} parent=1 // pred_region
      _
    $region45: #{generator_forward.17} parent=1 // pred_fallthru
      _
    %545 = vsyncpa [#allocation3], 1
    %546 = vsyncpa [#allocation5], 1
    %547 = vsyncpa [#allocation8], 1

// kernel: generator_forward.19
$region0: #{generator_forward.19}
  #allocation0 [shape = 'u32[]', space=smem, size = 0x4, offset = 0x4, fixed_abs, tag = 'smem constant byte address 0x4 - core index']
  #allocation1 [shape = 'u32[144,128]{1,0:T(1,128)}', space=vmem, size = 0x12000, scoped, tag = 'internal scratch']
  %s0 = inlined_call_operand.vmem [shape: f32[18,288], index: 0, kind: input, shape index: {}]
  %s1 = inlined_call_operand.vmem [shape: f32[288,32], index: 1, kind: input, shape index: {}]
  %s2 = inlined_call_operand.vmem [shape: f32[18,1], index: 2, kind: input, shape index: {}]
  %s3 = inlined_call_operand.vmem [shape: f32[1,18], index: 3, kind: input, shape index: {}]
  %s4 = inlined_call_operand.vmem [shape: f32[1,32], index: 4, kind: input, shape index: {}]
  %s5 = inlined_call_operand.vmem [shape: f32[1,32], index: 5, kind: input, shape index: {}]
  %s6 = inlined_call_operand.vmem [shape: f32[18,32], index: 6, kind: input, shape index: {}]
  %s7 = inlined_call_operand.vmem [shape: f32[18,32], index: 7, kind: output, shape index: {}]
  %s8 = sld [smem:[#allocation0]]
  $region38: #{generator_forward.19} parent=0
    _
  %s10 = ssub.s32 1, %s8
  %s11 = scalar_select 0, %s10, %s8
  // Predicated region
  $region2: #{generator_forward.19} parent=0 // pred_check
    _
  $region3: #{generator_forward.19} parent=0 // pred_check_branch
    %13 = sbr.rel (0) target = $region5
  $region4: #{generator_forward.19} parent=0 // pred_region
    _
  $region5: #{generator_forward.19} parent=0 // pred_fallthru
    _
  // Predicated region
  $region6: #{generator_forward.19} parent=0 // pred_check
    _
  $region7: #{generator_forward.19} parent=0 // pred_check_branch
    %15 = sbr.rel (0) target = $region9
  $region8: #{generator_forward.19} parent=0 // pred_region
    _
  $region9: #{generator_forward.19} parent=0 // pred_fallthru
    _
  // Predicated region
  $region10: #{generator_forward.19} parent=0 // pred_check
    _
  $region11: #{generator_forward.19} parent=0 // pred_check_branch
    %17 = sbr.rel (0) target = $region13
  $region12: #{generator_forward.19} parent=0 // pred_region
    _
  $region13: #{generator_forward.19} parent=0 // pred_fallthru
    _
  // Predicated region
  $region14: #{generator_forward.19} parent=0 // pred_check
    _
  $region15: #{generator_forward.19} parent=0 // pred_check_branch
    %19 = sbr.rel (0) target = $region17
  $region16: #{generator_forward.19} parent=0 // pred_region
    _
  $region17: #{generator_forward.19} parent=0 // pred_fallthru
    _
  // Predicated region
  $region18: #{generator_forward.19} parent=0 // pred_check
    _
  $region19: #{generator_forward.19} parent=0 // pred_check_branch
    %21 = sbr.rel (0) target = $region21
  $region20: #{generator_forward.19} parent=0 // pred_region
    _
  $region21: #{generator_forward.19} parent=0 // pred_fallthru
    _
  // Predicated region
  $region22: #{generator_forward.19} parent=0 // pred_check
    _
  $region23: #{generator_forward.19} parent=0 // pred_check_branch
    %23 = sbr.rel (0) target = $region25
  $region24: #{generator_forward.19} parent=0 // pred_region
    _
  $region25: #{generator_forward.19} parent=0 // pred_fallthru
    _
  // Predicated region
  $region26: #{generator_forward.19} parent=0 // pred_check
    _
  $region27: #{generator_forward.19} parent=0 // pred_check_branch
    %25 = sbr.rel (0) target = $region29
  $region28: #{generator_forward.19} parent=0 // pred_region
    _
  $region29: #{generator_forward.19} parent=0 // pred_fallthru
    _
  %v26 = vld [vmem:[%s0] sm:$0xff]
  %v27 = vld [vmem:[%s0 + $0x8] sm:$0xff]
  %v28 = vld [vmem:[%s0 + $0x10] sm:$0xff]
  %v29 = vld [vmem:[%s0 + $0x18] sm:$0xff]
  %v30 = vld [vmem:[%s0 + $0x20] sm:$0xff]
  %v31 = vld [vmem:[%s0 + $0x28] sm:$0xff]
  %v32 = vld [vmem:[%s0 + $0x30] sm:$0x3]
  %v33 = vld [vmem:[%s0 + $0x38] sm:$0x3]
  %v34 = vld [vmem:[%s0 + $0x40] sm:$0x3]
  %v35 = vld [vmem:[%s1] sm:$0xff]
  %v36 = vld [vmem:[%s1 + $0x8] sm:$0xff]
  %v37 = vld [vmem:[%s1 + $0x10] sm:$0xff]
  %v38 = vld [vmem:[%s1 + $0x18] sm:$0xff]
  %v39 = vld [vmem:[%s1 + $0x20] sm:$0xff]
  %v40 = vld [vmem:[%s1 + $0x28] sm:$0xff]
  %v41 = vld [vmem:[%s1 + $0x30] sm:$0xff]
  %v42 = vld [vmem:[%s1 + $0x38] sm:$0xff]
  %v43 = vld [vmem:[%s1 + $0x40] sm:$0xff]
  %v44 = vld [vmem:[%s1 + $0x48] sm:$0xff]
  %v45 = vld [vmem:[%s1 + $0x50] sm:$0xff]
  %v46 = vld [vmem:[%s1 + $0x58] sm:$0xff]
  %v47 = vld [vmem:[%s1 + $0x60] sm:$0xff]
  %v48 = vld [vmem:[%s1 + $0x68] sm:$0xff]
  %v49 = vld [vmem:[%s1 + $0x70] sm:$0xff]
  %v50 = vld [vmem:[%s1 + $0x78] sm:$0xff]
  %v51 = vld [vmem:[%s1 + $0x80] sm:$0xff]
  %v52 = vld [vmem:[%s1 + $0x88] sm:$0xff]
  %v53 = vld [vmem:[%s1 + $0x90] sm:$0xff]
  %v54 = vld [vmem:[%s1 + $0x98] sm:$0xff]
  %v55 = vld [vmem:[%s1 + $0xa0] sm:$0xff]
  %v56 = vld [vmem:[%s1 + $0xa8] sm:$0xff]
  %v57 = vld [vmem:[%s1 + $0xb0] sm:$0xff]
  %v58 = vld [vmem:[%s1 + $0xb8] sm:$0xff]
  %v59 = vld [vmem:[%s1 + $0xc0] sm:$0xff]
  %v60 = vld [vmem:[%s1 + $0xc8] sm:$0xff]
  %v61 = vld [vmem:[%s1 + $0xd0] sm:$0xff]
  %v62 = vld [vmem:[%s1 + $0xd8] sm:$0xff]
  %v63 = vld [vmem:[%s1 + $0xe0] sm:$0xff]
  %v64 = vld [vmem:[%s1 + $0xe8] sm:$0xff]
  %v65 = vld [vmem:[%s1 + $0xf0] sm:$0xff]
  %v66 = vld [vmem:[%s1 + $0xf8] sm:$0xff]
  %v67 = vld [vmem:[%s1 + $0x100] sm:$0xff]
  %v68 = vld [vmem:[%s1 + $0x108] sm:$0xff]
  %v69 = vld [vmem:[%s1 + $0x110] sm:$0xff]
  %v70 = vld [vmem:[%s1 + $0x118] sm:$0xff]
  %vm71 = vcmask 261120
  %v73 = vsel %vm71, %v28, 0
  %v76 = vsel %vm71, %v31, 0
  %v79 = vsel %vm71, %v34, 0
  %81 = vmatprep.subr.mxu0 0.0
  %82 = vmatpush1.msra.mxu0 %v50
  %83 = vmatprep.subr.mxu0 0.0
  %84 = vmatpush1.msra.mxu0 %v49
  %85 = vmatprep.subr.mxu0 0.0
  %86 = vmatpush1.msra.mxu0 %v48
  %87 = vmatprep.subr.mxu0 0.0
  %88 = vmatpush1.msra.mxu0 %v47
  %89 = vmatprep.subr.mxu0 0.0
  %90 = vmatpush1.msra.mxu0 %v46
  %91 = vmatprep.subr.mxu0 0.0
  %92 = vmatpush1.msra.mxu0 %v45
  %93 = vmatprep.subr.mxu0 0.0
  %94 = vmatpush1.msra.mxu0 %v44
  %95 = vmatprep.subr.mxu0 0.0
  %96 = vmatpush1.msra.mxu0 %v43
  %97 = vmatprep.subr.mxu0 0.0
  %98 = vmatpush1.msra.mxu0 %v42
  %99 = vmatprep.subr.mxu0 0.0
  %100 = vmatpush1.msra.mxu0 %v41
  %101 = vmatprep.subr.mxu0 0.0
  %102 = vmatpush1.msra.mxu0 %v40
  %103 = vmatprep.subr.mxu0 0.0
  %104 = vmatpush1.msra.mxu0 %v39
  %105 = vmatprep.subr.mxu0 0.0
  %106 = vmatpush1.msra.mxu0 %v38
  %107 = vmatprep.subr.mxu0 0.0
  %108 = vmatpush1.msra.mxu0 %v37
  %109 = vmatprep.subr.mxu0 0.0
  %110 = vmatpush1.msra.mxu0 %v36
  %111 = vmatprep.subr.mxu0 0.0
  %112 = vmatpush1.msra.mxu0 %v35
  %113 = vmatprep.subr.mxu0 0.0
  %114 = vmatpush2.msra.mxu0 %v66
  %115 = vmatprep.subr.mxu0 0.0
  %116 = vmatpush2.msra.mxu0 %v65
  %117 = vmatprep.subr.mxu0 0.0
  %118 = vmatpush2.msra.mxu0 %v64
  %119 = vmatprep.subr.mxu0 0.0
  %120 = vmatpush2.msra.mxu0 %v63
  %121 = vmatprep.subr.mxu0 0.0
  %122 = vmatpush2.msra.mxu0 %v62
  %123 = vmatprep.subr.mxu0 0.0
  %124 = vmatpush2.msra.mxu0 %v61
  %125 = vmatprep.subr.mxu0 0.0
  %126 = vmatpush2.msra.mxu0 %v60
  %127 = vmatprep.subr.mxu0 0.0
  %128 = vmatpush2.msra.mxu0 %v59
  %129 = vmatprep.subr.mxu0 0.0
  %130 = vmatpush2.msra.mxu0 %v58
  %131 = vmatprep.subr.mxu0 0.0
  %132 = vmatpush2.msra.mxu0 %v57
  %133 = vmatprep.subr.mxu0 0.0
  %134 = vmatpush2.msra.mxu0 %v56
  %135 = vmatprep.subr.mxu0 0.0
  %136 = vmatpush2.msra.mxu0 %v55
  %137 = vmatprep.subr.mxu0 0.0
  %138 = vmatpush2.msra.mxu0 %v54
  %139 = vmatprep.subr.mxu0 0.0
  %140 = vmatpush2.msra.mxu0 %v53
  %141 = vmatprep.subr.mxu0 0.0
  %142 = vmatpush2.msra.mxu0 %v52
  %143 = vmatprep.subr.mxu0 0.0
  %144 = vmatpush2.msra.mxu0 %v51
  %145 = vmatprep.mubr.f32.mxu0 %v27
  %146 = vmatmul.mubr.f32.gmra.mxu0 %v26
  %v147 = vpop.f32.mrf.mxu0
  %v148 = vadd.f32 0.0, %v147
  %v149 = vpop.f32.mrf.mxu0
  %150 = vmatprep.mubr.f32.mxu0 %v30
  %151 = vmatmul.mubr.f32.gmra.mxu0 %v29
  %v152 = vpop.f32.mrf.mxu0
  %v153 = vadd.f32 0.0, %v152
  %v154 = vpop.f32.mrf.mxu0
  %155 = vmatprep.mubr.f32.mxu0 %v33
  %156 = vmatmul.mubr.f32.gmra.mxu0 %v32
  %v157 = vpop.f32.mrf.mxu0
  %v158 = vadd.f32 0.0, %v157
  %v159 = vpop.f32.mrf.mxu0
  %160 = vdwg.mxu0
  %161 = vmatprep.subr.mxu0 0.0
  %162 = vmatpush1.msra.mxu0 0.0
  %163 = vmatprep.subr.mxu0 0.0
  %164 = vmatpush1.msra.mxu0 0.0
  %165 = vmatprep.subr.mxu0 0.0
  %166 = vmatpush1.msra.mxu0 0.0
  %167 = vmatprep.subr.mxu0 0.0
  %168 = vmatpush1.msra.mxu0 0.0
  %169 = vmatprep.subr.mxu0 0.0
  %170 = vmatpush1.msra.mxu0 0.0
  %171 = vmatprep.subr.mxu0 0.0
  %172 = vmatpush1.msra.mxu0 0.0
  %173 = vmatprep.subr.mxu0 0.0
  %174 = vmatpush1.msra.mxu0 0.0
  %175 = vmatprep.subr.mxu0 0.0
  %176 = vmatpush1.msra.mxu0 0.0
  %177 = vmatprep.subr.mxu0 0.0
  %178 = vmatpush1.msra.mxu0 0.0
  %179 = vmatprep.subr.mxu0 0.0
  %180 = vmatpush1.msra.mxu0 0.0
  %181 = vmatprep.subr.mxu0 0.0
  %182 = vmatpush1.msra.mxu0 0.0
  %183 = vmatprep.subr.mxu0 0.0
  %184 = vmatpush1.msra.mxu0 0.0
  %185 = vmatprep.subr.mxu0 0.0
  %186 = vmatpush1.msra.mxu0 %v70
  %187 = vmatprep.subr.mxu0 0.0
  %188 = vmatpush1.msra.mxu0 %v69
  %189 = vmatprep.subr.mxu0 0.0
  %190 = vmatpush1.msra.mxu0 %v68
  %191 = vmatprep.subr.mxu0 0.0
  %192 = vmatpush1.msra.mxu0 %v67
  %193 = vmatprep.subr.mxu0 0.0
  %194 = vmatpush2.msra.mxu0 0.0
  %195 = vmatprep.subr.mxu0 0.0
  %196 = vmatpush2.msra.mxu0 0.0
  %197 = vmatprep.subr.mxu0 0.0
  %198 = vmatpush2.msra.mxu0 0.0
  %199 = vmatprep.subr.mxu0 0.0
  %200 = vmatpush2.msra.mxu0 0.0
  %201 = vmatprep.subr.mxu0 0.0
  %202 = vmatpush2.msra.mxu0 0.0
  %203 = vmatprep.subr.mxu0 0.0
  %204 = vmatpush2.msra.mxu0 0.0
  %205 = vmatprep.subr.mxu0 0.0
  %206 = vmatpush2.msra.mxu0 0.0
  %207 = vmatprep.subr.mxu0 0.0
  %208 = vmatpush2.msra.mxu0 0.0
  %209 = vmatprep.subr.mxu0 0.0
  %210 = vmatpush2.msra.mxu0 0.0
  %211 = vmatprep.subr.mxu0 0.0
  %212 = vmatpush2.msra.mxu0 0.0
  %213 = vmatprep.subr.mxu0 0.0
  %214 = vmatpush2.msra.mxu0 0.0
  %215 = vmatprep.subr.mxu0 0.0
  %216 = vmatpush2.msra.mxu0 0.0
  %217 = vmatprep.subr.mxu0 0.0
  %218 = vmatpush2.msra.mxu0 0.0
  %219 = vmatprep.subr.mxu0 0.0
  %220 = vmatpush2.msra.mxu0 0.0
  %221 = vmatprep.subr.mxu0 0.0
  %222 = vmatpush2.msra.mxu0 0.0
  %223 = vmatprep.subr.mxu0 0.0
  %224 = vmatpush2.msra.mxu0 0.0
  %225 = vmatprep.mubr.f32.mxu0 0.0
  %226 = vmatmul.mubr.f32.gmra.mxu0 %v73
  %v227 = vpop.f32.mrf.mxu0
  %v228 = vadd.f32 %v148, %v227
  %v229 = vpop.f32.mrf.mxu0
  %230 = vmatprep.mubr.f32.mxu0 0.0
  %231 = vmatmul.mubr.f32.gmra.mxu0 %v76
  %v232 = vpop.f32.mrf.mxu0
  %v233 = vadd.f32 %v153, %v232
  %v234 = vpop.f32.mrf.mxu0
  %235 = vmatprep.mubr.f32.mxu0 0.0
  %236 = vmatmul.mubr.f32.gmra.mxu0 %v79
  %v237 = vpop.f32.mrf.mxu0
  %v238 = vadd.f32 %v158, %v237
  %v239 = vpop.f32.mrf.mxu0
  %240 = vdwg.mxu0
  %v241 = vld [vmem:[%s2] sm:$0xff]
  %v242 = vld [vmem:[%s2 + $0x8] sm:$0xff]
  %v243 = vld [vmem:[%s2 + $0x10] sm:$0x3]
  %v244 = vld [vmem:[%s3] sm:$0x1]
  %vm245 = vcmask 146432
  %v247 = vsel %vm245, %v244, 0
  %vm249 = vcmask 1041408
  %v251 = vsel %vm249, %v238, 0
  %253 = vmatprep.subr.mxu0 0.0
  %254 = vmatpush1.msra.mxu0 0.0
  %255 = vmatprep.subr.mxu0 0.0
  %256 = vmatpush1.msra.mxu0 0.0
  %257 = vmatprep.subr.mxu0 0.0
  %258 = vmatpush1.msra.mxu0 0.0
  %259 = vmatprep.subr.mxu0 0.0
  %260 = vmatpush1.msra.mxu0 0.0
  %261 = vmatprep.subr.mxu0 0.0
  %262 = vmatpush1.msra.mxu0 0.0
  %263 = vmatprep.subr.mxu0 0.0
  %264 = vmatpush1.msra.mxu0 0.0
  %265 = vmatprep.subr.mxu0 0.0
  %266 = vmatpush1.msra.mxu0 0.0
  %267 = vmatprep.subr.mxu0 0.0
  %268 = vmatpush1.msra.mxu0 0.0
  %269 = vmatprep.subr.mxu0 0.0
  %270 = vmatpush1.msra.mxu0 0.0
  %271 = vmatprep.subr.mxu0 0.0
  %272 = vmatpush1.msra.mxu0 0.0
  %273 = vmatprep.subr.mxu0 0.0
  %274 = vmatpush1.msra.mxu0 0.0
  %275 = vmatprep.subr.mxu0 0.0
  %276 = vmatpush1.msra.mxu0 0.0
  %277 = vmatprep.subr.mxu0 0.0
  %278 = vmatpush1.msra.mxu0 0.0
  %279 = vmatprep.subr.mxu0 0.0
  %280 = vmatpush1.msra.mxu0 %v251
  %281 = vmatprep.subr.mxu0 0.0
  %282 = vmatpush1.msra.mxu0 %v233
  %283 = vmatprep.subr.mxu0 0.0
  %284 = vmatpush1.msra.mxu0 %v228
  %285 = vmatprep.subr.mxu0 0.0
  %286 = vmatpush2.msra.mxu0 0.0
  %287 = vmatprep.subr.mxu0 0.0
  %288 = vmatpush2.msra.mxu0 0.0
  %289 = vmatprep.subr.mxu0 0.0
  %290 = vmatpush2.msra.mxu0 0.0
  %291 = vmatprep.subr.mxu0 0.0
  %292 = vmatpush2.msra.mxu0 0.0
  %293 = vmatprep.subr.mxu0 0.0
  %294 = vmatpush2.msra.mxu0 0.0
  %295 = vmatprep.subr.mxu0 0.0
  %296 = vmatpush2.msra.mxu0 0.0
  %297 = vmatprep.subr.mxu0 0.0
  %298 = vmatpush2.msra.mxu0 0.0
  %299 = vmatprep.subr.mxu0 0.0
  %300 = vmatpush2.msra.mxu0 0.0
  %301 = vmatprep.subr.mxu0 0.0
  %302 = vmatpush2.msra.mxu0 0.0
  %303 = vmatprep.subr.mxu0 0.0
  %304 = vmatpush2.msra.mxu0 0.0
  %305 = vmatprep.subr.mxu0 0.0
  %306 = vmatpush2.msra.mxu0 0.0
  %307 = vmatprep.subr.mxu0 0.0
  %308 = vmatpush2.msra.mxu0 0.0
  %309 = vmatprep.subr.mxu0 0.0
  %310 = vmatpush2.msra.mxu0 0.0
  %311 = vmatprep.subr.mxu0 0.0
  %312 = vmatpush2.msra.mxu0 0.0
  %313 = vmatprep.subr.mxu0 0.0
  %314 = vmatpush2.msra.mxu0 0.0
  %315 = vmatprep.subr.mxu0 0.0
  %316 = vmatpush2.msra.mxu0 0.0
  %317 = vmatprep.mubr.f32.mxu0 0.0
  %318 = vmatmul.mubr.f32.gmra.mxu0 %v247
  %v319 = vpop.f32.mrf.mxu0
  %v320 = vadd.f32 0.0, %v319
  %v321 = vpop.f32.mrf.mxu0
  %322 = vdwg.mxu0
  %vm323 = vcmask 7168
  %v325 = vsel %vm323, %v241, 0
  %v328 = vsel %vm323, %v242, 0
  %v331 = vsel %vm323, %v243, 0
  %vm333 = vcmask 1040384
  %v335 = vsel %vm333, %v320, 0
  %337 = vmatprep.subr.mxu0 0.0
  %338 = vmatpush1.msra.mxu0 0.0
  %339 = vmatprep.subr.mxu0 0.0
  %340 = vmatpush1.msra.mxu0 0.0
  %341 = vmatprep.subr.mxu0 0.0
  %342 = vmatpush1.msra.mxu0 0.0
  %343 = vmatprep.subr.mxu0 0.0
  %344 = vmatpush1.msra.mxu0 0.0
  %345 = vmatprep.subr.mxu0 0.0
  %346 = vmatpush1.msra.mxu0 0.0
  %347 = vmatprep.subr.mxu0 0.0
  %348 = vmatpush1.msra.mxu0 0.0
  %349 = vmatprep.subr.mxu0 0.0
  %350 = vmatpush1.msra.mxu0 0.0
  %351 = vmatprep.subr.mxu0 0.0
  %352 = vmatpush1.msra.mxu0 0.0
  %353 = vmatprep.subr.mxu0 0.0
  %354 = vmatpush1.msra.mxu0 0.0
  %355 = vmatprep.subr.mxu0 0.0
  %356 = vmatpush1.msra.mxu0 0.0
  %357 = vmatprep.subr.mxu0 0.0
  %358 = vmatpush1.msra.mxu0 0.0
  %359 = vmatprep.subr.mxu0 0.0
  %360 = vmatpush1.msra.mxu0 0.0
  %361 = vmatprep.subr.mxu0 0.0
  %362 = vmatpush1.msra.mxu0 0.0
  %363 = vmatprep.subr.mxu0 0.0
  %364 = vmatpush1.msra.mxu0 0.0
  %365 = vmatprep.subr.mxu0 0.0
  %366 = vmatpush1.msra.mxu0 0.0
  %367 = vmatprep.subr.mxu0 0.0
  %368 = vmatpush1.msra.mxu0 %v335
  %369 = vmatprep.subr.mxu0 0.0
  %370 = vmatpush2.msra.mxu0 0.0
  %371 = vmatprep.subr.mxu0 0.0
  %372 = vmatpush2.msra.mxu0 0.0
  %373 = vmatprep.subr.mxu0 0.0
  %374 = vmatpush2.msra.mxu0 0.0
  %375 = vmatprep.subr.mxu0 0.0
  %376 = vmatpush2.msra.mxu0 0.0
  %377 = vmatprep.subr.mxu0 0.0
  %378 = vmatpush2.msra.mxu0 0.0
  %379 = vmatprep.subr.mxu0 0.0
  %380 = vmatpush2.msra.mxu0 0.0
  %381 = vmatprep.subr.mxu0 0.0
  %382 = vmatpush2.msra.mxu0 0.0
  %383 = vmatprep.subr.mxu0 0.0
  %384 = vmatpush2.msra.mxu0 0.0
  %385 = vmatprep.subr.mxu0 0.0
  %386 = vmatpush2.msra.mxu0 0.0
  %387 = vmatprep.subr.mxu0 0.0
  %388 = vmatpush2.msra.mxu0 0.0
  %389 = vmatprep.subr.mxu0 0.0
  %390 = vmatpush2.msra.mxu0 0.0
  %391 = vmatprep.subr.mxu0 0.0
  %392 = vmatpush2.msra.mxu0 0.0
  %393 = vmatprep.subr.mxu0 0.0
  %394 = vmatpush2.msra.mxu0 0.0
  %395 = vmatprep.subr.mxu0 0.0
  %396 = vmatpush2.msra.mxu0 0.0
  %397 = vmatprep.subr.mxu0 0.0
  %398 = vmatpush2.msra.mxu0 0.0
  %399 = vmatprep.subr.mxu0 0.0
  %400 = vmatpush2.msra.mxu0 0.0
  %401 = vmatprep.mubr.f32.mxu0 0.0
  %402 = vmatmul.mubr.f32.gmra.mxu0 %v325
  %v403 = vpop.f32.mrf.mxu0
  %v404 = vadd.f32 0.0, %v403
  %v405 = vpop.f32.mrf.mxu0
  %406 = vmatprep.mubr.f32.mxu0 0.0
  %407 = vmatmul.mubr.f32.gmra.mxu0 %v328
  %v408 = vpop.f32.mrf.mxu0
  %v409 = vadd.f32 0.0, %v408
  %v410 = vpop.f32.mrf.mxu0
  %411 = vmatprep.mubr.f32.mxu0 0.0
  %412 = vmatmul.mubr.f32.gmra.mxu0 %v331
  %v413 = vpop.f32.mrf.mxu0
  %v414 = vadd.f32 0.0, %v413
  %v415 = vpop.f32.mrf.mxu0
  %416 = vdwg.mxu0
  %v417 = vsub.f32 %v228, %v404
  %v418 = vsub.f32 %v233, %v409
  %v419 = vsub.f32 %v238, %v414
  %v420 = vmul.f32 %v417, %v417
  %v421 = vmul.f32 %v418, %v418
  %v422 = vmul.f32 %v419, %v419
  %v424 = vsel %vm249, %v422, 0
  %426 = vmatprep.subr.mxu0 0.0
  %427 = vmatpush1.msra.mxu0 0.0
  %428 = vmatprep.subr.mxu0 0.0
  %429 = vmatpush1.msra.mxu0 0.0
  %430 = vmatprep.subr.mxu0 0.0
  %431 = vmatpush1.msra.mxu0 0.0
  %432 = vmatprep.subr.mxu0 0.0
  %433 = vmatpush1.msra.mxu0 0.0
  %434 = vmatprep.subr.mxu0 0.0
  %435 = vmatpush1.msra.mxu0 0.0
  %436 = vmatprep.subr.mxu0 0.0
  %437 = vmatpush1.msra.mxu0 0.0
  %438 = vmatprep.subr.mxu0 0.0
  %439 = vmatpush1.msra.mxu0 0.0
  %440 = vmatprep.subr.mxu0 0.0
  %441 = vmatpush1.msra.mxu0 0.0
  %442 = vmatprep.subr.mxu0 0.0
  %443 = vmatpush1.msra.mxu0 0.0
  %444 = vmatprep.subr.mxu0 0.0
  %445 = vmatpush1.msra.mxu0 0.0
  %446 = vmatprep.subr.mxu0 0.0
  %447 = vmatpush1.msra.mxu0 0.0
  %448 = vmatprep.subr.mxu0 0.0
  %449 = vmatpush1.msra.mxu0 0.0
  %450 = vmatprep.subr.mxu0 0.0
  %451 = vmatpush1.msra.mxu0 0.0
  %452 = vmatprep.subr.mxu0 0.0
  %453 = vmatpush1.msra.mxu0 %v424
  %454 = vmatprep.subr.mxu0 0.0
  %455 = vmatpush1.msra.mxu0 %v421
  %456 = vmatprep.subr.mxu0 0.0
  %457 = vmatpush1.msra.mxu0 %v420
  %458 = vmatprep.subr.mxu0 0.0
  %459 = vmatpush2.msra.mxu0 0.0
  %460 = vmatprep.subr.mxu0 0.0
  %461 = vmatpush2.msra.mxu0 0.0
  %462 = vmatprep.subr.mxu0 0.0
  %463 = vmatpush2.msra.mxu0 0.0
  %464 = vmatprep.subr.mxu0 0.0
  %465 = vmatpush2.msra.mxu0 0.0
  %466 = vmatprep.subr.mxu0 0.0
  %467 = vmatpush2.msra.mxu0 0.0
  %468 = vmatprep.subr.mxu0 0.0
  %469 = vmatpush2.msra.mxu0 0.0
  %470 = vmatprep.subr.mxu0 0.0
  %471 = vmatpush2.msra.mxu0 0.0
  %472 = vmatprep.subr.mxu0 0.0
  %473 = vmatpush2.msra.mxu0 0.0
  %474 = vmatprep.subr.mxu0 0.0
  %475 = vmatpush2.msra.mxu0 0.0
  %476 = vmatprep.subr.mxu0 0.0
  %477 = vmatpush2.msra.mxu0 0.0
  %478 = vmatprep.subr.mxu0 0.0
  %479 = vmatpush2.msra.mxu0 0.0
  %480 = vmatprep.subr.mxu0 0.0
  %481 = vmatpush2.msra.mxu0 0.0
  %482 = vmatprep.subr.mxu0 0.0
  %483 = vmatpush2.msra.mxu0 0.0
  %484 = vmatprep.subr.mxu0 0.0
  %485 = vmatpush2.msra.mxu0 0.0
  %486 = vmatprep.subr.mxu0 0.0
  %487 = vmatpush2.msra.mxu0 0.0
  %488 = vmatprep.subr.mxu0 0.0
  %489 = vmatpush2.msra.mxu0 0.0
  %490 = vmatprep.mubr.f32.mxu0 0.0
  %491 = vmatmul.mubr.f32.gmra.mxu0 %v247
  %v492 = vpop.f32.mrf.mxu0
  %v493 = vadd.f32 1e-05, %v492
  %v494 = vpop.f32.mrf.mxu0
  %495 = vdwg.mxu0
  %v496 = vrsqrt.pop %v493
  %v498 = vsel %vm333, %v496, 0
  %500 = vmatprep.subr.mxu0 0.0
  %501 = vmatpush1.msra.mxu0 0.0
  %502 = vmatprep.subr.mxu0 0.0
  %503 = vmatpush1.msra.mxu0 0.0
  %504 = vmatprep.subr.mxu0 0.0
  %505 = vmatpush1.msra.mxu0 0.0
  %506 = vmatprep.subr.mxu0 0.0
  %507 = vmatpush1.msra.mxu0 0.0
  %508 = vmatprep.subr.mxu0 0.0
  %509 = vmatpush1.msra.mxu0 0.0
  %510 = vmatprep.subr.mxu0 0.0
  %511 = vmatpush1.msra.mxu0 0.0
  %512 = vmatprep.subr.mxu0 0.0
  %513 = vmatpush1.msra.mxu0 0.0
  %514 = vmatprep.subr.mxu0 0.0
  %515 = vmatpush1.msra.mxu0 0.0
  %516 = vmatprep.subr.mxu0 0.0
  %517 = vmatpush1.msra.mxu0 0.0
  %518 = vmatprep.subr.mxu0 0.0
  %519 = vmatpush1.msra.mxu0 0.0
  %520 = vmatprep.subr.mxu0 0.0
  %521 = vmatpush1.msra.mxu0 0.0
  %522 = vmatprep.subr.mxu0 0.0
  %523 = vmatpush1.msra.mxu0 0.0
  %524 = vmatprep.subr.mxu0 0.0
  %525 = vmatpush1.msra.mxu0 0.0
  %526 = vmatprep.subr.mxu0 0.0
  %527 = vmatpush1.msra.mxu0 0.0
  %528 = vmatprep.subr.mxu0 0.0
  %529 = vmatpush1.msra.mxu0 0.0
  %530 = vmatprep.subr.mxu0 0.0
  %531 = vmatpush1.msra.mxu0 %v498
  %532 = vmatprep.subr.mxu0 0.0
  %533 = vmatpush2.msra.mxu0 0.0
  %534 = vmatprep.subr.mxu0 0.0
  %535 = vmatpush2.msra.mxu0 0.0
  %536 = vmatprep.subr.mxu0 0.0
  %537 = vmatpush2.msra.mxu0 0.0
  %538 = vmatprep.subr.mxu0 0.0
  %539 = vmatpush2.msra.mxu0 0.0
  %540 = vmatprep.subr.mxu0 0.0
  %541 = vmatpush2.msra.mxu0 0.0
  %542 = vmatprep.subr.mxu0 0.0
  %543 = vmatpush2.msra.mxu0 0.0
  %544 = vmatprep.subr.mxu0 0.0
  %545 = vmatpush2.msra.mxu0 0.0
  %546 = vmatprep.subr.mxu0 0.0
  %547 = vmatpush2.msra.mxu0 0.0
  %548 = vmatprep.subr.mxu0 0.0
  %549 = vmatpush2.msra.mxu0 0.0
  %550 = vmatprep.subr.mxu0 0.0
  %551 = vmatpush2.msra.mxu0 0.0
  %552 = vmatprep.subr.mxu0 0.0
  %553 = vmatpush2.msra.mxu0 0.0
  %554 = vmatprep.subr.mxu0 0.0
  %555 = vmatpush2.msra.mxu0 0.0
  %556 = vmatprep.subr.mxu0 0.0
  %557 = vmatpush2.msra.mxu0 0.0
  %558 = vmatprep.subr.mxu0 0.0
  %559 = vmatpush2.msra.mxu0 0.0
  %560 = vmatprep.subr.mxu0 0.0
  %561 = vmatpush2.msra.mxu0 0.0
  %562 = vmatprep.subr.mxu0 0.0
  %563 = vmatpush2.msra.mxu0 0.0
  %564 = vmatprep.mubr.f32.mxu0 0.0
  %565 = vmatmul.mubr.f32.gmra.mxu0 %v325
  %v566 = vpop.f32.mrf.mxu0
  %v567 = vadd.f32 0.0, %v566
  %v568 = vpop.f32.mrf.mxu0
  %569 = vmatprep.mubr.f32.mxu0 0.0
  %570 = vmatmul.mubr.f32.gmra.mxu0 %v328
  %v571 = vpop.f32.mrf.mxu0
  %v572 = vadd.f32 0.0, %v571
  %v573 = vpop.f32.mrf.mxu0
  %574 = vmatprep.mubr.f32.mxu0 0.0
  %575 = vmatmul.mubr.f32.gmra.mxu0 %v331
  %v576 = vpop.f32.mrf.mxu0
  %v577 = vadd.f32 0.0, %v576
  %v578 = vpop.f32.mrf.mxu0
  %579 = vdwg.mxu0
  %v580 = vmul.f32 %v417, %v567
  %v581 = vmul.f32 %v418, %v572
  %v582 = vmul.f32 %v419, %v577
  %v583 = vld [vmem:[%s4] sm:$0x1]
  %v585 = vlaneseq
  %v586 = vshrl.u32 %v585, 7
  %v587 = vsub.s32 0, %v586
  %v588 = vrot.slane %v583, %v587
  %v590 = vmul.f32 %v580, %v588
  %v591 = vmul.f32 %v581, %v588
  %v592 = vmul.f32 %v582, %v588
  %v593 = vld [vmem:[%s5] sm:$0x1]
  %v595 = vlaneseq
  %v596 = vshrl.u32 %v595, 7
  %v597 = vsub.s32 0, %v596
  %v598 = vrot.slane %v593, %v597
  %v600 = vadd.f32 %v590, %v598
  %v601 = vadd.f32 %v591, %v598
  %v602 = vadd.f32 %v592, %v598
  %v603 = vld [vmem:[%s6] sm:$0xff]
  %v604 = vld [vmem:[%s6 + $0x8] sm:$0xff]
  %v605 = vld [vmem:[%s6 + $0x10] sm:$0x3]
  %v606 = vadd.f32 %v600, %v603
  %v607 = vadd.f32 %v601, %v604
  %v608 = vadd.f32 %v602, %v605
  %609 = vst.msk [vmem:[%s7] sm:$0xff] %vm71, %v606
  %610 = vst.msk [vmem:[%s7 + $0x8] sm:$0xff] %vm71, %v607
  %vm611 = vcmask 254976
  %612 = vst.msk [vmem:[%s7 + $0x10] sm:$0x3] %vm611, %v608
  // Predicated region
  $region30: #{generator_forward.19} parent=0 // pred_check
    _
  $region31: #{generator_forward.19} parent=0 // pred_check_branch
    %614 = sbr.rel (0) target = $region33
  $region32: #{generator_forward.19} parent=0 // pred_region
    _
  $region33: #{generator_forward.19} parent=0 // pred_fallthru
    _
  // Predicated region
  $region34: #{generator_forward.19} parent=0 // pred_check
    _
  $region35: #{generator_forward.19} parent=0 // pred_check_branch
    %616 = sbr.rel (0) target = $region37
  $region36: #{generator_forward.19} parent=0 // pred_region
    _
  $region37: #{generator_forward.19} parent=0 // pred_fallthru
    _

// kernel: generator_forward.20
$region0: #{generator_forward.20}
  #allocation0 [shape = 'u32[]', space=smem, size = 0x4, offset = 0x4, fixed_abs, tag = 'smem constant byte address 0x4 - core index']
  #allocation1 [shape = 'u32[144,128]{1,0:T(1,128)}', space=vmem, size = 0x12000, scoped, tag = 'internal scratch']
  %s0 = inlined_call_operand.vmem [shape: f32[18,288], index: 0, kind: input, shape index: {}]
  %s1 = inlined_call_operand.vmem [shape: f32[288,32], index: 1, kind: input, shape index: {}]
  %s2 = inlined_call_operand.vmem [shape: f32[18,1], index: 2, kind: input, shape index: {}]
  %s3 = inlined_call_operand.vmem [shape: f32[1,18], index: 3, kind: input, shape index: {}]
  %s4 = inlined_call_operand.vmem [shape: f32[1,32], index: 4, kind: input, shape index: {}]
  %s5 = inlined_call_operand.vmem [shape: f32[1,32], index: 5, kind: input, shape index: {}]
  %s6 = inlined_call_operand.vmem [shape: f32[18,32], index: 6, kind: output, shape index: {}]
  %s7 = sld [smem:[#allocation0]]
  $region34: #{generator_forward.20} parent=0
    _
  %s9 = ssub.s32 1, %s7
  %s10 = scalar_select 0, %s9, %s7
  // Predicated region
  $region2: #{generator_forward.20} parent=0 // pred_check
    _
  $region3: #{generator_forward.20} parent=0 // pred_check_branch
    %12 = sbr.rel (0) target = $region5
  $region4: #{generator_forward.20} parent=0 // pred_region
    _
  $region5: #{generator_forward.20} parent=0 // pred_fallthru
    _
  // Predicated region
  $region6: #{generator_forward.20} parent=0 // pred_check
    _
  $region7: #{generator_forward.20} parent=0 // pred_check_branch
    %14 = sbr.rel (0) target = $region9
  $region8: #{generator_forward.20} parent=0 // pred_region
    _
  $region9: #{generator_forward.20} parent=0 // pred_fallthru
    _
  // Predicated region
  $region10: #{generator_forward.20} parent=0 // pred_check
    _
  $region11: #{generator_forward.20} parent=0 // pred_check_branch
    %16 = sbr.rel (0) target = $region13
  $region12: #{generator_forward.20} parent=0 // pred_region
    _
  $region13: #{generator_forward.20} parent=0 // pred_fallthru
    _
  // Predicated region
  $region14: #{generator_forward.20} parent=0 // pred_check
    _
  $region15: #{generator_forward.20} parent=0 // pred_check_branch
    %18 = sbr.rel (0) target = $region17
  $region16: #{generator_forward.20} parent=0 // pred_region
    _
  $region17: #{generator_forward.20} parent=0 // pred_fallthru
    _
  // Predicated region
  $region18: #{generator_forward.20} parent=0 // pred_check
    _
  $region19: #{generator_forward.20} parent=0 // pred_check_branch
    %20 = sbr.rel (0) target = $region21
  $region20: #{generator_forward.20} parent=0 // pred_region
    _
  $region21: #{generator_forward.20} parent=0 // pred_fallthru
    _
  // Predicated region
  $region22: #{generator_forward.20} parent=0 // pred_check
    _
  $region23: #{generator_forward.20} parent=0 // pred_check_branch
    %22 = sbr.rel (0) target = $region25
  $region24: #{generator_forward.20} parent=0 // pred_region
    _
  $region25: #{generator_forward.20} parent=0 // pred_fallthru
    _
  %v23 = vld [vmem:[%s0] sm:$0xff]
  %v24 = vld [vmem:[%s0 + $0x8] sm:$0xff]
  %v25 = vld [vmem:[%s0 + $0x10] sm:$0xff]
  %v26 = vld [vmem:[%s0 + $0x18] sm:$0xff]
  %v27 = vld [vmem:[%s0 + $0x20] sm:$0xff]
  %v28 = vld [vmem:[%s0 + $0x28] sm:$0xff]
  %v29 = vld [vmem:[%s0 + $0x30] sm:$0x3]
  %v30 = vld [vmem:[%s0 + $0x38] sm:$0x3]
  %v31 = vld [vmem:[%s0 + $0x40] sm:$0x3]
  %v32 = vld [vmem:[%s1] sm:$0xff]
  %v33 = vld [vmem:[%s1 + $0x8] sm:$0xff]
  %v34 = vld [vmem:[%s1 + $0x10] sm:$0xff]
  %v35 = vld [vmem:[%s1 + $0x18] sm:$0xff]
  %v36 = vld [vmem:[%s1 + $0x20] sm:$0xff]
  %v37 = vld [vmem:[%s1 + $0x28] sm:$0xff]
  %v38 = vld [vmem:[%s1 + $0x30] sm:$0xff]
  %v39 = vld [vmem:[%s1 + $0x38] sm:$0xff]
  %v40 = vld [vmem:[%s1 + $0x40] sm:$0xff]
  %v41 = vld [vmem:[%s1 + $0x48] sm:$0xff]
  %v42 = vld [vmem:[%s1 + $0x50] sm:$0xff]
  %v43 = vld [vmem:[%s1 + $0x58] sm:$0xff]
  %v44 = vld [vmem:[%s1 + $0x60] sm:$0xff]
  %v45 = vld [vmem:[%s1 + $0x68] sm:$0xff]
  %v46 = vld [vmem:[%s1 + $0x70] sm:$0xff]
  %v47 = vld [vmem:[%s1 + $0x78] sm:$0xff]
  %v48 = vld [vmem:[%s1 + $0x80] sm:$0xff]
  %v49 = vld [vmem:[%s1 + $0x88] sm:$0xff]
  %v50 = vld [vmem:[%s1 + $0x90] sm:$0xff]
  %v51 = vld [vmem:[%s1 + $0x98] sm:$0xff]
  %v52 = vld [vmem:[%s1 + $0xa0] sm:$0xff]
  %v53 = vld [vmem:[%s1 + $0xa8] sm:$0xff]
  %v54 = vld [vmem:[%s1 + $0xb0] sm:$0xff]
  %v55 = vld [vmem:[%s1 + $0xb8] sm:$0xff]
  %v56 = vld [vmem:[%s1 + $0xc0] sm:$0xff]
  %v57 = vld [vmem:[%s1 + $0xc8] sm:$0xff]
  %v58 = vld [vmem:[%s1 + $0xd0] sm:$0xff]
  %v59 = vld [vmem:[%s1 + $0xd8] sm:$0xff]
  %v60 = vld [vmem:[%s1 + $0xe0] sm:$0xff]
  %v61 = vld [vmem:[%s1 + $0xe8] sm:$0xff]
  %v62 = vld [vmem:[%s1 + $0xf0] sm:$0xff]
  %v63 = vld [vmem:[%s1 + $0xf8] sm:$0xff]
  %v64 = vld [vmem:[%s1 + $0x100] sm:$0xff]
  %v65 = vld [vmem:[%s1 + $0x108] sm:$0xff]
  %v66 = vld [vmem:[%s1 + $0x110] sm:$0xff]
  %v67 = vld [vmem:[%s1 + $0x118] sm:$0xff]
  %vm68 = vcmask 261120
  %v70 = vsel %vm68, %v25, 0
  %v73 = vsel %vm68, %v28, 0
  %v76 = vsel %vm68, %v31, 0
  %78 = vmatprep.subr.mxu0 0.0
  %79 = vmatpush1.msra.mxu0 %v47
  %80 = vmatprep.subr.mxu0 0.0
  %81 = vmatpush1.msra.mxu0 %v46
  %82 = vmatprep.subr.mxu0 0.0
  %83 = vmatpush1.msra.mxu0 %v45
  %84 = vmatprep.subr.mxu0 0.0
  %85 = vmatpush1.msra.mxu0 %v44
  %86 = vmatprep.subr.mxu0 0.0
  %87 = vmatpush1.msra.mxu0 %v43
  %88 = vmatprep.subr.mxu0 0.0
  %89 = vmatpush1.msra.mxu0 %v42
  %90 = vmatprep.subr.mxu0 0.0
  %91 = vmatpush1.msra.mxu0 %v41
  %92 = vmatprep.subr.mxu0 0.0
  %93 = vmatpush1.msra.mxu0 %v40
  %94 = vmatprep.subr.mxu0 0.0
  %95 = vmatpush1.msra.mxu0 %v39
  %96 = vmatprep.subr.mxu0 0.0
  %97 = vmatpush1.msra.mxu0 %v38
  %98 = vmatprep.subr.mxu0 0.0
  %99 = vmatpush1.msra.mxu0 %v37
  %100 = vmatprep.subr.mxu0 0.0
  %101 = vmatpush1.msra.mxu0 %v36
  %102 = vmatprep.subr.mxu0 0.0
  %103 = vmatpush1.msra.mxu0 %v35
  %104 = vmatprep.subr.mxu0 0.0
  %105 = vmatpush1.msra.mxu0 %v34
  %106 = vmatprep.subr.mxu0 0.0
  %107 = vmatpush1.msra.mxu0 %v33
  %108 = vmatprep.subr.mxu0 0.0
  %109 = vmatpush1.msra.mxu0 %v32
  %110 = vmatprep.subr.mxu0 0.0
  %111 = vmatpush2.msra.mxu0 %v63
  %112 = vmatprep.subr.mxu0 0.0
  %113 = vmatpush2.msra.mxu0 %v62
  %114 = vmatprep.subr.mxu0 0.0
  %115 = vmatpush2.msra.mxu0 %v61
  %116 = vmatprep.subr.mxu0 0.0
  %117 = vmatpush2.msra.mxu0 %v60
  %118 = vmatprep.subr.mxu0 0.0
  %119 = vmatpush2.msra.mxu0 %v59
  %120 = vmatprep.subr.mxu0 0.0
  %121 = vmatpush2.msra.mxu0 %v58
  %122 = vmatprep.subr.mxu0 0.0
  %123 = vmatpush2.msra.mxu0 %v57
  %124 = vmatprep.subr.mxu0 0.0
  %125 = vmatpush2.msra.mxu0 %v56
  %126 = vmatprep.subr.mxu0 0.0
  %127 = vmatpush2.msra.mxu0 %v55
  %128 = vmatprep.subr.mxu0 0.0
  %129 = vmatpush2.msra.mxu0 %v54
  %130 = vmatprep.subr.mxu0 0.0
  %131 = vmatpush2.msra.mxu0 %v53
  %132 = vmatprep.subr.mxu0 0.0
  %133 = vmatpush2.msra.mxu0 %v52
  %134 = vmatprep.subr.mxu0 0.0
  %135 = vmatpush2.msra.mxu0 %v51
  %136 = vmatprep.subr.mxu0 0.0
  %137 = vmatpush2.msra.mxu0 %v50
  %138 = vmatprep.subr.mxu0 0.0
  %139 = vmatpush2.msra.mxu0 %v49
  %140 = vmatprep.subr.mxu0 0.0
  %141 = vmatpush2.msra.mxu0 %v48
  %142 = vmatprep.mubr.f32.mxu0 %v24
  %143 = vmatmul.mubr.f32.gmra.mxu0 %v23
  %v144 = vpop.f32.mrf.mxu0
  %v145 = vadd.f32 0.0, %v144
  %v146 = vpop.f32.mrf.mxu0
  %147 = vmatprep.mubr.f32.mxu0 %v27
  %148 = vmatmul.mubr.f32.gmra.mxu0 %v26
  %v149 = vpop.f32.mrf.mxu0
  %v150 = vadd.f32 0.0, %v149
  %v151 = vpop.f32.mrf.mxu0
  %152 = vmatprep.mubr.f32.mxu0 %v30
  %153 = vmatmul.mubr.f32.gmra.mxu0 %v29
  %v154 = vpop.f32.mrf.mxu0
  %v155 = vadd.f32 0.0, %v154
  %v156 = vpop.f32.mrf.mxu0
  %157 = vdwg.mxu0
  %158 = vmatprep.subr.mxu0 0.0
  %159 = vmatpush1.msra.mxu0 0.0
  %160 = vmatprep.subr.mxu0 0.0
  %161 = vmatpush1.msra.mxu0 0.0
  %162 = vmatprep.subr.mxu0 0.0
  %163 = vmatpush1.msra.mxu0 0.0
  %164 = vmatprep.subr.mxu0 0.0
  %165 = vmatpush1.msra.mxu0 0.0
  %166 = vmatprep.subr.mxu0 0.0
  %167 = vmatpush1.msra.mxu0 0.0
  %168 = vmatprep.subr.mxu0 0.0
  %169 = vmatpush1.msra.mxu0 0.0
  %170 = vmatprep.subr.mxu0 0.0
  %171 = vmatpush1.msra.mxu0 0.0
  %172 = vmatprep.subr.mxu0 0.0
  %173 = vmatpush1.msra.mxu0 0.0
  %174 = vmatprep.subr.mxu0 0.0
  %175 = vmatpush1.msra.mxu0 0.0
  %176 = vmatprep.subr.mxu0 0.0
  %177 = vmatpush1.msra.mxu0 0.0
  %178 = vmatprep.subr.mxu0 0.0
  %179 = vmatpush1.msra.mxu0 0.0
  %180 = vmatprep.subr.mxu0 0.0
  %181 = vmatpush1.msra.mxu0 0.0
  %182 = vmatprep.subr.mxu0 0.0
  %183 = vmatpush1.msra.mxu0 %v67
  %184 = vmatprep.subr.mxu0 0.0
  %185 = vmatpush1.msra.mxu0 %v66
  %186 = vmatprep.subr.mxu0 0.0
  %187 = vmatpush1.msra.mxu0 %v65
  %188 = vmatprep.subr.mxu0 0.0
  %189 = vmatpush1.msra.mxu0 %v64
  %190 = vmatprep.subr.mxu0 0.0
  %191 = vmatpush2.msra.mxu0 0.0
  %192 = vmatprep.subr.mxu0 0.0
  %193 = vmatpush2.msra.mxu0 0.0
  %194 = vmatprep.subr.mxu0 0.0
  %195 = vmatpush2.msra.mxu0 0.0
  %196 = vmatprep.subr.mxu0 0.0
  %197 = vmatpush2.msra.mxu0 0.0
  %198 = vmatprep.subr.mxu0 0.0
  %199 = vmatpush2.msra.mxu0 0.0
  %200 = vmatprep.subr.mxu0 0.0
  %201 = vmatpush2.msra.mxu0 0.0
  %202 = vmatprep.subr.mxu0 0.0
  %203 = vmatpush2.msra.mxu0 0.0
  %204 = vmatprep.subr.mxu0 0.0
  %205 = vmatpush2.msra.mxu0 0.0
  %206 = vmatprep.subr.mxu0 0.0
  %207 = vmatpush2.msra.mxu0 0.0
  %208 = vmatprep.subr.mxu0 0.0
  %209 = vmatpush2.msra.mxu0 0.0
  %210 = vmatprep.subr.mxu0 0.0
  %211 = vmatpush2.msra.mxu0 0.0
  %212 = vmatprep.subr.mxu0 0.0
  %213 = vmatpush2.msra.mxu0 0.0
  %214 = vmatprep.subr.mxu0 0.0
  %215 = vmatpush2.msra.mxu0 0.0
  %216 = vmatprep.subr.mxu0 0.0
  %217 = vmatpush2.msra.mxu0 0.0
  %218 = vmatprep.subr.mxu0 0.0
  %219 = vmatpush2.msra.mxu0 0.0
  %220 = vmatprep.subr.mxu0 0.0
  %221 = vmatpush2.msra.mxu0 0.0
  %222 = vmatprep.mubr.f32.mxu0 0.0
  %223 = vmatmul.mubr.f32.gmra.mxu0 %v70
  %v224 = vpop.f32.mrf.mxu0
  %v225 = vadd.f32 %v145, %v224
  %v226 = vpop.f32.mrf.mxu0
  %227 = vmatprep.mubr.f32.mxu0 0.0
  %228 = vmatmul.mubr.f32.gmra.mxu0 %v73
  %v229 = vpop.f32.mrf.mxu0
  %v230 = vadd.f32 %v150, %v229
  %v231 = vpop.f32.mrf.mxu0
  %232 = vmatprep.mubr.f32.mxu0 0.0
  %233 = vmatmul.mubr.f32.gmra.mxu0 %v76
  %v234 = vpop.f32.mrf.mxu0
  %v235 = vadd.f32 %v155, %v234
  %v236 = vpop.f32.mrf.mxu0
  %237 = vdwg.mxu0
  %v238 = vld [vmem:[%s2] sm:$0xff]
  %v239 = vld [vmem:[%s2 + $0x8] sm:$0xff]
  %v240 = vld [vmem:[%s2 + $0x10] sm:$0x3]
  %v241 = vld [vmem:[%s3] sm:$0x1]
  %vm242 = vcmask 146432
  %v244 = vsel %vm242, %v241, 0
  %vm246 = vcmask 1041408
  %v248 = vsel %vm246, %v235, 0
  %250 = vmatprep.subr.mxu0 0.0
  %251 = vmatpush1.msra.mxu0 0.0
  %252 = vmatprep.subr.mxu0 0.0
  %253 = vmatpush1.msra.mxu0 0.0
  %254 = vmatprep.subr.mxu0 0.0
  %255 = vmatpush1.msra.mxu0 0.0
  %256 = vmatprep.subr.mxu0 0.0
  %257 = vmatpush1.msra.mxu0 0.0
  %258 = vmatprep.subr.mxu0 0.0
  %259 = vmatpush1.msra.mxu0 0.0
  %260 = vmatprep.subr.mxu0 0.0
  %261 = vmatpush1.msra.mxu0 0.0
  %262 = vmatprep.subr.mxu0 0.0
  %263 = vmatpush1.msra.mxu0 0.0
  %264 = vmatprep.subr.mxu0 0.0
  %265 = vmatpush1.msra.mxu0 0.0
  %266 = vmatprep.subr.mxu0 0.0
  %267 = vmatpush1.msra.mxu0 0.0
  %268 = vmatprep.subr.mxu0 0.0
  %269 = vmatpush1.msra.mxu0 0.0
  %270 = vmatprep.subr.mxu0 0.0
  %271 = vmatpush1.msra.mxu0 0.0
  %272 = vmatprep.subr.mxu0 0.0
  %273 = vmatpush1.msra.mxu0 0.0
  %274 = vmatprep.subr.mxu0 0.0
  %275 = vmatpush1.msra.mxu0 0.0
  %276 = vmatprep.subr.mxu0 0.0
  %277 = vmatpush1.msra.mxu0 %v248
  %278 = vmatprep.subr.mxu0 0.0
  %279 = vmatpush1.msra.mxu0 %v230
  %280 = vmatprep.subr.mxu0 0.0
  %281 = vmatpush1.msra.mxu0 %v225
  %282 = vmatprep.subr.mxu0 0.0
  %283 = vmatpush2.msra.mxu0 0.0
  %284 = vmatprep.subr.mxu0 0.0
  %285 = vmatpush2.msra.mxu0 0.0
  %286 = vmatprep.subr.mxu0 0.0
  %287 = vmatpush2.msra.mxu0 0.0
  %288 = vmatprep.subr.mxu0 0.0
  %289 = vmatpush2.msra.mxu0 0.0
  %290 = vmatprep.subr.mxu0 0.0
  %291 = vmatpush2.msra.mxu0 0.0
  %292 = vmatprep.subr.mxu0 0.0
  %293 = vmatpush2.msra.mxu0 0.0
  %294 = vmatprep.subr.mxu0 0.0
  %295 = vmatpush2.msra.mxu0 0.0
  %296 = vmatprep.subr.mxu0 0.0
  %297 = vmatpush2.msra.mxu0 0.0
  %298 = vmatprep.subr.mxu0 0.0
  %299 = vmatpush2.msra.mxu0 0.0
  %300 = vmatprep.subr.mxu0 0.0
  %301 = vmatpush2.msra.mxu0 0.0
  %302 = vmatprep.subr.mxu0 0.0
  %303 = vmatpush2.msra.mxu0 0.0
  %304 = vmatprep.subr.mxu0 0.0
  %305 = vmatpush2.msra.mxu0 0.0
  %306 = vmatprep.subr.mxu0 0.0
  %307 = vmatpush2.msra.mxu0 0.0
  %308 = vmatprep.subr.mxu0 0.0
  %309 = vmatpush2.msra.mxu0 0.0
  %310 = vmatprep.subr.mxu0 0.0
  %311 = vmatpush2.msra.mxu0 0.0
  %312 = vmatprep.subr.mxu0 0.0
  %313 = vmatpush2.msra.mxu0 0.0
  %314 = vmatprep.mubr.f32.mxu0 0.0
  %315 = vmatmul.mubr.f32.gmra.mxu0 %v244
  %v316 = vpop.f32.mrf.mxu0
  %v317 = vadd.f32 0.0, %v316
  %v318 = vpop.f32.mrf.mxu0
  %319 = vdwg.mxu0
  %vm320 = vcmask 7168
  %v322 = vsel %vm320, %v238, 0
  %v325 = vsel %vm320, %v239, 0
  %v328 = vsel %vm320, %v240, 0
  %vm330 = vcmask 1040384
  %v332 = vsel %vm330, %v317, 0
  %334 = vmatprep.subr.mxu0 0.0
  %335 = vmatpush1.msra.mxu0 0.0
  %336 = vmatprep.subr.mxu0 0.0
  %337 = vmatpush1.msra.mxu0 0.0
  %338 = vmatprep.subr.mxu0 0.0
  %339 = vmatpush1.msra.mxu0 0.0
  %340 = vmatprep.subr.mxu0 0.0
  %341 = vmatpush1.msra.mxu0 0.0
  %342 = vmatprep.subr.mxu0 0.0
  %343 = vmatpush1.msra.mxu0 0.0
  %344 = vmatprep.subr.mxu0 0.0
  %345 = vmatpush1.msra.mxu0 0.0
  %346 = vmatprep.subr.mxu0 0.0
  %347 = vmatpush1.msra.mxu0 0.0
  %348 = vmatprep.subr.mxu0 0.0
  %349 = vmatpush1.msra.mxu0 0.0
  %350 = vmatprep.subr.mxu0 0.0
  %351 = vmatpush1.msra.mxu0 0.0
  %352 = vmatprep.subr.mxu0 0.0
  %353 = vmatpush1.msra.mxu0 0.0
  %354 = vmatprep.subr.mxu0 0.0
  %355 = vmatpush1.msra.mxu0 0.0
  %356 = vmatprep.subr.mxu0 0.0
  %357 = vmatpush1.msra.mxu0 0.0
  %358 = vmatprep.subr.mxu0 0.0
  %359 = vmatpush1.msra.mxu0 0.0
  %360 = vmatprep.subr.mxu0 0.0
  %361 = vmatpush1.msra.mxu0 0.0
  %362 = vmatprep.subr.mxu0 0.0
  %363 = vmatpush1.msra.mxu0 0.0
  %364 = vmatprep.subr.mxu0 0.0
  %365 = vmatpush1.msra.mxu0 %v332
  %366 = vmatprep.subr.mxu0 0.0
  %367 = vmatpush2.msra.mxu0 0.0
  %368 = vmatprep.subr.mxu0 0.0
  %369 = vmatpush2.msra.mxu0 0.0
  %370 = vmatprep.subr.mxu0 0.0
  %371 = vmatpush2.msra.mxu0 0.0
  %372 = vmatprep.subr.mxu0 0.0
  %373 = vmatpush2.msra.mxu0 0.0
  %374 = vmatprep.subr.mxu0 0.0
  %375 = vmatpush2.msra.mxu0 0.0
  %376 = vmatprep.subr.mxu0 0.0
  %377 = vmatpush2.msra.mxu0 0.0
  %378 = vmatprep.subr.mxu0 0.0
  %379 = vmatpush2.msra.mxu0 0.0
  %380 = vmatprep.subr.mxu0 0.0
  %381 = vmatpush2.msra.mxu0 0.0
  %382 = vmatprep.subr.mxu0 0.0
  %383 = vmatpush2.msra.mxu0 0.0
  %384 = vmatprep.subr.mxu0 0.0
  %385 = vmatpush2.msra.mxu0 0.0
  %386 = vmatprep.subr.mxu0 0.0
  %387 = vmatpush2.msra.mxu0 0.0
  %388 = vmatprep.subr.mxu0 0.0
  %389 = vmatpush2.msra.mxu0 0.0
  %390 = vmatprep.subr.mxu0 0.0
  %391 = vmatpush2.msra.mxu0 0.0
  %392 = vmatprep.subr.mxu0 0.0
  %393 = vmatpush2.msra.mxu0 0.0
  %394 = vmatprep.subr.mxu0 0.0
  %395 = vmatpush2.msra.mxu0 0.0
  %396 = vmatprep.subr.mxu0 0.0
  %397 = vmatpush2.msra.mxu0 0.0
  %398 = vmatprep.mubr.f32.mxu0 0.0
  %399 = vmatmul.mubr.f32.gmra.mxu0 %v322
  %v400 = vpop.f32.mrf.mxu0
  %v401 = vadd.f32 0.0, %v400
  %v402 = vpop.f32.mrf.mxu0
  %403 = vmatprep.mubr.f32.mxu0 0.0
  %404 = vmatmul.mubr.f32.gmra.mxu0 %v325
  %v405 = vpop.f32.mrf.mxu0
  %v406 = vadd.f32 0.0, %v405
  %v407 = vpop.f32.mrf.mxu0
  %408 = vmatprep.mubr.f32.mxu0 0.0
  %409 = vmatmul.mubr.f32.gmra.mxu0 %v328
  %v410 = vpop.f32.mrf.mxu0
  %v411 = vadd.f32 0.0, %v410
  %v412 = vpop.f32.mrf.mxu0
  %413 = vdwg.mxu0
  %v414 = vsub.f32 %v225, %v401
  %v415 = vsub.f32 %v230, %v406
  %v416 = vsub.f32 %v235, %v411
  %v417 = vmul.f32 %v414, %v414
  %v418 = vmul.f32 %v415, %v415
  %v419 = vmul.f32 %v416, %v416
  %v421 = vsel %vm246, %v419, 0
  %423 = vmatprep.subr.mxu0 0.0
  %424 = vmatpush1.msra.mxu0 0.0
  %425 = vmatprep.subr.mxu0 0.0
  %426 = vmatpush1.msra.mxu0 0.0
  %427 = vmatprep.subr.mxu0 0.0
  %428 = vmatpush1.msra.mxu0 0.0
  %429 = vmatprep.subr.mxu0 0.0
  %430 = vmatpush1.msra.mxu0 0.0
  %431 = vmatprep.subr.mxu0 0.0
  %432 = vmatpush1.msra.mxu0 0.0
  %433 = vmatprep.subr.mxu0 0.0
  %434 = vmatpush1.msra.mxu0 0.0
  %435 = vmatprep.subr.mxu0 0.0
  %436 = vmatpush1.msra.mxu0 0.0
  %437 = vmatprep.subr.mxu0 0.0
  %438 = vmatpush1.msra.mxu0 0.0
  %439 = vmatprep.subr.mxu0 0.0
  %440 = vmatpush1.msra.mxu0 0.0
  %441 = vmatprep.subr.mxu0 0.0
  %442 = vmatpush1.msra.mxu0 0.0
  %443 = vmatprep.subr.mxu0 0.0
  %444 = vmatpush1.msra.mxu0 0.0
  %445 = vmatprep.subr.mxu0 0.0
  %446 = vmatpush1.msra.mxu0 0.0
  %447 = vmatprep.subr.mxu0 0.0
  %448 = vmatpush1.msra.mxu0 0.0
  %449 = vmatprep.subr.mxu0 0.0
  %450 = vmatpush1.msra.mxu0 %v421
  %451 = vmatprep.subr.mxu0 0.0
  %452 = vmatpush1.msra.mxu0 %v418
  %453 = vmatprep.subr.mxu0 0.0
  %454 = vmatpush1.msra.mxu0 %v417
  %455 = vmatprep.subr.mxu0 0.0
  %456 = vmatpush2.msra.mxu0 0.0
  %457 = vmatprep.subr.mxu0 0.0
  %458 = vmatpush2.msra.mxu0 0.0
  %459 = vmatprep.subr.mxu0 0.0
  %460 = vmatpush2.msra.mxu0 0.0
  %461 = vmatprep.subr.mxu0 0.0
  %462 = vmatpush2.msra.mxu0 0.0
  %463 = vmatprep.subr.mxu0 0.0
  %464 = vmatpush2.msra.mxu0 0.0
  %465 = vmatprep.subr.mxu0 0.0
  %466 = vmatpush2.msra.mxu0 0.0
  %467 = vmatprep.subr.mxu0 0.0
  %468 = vmatpush2.msra.mxu0 0.0
  %469 = vmatprep.subr.mxu0 0.0
  %470 = vmatpush2.msra.mxu0 0.0
  %471 = vmatprep.subr.mxu0 0.0
  %472 = vmatpush2.msra.mxu0 0.0
  %473 = vmatprep.subr.mxu0 0.0
  %474 = vmatpush2.msra.mxu0 0.0
  %475 = vmatprep.subr.mxu0 0.0
  %476 = vmatpush2.msra.mxu0 0.0
  %477 = vmatprep.subr.mxu0 0.0
  %478 = vmatpush2.msra.mxu0 0.0
  %479 = vmatprep.subr.mxu0 0.0
  %480 = vmatpush2.msra.mxu0 0.0
  %481 = vmatprep.subr.mxu0 0.0
  %482 = vmatpush2.msra.mxu0 0.0
  %483 = vmatprep.subr.mxu0 0.0
  %484 = vmatpush2.msra.mxu0 0.0
  %485 = vmatprep.subr.mxu0 0.0
  %486 = vmatpush2.msra.mxu0 0.0
  %487 = vmatprep.mubr.f32.mxu0 0.0
  %488 = vmatmul.mubr.f32.gmra.mxu0 %v244
  %v489 = vpop.f32.mrf.mxu0
  %v490 = vadd.f32 1e-05, %v489
  %v491 = vpop.f32.mrf.mxu0
  %492 = vdwg.mxu0
  %v493 = vrsqrt.pop %v490
  %v495 = vsel %vm330, %v493, 0
  %497 = vmatprep.subr.mxu0 0.0
  %498 = vmatpush1.msra.mxu0 0.0
  %499 = vmatprep.subr.mxu0 0.0
  %500 = vmatpush1.msra.mxu0 0.0
  %501 = vmatprep.subr.mxu0 0.0
  %502 = vmatpush1.msra.mxu0 0.0
  %503 = vmatprep.subr.mxu0 0.0
  %504 = vmatpush1.msra.mxu0 0.0
  %505 = vmatprep.subr.mxu0 0.0
  %506 = vmatpush1.msra.mxu0 0.0
  %507 = vmatprep.subr.mxu0 0.0
  %508 = vmatpush1.msra.mxu0 0.0
  %509 = vmatprep.subr.mxu0 0.0
  %510 = vmatpush1.msra.mxu0 0.0
  %511 = vmatprep.subr.mxu0 0.0
  %512 = vmatpush1.msra.mxu0 0.0
  %513 = vmatprep.subr.mxu0 0.0
  %514 = vmatpush1.msra.mxu0 0.0
  %515 = vmatprep.subr.mxu0 0.0
  %516 = vmatpush1.msra.mxu0 0.0
  %517 = vmatprep.subr.mxu0 0.0
  %518 = vmatpush1.msra.mxu0 0.0
  %519 = vmatprep.subr.mxu0 0.0
  %520 = vmatpush1.msra.mxu0 0.0
  %521 = vmatprep.subr.mxu0 0.0
  %522 = vmatpush1.msra.mxu0 0.0
  %523 = vmatprep.subr.mxu0 0.0
  %524 = vmatpush1.msra.mxu0 0.0
  %525 = vmatprep.subr.mxu0 0.0
  %526 = vmatpush1.msra.mxu0 0.0
  %527 = vmatprep.subr.mxu0 0.0
  %528 = vmatpush1.msra.mxu0 %v495
  %529 = vmatprep.subr.mxu0 0.0
  %530 = vmatpush2.msra.mxu0 0.0
  %531 = vmatprep.subr.mxu0 0.0
  %532 = vmatpush2.msra.mxu0 0.0
  %533 = vmatprep.subr.mxu0 0.0
  %534 = vmatpush2.msra.mxu0 0.0
  %535 = vmatprep.subr.mxu0 0.0
  %536 = vmatpush2.msra.mxu0 0.0
  %537 = vmatprep.subr.mxu0 0.0
  %538 = vmatpush2.msra.mxu0 0.0
  %539 = vmatprep.subr.mxu0 0.0
  %540 = vmatpush2.msra.mxu0 0.0
  %541 = vmatprep.subr.mxu0 0.0
  %542 = vmatpush2.msra.mxu0 0.0
  %543 = vmatprep.subr.mxu0 0.0
  %544 = vmatpush2.msra.mxu0 0.0
  %545 = vmatprep.subr.mxu0 0.0
  %546 = vmatpush2.msra.mxu0 0.0
  %547 = vmatprep.subr.mxu0 0.0
  %548 = vmatpush2.msra.mxu0 0.0
  %549 = vmatprep.subr.mxu0 0.0
  %550 = vmatpush2.msra.mxu0 0.0
  %551 = vmatprep.subr.mxu0 0.0
  %552 = vmatpush2.msra.mxu0 0.0
  %553 = vmatprep.subr.mxu0 0.0
  %554 = vmatpush2.msra.mxu0 0.0
  %555 = vmatprep.subr.mxu0 0.0
  %556 = vmatpush2.msra.mxu0 0.0
  %557 = vmatprep.subr.mxu0 0.0
  %558 = vmatpush2.msra.mxu0 0.0
  %559 = vmatprep.subr.mxu0 0.0
  %560 = vmatpush2.msra.mxu0 0.0
  %561 = vmatprep.mubr.f32.mxu0 0.0
  %562 = vmatmul.mubr.f32.gmra.mxu0 %v322
  %v563 = vpop.f32.mrf.mxu0
  %v564 = vadd.f32 0.0, %v563
  %v565 = vpop.f32.mrf.mxu0
  %566 = vmatprep.mubr.f32.mxu0 0.0
  %567 = vmatmul.mubr.f32.gmra.mxu0 %v325
  %v568 = vpop.f32.mrf.mxu0
  %v569 = vadd.f32 0.0, %v568
  %v570 = vpop.f32.mrf.mxu0
  %571 = vmatprep.mubr.f32.mxu0 0.0
  %572 = vmatmul.mubr.f32.gmra.mxu0 %v328
  %v573 = vpop.f32.mrf.mxu0
  %v574 = vadd.f32 0.0, %v573
  %v575 = vpop.f32.mrf.mxu0
  %576 = vdwg.mxu0
  %v577 = vmul.f32 %v414, %v564
  %v578 = vmul.f32 %v415, %v569
  %v579 = vmul.f32 %v416, %v574
  %v580 = vld [vmem:[%s4] sm:$0x1]
  %v582 = vlaneseq
  %v583 = vshrl.u32 %v582, 7
  %v584 = vsub.s32 0, %v583
  %v585 = vrot.slane %v580, %v584
  %v587 = vmul.f32 %v577, %v585
  %v588 = vmul.f32 %v578, %v585
  %v589 = vmul.f32 %v579, %v585
  %v590 = vld [vmem:[%s5] sm:$0x1]
  %v592 = vlaneseq
  %v593 = vshrl.u32 %v592, 7
  %v594 = vsub.s32 0, %v593
  %v595 = vrot.slane %v590, %v594
  %v597 = vadd.f32 %v587, %v595
  %v598 = vadd.f32 %v588, %v595
  %v599 = vadd.f32 %v589, %v595
  %v600 = vmax.f32 %v597, 0.0
  %v601 = vmax.f32 %v598, 0.0
  %v602 = vmax.f32 %v599, 0.0
  %603 = vst.msk [vmem:[%s6] sm:$0xff] %vm68, %v600
  %604 = vst.msk [vmem:[%s6 + $0x8] sm:$0xff] %vm68, %v601
  %vm605 = vcmask 254976
  %606 = vst.msk [vmem:[%s6 + $0x10] sm:$0x3] %vm605, %v602
  // Predicated region
  $region26: #{generator_forward.20} parent=0 // pred_check
    _
  $region27: #{generator_forward.20} parent=0 // pred_check_branch
    %608 = sbr.rel (0) target = $region29
  $region28: #{generator_forward.20} parent=0 // pred_region
    _
  $region29: #{generator_forward.20} parent=0 // pred_fallthru
    _
  // Predicated region
  $region30: #{generator_forward.20} parent=0 // pred_check
    _
  $region31: #{generator_forward.20} parent=0 // pred_check_branch
    %610 = sbr.rel (0) target = $region33
  $region32: #{generator_forward.20} parent=0 // pred_region
    _
  $region33: #{generator_forward.20} parent=0 // pred_fallthru
    _

// kernel: generator_forward.18
$region0: #{generator_forward.18}
  #allocation0 [shape = 'u32[]', space=smem, size = 0x4, offset = 0x4, fixed_abs, tag = 'smem constant byte address 0x4 - core index']
  #allocation1 [shape = 'u32[144,128]{1,0:T(1,128)}', space=vmem, size = 0x12000, scoped, tag = 'internal scratch']
  %s0 = inlined_call_operand.vmem [shape: f32[18,288], index: 0, kind: input, shape index: {}]
  %s1 = inlined_call_operand.vmem [shape: f32[288,32], index: 1, kind: input, shape index: {}]
  %s2 = inlined_call_operand.vmem [shape: f32[18,1], index: 2, kind: input, shape index: {}]
  %s3 = inlined_call_operand.vmem [shape: f32[1,18], index: 3, kind: input, shape index: {}]
  %s4 = inlined_call_operand.hbm [shape: f32[1,32], index: 4, kind: input, shape index: {}]
  %s5 = inlined_call_operand.hbm [shape: f32[1,32], index: 5, kind: input, shape index: {}]
  %s6 = inlined_call_operand.vmem [shape: f32[18,32], index: 6, kind: output, shape index: {}]
  %s7 = sld [smem:[#allocation0]]
  $region42: #{generator_forward.18} parent=0
    _
  %s9 = ssub.s32 1, %s7
  %s10 = scalar_select 0, %s9, %s7
  $region1: #{generator_forward.18} parent=0
    #allocation2 [shape = 'u8[512]{0}', space=vmem, size = 0x400, scoped, tag = 'input window, operand 4, single buffered']
    #allocation3 [shape = 's32[1]{0}', space=sflag, size = 0x4, scoped, tag = 'scoped memory for generator_forward.18']
    #allocation4 [shape = 'u8[512]{0}', space=vmem, size = 0x400, scoped, tag = 'input window, operand 5, single buffered']
    #allocation5 [shape = 's32[1]{0}', space=sflag, size = 0x4, scoped, tag = 'scoped memory for generator_forward.18']
    %11 = vsyncpa [#allocation3], 0
    %12 = vsyncpa [#allocation5], 0
    // Predicated region
    $region2: #{generator_forward.18} parent=1 // pred_check
      _
    $region3: #{generator_forward.18} parent=1 // pred_check_branch
      %14 = sbr.rel (0) target = $region5
    $region4: #{generator_forward.18} parent=1 // pred_region
      _
    $region5: #{generator_forward.18} parent=1 // pred_fallthru
      _
    // Predicated region
    $region6: #{generator_forward.18} parent=1 // pred_check
      _
    $region7: #{generator_forward.18} parent=1 // pred_check_branch
      %16 = sbr.rel (0) target = $region9
    $region8: #{generator_forward.18} parent=1 // pred_region
      _
    $region9: #{generator_forward.18} parent=1 // pred_fallthru
      _
    // Predicated region
    $region10: #{generator_forward.18} parent=1 // pred_check
      _
    $region11: #{generator_forward.18} parent=1 // pred_check_branch
      %18 = sbr.rel (0) target = $region13
    $region12: #{generator_forward.18} parent=1 // pred_region
      _
    $region13: #{generator_forward.18} parent=1 // pred_fallthru
      _
    // Predicated region
    $region14: #{generator_forward.18} parent=1 // pred_check
      _
    $region15: #{generator_forward.18} parent=1 // pred_check_branch
      %20 = sbr.rel (0) target = $region17
    $region16: #{generator_forward.18} parent=1 // pred_region
      _
    $region17: #{generator_forward.18} parent=1 // pred_fallthru
      _
    // Predicated region
    $region18: #{generator_forward.18} parent=1 // pred_check
      _
    $region19: #{generator_forward.18} parent=1 // pred_check_branch
      %22 = sbr.rel (0) target = $region21
    $region20: #{generator_forward.18} parent=1 // pred_region
      %s24 = ssub.s32 16, 16
      %25 = vsyncadd [#allocation3], %s24
      %s27 = sshll.u32 [#allocation2], 4
      %s28 = int_to_ptr.vmem [resolvable:$true] %s27
      %30 = dma.hbm_to_vmem [thread:$0]  %s4, 16, %s28, [#allocation3]
    $region21: #{generator_forward.18} parent=1 // pred_fallthru
      _
    // Predicated region
    $region22: #{generator_forward.18} parent=1 // pred_check
      _
    $region23: #{generator_forward.18} parent=1 // pred_check_branch
      %32 = sbr.rel (0) target = $region25
    $region24: #{generator_forward.18} parent=1 // pred_region
      %s34 = ssub.s32 16, 16
      %35 = vsyncadd [#allocation5], %s34
      %s37 = sshll.u32 [#allocation4], 4
      %s38 = int_to_ptr.vmem [resolvable:$true] %s37
      %40 = dma.hbm_to_vmem [thread:$0]  %s5, 16, %s38, [#allocation5]
    $region25: #{generator_forward.18} parent=1 // pred_fallthru
      _
    // Predicated region
    $region26: #{generator_forward.18} parent=1 // pred_check
      _
    $region27: #{generator_forward.18} parent=1 // pred_check_branch
      %42 = sbr.rel (0) target = $region29
    $region28: #{generator_forward.18} parent=1 // pred_region
      %43 = dma.done [#allocation3], 16
    $region29: #{generator_forward.18} parent=1 // pred_fallthru
      _
    // Predicated region
    $region30: #{generator_forward.18} parent=1 // pred_check
      _
    $region31: #{generator_forward.18} parent=1 // pred_check_branch
      %45 = sbr.rel (0) target = $region33
    $region32: #{generator_forward.18} parent=1 // pred_region
      %46 = dma.done [#allocation5], 16
    $region33: #{generator_forward.18} parent=1 // pred_fallthru
      _
    %v47 = vld [vmem:[%s0] sm:$0xff]
    %v48 = vld [vmem:[%s0 + $0x8] sm:$0xff]
    %v49 = vld [vmem:[%s0 + $0x10] sm:$0xff]
    %v50 = vld [vmem:[%s0 + $0x18] sm:$0xff]
    %v51 = vld [vmem:[%s0 + $0x20] sm:$0xff]
    %v52 = vld [vmem:[%s0 + $0x28] sm:$0xff]
    %v53 = vld [vmem:[%s0 + $0x30] sm:$0x3]
    %v54 = vld [vmem:[%s0 + $0x38] sm:$0x3]
    %v55 = vld [vmem:[%s0 + $0x40] sm:$0x3]
    %v56 = vld [vmem:[%s1] sm:$0xff]
    %v57 = vld [vmem:[%s1 + $0x8] sm:$0xff]
    %v58 = vld [vmem:[%s1 + $0x10] sm:$0xff]
    %v59 = vld [vmem:[%s1 + $0x18] sm:$0xff]
    %v60 = vld [vmem:[%s1 + $0x20] sm:$0xff]
    %v61 = vld [vmem:[%s1 + $0x28] sm:$0xff]
    %v62 = vld [vmem:[%s1 + $0x30] sm:$0xff]
    %v63 = vld [vmem:[%s1 + $0x38] sm:$0xff]
    %v64 = vld [vmem:[%s1 + $0x40] sm:$0xff]
    %v65 = vld [vmem:[%s1 + $0x48] sm:$0xff]
    %v66 = vld [vmem:[%s1 + $0x50] sm:$0xff]
    %v67 = vld [vmem:[%s1 + $0x58] sm:$0xff]
    %v68 = vld [vmem:[%s1 + $0x60] sm:$0xff]
    %v69 = vld [vmem:[%s1 + $0x68] sm:$0xff]
    %v70 = vld [vmem:[%s1 + $0x70] sm:$0xff]
    %v71 = vld [vmem:[%s1 + $0x78] sm:$0xff]
    %v72 = vld [vmem:[%s1 + $0x80] sm:$0xff]
    %v73 = vld [vmem:[%s1 + $0x88] sm:$0xff]
    %v74 = vld [vmem:[%s1 + $0x90] sm:$0xff]
    %v75 = vld [vmem:[%s1 + $0x98] sm:$0xff]
    %v76 = vld [vmem:[%s1 + $0xa0] sm:$0xff]
    %v77 = vld [vmem:[%s1 + $0xa8] sm:$0xff]
    %v78 = vld [vmem:[%s1 + $0xb0] sm:$0xff]
    %v79 = vld [vmem:[%s1 + $0xb8] sm:$0xff]
    %v80 = vld [vmem:[%s1 + $0xc0] sm:$0xff]
    %v81 = vld [vmem:[%s1 + $0xc8] sm:$0xff]
    %v82 = vld [vmem:[%s1 + $0xd0] sm:$0xff]
    %v83 = vld [vmem:[%s1 + $0xd8] sm:$0xff]
    %v84 = vld [vmem:[%s1 + $0xe0] sm:$0xff]
    %v85 = vld [vmem:[%s1 + $0xe8] sm:$0xff]
    %v86 = vld [vmem:[%s1 + $0xf0] sm:$0xff]
    %v87 = vld [vmem:[%s1 + $0xf8] sm:$0xff]
    %v88 = vld [vmem:[%s1 + $0x100] sm:$0xff]
    %v89 = vld [vmem:[%s1 + $0x108] sm:$0xff]
    %v90 = vld [vmem:[%s1 + $0x110] sm:$0xff]
    %v91 = vld [vmem:[%s1 + $0x118] sm:$0xff]
    %vm92 = vcmask 261120
    %v94 = vsel %vm92, %v49, 0
    %v97 = vsel %vm92, %v52, 0
    %v100 = vsel %vm92, %v55, 0
    %102 = vmatprep.subr.mxu0 0.0
    %103 = vmatpush1.msra.mxu0 %v71
    %104 = vmatprep.subr.mxu0 0.0
    %105 = vmatpush1.msra.mxu0 %v70
    %106 = vmatprep.subr.mxu0 0.0
    %107 = vmatpush1.msra.mxu0 %v69
    %108 = vmatprep.subr.mxu0 0.0
    %109 = vmatpush1.msra.mxu0 %v68
    %110 = vmatprep.subr.mxu0 0.0
    %111 = vmatpush1.msra.mxu0 %v67
    %112 = vmatprep.subr.mxu0 0.0
    %113 = vmatpush1.msra.mxu0 %v66
    %114 = vmatprep.subr.mxu0 0.0
    %115 = vmatpush1.msra.mxu0 %v65
    %116 = vmatprep.subr.mxu0 0.0
    %117 = vmatpush1.msra.mxu0 %v64
    %118 = vmatprep.subr.mxu0 0.0
    %119 = vmatpush1.msra.mxu0 %v63
    %120 = vmatprep.subr.mxu0 0.0
    %121 = vmatpush1.msra.mxu0 %v62
    %122 = vmatprep.subr.mxu0 0.0
    %123 = vmatpush1.msra.mxu0 %v61
    %124 = vmatprep.subr.mxu0 0.0
    %125 = vmatpush1.msra.mxu0 %v60
    %126 = vmatprep.subr.mxu0 0.0
    %127 = vmatpush1.msra.mxu0 %v59
    %128 = vmatprep.subr.mxu0 0.0
    %129 = vmatpush1.msra.mxu0 %v58
    %130 = vmatprep.subr.mxu0 0.0
    %131 = vmatpush1.msra.mxu0 %v57
    %132 = vmatprep.subr.mxu0 0.0
    %133 = vmatpush1.msra.mxu0 %v56
    %134 = vmatprep.subr.mxu0 0.0
    %135 = vmatpush2.msra.mxu0 %v87
    %136 = vmatprep.subr.mxu0 0.0
    %137 = vmatpush2.msra.mxu0 %v86
    %138 = vmatprep.subr.mxu0 0.0
    %139 = vmatpush2.msra.mxu0 %v85
    %140 = vmatprep.subr.mxu0 0.0
    %141 = vmatpush2.msra.mxu0 %v84
    %142 = vmatprep.subr.mxu0 0.0
    %143 = vmatpush2.msra.mxu0 %v83
    %144 = vmatprep.subr.mxu0 0.0
    %145 = vmatpush2.msra.mxu0 %v82
    %146 = vmatprep.subr.mxu0 0.0
    %147 = vmatpush2.msra.mxu0 %v81
    %148 = vmatprep.subr.mxu0 0.0
    %149 = vmatpush2.msra.mxu0 %v80
    %150 = vmatprep.subr.mxu0 0.0
    %151 = vmatpush2.msra.mxu0 %v79
    %152 = vmatprep.subr.mxu0 0.0
    %153 = vmatpush2.msra.mxu0 %v78
    %154 = vmatprep.subr.mxu0 0.0
    %155 = vmatpush2.msra.mxu0 %v77
    %156 = vmatprep.subr.mxu0 0.0
    %157 = vmatpush2.msra.mxu0 %v76
    %158 = vmatprep.subr.mxu0 0.0
    %159 = vmatpush2.msra.mxu0 %v75
    %160 = vmatprep.subr.mxu0 0.0
    %161 = vmatpush2.msra.mxu0 %v74
    %162 = vmatprep.subr.mxu0 0.0
    %163 = vmatpush2.msra.mxu0 %v73
    %164 = vmatprep.subr.mxu0 0.0
    %165 = vmatpush2.msra.mxu0 %v72
    %166 = vmatprep.mubr.f32.mxu0 %v48
    %167 = vmatmul.mubr.f32.gmra.mxu0 %v47
    %v168 = vpop.f32.mrf.mxu0
    %v169 = vadd.f32 0.0, %v168
    %v170 = vpop.f32.mrf.mxu0
    %171 = vmatprep.mubr.f32.mxu0 %v51
    %172 = vmatmul.mubr.f32.gmra.mxu0 %v50
    %v173 = vpop.f32.mrf.mxu0
    %v174 = vadd.f32 0.0, %v173
    %v175 = vpop.f32.mrf.mxu0
    %176 = vmatprep.mubr.f32.mxu0 %v54
    %177 = vmatmul.mubr.f32.gmra.mxu0 %v53
    %v178 = vpop.f32.mrf.mxu0
    %v179 = vadd.f32 0.0, %v178
    %v180 = vpop.f32.mrf.mxu0
    %181 = vdwg.mxu0
    %182 = vmatprep.subr.mxu0 0.0
    %183 = vmatpush1.msra.mxu0 0.0
    %184 = vmatprep.subr.mxu0 0.0
    %185 = vmatpush1.msra.mxu0 0.0
    %186 = vmatprep.subr.mxu0 0.0
    %187 = vmatpush1.msra.mxu0 0.0
    %188 = vmatprep.subr.mxu0 0.0
    %189 = vmatpush1.msra.mxu0 0.0
    %190 = vmatprep.subr.mxu0 0.0
    %191 = vmatpush1.msra.mxu0 0.0
    %192 = vmatprep.subr.mxu0 0.0
    %193 = vmatpush1.msra.mxu0 0.0
    %194 = vmatprep.subr.mxu0 0.0
    %195 = vmatpush1.msra.mxu0 0.0
    %196 = vmatprep.subr.mxu0 0.0
    %197 = vmatpush1.msra.mxu0 0.0
    %198 = vmatprep.subr.mxu0 0.0
    %199 = vmatpush1.msra.mxu0 0.0
    %200 = vmatprep.subr.mxu0 0.0
    %201 = vmatpush1.msra.mxu0 0.0
    %202 = vmatprep.subr.mxu0 0.0
    %203 = vmatpush1.msra.mxu0 0.0
    %204 = vmatprep.subr.mxu0 0.0
    %205 = vmatpush1.msra.mxu0 0.0
    %206 = vmatprep.subr.mxu0 0.0
    %207 = vmatpush1.msra.mxu0 %v91
    %208 = vmatprep.subr.mxu0 0.0
    %209 = vmatpush1.msra.mxu0 %v90
    %210 = vmatprep.subr.mxu0 0.0
    %211 = vmatpush1.msra.mxu0 %v89
    %212 = vmatprep.subr.mxu0 0.0
    %213 = vmatpush1.msra.mxu0 %v88
    %214 = vmatprep.subr.mxu0 0.0
    %215 = vmatpush2.msra.mxu0 0.0
    %216 = vmatprep.subr.mxu0 0.0
    %217 = vmatpush2.msra.mxu0 0.0
    %218 = vmatprep.subr.mxu0 0.0
    %219 = vmatpush2.msra.mxu0 0.0
    %220 = vmatprep.subr.mxu0 0.0
    %221 = vmatpush2.msra.mxu0 0.0
    %222 = vmatprep.subr.mxu0 0.0
    %223 = vmatpush2.msra.mxu0 0.0
    %224 = vmatprep.subr.mxu0 0.0
    %225 = vmatpush2.msra.mxu0 0.0
    %226 = vmatprep.subr.mxu0 0.0
    %227 = vmatpush2.msra.mxu0 0.0
    %228 = vmatprep.subr.mxu0 0.0
    %229 = vmatpush2.msra.mxu0 0.0
    %230 = vmatprep.subr.mxu0 0.0
    %231 = vmatpush2.msra.mxu0 0.0
    %232 = vmatprep.subr.mxu0 0.0
    %233 = vmatpush2.msra.mxu0 0.0
    %234 = vmatprep.subr.mxu0 0.0
    %235 = vmatpush2.msra.mxu0 0.0
    %236 = vmatprep.subr.mxu0 0.0
    %237 = vmatpush2.msra.mxu0 0.0
    %238 = vmatprep.subr.mxu0 0.0
    %239 = vmatpush2.msra.mxu0 0.0
    %240 = vmatprep.subr.mxu0 0.0
    %241 = vmatpush2.msra.mxu0 0.0
    %242 = vmatprep.subr.mxu0 0.0
    %243 = vmatpush2.msra.mxu0 0.0
    %244 = vmatprep.subr.mxu0 0.0
    %245 = vmatpush2.msra.mxu0 0.0
    %246 = vmatprep.mubr.f32.mxu0 0.0
    %247 = vmatmul.mubr.f32.gmra.mxu0 %v94
    %v248 = vpop.f32.mrf.mxu0
    %v249 = vadd.f32 %v169, %v248
    %v250 = vpop.f32.mrf.mxu0
    %251 = vmatprep.mubr.f32.mxu0 0.0
    %252 = vmatmul.mubr.f32.gmra.mxu0 %v97
    %v253 = vpop.f32.mrf.mxu0
    %v254 = vadd.f32 %v174, %v253
    %v255 = vpop.f32.mrf.mxu0
    %256 = vmatprep.mubr.f32.mxu0 0.0
    %257 = vmatmul.mubr.f32.gmra.mxu0 %v100
    %v258 = vpop.f32.mrf.mxu0
    %v259 = vadd.f32 %v179, %v258
    %v260 = vpop.f32.mrf.mxu0
    %261 = vdwg.mxu0
    %v262 = vld [vmem:[%s2] sm:$0xff]
    %v263 = vld [vmem:[%s2 + $0x8] sm:$0xff]
    %v264 = vld [vmem:[%s2 + $0x10] sm:$0x3]
    %v265 = vld [vmem:[%s3] sm:$0x1]
    %vm266 = vcmask 146432
    %v268 = vsel %vm266, %v265, 0
    %vm270 = vcmask 1041408
    %v272 = vsel %vm270, %v259, 0
    %274 = vmatprep.subr.mxu0 0.0
    %275 = vmatpush1.msra.mxu0 0.0
    %276 = vmatprep.subr.mxu0 0.0
    %277 = vmatpush1.msra.mxu0 0.0
    %278 = vmatprep.subr.mxu0 0.0
    %279 = vmatpush1.msra.mxu0 0.0
    %280 = vmatprep.subr.mxu0 0.0
    %281 = vmatpush1.msra.mxu0 0.0
    %282 = vmatprep.subr.mxu0 0.0
    %283 = vmatpush1.msra.mxu0 0.0
    %284 = vmatprep.subr.mxu0 0.0
    %285 = vmatpush1.msra.mxu0 0.0
    %286 = vmatprep.subr.mxu0 0.0
    %287 = vmatpush1.msra.mxu0 0.0
    %288 = vmatprep.subr.mxu0 0.0
    %289 = vmatpush1.msra.mxu0 0.0
    %290 = vmatprep.subr.mxu0 0.0
    %291 = vmatpush1.msra.mxu0 0.0
    %292 = vmatprep.subr.mxu0 0.0
    %293 = vmatpush1.msra.mxu0 0.0
    %294 = vmatprep.subr.mxu0 0.0
    %295 = vmatpush1.msra.mxu0 0.0
    %296 = vmatprep.subr.mxu0 0.0
    %297 = vmatpush1.msra.mxu0 0.0
    %298 = vmatprep.subr.mxu0 0.0
    %299 = vmatpush1.msra.mxu0 0.0
    %300 = vmatprep.subr.mxu0 0.0
    %301 = vmatpush1.msra.mxu0 %v272
    %302 = vmatprep.subr.mxu0 0.0
    %303 = vmatpush1.msra.mxu0 %v254
    %304 = vmatprep.subr.mxu0 0.0
    %305 = vmatpush1.msra.mxu0 %v249
    %306 = vmatprep.subr.mxu0 0.0
    %307 = vmatpush2.msra.mxu0 0.0
    %308 = vmatprep.subr.mxu0 0.0
    %309 = vmatpush2.msra.mxu0 0.0
    %310 = vmatprep.subr.mxu0 0.0
    %311 = vmatpush2.msra.mxu0 0.0
    %312 = vmatprep.subr.mxu0 0.0
    %313 = vmatpush2.msra.mxu0 0.0
    %314 = vmatprep.subr.mxu0 0.0
    %315 = vmatpush2.msra.mxu0 0.0
    %316 = vmatprep.subr.mxu0 0.0
    %317 = vmatpush2.msra.mxu0 0.0
    %318 = vmatprep.subr.mxu0 0.0
    %319 = vmatpush2.msra.mxu0 0.0
    %320 = vmatprep.subr.mxu0 0.0
    %321 = vmatpush2.msra.mxu0 0.0
    %322 = vmatprep.subr.mxu0 0.0
    %323 = vmatpush2.msra.mxu0 0.0
    %324 = vmatprep.subr.mxu0 0.0
    %325 = vmatpush2.msra.mxu0 0.0
    %326 = vmatprep.subr.mxu0 0.0
    %327 = vmatpush2.msra.mxu0 0.0
    %328 = vmatprep.subr.mxu0 0.0
    %329 = vmatpush2.msra.mxu0 0.0
    %330 = vmatprep.subr.mxu0 0.0
    %331 = vmatpush2.msra.mxu0 0.0
    %332 = vmatprep.subr.mxu0 0.0
    %333 = vmatpush2.msra.mxu0 0.0
    %334 = vmatprep.subr.mxu0 0.0
    %335 = vmatpush2.msra.mxu0 0.0
    %336 = vmatprep.subr.mxu0 0.0
    %337 = vmatpush2.msra.mxu0 0.0
    %338 = vmatprep.mubr.f32.mxu0 0.0
    %339 = vmatmul.mubr.f32.gmra.mxu0 %v268
    %v340 = vpop.f32.mrf.mxu0
    %v341 = vadd.f32 0.0, %v340
    %v342 = vpop.f32.mrf.mxu0
    %343 = vdwg.mxu0
    %vm344 = vcmask 7168
    %v346 = vsel %vm344, %v262, 0
    %v349 = vsel %vm344, %v263, 0
    %v352 = vsel %vm344, %v264, 0
    %vm354 = vcmask 1040384
    %v356 = vsel %vm354, %v341, 0
    %358 = vmatprep.subr.mxu0 0.0
    %359 = vmatpush1.msra.mxu0 0.0
    %360 = vmatprep.subr.mxu0 0.0
    %361 = vmatpush1.msra.mxu0 0.0
    %362 = vmatprep.subr.mxu0 0.0
    %363 = vmatpush1.msra.mxu0 0.0
    %364 = vmatprep.subr.mxu0 0.0
    %365 = vmatpush1.msra.mxu0 0.0
    %366 = vmatprep.subr.mxu0 0.0
    %367 = vmatpush1.msra.mxu0 0.0
    %368 = vmatprep.subr.mxu0 0.0
    %369 = vmatpush1.msra.mxu0 0.0
    %370 = vmatprep.subr.mxu0 0.0
    %371 = vmatpush1.msra.mxu0 0.0
    %372 = vmatprep.subr.mxu0 0.0
    %373 = vmatpush1.msra.mxu0 0.0
    %374 = vmatprep.subr.mxu0 0.0
    %375 = vmatpush1.msra.mxu0 0.0
    %376 = vmatprep.subr.mxu0 0.0
    %377 = vmatpush1.msra.mxu0 0.0
    %378 = vmatprep.subr.mxu0 0.0
    %379 = vmatpush1.msra.mxu0 0.0
    %380 = vmatprep.subr.mxu0 0.0
    %381 = vmatpush1.msra.mxu0 0.0
    %382 = vmatprep.subr.mxu0 0.0
    %383 = vmatpush1.msra.mxu0 0.0
    %384 = vmatprep.subr.mxu0 0.0
    %385 = vmatpush1.msra.mxu0 0.0
    %386 = vmatprep.subr.mxu0 0.0
    %387 = vmatpush1.msra.mxu0 0.0
    %388 = vmatprep.subr.mxu0 0.0
    %389 = vmatpush1.msra.mxu0 %v356
    %390 = vmatprep.subr.mxu0 0.0
    %391 = vmatpush2.msra.mxu0 0.0
    %392 = vmatprep.subr.mxu0 0.0
    %393 = vmatpush2.msra.mxu0 0.0
    %394 = vmatprep.subr.mxu0 0.0
    %395 = vmatpush2.msra.mxu0 0.0
    %396 = vmatprep.subr.mxu0 0.0
    %397 = vmatpush2.msra.mxu0 0.0
    %398 = vmatprep.subr.mxu0 0.0
    %399 = vmatpush2.msra.mxu0 0.0
    %400 = vmatprep.subr.mxu0 0.0
    %401 = vmatpush2.msra.mxu0 0.0
    %402 = vmatprep.subr.mxu0 0.0
    %403 = vmatpush2.msra.mxu0 0.0
    %404 = vmatprep.subr.mxu0 0.0
    %405 = vmatpush2.msra.mxu0 0.0
    %406 = vmatprep.subr.mxu0 0.0
    %407 = vmatpush2.msra.mxu0 0.0
    %408 = vmatprep.subr.mxu0 0.0
    %409 = vmatpush2.msra.mxu0 0.0
    %410 = vmatprep.subr.mxu0 0.0
    %411 = vmatpush2.msra.mxu0 0.0
    %412 = vmatprep.subr.mxu0 0.0
    %413 = vmatpush2.msra.mxu0 0.0
    %414 = vmatprep.subr.mxu0 0.0
    %415 = vmatpush2.msra.mxu0 0.0
    %416 = vmatprep.subr.mxu0 0.0
    %417 = vmatpush2.msra.mxu0 0.0
    %418 = vmatprep.subr.mxu0 0.0
    %419 = vmatpush2.msra.mxu0 0.0
    %420 = vmatprep.subr.mxu0 0.0
    %421 = vmatpush2.msra.mxu0 0.0
    %422 = vmatprep.mubr.f32.mxu0 0.0
    %423 = vmatmul.mubr.f32.gmra.mxu0 %v346
    %v424 = vpop.f32.mrf.mxu0
    %v425 = vadd.f32 0.0, %v424
    %v426 = vpop.f32.mrf.mxu0
    %427 = vmatprep.mubr.f32.mxu0 0.0
    %428 = vmatmul.mubr.f32.gmra.mxu0 %v349
    %v429 = vpop.f32.mrf.mxu0
    %v430 = vadd.f32 0.0, %v429
    %v431 = vpop.f32.mrf.mxu0
    %432 = vmatprep.mubr.f32.mxu0 0.0
    %433 = vmatmul.mubr.f32.gmra.mxu0 %v352
    %v434 = vpop.f32.mrf.mxu0
    %v435 = vadd.f32 0.0, %v434
    %v436 = vpop.f32.mrf.mxu0
    %437 = vdwg.mxu0
    %v438 = vsub.f32 %v249, %v425
    %v439 = vsub.f32 %v254, %v430
    %v440 = vsub.f32 %v259, %v435
    %v441 = vmul.f32 %v438, %v438
    %v442 = vmul.f32 %v439, %v439
    %v443 = vmul.f32 %v440, %v440
    %v445 = vsel %vm270, %v443, 0
    %447 = vmatprep.subr.mxu0 0.0
    %448 = vmatpush1.msra.mxu0 0.0
    %449 = vmatprep.subr.mxu0 0.0
    %450 = vmatpush1.msra.mxu0 0.0
    %451 = vmatprep.subr.mxu0 0.0
    %452 = vmatpush1.msra.mxu0 0.0
    %453 = vmatprep.subr.mxu0 0.0
    %454 = vmatpush1.msra.mxu0 0.0
    %455 = vmatprep.subr.mxu0 0.0
    %456 = vmatpush1.msra.mxu0 0.0
    %457 = vmatprep.subr.mxu0 0.0
    %458 = vmatpush1.msra.mxu0 0.0
    %459 = vmatprep.subr.mxu0 0.0
    %460 = vmatpush1.msra.mxu0 0.0
    %461 = vmatprep.subr.mxu0 0.0
    %462 = vmatpush1.msra.mxu0 0.0
    %463 = vmatprep.subr.mxu0 0.0
    %464 = vmatpush1.msra.mxu0 0.0
    %465 = vmatprep.subr.mxu0 0.0
    %466 = vmatpush1.msra.mxu0 0.0
    %467 = vmatprep.subr.mxu0 0.0
    %468 = vmatpush1.msra.mxu0 0.0
    %469 = vmatprep.subr.mxu0 0.0
    %470 = vmatpush1.msra.mxu0 0.0
    %471 = vmatprep.subr.mxu0 0.0
    %472 = vmatpush1.msra.mxu0 0.0
    %473 = vmatprep.subr.mxu0 0.0
    %474 = vmatpush1.msra.mxu0 %v445
    %475 = vmatprep.subr.mxu0 0.0
    %476 = vmatpush1.msra.mxu0 %v442
    %477 = vmatprep.subr.mxu0 0.0
    %478 = vmatpush1.msra.mxu0 %v441
    %479 = vmatprep.subr.mxu0 0.0
    %480 = vmatpush2.msra.mxu0 0.0
    %481 = vmatprep.subr.mxu0 0.0
    %482 = vmatpush2.msra.mxu0 0.0
    %483 = vmatprep.subr.mxu0 0.0
    %484 = vmatpush2.msra.mxu0 0.0
    %485 = vmatprep.subr.mxu0 0.0
    %486 = vmatpush2.msra.mxu0 0.0
    %487 = vmatprep.subr.mxu0 0.0
    %488 = vmatpush2.msra.mxu0 0.0
    %489 = vmatprep.subr.mxu0 0.0
    %490 = vmatpush2.msra.mxu0 0.0
    %491 = vmatprep.subr.mxu0 0.0
    %492 = vmatpush2.msra.mxu0 0.0
    %493 = vmatprep.subr.mxu0 0.0
    %494 = vmatpush2.msra.mxu0 0.0
    %495 = vmatprep.subr.mxu0 0.0
    %496 = vmatpush2.msra.mxu0 0.0
    %497 = vmatprep.subr.mxu0 0.0
    %498 = vmatpush2.msra.mxu0 0.0
    %499 = vmatprep.subr.mxu0 0.0
    %500 = vmatpush2.msra.mxu0 0.0
    %501 = vmatprep.subr.mxu0 0.0
    %502 = vmatpush2.msra.mxu0 0.0
    %503 = vmatprep.subr.mxu0 0.0
    %504 = vmatpush2.msra.mxu0 0.0
    %505 = vmatprep.subr.mxu0 0.0
    %506 = vmatpush2.msra.mxu0 0.0
    %507 = vmatprep.subr.mxu0 0.0
    %508 = vmatpush2.msra.mxu0 0.0
    %509 = vmatprep.subr.mxu0 0.0
    %510 = vmatpush2.msra.mxu0 0.0
    %511 = vmatprep.mubr.f32.mxu0 0.0
    %512 = vmatmul.mubr.f32.gmra.mxu0 %v268
    %v513 = vpop.f32.mrf.mxu0
    %v514 = vadd.f32 1e-05, %v513
    %v515 = vpop.f32.mrf.mxu0
    %516 = vdwg.mxu0
    %v517 = vrsqrt.pop %v514
    %v519 = vsel %vm354, %v517, 0
    %521 = vmatprep.subr.mxu0 0.0
    %522 = vmatpush1.msra.mxu0 0.0
    %523 = vmatprep.subr.mxu0 0.0
    %524 = vmatpush1.msra.mxu0 0.0
    %525 = vmatprep.subr.mxu0 0.0
    %526 = vmatpush1.msra.mxu0 0.0
    %527 = vmatprep.subr.mxu0 0.0
    %528 = vmatpush1.msra.mxu0 0.0
    %529 = vmatprep.subr.mxu0 0.0
    %530 = vmatpush1.msra.mxu0 0.0
    %531 = vmatprep.subr.mxu0 0.0
    %532 = vmatpush1.msra.mxu0 0.0
    %533 = vmatprep.subr.mxu0 0.0
    %534 = vmatpush1.msra.mxu0 0.0
    %535 = vmatprep.subr.mxu0 0.0
    %536 = vmatpush1.msra.mxu0 0.0
    %537 = vmatprep.subr.mxu0 0.0
    %538 = vmatpush1.msra.mxu0 0.0
    %539 = vmatprep.subr.mxu0 0.0
    %540 = vmatpush1.msra.mxu0 0.0
    %541 = vmatprep.subr.mxu0 0.0
    %542 = vmatpush1.msra.mxu0 0.0
    %543 = vmatprep.subr.mxu0 0.0
    %544 = vmatpush1.msra.mxu0 0.0
    %545 = vmatprep.subr.mxu0 0.0
    %546 = vmatpush1.msra.mxu0 0.0
    %547 = vmatprep.subr.mxu0 0.0
    %548 = vmatpush1.msra.mxu0 0.0
    %549 = vmatprep.subr.mxu0 0.0
    %550 = vmatpush1.msra.mxu0 0.0
    %551 = vmatprep.subr.mxu0 0.0
    %552 = vmatpush1.msra.mxu0 %v519
    %553 = vmatprep.subr.mxu0 0.0
    %554 = vmatpush2.msra.mxu0 0.0
    %555 = vmatprep.subr.mxu0 0.0
    %556 = vmatpush2.msra.mxu0 0.0
    %557 = vmatprep.subr.mxu0 0.0
    %558 = vmatpush2.msra.mxu0 0.0
    %559 = vmatprep.subr.mxu0 0.0
    %560 = vmatpush2.msra.mxu0 0.0
    %561 = vmatprep.subr.mxu0 0.0
    %562 = vmatpush2.msra.mxu0 0.0
    %563 = vmatprep.subr.mxu0 0.0
    %564 = vmatpush2.msra.mxu0 0.0
    %565 = vmatprep.subr.mxu0 0.0
    %566 = vmatpush2.msra.mxu0 0.0
    %567 = vmatprep.subr.mxu0 0.0
    %568 = vmatpush2.msra.mxu0 0.0
    %569 = vmatprep.subr.mxu0 0.0
    %570 = vmatpush2.msra.mxu0 0.0
    %571 = vmatprep.subr.mxu0 0.0
    %572 = vmatpush2.msra.mxu0 0.0
    %573 = vmatprep.subr.mxu0 0.0
    %574 = vmatpush2.msra.mxu0 0.0
    %575 = vmatprep.subr.mxu0 0.0
    %576 = vmatpush2.msra.mxu0 0.0
    %577 = vmatprep.subr.mxu0 0.0
    %578 = vmatpush2.msra.mxu0 0.0
    %579 = vmatprep.subr.mxu0 0.0
    %580 = vmatpush2.msra.mxu0 0.0
    %581 = vmatprep.subr.mxu0 0.0
    %582 = vmatpush2.msra.mxu0 0.0
    %583 = vmatprep.subr.mxu0 0.0
    %584 = vmatpush2.msra.mxu0 0.0
    %585 = vmatprep.mubr.f32.mxu0 0.0
    %586 = vmatmul.mubr.f32.gmra.mxu0 %v346
    %v587 = vpop.f32.mrf.mxu0
    %v588 = vadd.f32 0.0, %v587
    %v589 = vpop.f32.mrf.mxu0
    %590 = vmatprep.mubr.f32.mxu0 0.0
    %591 = vmatmul.mubr.f32.gmra.mxu0 %v349
    %v592 = vpop.f32.mrf.mxu0
    %v593 = vadd.f32 0.0, %v592
    %v594 = vpop.f32.mrf.mxu0
    %595 = vmatprep.mubr.f32.mxu0 0.0
    %596 = vmatmul.mubr.f32.gmra.mxu0 %v352
    %v597 = vpop.f32.mrf.mxu0
    %v598 = vadd.f32 0.0, %v597
    %v599 = vpop.f32.mrf.mxu0
    %600 = vdwg.mxu0
    %v601 = vmul.f32 %v438, %v588
    %v602 = vmul.f32 %v439, %v593
    %v603 = vmul.f32 %v440, %v598
    %v604 = vld [vmem:[#allocation2] sm:$0x1]
    %v606 = vlaneseq
    %v607 = vshrl.u32 %v606, 7
    %v608 = vsub.s32 0, %v607
    %v609 = vrot.slane %v604, %v608
    %v611 = vmul.f32 %v601, %v609
    %v612 = vmul.f32 %v602, %v609
    %v613 = vmul.f32 %v603, %v609
    %v614 = vld [vmem:[#allocation4] sm:$0x1]
    %v616 = vlaneseq
    %v617 = vshrl.u32 %v616, 7
    %v618 = vsub.s32 0, %v617
    %v619 = vrot.slane %v614, %v618
    %v621 = vadd.f32 %v611, %v619
    %v622 = vadd.f32 %v612, %v619
    %v623 = vadd.f32 %v613, %v619
    %v624 = vmax.f32 %v621, 0.0
    %v625 = vmax.f32 %v622, 0.0
    %v626 = vmax.f32 %v623, 0.0
    %627 = vst.msk [vmem:[%s6] sm:$0xff] %vm92, %v624
    %628 = vst.msk [vmem:[%s6 + $0x8] sm:$0xff] %vm92, %v625
    %vm629 = vcmask 254976
    %630 = vst.msk [vmem:[%s6 + $0x10] sm:$0x3] %vm629, %v626
    // Predicated region
    $region34: #{generator_forward.18} parent=1 // pred_check
      _
    $region35: #{generator_forward.18} parent=1 // pred_check_branch
      %632 = sbr.rel (0) target = $region37
    $region36: #{generator_forward.18} parent=1 // pred_region
      _
    $region37: #{generator_forward.18} parent=1 // pred_fallthru
      _
    // Predicated region
    $region38: #{generator_forward.18} parent=1 // pred_check
      _
    $region39: #{generator_forward.18} parent=1 // pred_check_branch
      %634 = sbr.rel (0) target = $region41
    $region40: #{generator_forward.18} parent=1 // pred_region
      _
    $region41: #{generator_forward.18} parent=1 // pred_fallthru
      _
    %635 = vsyncpa [#allocation3], 1
    %636 = vsyncpa [#allocation5], 1

// kernel: generator_forward.26
$region0: #{generator_forward.26}
  #allocation0 [shape = 'u32[]', space=smem, size = 0x4, offset = 0x4, fixed_abs, tag = 'smem constant byte address 0x4 - core index']
  #allocation1 [shape = 'u32[144,128]{1,0:T(1,128)}', space=vmem, size = 0x12000, scoped, tag = 'internal scratch']
  %s0 = inlined_call_operand.vmem [shape: f32[98,288], index: 0, kind: input, shape index: {}]
  %s1 = inlined_call_operand.vmem [shape: f32[288,16], index: 1, kind: input, shape index: {}]
  %s2 = inlined_call_operand.vmem [shape: f32[98,2], index: 2, kind: input, shape index: {}]
  %s3 = inlined_call_operand.vmem [shape: f32[2,98], index: 3, kind: input, shape index: {}]
  %s4 = inlined_call_operand.vmem [shape: f32[98,16], index: 4, kind: output, shape index: {}]
  %s5 = sld [smem:[#allocation0]]
  $region26: #{generator_forward.26} parent=0
    _
  %s7 = ssub.s32 1, %s5
  %s8 = scalar_select 0, %s7, %s5
  // Predicated region
  $region2: #{generator_forward.26} parent=0 // pred_check
    _
  $region3: #{generator_forward.26} parent=0 // pred_check_branch
    %10 = sbr.rel (0) target = $region5
  $region4: #{generator_forward.26} parent=0 // pred_region
    _
  $region5: #{generator_forward.26} parent=0 // pred_fallthru
    _
  // Predicated region
  $region6: #{generator_forward.26} parent=0 // pred_check
    _
  $region7: #{generator_forward.26} parent=0 // pred_check_branch
    %12 = sbr.rel (0) target = $region9
  $region8: #{generator_forward.26} parent=0 // pred_region
    _
  $region9: #{generator_forward.26} parent=0 // pred_fallthru
    _
  // Predicated region
  $region10: #{generator_forward.26} parent=0 // pred_check
    _
  $region11: #{generator_forward.26} parent=0 // pred_check_branch
    %14 = sbr.rel (0) target = $region13
  $region12: #{generator_forward.26} parent=0 // pred_region
    _
  $region13: #{generator_forward.26} parent=0 // pred_fallthru
    _
  // Predicated region
  $region14: #{generator_forward.26} parent=0 // pred_check
    _
  $region15: #{generator_forward.26} parent=0 // pred_check_branch
    %16 = sbr.rel (0) target = $region17
  $region16: #{generator_forward.26} parent=0 // pred_region
    _
  $region17: #{generator_forward.26} parent=0 // pred_fallthru
    _
  %v17 = vld [vmem:[%s0] sm:$0xff]
  %v18 = vld [vmem:[%s0 + $0x8] sm:$0xff]
  %v19 = vld [vmem:[%s0 + $0x10] sm:$0xff]
  %v20 = vld [vmem:[%s0 + $0x18] sm:$0xff]
  %v21 = vld [vmem:[%s0 + $0x20] sm:$0xff]
  %v22 = vld [vmem:[%s0 + $0x28] sm:$0xff]
  %v23 = vld [vmem:[%s0 + $0x30] sm:$0xff]
  %v24 = vld [vmem:[%s0 + $0x38] sm:$0xff]
  %v25 = vld [vmem:[%s0 + $0x40] sm:$0xff]
  %v26 = vld [vmem:[%s0 + $0x48] sm:$0xff]
  %v27 = vld [vmem:[%s0 + $0x50] sm:$0xff]
  %v28 = vld [vmem:[%s0 + $0x58] sm:$0xff]
  %v29 = vld [vmem:[%s0 + $0x60] sm:$0xff]
  %v30 = vld [vmem:[%s0 + $0x68] sm:$0xff]
  %v31 = vld [vmem:[%s0 + $0x70] sm:$0xff]
  %v32 = vld [vmem:[%s0 + $0x78] sm:$0xff]
  %v33 = vld [vmem:[%s0 + $0x80] sm:$0xff]
  %v34 = vld [vmem:[%s0 + $0x88] sm:$0xff]
  %v35 = vld [vmem:[%s0 + $0x90] sm:$0xff]
  %v36 = vld [vmem:[%s0 + $0x98] sm:$0xff]
  %v37 = vld [vmem:[%s0 + $0xa0] sm:$0xff]
  %v38 = vld [vmem:[%s0 + $0xa8] sm:$0xff]
  %v39 = vld [vmem:[%s0 + $0xb0] sm:$0xff]
  %v40 = vld [vmem:[%s0 + $0xb8] sm:$0xff]
  %v41 = vld [vmem:[%s0 + $0xc0] sm:$0xff]
  %v42 = vld [vmem:[%s0 + $0xc8] sm:$0xff]
  %v43 = vld [vmem:[%s0 + $0xd0] sm:$0xff]
  %v44 = vld [vmem:[%s0 + $0xd8] sm:$0xff]
  %v45 = vld [vmem:[%s0 + $0xe0] sm:$0xff]
  %v46 = vld [vmem:[%s0 + $0xe8] sm:$0xff]
  %v47 = vld [vmem:[%s0 + $0xf0] sm:$0xff]
  %v48 = vld [vmem:[%s0 + $0xf8] sm:$0xff]
  %v49 = vld [vmem:[%s0 + $0x100] sm:$0xff]
  %v50 = vld [vmem:[%s0 + $0x108] sm:$0xff]
  %v51 = vld [vmem:[%s0 + $0x110] sm:$0xff]
  %v52 = vld [vmem:[%s0 + $0x118] sm:$0xff]
  %v53 = vld [vmem:[%s0 + $0x120] sm:$0x3]
  %v54 = vld [vmem:[%s0 + $0x128] sm:$0x3]
  %v55 = vld [vmem:[%s0 + $0x130] sm:$0x3]
  %v56 = vld [vmem:[%s1] sm:$0xff]
  %v57 = vld [vmem:[%s1 + $0x8] sm:$0xff]
  %v58 = vld [vmem:[%s1 + $0x10] sm:$0xff]
  %v59 = vld [vmem:[%s1 + $0x18] sm:$0xff]
  %v60 = vld [vmem:[%s1 + $0x20] sm:$0xff]
  %v61 = vld [vmem:[%s1 + $0x28] sm:$0xff]
  %v62 = vld [vmem:[%s1 + $0x30] sm:$0xff]
  %v63 = vld [vmem:[%s1 + $0x38] sm:$0xff]
  %v64 = vld [vmem:[%s1 + $0x40] sm:$0xff]
  %v65 = vld [vmem:[%s1 + $0x48] sm:$0xff]
  %v66 = vld [vmem:[%s1 + $0x50] sm:$0xff]
  %v67 = vld [vmem:[%s1 + $0x58] sm:$0xff]
  %v68 = vld [vmem:[%s1 + $0x60] sm:$0xff]
  %v69 = vld [vmem:[%s1 + $0x68] sm:$0xff]
  %v70 = vld [vmem:[%s1 + $0x70] sm:$0xff]
  %v71 = vld [vmem:[%s1 + $0x78] sm:$0xff]
  %v72 = vld [vmem:[%s1 + $0x80] sm:$0xff]
  %v73 = vld [vmem:[%s1 + $0x88] sm:$0xff]
  %v74 = vld [vmem:[%s1 + $0x90] sm:$0xff]
  %v75 = vld [vmem:[%s1 + $0x98] sm:$0xff]
  %v76 = vld [vmem:[%s1 + $0xa0] sm:$0xff]
  %v77 = vld [vmem:[%s1 + $0xa8] sm:$0xff]
  %v78 = vld [vmem:[%s1 + $0xb0] sm:$0xff]
  %v79 = vld [vmem:[%s1 + $0xb8] sm:$0xff]
  %v80 = vld [vmem:[%s1 + $0xc0] sm:$0xff]
  %v81 = vld [vmem:[%s1 + $0xc8] sm:$0xff]
  %v82 = vld [vmem:[%s1 + $0xd0] sm:$0xff]
  %v83 = vld [vmem:[%s1 + $0xd8] sm:$0xff]
  %v84 = vld [vmem:[%s1 + $0xe0] sm:$0xff]
  %v85 = vld [vmem:[%s1 + $0xe8] sm:$0xff]
  %v86 = vld [vmem:[%s1 + $0xf0] sm:$0xff]
  %v87 = vld [vmem:[%s1 + $0xf8] sm:$0xff]
  %v88 = vld [vmem:[%s1 + $0x100] sm:$0xff]
  %v89 = vld [vmem:[%s1 + $0x108] sm:$0xff]
  %v90 = vld [vmem:[%s1 + $0x110] sm:$0xff]
  %v91 = vld [vmem:[%s1 + $0x118] sm:$0xff]
  %vm92 = vcmask 261120
  %v94 = vsel %vm92, %v19, 0
  %v97 = vsel %vm92, %v22, 0
  %v100 = vsel %vm92, %v25, 0
  %v103 = vsel %vm92, %v28, 0
  %v106 = vsel %vm92, %v31, 0
  %v109 = vsel %vm92, %v34, 0
  %v112 = vsel %vm92, %v37, 0
  %v115 = vsel %vm92, %v40, 0
  %v118 = vsel %vm92, %v43, 0
  %v121 = vsel %vm92, %v46, 0
  %v124 = vsel %vm92, %v49, 0
  %v127 = vsel %vm92, %v52, 0
  %v130 = vsel %vm92, %v55, 0
  %132 = vmatprep.subr.mxu0 0.0
  %133 = vmatpush1.msra.mxu0 %v71
  %134 = vmatprep.subr.mxu0 0.0
  %135 = vmatpush1.msra.mxu0 %v70
  %136 = vmatprep.subr.mxu0 0.0
  %137 = vmatpush1.msra.mxu0 %v69
  %138 = vmatprep.subr.mxu0 0.0
  %139 = vmatpush1.msra.mxu0 %v68
  %140 = vmatprep.subr.mxu0 0.0
  %141 = vmatpush1.msra.mxu0 %v67
  %142 = vmatprep.subr.mxu0 0.0
  %143 = vmatpush1.msra.mxu0 %v66
  %144 = vmatprep.subr.mxu0 0.0
  %145 = vmatpush1.msra.mxu0 %v65
  %146 = vmatprep.subr.mxu0 0.0
  %147 = vmatpush1.msra.mxu0 %v64
  %148 = vmatprep.subr.mxu0 0.0
  %149 = vmatpush1.msra.mxu0 %v63
  %150 = vmatprep.subr.mxu0 0.0
  %151 = vmatpush1.msra.mxu0 %v62
  %152 = vmatprep.subr.mxu0 0.0
  %153 = vmatpush1.msra.mxu0 %v61
  %154 = vmatprep.subr.mxu0 0.0
  %155 = vmatpush1.msra.mxu0 %v60
  %156 = vmatprep.subr.mxu0 0.0
  %157 = vmatpush1.msra.mxu0 %v59
  %158 = vmatprep.subr.mxu0 0.0
  %159 = vmatpush1.msra.mxu0 %v58
  %160 = vmatprep.subr.mxu0 0.0
  %161 = vmatpush1.msra.mxu0 %v57
  %162 = vmatprep.subr.mxu0 0.0
  %163 = vmatpush1.msra.mxu0 %v56
  %164 = vmatprep.subr.mxu0 0.0
  %165 = vmatpush2.msra.mxu0 %v87
  %166 = vmatprep.subr.mxu0 0.0
  %167 = vmatpush2.msra.mxu0 %v86
  %168 = vmatprep.subr.mxu0 0.0
  %169 = vmatpush2.msra.mxu0 %v85
  %170 = vmatprep.subr.mxu0 0.0
  %171 = vmatpush2.msra.mxu0 %v84
  %172 = vmatprep.subr.mxu0 0.0
  %173 = vmatpush2.msra.mxu0 %v83
  %174 = vmatprep.subr.mxu0 0.0
  %175 = vmatpush2.msra.mxu0 %v82
  %176 = vmatprep.subr.mxu0 0.0
  %177 = vmatpush2.msra.mxu0 %v81
  %178 = vmatprep.subr.mxu0 0.0
  %179 = vmatpush2.msra.mxu0 %v80
  %180 = vmatprep.subr.mxu0 0.0
  %181 = vmatpush2.msra.mxu0 %v79
  %182 = vmatprep.subr.mxu0 0.0
  %183 = vmatpush2.msra.mxu0 %v78
  %184 = vmatprep.subr.mxu0 0.0
  %185 = vmatpush2.msra.mxu0 %v77
  %186 = vmatprep.subr.mxu0 0.0
  %187 = vmatpush2.msra.mxu0 %v76
  %188 = vmatprep.subr.mxu0 0.0
  %189 = vmatpush2.msra.mxu0 %v75
  %190 = vmatprep.subr.mxu0 0.0
  %191 = vmatpush2.msra.mxu0 %v74
  %192 = vmatprep.subr.mxu0 0.0
  %193 = vmatpush2.msra.mxu0 %v73
  %194 = vmatprep.subr.mxu0 0.0
  %195 = vmatpush2.msra.mxu0 %v72
  %196 = vmatprep.mubr.f32.mxu0 %v18
  %197 = vmatmul.mubr.f32.gmra.mxu0 %v17
  %v198 = vpop.f32.mrf.mxu0
  %v199 = vadd.f32 0.0, %v198
  %v200 = vpop.f32.mrf.mxu0
  %201 = vmatprep.mubr.f32.mxu0 %v21
  %202 = vmatmul.mubr.f32.gmra.mxu0 %v20
  %v203 = vpop.f32.mrf.mxu0
  %v204 = vadd.f32 0.0, %v203
  %v205 = vpop.f32.mrf.mxu0
  %206 = vmatprep.mubr.f32.mxu0 %v24
  %207 = vmatmul.mubr.f32.gmra.mxu0 %v23
  %v208 = vpop.f32.mrf.mxu0
  %v209 = vadd.f32 0.0, %v208
  %v210 = vpop.f32.mrf.mxu0
  %211 = vmatprep.mubr.f32.mxu0 %v27
  %212 = vmatmul.mubr.f32.gmra.mxu0 %v26
  %v213 = vpop.f32.mrf.mxu0
  %v214 = vadd.f32 0.0, %v213
  %v215 = vpop.f32.mrf.mxu0
  %216 = vmatprep.mubr.f32.mxu0 %v30
  %217 = vmatmul.mubr.f32.gmra.mxu0 %v29
  %v218 = vpop.f32.mrf.mxu0
  %v219 = vadd.f32 0.0, %v218
  %v220 = vpop.f32.mrf.mxu0
  %221 = vmatprep.mubr.f32.mxu0 %v33
  %222 = vmatmul.mubr.f32.gmra.mxu0 %v32
  %v223 = vpop.f32.mrf.mxu0
  %v224 = vadd.f32 0.0, %v223
  %v225 = vpop.f32.mrf.mxu0
  %226 = vmatprep.mubr.f32.mxu0 %v36
  %227 = vmatmul.mubr.f32.gmra.mxu0 %v35
  %v228 = vpop.f32.mrf.mxu0
  %v229 = vadd.f32 0.0, %v228
  %v230 = vpop.f32.mrf.mxu0
  %231 = vmatprep.mubr.f32.mxu0 %v39
  %232 = vmatmul.mubr.f32.gmra.mxu0 %v38
  %v233 = vpop.f32.mrf.mxu0
  %v234 = vadd.f32 0.0, %v233
  %v235 = vpop.f32.mrf.mxu0
  %236 = vmatprep.mubr.f32.mxu0 %v42
  %237 = vmatmul.mubr.f32.gmra.mxu0 %v41
  %v238 = vpop.f32.mrf.mxu0
  %v239 = vadd.f32 0.0, %v238
  %v240 = vpop.f32.mrf.mxu0
  %241 = vmatprep.mubr.f32.mxu0 %v45
  %242 = vmatmul.mubr.f32.gmra.mxu0 %v44
  %v243 = vpop.f32.mrf.mxu0
  %v244 = vadd.f32 0.0, %v243
  %v245 = vpop.f32.mrf.mxu0
  %246 = vmatprep.mubr.f32.mxu0 %v48
  %247 = vmatmul.mubr.f32.gmra.mxu0 %v47
  %v248 = vpop.f32.mrf.mxu0
  %v249 = vadd.f32 0.0, %v248
  %v250 = vpop.f32.mrf.mxu0
  %251 = vmatprep.mubr.f32.mxu0 %v51
  %252 = vmatmul.mubr.f32.gmra.mxu0 %v50
  %v253 = vpop.f32.mrf.mxu0
  %v254 = vadd.f32 0.0, %v253
  %v255 = vpop.f32.mrf.mxu0
  %256 = vmatprep.mubr.f32.mxu0 %v54
  %257 = vmatmul.mubr.f32.gmra.mxu0 %v53
  %v258 = vpop.f32.mrf.mxu0
  %v259 = vadd.f32 0.0, %v258
  %v260 = vpop.f32.mrf.mxu0
  %261 = vdwg.mxu0
  %262 = vmatprep.subr.mxu0 0.0
  %263 = vmatpush1.msra.mxu0 0.0
  %264 = vmatprep.subr.mxu0 0.0
  %265 = vmatpush1.msra.mxu0 0.0
  %266 = vmatprep.subr.mxu0 0.0
  %267 = vmatpush1.msra.mxu0 0.0
  %268 = vmatprep.subr.mxu0 0.0
  %269 = vmatpush1.msra.mxu0 0.0
  %270 = vmatprep.subr.mxu0 0.0
  %271 = vmatpush1.msra.mxu0 0.0
  %272 = vmatprep.subr.mxu0 0.0
  %273 = vmatpush1.msra.mxu0 0.0
  %274 = vmatprep.subr.mxu0 0.0
  %275 = vmatpush1.msra.mxu0 0.0
  %276 = vmatprep.subr.mxu0 0.0
  %277 = vmatpush1.msra.mxu0 0.0
  %278 = vmatprep.subr.mxu0 0.0
  %279 = vmatpush1.msra.mxu0 0.0
  %280 = vmatprep.subr.mxu0 0.0
  %281 = vmatpush1.msra.mxu0 0.0
  %282 = vmatprep.subr.mxu0 0.0
  %283 = vmatpush1.msra.mxu0 0.0
  %284 = vmatprep.subr.mxu0 0.0
  %285 = vmatpush1.msra.mxu0 0.0
  %286 = vmatprep.subr.mxu0 0.0
  %287 = vmatpush1.msra.mxu0 %v91
  %288 = vmatprep.subr.mxu0 0.0
  %289 = vmatpush1.msra.mxu0 %v90
  %290 = vmatprep.subr.mxu0 0.0
  %291 = vmatpush1.msra.mxu0 %v89
  %292 = vmatprep.subr.mxu0 0.0
  %293 = vmatpush1.msra.mxu0 %v88
  %294 = vmatprep.subr.mxu0 0.0
  %295 = vmatpush2.msra.mxu0 0.0
  %296 = vmatprep.subr.mxu0 0.0
  %297 = vmatpush2.msra.mxu0 0.0
  %298 = vmatprep.subr.mxu0 0.0
  %299 = vmatpush2.msra.mxu0 0.0
  %300 = vmatprep.subr.mxu0 0.0
  %301 = vmatpush2.msra.mxu0 0.0
  %302 = vmatprep.subr.mxu0 0.0
  %303 = vmatpush2.msra.mxu0 0.0
  %304 = vmatprep.subr.mxu0 0.0
  %305 = vmatpush2.msra.mxu0 0.0
  %306 = vmatprep.subr.mxu0 0.0
  %307 = vmatpush2.msra.mxu0 0.0
  %308 = vmatprep.subr.mxu0 0.0
  %309 = vmatpush2.msra.mxu0 0.0
  %310 = vmatprep.subr.mxu0 0.0
  %311 = vmatpush2.msra.mxu0 0.0
  %312 = vmatprep.subr.mxu0 0.0
  %313 = vmatpush2.msra.mxu0 0.0
  %314 = vmatprep.subr.mxu0 0.0
  %315 = vmatpush2.msra.mxu0 0.0
  %316 = vmatprep.subr.mxu0 0.0
  %317 = vmatpush2.msra.mxu0 0.0
  %318 = vmatprep.subr.mxu0 0.0
  %319 = vmatpush2.msra.mxu0 0.0
  %320 = vmatprep.subr.mxu0 0.0
  %321 = vmatpush2.msra.mxu0 0.0
  %322 = vmatprep.subr.mxu0 0.0
  %323 = vmatpush2.msra.mxu0 0.0
  %324 = vmatprep.subr.mxu0 0.0
  %325 = vmatpush2.msra.mxu0 0.0
  %326 = vmatprep.mubr.f32.mxu0 0.0
  %327 = vmatmul.mubr.f32.gmra.mxu0 %v94
  %v328 = vpop.f32.mrf.mxu0
  %v329 = vadd.f32 %v199, %v328
  %v330 = vpop.f32.mrf.mxu0
  %331 = vmatprep.mubr.f32.mxu0 0.0
  %332 = vmatmul.mubr.f32.gmra.mxu0 %v97
  %v333 = vpop.f32.mrf.mxu0
  %v334 = vadd.f32 %v204, %v333
  %v335 = vpop.f32.mrf.mxu0
  %336 = vmatprep.mubr.f32.mxu0 0.0
  %337 = vmatmul.mubr.f32.gmra.mxu0 %v100
  %v338 = vpop.f32.mrf.mxu0
  %v339 = vadd.f32 %v209, %v338
  %v340 = vpop.f32.mrf.mxu0
  %341 = vmatprep.mubr.f32.mxu0 0.0
  %342 = vmatmul.mubr.f32.gmra.mxu0 %v103
  %v343 = vpop.f32.mrf.mxu0
  %v344 = vadd.f32 %v214, %v343
  %v345 = vpop.f32.mrf.mxu0
  %346 = vmatprep.mubr.f32.mxu0 0.0
  %347 = vmatmul.mubr.f32.gmra.mxu0 %v106
  %v348 = vpop.f32.mrf.mxu0
  %v349 = vadd.f32 %v219, %v348
  %v350 = vpop.f32.mrf.mxu0
  %351 = vmatprep.mubr.f32.mxu0 0.0
  %352 = vmatmul.mubr.f32.gmra.mxu0 %v109
  %v353 = vpop.f32.mrf.mxu0
  %v354 = vadd.f32 %v224, %v353
  %v355 = vpop.f32.mrf.mxu0
  %356 = vmatprep.mubr.f32.mxu0 0.0
  %357 = vmatmul.mubr.f32.gmra.mxu0 %v112
  %v358 = vpop.f32.mrf.mxu0
  %v359 = vadd.f32 %v229, %v358
  %v360 = vpop.f32.mrf.mxu0
  %361 = vmatprep.mubr.f32.mxu0 0.0
  %362 = vmatmul.mubr.f32.gmra.mxu0 %v115
  %v363 = vpop.f32.mrf.mxu0
  %v364 = vadd.f32 %v234, %v363
  %v365 = vpop.f32.mrf.mxu0
  %366 = vmatprep.mubr.f32.mxu0 0.0
  %367 = vmatmul.mubr.f32.gmra.mxu0 %v118
  %v368 = vpop.f32.mrf.mxu0
  %v369 = vadd.f32 %v239, %v368
  %v370 = vpop.f32.mrf.mxu0
  %371 = vmatprep.mubr.f32.mxu0 0.0
  %372 = vmatmul.mubr.f32.gmra.mxu0 %v121
  %v373 = vpop.f32.mrf.mxu0
  %v374 = vadd.f32 %v244, %v373
  %v375 = vpop.f32.mrf.mxu0
  %376 = vmatprep.mubr.f32.mxu0 0.0
  %377 = vmatmul.mubr.f32.gmra.mxu0 %v124
  %v378 = vpop.f32.mrf.mxu0
  %v379 = vadd.f32 %v249, %v378
  %v380 = vpop.f32.mrf.mxu0
  %381 = vmatprep.mubr.f32.mxu0 0.0
  %382 = vmatmul.mubr.f32.gmra.mxu0 %v127
  %v383 = vpop.f32.mrf.mxu0
  %v384 = vadd.f32 %v254, %v383
  %v385 = vpop.f32.mrf.mxu0
  %386 = vmatprep.mubr.f32.mxu0 0.0
  %387 = vmatmul.mubr.f32.gmra.mxu0 %v130
  %v388 = vpop.f32.mrf.mxu0
  %v389 = vadd.f32 %v259, %v388
  %v390 = vpop.f32.mrf.mxu0
  %391 = vdwg.mxu0
  %v392 = vld [vmem:[%s2] sm:$0xff]
  %v393 = vld [vmem:[%s2 + $0x8] sm:$0xff]
  %v394 = vld [vmem:[%s2 + $0x10] sm:$0xff]
  %v395 = vld [vmem:[%s2 + $0x18] sm:$0xff]
  %v396 = vld [vmem:[%s2 + $0x20] sm:$0xff]
  %v397 = vld [vmem:[%s2 + $0x28] sm:$0xff]
  %v398 = vld [vmem:[%s2 + $0x30] sm:$0xff]
  %v399 = vld [vmem:[%s2 + $0x38] sm:$0xff]
  %v400 = vld [vmem:[%s2 + $0x40] sm:$0xff]
  %v401 = vld [vmem:[%s2 + $0x48] sm:$0xff]
  %v402 = vld [vmem:[%s2 + $0x50] sm:$0xff]
  %v403 = vld [vmem:[%s2 + $0x58] sm:$0xff]
  %v404 = vld [vmem:[%s2 + $0x60] sm:$0x3]
  %v405 = vld [vmem:[%s3] sm:$0x3]
  %vm406 = vcmask 801792
  %v408 = vsel %vm406, %v405, 0
  %vm410 = vcmask 1041408
  %v412 = vsel %vm410, %v389, 0
  %414 = vmatprep.subr.mxu0 0.0
  %415 = vmatpush1.msra.mxu0 0.0
  %416 = vmatprep.subr.mxu0 0.0
  %417 = vmatpush1.msra.mxu0 0.0
  %418 = vmatprep.subr.mxu0 0.0
  %419 = vmatpush1.msra.mxu0 0.0
  %420 = vmatprep.subr.mxu0 0.0
  %421 = vmatpush1.msra.mxu0 %v412
  %422 = vmatprep.subr.mxu0 0.0
  %423 = vmatpush1.msra.mxu0 %v384
  %424 = vmatprep.subr.mxu0 0.0
  %425 = vmatpush1.msra.mxu0 %v379
  %426 = vmatprep.subr.mxu0 0.0
  %427 = vmatpush1.msra.mxu0 %v374
  %428 = vmatprep.subr.mxu0 0.0
  %429 = vmatpush1.msra.mxu0 %v369
  %430 = vmatprep.subr.mxu0 0.0
  %431 = vmatpush1.msra.mxu0 %v364
  %432 = vmatprep.subr.mxu0 0.0
  %433 = vmatpush1.msra.mxu0 %v359
  %434 = vmatprep.subr.mxu0 0.0
  %435 = vmatpush1.msra.mxu0 %v354
  %436 = vmatprep.subr.mxu0 0.0
  %437 = vmatpush1.msra.mxu0 %v349
  %438 = vmatprep.subr.mxu0 0.0
  %439 = vmatpush1.msra.mxu0 %v344
  %440 = vmatprep.subr.mxu0 0.0
  %441 = vmatpush1.msra.mxu0 %v339
  %442 = vmatprep.subr.mxu0 0.0
  %443 = vmatpush1.msra.mxu0 %v334
  %444 = vmatprep.subr.mxu0 0.0
  %445 = vmatpush1.msra.mxu0 %v329
  %446 = vmatprep.subr.mxu0 0.0
  %447 = vmatpush2.msra.mxu0 0.0
  %448 = vmatprep.subr.mxu0 0.0
  %449 = vmatpush2.msra.mxu0 0.0
  %450 = vmatprep.subr.mxu0 0.0
  %451 = vmatpush2.msra.mxu0 0.0
  %452 = vmatprep.subr.mxu0 0.0
  %453 = vmatpush2.msra.mxu0 0.0
  %454 = vmatprep.subr.mxu0 0.0
  %455 = vmatpush2.msra.mxu0 0.0
  %456 = vmatprep.subr.mxu0 0.0
  %457 = vmatpush2.msra.mxu0 0.0
  %458 = vmatprep.subr.mxu0 0.0
  %459 = vmatpush2.msra.mxu0 0.0
  %460 = vmatprep.subr.mxu0 0.0
  %461 = vmatpush2.msra.mxu0 0.0
  %462 = vmatprep.subr.mxu0 0.0
  %463 = vmatpush2.msra.mxu0 0.0
  %464 = vmatprep.subr.mxu0 0.0
  %465 = vmatpush2.msra.mxu0 0.0
  %466 = vmatprep.subr.mxu0 0.0
  %467 = vmatpush2.msra.mxu0 0.0
  %468 = vmatprep.subr.mxu0 0.0
  %469 = vmatpush2.msra.mxu0 0.0
  %470 = vmatprep.subr.mxu0 0.0
  %471 = vmatpush2.msra.mxu0 0.0
  %472 = vmatprep.subr.mxu0 0.0
  %473 = vmatpush2.msra.mxu0 0.0
  %474 = vmatprep.subr.mxu0 0.0
  %475 = vmatpush2.msra.mxu0 0.0
  %476 = vmatprep.subr.mxu0 0.0
  %477 = vmatpush2.msra.mxu0 0.0
  %478 = vmatprep.mubr.f32.mxu0 0.0
  %479 = vmatmul.mubr.f32.gmra.mxu0 %v408
  %v480 = vpop.f32.mrf.mxu0
  %v481 = vadd.f32 0.0, %v480
  %v482 = vpop.f32.mrf.mxu0
  %483 = vdwg.mxu0
  %vm484 = vcmask 15360
  %v486 = vsel %vm484, %v392, 0
  %v489 = vsel %vm484, %v393, 0
  %v492 = vsel %vm484, %v394, 0
  %v495 = vsel %vm484, %v395, 0
  %v498 = vsel %vm484, %v396, 0
  %v501 = vsel %vm484, %v397, 0
  %v504 = vsel %vm484, %v398, 0
  %v507 = vsel %vm484, %v399, 0
  %v510 = vsel %vm484, %v400, 0
  %v513 = vsel %vm484, %v401, 0
  %v516 = vsel %vm484, %v402, 0
  %v519 = vsel %vm484, %v403, 0
  %v522 = vsel %vm484, %v404, 0
  %v525 = vsel %vm410, %v481, 0
  %527 = vmatprep.subr.mxu0 0.0
  %528 = vmatpush1.msra.mxu0 0.0
  %529 = vmatprep.subr.mxu0 0.0
  %530 = vmatpush1.msra.mxu0 0.0
  %531 = vmatprep.subr.mxu0 0.0
  %532 = vmatpush1.msra.mxu0 0.0
  %533 = vmatprep.subr.mxu0 0.0
  %534 = vmatpush1.msra.mxu0 0.0
  %535 = vmatprep.subr.mxu0 0.0
  %536 = vmatpush1.msra.mxu0 0.0
  %537 = vmatprep.subr.mxu0 0.0
  %538 = vmatpush1.msra.mxu0 0.0
  %539 = vmatprep.subr.mxu0 0.0
  %540 = vmatpush1.msra.mxu0 0.0
  %541 = vmatprep.subr.mxu0 0.0
  %542 = vmatpush1.msra.mxu0 0.0
  %543 = vmatprep.subr.mxu0 0.0
  %544 = vmatpush1.msra.mxu0 0.0
  %545 = vmatprep.subr.mxu0 0.0
  %546 = vmatpush1.msra.mxu0 0.0
  %547 = vmatprep.subr.mxu0 0.0
  %548 = vmatpush1.msra.mxu0 0.0
  %549 = vmatprep.subr.mxu0 0.0
  %550 = vmatpush1.msra.mxu0 0.0
  %551 = vmatprep.subr.mxu0 0.0
  %552 = vmatpush1.msra.mxu0 0.0
  %553 = vmatprep.subr.mxu0 0.0
  %554 = vmatpush1.msra.mxu0 0.0
  %555 = vmatprep.subr.mxu0 0.0
  %556 = vmatpush1.msra.mxu0 0.0
  %557 = vmatprep.subr.mxu0 0.0
  %558 = vmatpush1.msra.mxu0 %v525
  %559 = vmatprep.subr.mxu0 0.0
  %560 = vmatpush2.msra.mxu0 0.0
  %561 = vmatprep.subr.mxu0 0.0
  %562 = vmatpush2.msra.mxu0 0.0
  %563 = vmatprep.subr.mxu0 0.0
  %564 = vmatpush2.msra.mxu0 0.0
  %565 = vmatprep.subr.mxu0 0.0
  %566 = vmatpush2.msra.mxu0 0.0
  %567 = vmatprep.subr.mxu0 0.0
  %568 = vmatpush2.msra.mxu0 0.0
  %569 = vmatprep.subr.mxu0 0.0
  %570 = vmatpush2.msra.mxu0 0.0
  %571 = vmatprep.subr.mxu0 0.0
  %572 = vmatpush2.msra.mxu0 0.0
  %573 = vmatprep.subr.mxu0 0.0
  %574 = vmatpush2.msra.mxu0 0.0
  %575 = vmatprep.subr.mxu0 0.0
  %576 = vmatpush2.msra.mxu0 0.0
  %577 = vmatprep.subr.mxu0 0.0
  %578 = vmatpush2.msra.mxu0 0.0
  %579 = vmatprep.subr.mxu0 0.0
  %580 = vmatpush2.msra.mxu0 0.0
  %581 = vmatprep.subr.mxu0 0.0
  %582 = vmatpush2.msra.mxu0 0.0
  %583 = vmatprep.subr.mxu0 0.0
  %584 = vmatpush2.msra.mxu0 0.0
  %585 = vmatprep.subr.mxu0 0.0
  %586 = vmatpush2.msra.mxu0 0.0
  %587 = vmatprep.subr.mxu0 0.0
  %588 = vmatpush2.msra.mxu0 0.0
  %589 = vmatprep.subr.mxu0 0.0
  %590 = vmatpush2.msra.mxu0 0.0
  %591 = vmatprep.mubr.f32.mxu0 0.0
  %592 = vmatmul.mubr.f32.gmra.mxu0 %v486
  %v593 = vpop.f32.mrf.mxu0
  %v594 = vadd.f32 0.0, %v593
  %v595 = vpop.f32.mrf.mxu0
  %596 = vmatprep.mubr.f32.mxu0 0.0
  %597 = vmatmul.mubr.f32.gmra.mxu0 %v489
  %v598 = vpop.f32.mrf.mxu0
  %v599 = vadd.f32 0.0, %v598
  %v600 = vpop.f32.mrf.mxu0
  %601 = vmatprep.mubr.f32.mxu0 0.0
  %602 = vmatmul.mubr.f32.gmra.mxu0 %v492
  %v603 = vpop.f32.mrf.mxu0
  %v604 = vadd.f32 0.0, %v603
  %v605 = vpop.f32.mrf.mxu0
  %606 = vmatprep.mubr.f32.mxu0 0.0
  %607 = vmatmul.mubr.f32.gmra.mxu0 %v495
  %v608 = vpop.f32.mrf.mxu0
  %v609 = vadd.f32 0.0, %v608
  %v610 = vpop.f32.mrf.mxu0
  %611 = vmatprep.mubr.f32.mxu0 0.0
  %612 = vmatmul.mubr.f32.gmra.mxu0 %v498
  %v613 = vpop.f32.mrf.mxu0
  %v614 = vadd.f32 0.0, %v613
  %v615 = vpop.f32.mrf.mxu0
  %616 = vmatprep.mubr.f32.mxu0 0.0
  %617 = vmatmul.mubr.f32.gmra.mxu0 %v501
  %v618 = vpop.f32.mrf.mxu0
  %v619 = vadd.f32 0.0, %v618
  %v620 = vpop.f32.mrf.mxu0
  %621 = vmatprep.mubr.f32.mxu0 0.0
  %622 = vmatmul.mubr.f32.gmra.mxu0 %v504
  %v623 = vpop.f32.mrf.mxu0
  %v624 = vadd.f32 0.0, %v623
  %v625 = vpop.f32.mrf.mxu0
  %626 = vmatprep.mubr.f32.mxu0 0.0
  %627 = vmatmul.mubr.f32.gmra.mxu0 %v507
  %v628 = vpop.f32.mrf.mxu0
  %v629 = vadd.f32 0.0, %v628
  %v630 = vpop.f32.mrf.mxu0
  %631 = vmatprep.mubr.f32.mxu0 0.0
  %632 = vmatmul.mubr.f32.gmra.mxu0 %v510
  %v633 = vpop.f32.mrf.mxu0
  %v634 = vadd.f32 0.0, %v633
  %v635 = vpop.f32.mrf.mxu0
  %636 = vmatprep.mubr.f32.mxu0 0.0
  %637 = vmatmul.mubr.f32.gmra.mxu0 %v513
  %v638 = vpop.f32.mrf.mxu0
  %v639 = vadd.f32 0.0, %v638
  %v640 = vpop.f32.mrf.mxu0
  %641 = vmatprep.mubr.f32.mxu0 0.0
  %642 = vmatmul.mubr.f32.gmra.mxu0 %v516
  %v643 = vpop.f32.mrf.mxu0
  %v644 = vadd.f32 0.0, %v643
  %v645 = vpop.f32.mrf.mxu0
  %646 = vmatprep.mubr.f32.mxu0 0.0
  %647 = vmatmul.mubr.f32.gmra.mxu0 %v519
  %v648 = vpop.f32.mrf.mxu0
  %v649 = vadd.f32 0.0, %v648
  %v650 = vpop.f32.mrf.mxu0
  %651 = vmatprep.mubr.f32.mxu0 0.0
  %652 = vmatmul.mubr.f32.gmra.mxu0 %v522
  %v653 = vpop.f32.mrf.mxu0
  %v654 = vadd.f32 0.0, %v653
  %v655 = vpop.f32.mrf.mxu0
  %656 = vdwg.mxu0
  %v657 = vsub.f32 %v329, %v594
  %v658 = vsub.f32 %v334, %v599
  %v659 = vsub.f32 %v339, %v604
  %v660 = vsub.f32 %v344, %v609
  %v661 = vsub.f32 %v349, %v614
  %v662 = vsub.f32 %v354, %v619
  %v663 = vsub.f32 %v359, %v624
  %v664 = vsub.f32 %v364, %v629
  %v665 = vsub.f32 %v369, %v634
  %v666 = vsub.f32 %v374, %v639
  %v667 = vsub.f32 %v379, %v644
  %v668 = vsub.f32 %v384, %v649
  %v669 = vsub.f32 %v389, %v654
  %v670 = vmul.f32 %v657, %v657
  %v671 = vmul.f32 %v658, %v658
  %v672 = vmul.f32 %v659, %v659
  %v673 = vmul.f32 %v660, %v660
  %v674 = vmul.f32 %v661, %v661
  %v675 = vmul.f32 %v662, %v662
  %v676 = vmul.f32 %v663, %v663
  %v677 = vmul.f32 %v664, %v664
  %v678 = vmul.f32 %v665, %v665
  %v679 = vmul.f32 %v666, %v666
  %v680 = vmul.f32 %v667, %v667
  %v681 = vmul.f32 %v668, %v668
  %v682 = vmul.f32 %v669, %v669
  %v684 = vsel %vm410, %v682, 0
  %686 = vmatprep.subr.mxu0 0.0
  %687 = vmatpush1.msra.mxu0 0.0
  %688 = vmatprep.subr.mxu0 0.0
  %689 = vmatpush1.msra.mxu0 0.0
  %690 = vmatprep.subr.mxu0 0.0
  %691 = vmatpush1.msra.mxu0 0.0
  %692 = vmatprep.subr.mxu0 0.0
  %693 = vmatpush1.msra.mxu0 %v684
  %694 = vmatprep.subr.mxu0 0.0
  %695 = vmatpush1.msra.mxu0 %v681
  %696 = vmatprep.subr.mxu0 0.0
  %697 = vmatpush1.msra.mxu0 %v680
  %698 = vmatprep.subr.mxu0 0.0
  %699 = vmatpush1.msra.mxu0 %v679
  %700 = vmatprep.subr.mxu0 0.0
  %701 = vmatpush1.msra.mxu0 %v678
  %702 = vmatprep.subr.mxu0 0.0
  %703 = vmatpush1.msra.mxu0 %v677
  %704 = vmatprep.subr.mxu0 0.0
  %705 = vmatpush1.msra.mxu0 %v676
  %706 = vmatprep.subr.mxu0 0.0
  %707 = vmatpush1.msra.mxu0 %v675
  %708 = vmatprep.subr.mxu0 0.0
  %709 = vmatpush1.msra.mxu0 %v674
  %710 = vmatprep.subr.mxu0 0.0
  %711 = vmatpush1.msra.mxu0 %v673
  %712 = vmatprep.subr.mxu0 0.0
  %713 = vmatpush1.msra.mxu0 %v672
  %714 = vmatprep.subr.mxu0 0.0
  %715 = vmatpush1.msra.mxu0 %v671
  %716 = vmatprep.subr.mxu0 0.0
  %717 = vmatpush1.msra.mxu0 %v670
  %718 = vmatprep.subr.mxu0 0.0
  %719 = vmatpush2.msra.mxu0 0.0
  %720 = vmatprep.subr.mxu0 0.0
  %721 = vmatpush2.msra.mxu0 0.0
  %722 = vmatprep.subr.mxu0 0.0
  %723 = vmatpush2.msra.mxu0 0.0
  %724 = vmatprep.subr.mxu0 0.0
  %725 = vmatpush2.msra.mxu0 0.0
  %726 = vmatprep.subr.mxu0 0.0
  %727 = vmatpush2.msra.mxu0 0.0
  %728 = vmatprep.subr.mxu0 0.0
  %729 = vmatpush2.msra.mxu0 0.0
  %730 = vmatprep.subr.mxu0 0.0
  %731 = vmatpush2.msra.mxu0 0.0
  %732 = vmatprep.subr.mxu0 0.0
  %733 = vmatpush2.msra.mxu0 0.0
  %734 = vmatprep.subr.mxu0 0.0
  %735 = vmatpush2.msra.mxu0 0.0
  %736 = vmatprep.subr.mxu0 0.0
  %737 = vmatpush2.msra.mxu0 0.0
  %738 = vmatprep.subr.mxu0 0.0
  %739 = vmatpush2.msra.mxu0 0.0
  %740 = vmatprep.subr.mxu0 0.0
  %741 = vmatpush2.msra.mxu0 0.0
  %742 = vmatprep.subr.mxu0 0.0
  %743 = vmatpush2.msra.mxu0 0.0
  %744 = vmatprep.subr.mxu0 0.0
  %745 = vmatpush2.msra.mxu0 0.0
  %746 = vmatprep.subr.mxu0 0.0
  %747 = vmatpush2.msra.mxu0 0.0
  %748 = vmatprep.subr.mxu0 0.0
  %749 = vmatpush2.msra.mxu0 0.0
  %750 = vmatprep.mubr.f32.mxu0 0.0
  %751 = vmatmul.mubr.f32.gmra.mxu0 %v408
  %v752 = vpop.f32.mrf.mxu0
  %v753 = vadd.f32 1e-05, %v752
  %v754 = vpop.f32.mrf.mxu0
  %755 = vdwg.mxu0
  %v756 = vrsqrt.pop %v753
  %v758 = vsel %vm410, %v756, 0
  %760 = vmatprep.subr.mxu0 0.0
  %761 = vmatpush1.msra.mxu0 0.0
  %762 = vmatprep.subr.mxu0 0.0
  %763 = vmatpush1.msra.mxu0 0.0
  %764 = vmatprep.subr.mxu0 0.0
  %765 = vmatpush1.msra.mxu0 0.0
  %766 = vmatprep.subr.mxu0 0.0
  %767 = vmatpush1.msra.mxu0 0.0
  %768 = vmatprep.subr.mxu0 0.0
  %769 = vmatpush1.msra.mxu0 0.0
  %770 = vmatprep.subr.mxu0 0.0
  %771 = vmatpush1.msra.mxu0 0.0
  %772 = vmatprep.subr.mxu0 0.0
  %773 = vmatpush1.msra.mxu0 0.0
  %774 = vmatprep.subr.mxu0 0.0
  %775 = vmatpush1.msra.mxu0 0.0
  %776 = vmatprep.subr.mxu0 0.0
  %777 = vmatpush1.msra.mxu0 0.0
  %778 = vmatprep.subr.mxu0 0.0
  %779 = vmatpush1.msra.mxu0 0.0
  %780 = vmatprep.subr.mxu0 0.0
  %781 = vmatpush1.msra.mxu0 0.0
  %782 = vmatprep.subr.mxu0 0.0
  %783 = vmatpush1.msra.mxu0 0.0
  %784 = vmatprep.subr.mxu0 0.0
  %785 = vmatpush1.msra.mxu0 0.0
  %786 = vmatprep.subr.mxu0 0.0
  %787 = vmatpush1.msra.mxu0 0.0
  %788 = vmatprep.subr.mxu0 0.0
  %789 = vmatpush1.msra.mxu0 0.0
  %790 = vmatprep.subr.mxu0 0.0
  %791 = vmatpush1.msra.mxu0 %v758
  %792 = vmatprep.subr.mxu0 0.0
  %793 = vmatpush2.msra.mxu0 0.0
  %794 = vmatprep.subr.mxu0 0.0
  %795 = vmatpush2.msra.mxu0 0.0
  %796 = vmatprep.subr.mxu0 0.0
  %797 = vmatpush2.msra.mxu0 0.0
  %798 = vmatprep.subr.mxu0 0.0
  %799 = vmatpush2.msra.mxu0 0.0
  %800 = vmatprep.subr.mxu0 0.0
  %801 = vmatpush2.msra.mxu0 0.0
  %802 = vmatprep.subr.mxu0 0.0
  %803 = vmatpush2.msra.mxu0 0.0
  %804 = vmatprep.subr.mxu0 0.0
  %805 = vmatpush2.msra.mxu0 0.0
  %806 = vmatprep.subr.mxu0 0.0
  %807 = vmatpush2.msra.mxu0 0.0
  %808 = vmatprep.subr.mxu0 0.0
  %809 = vmatpush2.msra.mxu0 0.0
  %810 = vmatprep.subr.mxu0 0.0
  %811 = vmatpush2.msra.mxu0 0.0
  %812 = vmatprep.subr.mxu0 0.0
  %813 = vmatpush2.msra.mxu0 0.0
  %814 = vmatprep.subr.mxu0 0.0
  %815 = vmatpush2.msra.mxu0 0.0
  %816 = vmatprep.subr.mxu0 0.0
  %817 = vmatpush2.msra.mxu0 0.0
  %818 = vmatprep.subr.mxu0 0.0
  %819 = vmatpush2.msra.mxu0 0.0
  %820 = vmatprep.subr.mxu0 0.0
  %821 = vmatpush2.msra.mxu0 0.0
  %822 = vmatprep.subr.mxu0 0.0
  %823 = vmatpush2.msra.mxu0 0.0
  %824 = vmatprep.mubr.f32.mxu0 0.0
  %825 = vmatmul.mubr.f32.gmra.mxu0 %v486
  %v826 = vpop.f32.mrf.mxu0
  %v827 = vadd.f32 0.0, %v826
  %v828 = vpop.f32.mrf.mxu0
  %829 = vmatprep.mubr.f32.mxu0 0.0
  %830 = vmatmul.mubr.f32.gmra.mxu0 %v489
  %v831 = vpop.f32.mrf.mxu0
  %v832 = vadd.f32 0.0, %v831
  %v833 = vpop.f32.mrf.mxu0
  %834 = vmatprep.mubr.f32.mxu0 0.0
  %835 = vmatmul.mubr.f32.gmra.mxu0 %v492
  %v836 = vpop.f32.mrf.mxu0
  %v837 = vadd.f32 0.0, %v836
  %v838 = vpop.f32.mrf.mxu0
  %839 = vmatprep.mubr.f32.mxu0 0.0
  %840 = vmatmul.mubr.f32.gmra.mxu0 %v495
  %v841 = vpop.f32.mrf.mxu0
  %v842 = vadd.f32 0.0, %v841
  %v843 = vpop.f32.mrf.mxu0
  %844 = vmatprep.mubr.f32.mxu0 0.0
  %845 = vmatmul.mubr.f32.gmra.mxu0 %v498
  %v846 = vpop.f32.mrf.mxu0
  %v847 = vadd.f32 0.0, %v846
  %v848 = vpop.f32.mrf.mxu0
  %849 = vmatprep.mubr.f32.mxu0 0.0
  %850 = vmatmul.mubr.f32.gmra.mxu0 %v501
  %v851 = vpop.f32.mrf.mxu0
  %v852 = vadd.f32 0.0, %v851
  %v853 = vpop.f32.mrf.mxu0
  %854 = vmatprep.mubr.f32.mxu0 0.0
  %855 = vmatmul.mubr.f32.gmra.mxu0 %v504
  %v856 = vpop.f32.mrf.mxu0
  %v857 = vadd.f32 0.0, %v856
  %v858 = vpop.f32.mrf.mxu0
  %859 = vmatprep.mubr.f32.mxu0 0.0
  %860 = vmatmul.mubr.f32.gmra.mxu0 %v507
  %v861 = vpop.f32.mrf.mxu0
  %v862 = vadd.f32 0.0, %v861
  %v863 = vpop.f32.mrf.mxu0
  %864 = vmatprep.mubr.f32.mxu0 0.0
  %865 = vmatmul.mubr.f32.gmra.mxu0 %v510
  %v866 = vpop.f32.mrf.mxu0
  %v867 = vadd.f32 0.0, %v866
  %v868 = vpop.f32.mrf.mxu0
  %869 = vmatprep.mubr.f32.mxu0 0.0
  %870 = vmatmul.mubr.f32.gmra.mxu0 %v513
  %v871 = vpop.f32.mrf.mxu0
  %v872 = vadd.f32 0.0, %v871
  %v873 = vpop.f32.mrf.mxu0
  %874 = vmatprep.mubr.f32.mxu0 0.0
  %875 = vmatmul.mubr.f32.gmra.mxu0 %v516
  %v876 = vpop.f32.mrf.mxu0
  %v877 = vadd.f32 0.0, %v876
  %v878 = vpop.f32.mrf.mxu0
  %879 = vmatprep.mubr.f32.mxu0 0.0
  %880 = vmatmul.mubr.f32.gmra.mxu0 %v519
  %v881 = vpop.f32.mrf.mxu0
  %v882 = vadd.f32 0.0, %v881
  %v883 = vpop.f32.mrf.mxu0
  %884 = vmatprep.mubr.f32.mxu0 0.0
  %885 = vmatmul.mubr.f32.gmra.mxu0 %v522
  %v886 = vpop.f32.mrf.mxu0
  %v887 = vadd.f32 0.0, %v886
  %v888 = vpop.f32.mrf.mxu0
  %889 = vdwg.mxu0
  %v890 = vmul.f32 %v657, %v827
  %v891 = vmul.f32 %v658, %v832
  %v892 = vmul.f32 %v659, %v837
  %v893 = vmul.f32 %v660, %v842
  %v894 = vmul.f32 %v661, %v847
  %v895 = vmul.f32 %v662, %v852
  %v896 = vmul.f32 %v663, %v857
  %v897 = vmul.f32 %v664, %v862
  %v898 = vmul.f32 %v665, %v867
  %v899 = vmul.f32 %v666, %v872
  %v900 = vmul.f32 %v667, %v877
  %v901 = vmul.f32 %v668, %v882
  %v902 = vmul.f32 %v669, %v887
  %v903 = vmax.f32 %v890, 0.0
  %v904 = vmax.f32 %v891, 0.0
  %v905 = vmax.f32 %v892, 0.0
  %v906 = vmax.f32 %v893, 0.0
  %v907 = vmax.f32 %v894, 0.0
  %v908 = vmax.f32 %v895, 0.0
  %v909 = vmax.f32 %v896, 0.0
  %v910 = vmax.f32 %v897, 0.0
  %v911 = vmax.f32 %v898, 0.0
  %v912 = vmax.f32 %v899, 0.0
  %v913 = vmax.f32 %v900, 0.0
  %v914 = vmax.f32 %v901, 0.0
  %v915 = vmax.f32 %v902, 0.0
  %vm916 = vcmask 130048
  %917 = vst.msk [vmem:[%s4] sm:$0xff] %vm916, %v903
  %918 = vst.msk [vmem:[%s4 + $0x8] sm:$0xff] %vm916, %v904
  %919 = vst.msk [vmem:[%s4 + $0x10] sm:$0xff] %vm916, %v905
  %920 = vst.msk [vmem:[%s4 + $0x18] sm:$0xff] %vm916, %v906
  %921 = vst.msk [vmem:[%s4 + $0x20] sm:$0xff] %vm916, %v907
  %922 = vst.msk [vmem:[%s4 + $0x28] sm:$0xff] %vm916, %v908
  %923 = vst.msk [vmem:[%s4 + $0x30] sm:$0xff] %vm916, %v909
  %924 = vst.msk [vmem:[%s4 + $0x38] sm:$0xff] %vm916, %v910
  %925 = vst.msk [vmem:[%s4 + $0x40] sm:$0xff] %vm916, %v911
  %926 = vst.msk [vmem:[%s4 + $0x48] sm:$0xff] %vm916, %v912
  %927 = vst.msk [vmem:[%s4 + $0x50] sm:$0xff] %vm916, %v913
  %928 = vst.msk [vmem:[%s4 + $0x58] sm:$0xff] %vm916, %v914
  %vm929 = vcmask 123904
  %930 = vst.msk [vmem:[%s4 + $0x60] sm:$0x3] %vm929, %v915
  // Predicated region
  $region18: #{generator_forward.26} parent=0 // pred_check
    _
  $region19: #{generator_forward.26} parent=0 // pred_check_branch
    %932 = sbr.rel (0) target = $region21
  $region20: #{generator_forward.26} parent=0 // pred_region
    _
  $region21: #{generator_forward.26} parent=0 // pred_fallthru
    _
  // Predicated region
  $region22: #{generator_forward.26} parent=0 // pred_check
    _
  $region23: #{generator_forward.26} parent=0 // pred_check_branch
    %934 = sbr.rel (0) target = $region25
  $region24: #{generator_forward.26} parent=0 // pred_region
    _
  $region25: #{generator_forward.26} parent=0 // pred_fallthru
    _

// kernel: generator_forward.27
$region0: #{generator_forward.27}
  #allocation0 [shape = 'u32[]', space=smem, size = 0x4, offset = 0x4, fixed_abs, tag = 'smem constant byte address 0x4 - core index']
  #allocation1 [shape = 'u32[144,128]{1,0:T(1,128)}', space=vmem, size = 0x12000, scoped, tag = 'internal scratch']
  %s0 = inlined_call_operand.vmem [shape: f32[450,144], index: 0, kind: input, shape index: {}]
  %s1 = inlined_call_operand.vmem [shape: f32[144,8], index: 1, kind: input, shape index: {}]
  %s2 = inlined_call_operand.vmem [shape: f32[450,2], index: 2, kind: input, shape index: {}]
  %s3 = inlined_call_operand.vmem [shape: f32[2,450], index: 3, kind: input, shape index: {}]
  %s4 = inlined_call_operand.vmem [shape: f32[450,8], index: 4, kind: output, shape index: {}]
  %s5 = sld [smem:[#allocation0]]
  $region26: #{generator_forward.27} parent=0
    _
  %s7 = ssub.s32 1, %s5
  %s8 = scalar_select 0, %s7, %s5
  // Predicated region
  $region2: #{generator_forward.27} parent=0 // pred_check
    _
  $region3: #{generator_forward.27} parent=0 // pred_check_branch
    %10 = sbr.rel (0) target = $region5
  $region4: #{generator_forward.27} parent=0 // pred_region
    _
  $region5: #{generator_forward.27} parent=0 // pred_fallthru
    _
  // Predicated region
  $region6: #{generator_forward.27} parent=0 // pred_check
    _
  $region7: #{generator_forward.27} parent=0 // pred_check_branch
    %12 = sbr.rel (0) target = $region9
  $region8: #{generator_forward.27} parent=0 // pred_region
    _
  $region9: #{generator_forward.27} parent=0 // pred_fallthru
    _
  // Predicated region
  $region10: #{generator_forward.27} parent=0 // pred_check
    _
  $region11: #{generator_forward.27} parent=0 // pred_check_branch
    %14 = sbr.rel (0) target = $region13
  $region12: #{generator_forward.27} parent=0 // pred_region
    _
  $region13: #{generator_forward.27} parent=0 // pred_fallthru
    _
  // Predicated region
  $region14: #{generator_forward.27} parent=0 // pred_check
    _
  $region15: #{generator_forward.27} parent=0 // pred_check_branch
    %16 = sbr.rel (0) target = $region17
  $region16: #{generator_forward.27} parent=0 // pred_region
    _
  $region17: #{generator_forward.27} parent=0 // pred_fallthru
    _
  %v17 = vld [vmem:[%s0] sm:$0xff]
  %v18 = vld [vmem:[%s0 + $0x8] sm:$0xff]
  %v19 = vld [vmem:[%s0 + $0x10] sm:$0xff]
  %v20 = vld [vmem:[%s0 + $0x18] sm:$0xff]
  %v21 = vld [vmem:[%s0 + $0x20] sm:$0xff]
  %v22 = vld [vmem:[%s0 + $0x28] sm:$0xff]
  %v23 = vld [vmem:[%s0 + $0x30] sm:$0xff]
  %v24 = vld [vmem:[%s0 + $0x38] sm:$0xff]
  %v25 = vld [vmem:[%s0 + $0x40] sm:$0xff]
  %v26 = vld [vmem:[%s0 + $0x48] sm:$0xff]
  %v27 = vld [vmem:[%s0 + $0x50] sm:$0xff]
  %v28 = vld [vmem:[%s0 + $0x58] sm:$0xff]
  %v29 = vld [vmem:[%s0 + $0x60] sm:$0xff]
  %v30 = vld [vmem:[%s0 + $0x68] sm:$0xff]
  %v31 = vld [vmem:[%s0 + $0x70] sm:$0xff]
  %v32 = vld [vmem:[%s0 + $0x78] sm:$0xff]
  %v33 = vld [vmem:[%s0 + $0x80] sm:$0xff]
  %v34 = vld [vmem:[%s0 + $0x88] sm:$0xff]
  %v35 = vld [vmem:[%s0 + $0x90] sm:$0xff]
  %v36 = vld [vmem:[%s0 + $0x98] sm:$0xff]
  %v37 = vld [vmem:[%s0 + $0xa0] sm:$0xff]
  %v38 = vld [vmem:[%s0 + $0xa8] sm:$0xff]
  %v39 = vld [vmem:[%s0 + $0xb0] sm:$0xff]
  %v40 = vld [vmem:[%s0 + $0xb8] sm:$0xff]
  %v41 = vld [vmem:[%s0 + $0xc0] sm:$0xff]
  %v42 = vld [vmem:[%s0 + $0xc8] sm:$0xff]
  %v43 = vld [vmem:[%s0 + $0xd0] sm:$0xff]
  %v44 = vld [vmem:[%s0 + $0xd8] sm:$0xff]
  %v45 = vld [vmem:[%s0 + $0xe0] sm:$0xff]
  %v46 = vld [vmem:[%s0 + $0xe8] sm:$0xff]
  %v47 = vld [vmem:[%s0 + $0xf0] sm:$0xff]
  %v48 = vld [vmem:[%s0 + $0xf8] sm:$0xff]
  %v49 = vld [vmem:[%s0 + $0x100] sm:$0xff]
  %v50 = vld [vmem:[%s0 + $0x108] sm:$0xff]
  %v51 = vld [vmem:[%s0 + $0x110] sm:$0xff]
  %v52 = vld [vmem:[%s0 + $0x118] sm:$0xff]
  %v53 = vld [vmem:[%s0 + $0x120] sm:$0xff]
  %v54 = vld [vmem:[%s0 + $0x128] sm:$0xff]
  %v55 = vld [vmem:[%s0 + $0x130] sm:$0xff]
  %v56 = vld [vmem:[%s0 + $0x138] sm:$0xff]
  %v57 = vld [vmem:[%s0 + $0x140] sm:$0xff]
  %v58 = vld [vmem:[%s0 + $0x148] sm:$0xff]
  %v59 = vld [vmem:[%s0 + $0x150] sm:$0xff]
  %v60 = vld [vmem:[%s0 + $0x158] sm:$0xff]
  %v61 = vld [vmem:[%s0 + $0x160] sm:$0xff]
  %v62 = vld [vmem:[%s0 + $0x168] sm:$0xff]
  %v63 = vld [vmem:[%s0 + $0x170] sm:$0xff]
  %v64 = vld [vmem:[%s0 + $0x178] sm:$0xff]
  %v65 = vld [vmem:[%s0 + $0x180] sm:$0xff]
  %v66 = vld [vmem:[%s0 + $0x188] sm:$0xff]
  %v67 = vld [vmem:[%s0 + $0x190] sm:$0xff]
  %v68 = vld [vmem:[%s0 + $0x198] sm:$0xff]
  %v69 = vld [vmem:[%s0 + $0x1a0] sm:$0xff]
  %v70 = vld [vmem:[%s0 + $0x1a8] sm:$0xff]
  %v71 = vld [vmem:[%s0 + $0x1b0] sm:$0xff]
  %v72 = vld [vmem:[%s0 + $0x1b8] sm:$0xff]
  %v73 = vld [vmem:[%s0 + $0x1c0] sm:$0xff]
  %v74 = vld [vmem:[%s0 + $0x1c8] sm:$0xff]
  %v75 = vld [vmem:[%s0 + $0x1d0] sm:$0xff]
  %v76 = vld [vmem:[%s0 + $0x1d8] sm:$0xff]
  %v77 = vld [vmem:[%s0 + $0x1e0] sm:$0xff]
  %v78 = vld [vmem:[%s0 + $0x1e8] sm:$0xff]
  %v79 = vld [vmem:[%s0 + $0x1f0] sm:$0xff]
  %v80 = vld [vmem:[%s0 + $0x1f8] sm:$0xff]
  %v81 = vld [vmem:[%s0 + $0x200] sm:$0xff]
  %v82 = vld [vmem:[%s0 + $0x208] sm:$0xff]
  %v83 = vld [vmem:[%s0 + $0x210] sm:$0xff]
  %v84 = vld [vmem:[%s0 + $0x218] sm:$0xff]
  %v85 = vld [vmem:[%s0 + $0x220] sm:$0xff]
  %v86 = vld [vmem:[%s0 + $0x228] sm:$0xff]
  %v87 = vld [vmem:[%s0 + $0x230] sm:$0xff]
  %v88 = vld [vmem:[%s0 + $0x238] sm:$0xff]
  %v89 = vld [vmem:[%s0 + $0x240] sm:$0xff]
  %v90 = vld [vmem:[%s0 + $0x248] sm:$0xff]
  %v91 = vld [vmem:[%s0 + $0x250] sm:$0xff]
  %v92 = vld [vmem:[%s0 + $0x258] sm:$0xff]
  %v93 = vld [vmem:[%s0 + $0x260] sm:$0xff]
  %v94 = vld [vmem:[%s0 + $0x268] sm:$0xff]
  %v95 = vld [vmem:[%s0 + $0x270] sm:$0xff]
  %v96 = vld [vmem:[%s0 + $0x278] sm:$0xff]
  %v97 = vld [vmem:[%s0 + $0x280] sm:$0xff]
  %v98 = vld [vmem:[%s0 + $0x288] sm:$0xff]
  %v99 = vld [vmem:[%s0 + $0x290] sm:$0xff]
  %v100 = vld [vmem:[%s0 + $0x298] sm:$0xff]
  %v101 = vld [vmem:[%s0 + $0x2a0] sm:$0xff]
  %v102 = vld [vmem:[%s0 + $0x2a8] sm:$0xff]
  %v103 = vld [vmem:[%s0 + $0x2b0] sm:$0xff]
  %v104 = vld [vmem:[%s0 + $0x2b8] sm:$0xff]
  %v105 = vld [vmem:[%s0 + $0x2c0] sm:$0xff]
  %v106 = vld [vmem:[%s0 + $0x2c8] sm:$0xff]
  %v107 = vld [vmem:[%s0 + $0x2d0] sm:$0xff]
  %v108 = vld [vmem:[%s0 + $0x2d8] sm:$0xff]
  %v109 = vld [vmem:[%s0 + $0x2e0] sm:$0xff]
  %v110 = vld [vmem:[%s0 + $0x2e8] sm:$0xff]
  %v111 = vld [vmem:[%s0 + $0x2f0] sm:$0xff]
  %v112 = vld [vmem:[%s0 + $0x2f8] sm:$0xff]
  %v113 = vld [vmem:[%s0 + $0x300] sm:$0xff]
  %v114 = vld [vmem:[%s0 + $0x308] sm:$0xff]
  %v115 = vld [vmem:[%s0 + $0x310] sm:$0xff]
  %v116 = vld [vmem:[%s0 + $0x318] sm:$0xff]
  %v117 = vld [vmem:[%s0 + $0x320] sm:$0xff]
  %v118 = vld [vmem:[%s0 + $0x328] sm:$0xff]
  %v119 = vld [vmem:[%s0 + $0x330] sm:$0xff]
  %v120 = vld [vmem:[%s0 + $0x338] sm:$0xff]
  %v121 = vld [vmem:[%s0 + $0x340] sm:$0xff]
  %v122 = vld [vmem:[%s0 + $0x348] sm:$0xff]
  %v123 = vld [vmem:[%s0 + $0x350] sm:$0xff]
  %v124 = vld [vmem:[%s0 + $0x358] sm:$0xff]
  %v125 = vld [vmem:[%s0 + $0x360] sm:$0xff]
  %v126 = vld [vmem:[%s0 + $0x368] sm:$0xff]
  %v127 = vld [vmem:[%s0 + $0x370] sm:$0xff]
  %v128 = vld [vmem:[%s0 + $0x378] sm:$0xff]
  %v129 = vld [vmem:[%s0 + $0x380] sm:$0x3]
  %v130 = vld [vmem:[%s0 + $0x388] sm:$0x3]
  %v131 = vld [vmem:[%s1] sm:$0xff]
  %v132 = vld [vmem:[%s1 + $0x8] sm:$0xff]
  %v133 = vld [vmem:[%s1 + $0x10] sm:$0xff]
  %v134 = vld [vmem:[%s1 + $0x18] sm:$0xff]
  %v135 = vld [vmem:[%s1 + $0x20] sm:$0xff]
  %v136 = vld [vmem:[%s1 + $0x28] sm:$0xff]
  %v137 = vld [vmem:[%s1 + $0x30] sm:$0xff]
  %v138 = vld [vmem:[%s1 + $0x38] sm:$0xff]
  %v139 = vld [vmem:[%s1 + $0x40] sm:$0xff]
  %v140 = vld [vmem:[%s1 + $0x48] sm:$0xff]
  %v141 = vld [vmem:[%s1 + $0x50] sm:$0xff]
  %v142 = vld [vmem:[%s1 + $0x58] sm:$0xff]
  %v143 = vld [vmem:[%s1 + $0x60] sm:$0xff]
  %v144 = vld [vmem:[%s1 + $0x68] sm:$0xff]
  %v145 = vld [vmem:[%s1 + $0x70] sm:$0xff]
  %v146 = vld [vmem:[%s1 + $0x78] sm:$0xff]
  %v147 = vld [vmem:[%s1 + $0x80] sm:$0xff]
  %v148 = vld [vmem:[%s1 + $0x88] sm:$0xff]
  %vm149 = vcmask 130048
  %v151 = vsel %vm149, %v18, 0
  %v154 = vsel %vm149, %v20, 0
  %v157 = vsel %vm149, %v22, 0
  %v160 = vsel %vm149, %v24, 0
  %v163 = vsel %vm149, %v26, 0
  %v166 = vsel %vm149, %v28, 0
  %v169 = vsel %vm149, %v30, 0
  %v172 = vsel %vm149, %v32, 0
  %v175 = vsel %vm149, %v34, 0
  %v178 = vsel %vm149, %v36, 0
  %v181 = vsel %vm149, %v38, 0
  %v184 = vsel %vm149, %v40, 0
  %v187 = vsel %vm149, %v42, 0
  %v190 = vsel %vm149, %v44, 0
  %v193 = vsel %vm149, %v46, 0
  %v196 = vsel %vm149, %v48, 0
  %v199 = vsel %vm149, %v50, 0
  %v202 = vsel %vm149, %v52, 0
  %v205 = vsel %vm149, %v54, 0
  %v208 = vsel %vm149, %v56, 0
  %v211 = vsel %vm149, %v58, 0
  %v214 = vsel %vm149, %v60, 0
  %v217 = vsel %vm149, %v62, 0
  %v220 = vsel %vm149, %v64, 0
  %v223 = vsel %vm149, %v66, 0
  %v226 = vsel %vm149, %v68, 0
  %v229 = vsel %vm149, %v70, 0
  %v232 = vsel %vm149, %v72, 0
  %v235 = vsel %vm149, %v74, 0
  %v238 = vsel %vm149, %v76, 0
  %v241 = vsel %vm149, %v78, 0
  %v244 = vsel %vm149, %v80, 0
  %v247 = vsel %vm149, %v82, 0
  %v250 = vsel %vm149, %v84, 0
  %v253 = vsel %vm149, %v86, 0
  %v256 = vsel %vm149, %v88, 0
  %v259 = vsel %vm149, %v90, 0
  %v262 = vsel %vm149, %v92, 0
  %v265 = vsel %vm149, %v94, 0
  %v268 = vsel %vm149, %v96, 0
  %v271 = vsel %vm149, %v98, 0
  %v274 = vsel %vm149, %v100, 0
  %v277 = vsel %vm149, %v102, 0
  %v280 = vsel %vm149, %v104, 0
  %v283 = vsel %vm149, %v106, 0
  %v286 = vsel %vm149, %v108, 0
  %v289 = vsel %vm149, %v110, 0
  %v292 = vsel %vm149, %v112, 0
  %v295 = vsel %vm149, %v114, 0
  %v298 = vsel %vm149, %v116, 0
  %v301 = vsel %vm149, %v118, 0
  %v304 = vsel %vm149, %v120, 0
  %v307 = vsel %vm149, %v122, 0
  %v310 = vsel %vm149, %v124, 0
  %v313 = vsel %vm149, %v126, 0
  %v316 = vsel %vm149, %v128, 0
  %v319 = vsel %vm149, %v130, 0
  %321 = vmatprep.subr.mxu0 0.0
  %322 = vmatpush1.msra.mxu0 %v146
  %323 = vmatprep.subr.mxu0 0.0
  %324 = vmatpush1.msra.mxu0 %v145
  %325 = vmatprep.subr.mxu0 0.0
  %326 = vmatpush1.msra.mxu0 %v144
  %327 = vmatprep.subr.mxu0 0.0
  %328 = vmatpush1.msra.mxu0 %v143
  %329 = vmatprep.subr.mxu0 0.0
  %330 = vmatpush1.msra.mxu0 %v142
  %331 = vmatprep.subr.mxu0 0.0
  %332 = vmatpush1.msra.mxu0 %v141
  %333 = vmatprep.subr.mxu0 0.0
  %334 = vmatpush1.msra.mxu0 %v140
  %335 = vmatprep.subr.mxu0 0.0
  %336 = vmatpush1.msra.mxu0 %v139
  %337 = vmatprep.subr.mxu0 0.0
  %338 = vmatpush1.msra.mxu0 %v138
  %339 = vmatprep.subr.mxu0 0.0
  %340 = vmatpush1.msra.mxu0 %v137
  %341 = vmatprep.subr.mxu0 0.0
  %342 = vmatpush1.msra.mxu0 %v136
  %343 = vmatprep.subr.mxu0 0.0
  %344 = vmatpush1.msra.mxu0 %v135
  %345 = vmatprep.subr.mxu0 0.0
  %346 = vmatpush1.msra.mxu0 %v134
  %347 = vmatprep.subr.mxu0 0.0
  %348 = vmatpush1.msra.mxu0 %v133
  %349 = vmatprep.subr.mxu0 0.0
  %350 = vmatpush1.msra.mxu0 %v132
  %351 = vmatprep.subr.mxu0 0.0
  %352 = vmatpush1.msra.mxu0 %v131
  %353 = vmatprep.subr.mxu0 0.0
  %354 = vmatpush2.msra.mxu0 0.0
  %355 = vmatprep.subr.mxu0 0.0
  %356 = vmatpush2.msra.mxu0 0.0
  %357 = vmatprep.subr.mxu0 0.0
  %358 = vmatpush2.msra.mxu0 0.0
  %359 = vmatprep.subr.mxu0 0.0
  %360 = vmatpush2.msra.mxu0 0.0
  %361 = vmatprep.subr.mxu0 0.0
  %362 = vmatpush2.msra.mxu0 0.0
  %363 = vmatprep.subr.mxu0 0.0
  %364 = vmatpush2.msra.mxu0 0.0
  %365 = vmatprep.subr.mxu0 0.0
  %366 = vmatpush2.msra.mxu0 0.0
  %367 = vmatprep.subr.mxu0 0.0
  %368 = vmatpush2.msra.mxu0 0.0
  %369 = vmatprep.subr.mxu0 0.0
  %370 = vmatpush2.msra.mxu0 0.0
  %371 = vmatprep.subr.mxu0 0.0
  %372 = vmatpush2.msra.mxu0 0.0
  %373 = vmatprep.subr.mxu0 0.0
  %374 = vmatpush2.msra.mxu0 0.0
  %375 = vmatprep.subr.mxu0 0.0
  %376 = vmatpush2.msra.mxu0 0.0
  %377 = vmatprep.subr.mxu0 0.0
  %378 = vmatpush2.msra.mxu0 0.0
  %379 = vmatprep.subr.mxu0 0.0
  %380 = vmatpush2.msra.mxu0 0.0
  %381 = vmatprep.subr.mxu0 0.0
  %382 = vmatpush2.msra.mxu0 %v148
  %383 = vmatprep.subr.mxu0 0.0
  %384 = vmatpush2.msra.mxu0 %v147
  %385 = vmatprep.mubr.f32.mxu0 %v151
  %386 = vmatmul.mubr.f32.gmra.mxu0 %v17
  %v387 = vpop.f32.mrf.mxu0
  %v388 = vadd.f32 0.0, %v387
  %v389 = vpop.f32.mrf.mxu0
  %390 = vmatprep.mubr.f32.mxu0 %v154
  %391 = vmatmul.mubr.f32.gmra.mxu0 %v19
  %v392 = vpop.f32.mrf.mxu0
  %v393 = vadd.f32 0.0, %v392
  %v394 = vpop.f32.mrf.mxu0
  %395 = vmatprep.mubr.f32.mxu0 %v157
  %396 = vmatmul.mubr.f32.gmra.mxu0 %v21
  %v397 = vpop.f32.mrf.mxu0
  %v398 = vadd.f32 0.0, %v397
  %v399 = vpop.f32.mrf.mxu0
  %400 = vmatprep.mubr.f32.mxu0 %v160
  %401 = vmatmul.mubr.f32.gmra.mxu0 %v23
  %v402 = vpop.f32.mrf.mxu0
  %v403 = vadd.f32 0.0, %v402
  %v404 = vpop.f32.mrf.mxu0
  %405 = vmatprep.mubr.f32.mxu0 %v163
  %406 = vmatmul.mubr.f32.gmra.mxu0 %v25
  %v407 = vpop.f32.mrf.mxu0
  %v408 = vadd.f32 0.0, %v407
  %v409 = vpop.f32.mrf.mxu0
  %410 = vmatprep.mubr.f32.mxu0 %v166
  %411 = vmatmul.mubr.f32.gmra.mxu0 %v27
  %v412 = vpop.f32.mrf.mxu0
  %v413 = vadd.f32 0.0, %v412
  %v414 = vpop.f32.mrf.mxu0
  %415 = vmatprep.mubr.f32.mxu0 %v169
  %416 = vmatmul.mubr.f32.gmra.mxu0 %v29
  %v417 = vpop.f32.mrf.mxu0
  %v418 = vadd.f32 0.0, %v417
  %v419 = vpop.f32.mrf.mxu0
  %420 = vmatprep.mubr.f32.mxu0 %v172
  %421 = vmatmul.mubr.f32.gmra.mxu0 %v31
  %v422 = vpop.f32.mrf.mxu0
  %v423 = vadd.f32 0.0, %v422
  %v424 = vpop.f32.mrf.mxu0
  %425 = vmatprep.mubr.f32.mxu0 %v175
  %426 = vmatmul.mubr.f32.gmra.mxu0 %v33
  %v427 = vpop.f32.mrf.mxu0
  %v428 = vadd.f32 0.0, %v427
  %v429 = vpop.f32.mrf.mxu0
  %430 = vmatprep.mubr.f32.mxu0 %v178
  %431 = vmatmul.mubr.f32.gmra.mxu0 %v35
  %v432 = vpop.f32.mrf.mxu0
  %v433 = vadd.f32 0.0, %v432
  %v434 = vpop.f32.mrf.mxu0
  %435 = vmatprep.mubr.f32.mxu0 %v181
  %436 = vmatmul.mubr.f32.gmra.mxu0 %v37
  %v437 = vpop.f32.mrf.mxu0
  %v438 = vadd.f32 0.0, %v437
  %v439 = vpop.f32.mrf.mxu0
  %440 = vmatprep.mubr.f32.mxu0 %v184
  %441 = vmatmul.mubr.f32.gmra.mxu0 %v39
  %v442 = vpop.f32.mrf.mxu0
  %v443 = vadd.f32 0.0, %v442
  %v444 = vpop.f32.mrf.mxu0
  %445 = vmatprep.mubr.f32.mxu0 %v187
  %446 = vmatmul.mubr.f32.gmra.mxu0 %v41
  %v447 = vpop.f32.mrf.mxu0
  %v448 = vadd.f32 0.0, %v447
  %v449 = vpop.f32.mrf.mxu0
  %450 = vmatprep.mubr.f32.mxu0 %v190
  %451 = vmatmul.mubr.f32.gmra.mxu0 %v43
  %v452 = vpop.f32.mrf.mxu0
  %v453 = vadd.f32 0.0, %v452
  %v454 = vpop.f32.mrf.mxu0
  %455 = vmatprep.mubr.f32.mxu0 %v193
  %456 = vmatmul.mubr.f32.gmra.mxu0 %v45
  %v457 = vpop.f32.mrf.mxu0
  %v458 = vadd.f32 0.0, %v457
  %v459 = vpop.f32.mrf.mxu0
  %460 = vmatprep.mubr.f32.mxu0 %v196
  %461 = vmatmul.mubr.f32.gmra.mxu0 %v47
  %v462 = vpop.f32.mrf.mxu0
  %v463 = vadd.f32 0.0, %v462
  %v464 = vpop.f32.mrf.mxu0
  %465 = vmatprep.mubr.f32.mxu0 %v199
  %466 = vmatmul.mubr.f32.gmra.mxu0 %v49
  %v467 = vpop.f32.mrf.mxu0
  %v468 = vadd.f32 0.0, %v467
  %v469 = vpop.f32.mrf.mxu0
  %470 = vmatprep.mubr.f32.mxu0 %v202
  %471 = vmatmul.mubr.f32.gmra.mxu0 %v51
  %v472 = vpop.f32.mrf.mxu0
  %v473 = vadd.f32 0.0, %v472
  %v474 = vpop.f32.mrf.mxu0
  %475 = vmatprep.mubr.f32.mxu0 %v205
  %476 = vmatmul.mubr.f32.gmra.mxu0 %v53
  %v477 = vpop.f32.mrf.mxu0
  %v478 = vadd.f32 0.0, %v477
  %v479 = vpop.f32.mrf.mxu0
  %480 = vmatprep.mubr.f32.mxu0 %v208
  %481 = vmatmul.mubr.f32.gmra.mxu0 %v55
  %v482 = vpop.f32.mrf.mxu0
  %v483 = vadd.f32 0.0, %v482
  %v484 = vpop.f32.mrf.mxu0
  %485 = vmatprep.mubr.f32.mxu0 %v211
  %486 = vmatmul.mubr.f32.gmra.mxu0 %v57
  %v487 = vpop.f32.mrf.mxu0
  %v488 = vadd.f32 0.0, %v487
  %v489 = vpop.f32.mrf.mxu0
  %490 = vmatprep.mubr.f32.mxu0 %v214
  %491 = vmatmul.mubr.f32.gmra.mxu0 %v59
  %v492 = vpop.f32.mrf.mxu0
  %v493 = vadd.f32 0.0, %v492
  %v494 = vpop.f32.mrf.mxu0
  %495 = vmatprep.mubr.f32.mxu0 %v217
  %496 = vmatmul.mubr.f32.gmra.mxu0 %v61
  %v497 = vpop.f32.mrf.mxu0
  %v498 = vadd.f32 0.0, %v497
  %v499 = vpop.f32.mrf.mxu0
  %500 = vmatprep.mubr.f32.mxu0 %v220
  %501 = vmatmul.mubr.f32.gmra.mxu0 %v63
  %v502 = vpop.f32.mrf.mxu0
  %v503 = vadd.f32 0.0, %v502
  %v504 = vpop.f32.mrf.mxu0
  %505 = vmatprep.mubr.f32.mxu0 %v223
  %506 = vmatmul.mubr.f32.gmra.mxu0 %v65
  %v507 = vpop.f32.mrf.mxu0
  %v508 = vadd.f32 0.0, %v507
  %v509 = vpop.f32.mrf.mxu0
  %510 = vmatprep.mubr.f32.mxu0 %v226
  %511 = vmatmul.mubr.f32.gmra.mxu0 %v67
  %v512 = vpop.f32.mrf.mxu0
  %v513 = vadd.f32 0.0, %v512
  %v514 = vpop.f32.mrf.mxu0
  %515 = vmatprep.mubr.f32.mxu0 %v229
  %516 = vmatmul.mubr.f32.gmra.mxu0 %v69
  %v517 = vpop.f32.mrf.mxu0
  %v518 = vadd.f32 0.0, %v517
  %v519 = vpop.f32.mrf.mxu0
  %520 = vmatprep.mubr.f32.mxu0 %v232
  %521 = vmatmul.mubr.f32.gmra.mxu0 %v71
  %v522 = vpop.f32.mrf.mxu0
  %v523 = vadd.f32 0.0, %v522
  %v524 = vpop.f32.mrf.mxu0
  %525 = vmatprep.mubr.f32.mxu0 %v235
  %526 = vmatmul.mubr.f32.gmra.mxu0 %v73
  %v527 = vpop.f32.mrf.mxu0
  %v528 = vadd.f32 0.0, %v527
  %v529 = vpop.f32.mrf.mxu0
  %530 = vmatprep.mubr.f32.mxu0 %v238
  %531 = vmatmul.mubr.f32.gmra.mxu0 %v75
  %v532 = vpop.f32.mrf.mxu0
  %v533 = vadd.f32 0.0, %v532
  %v534 = vpop.f32.mrf.mxu0
  %535 = vmatprep.mubr.f32.mxu0 %v241
  %536 = vmatmul.mubr.f32.gmra.mxu0 %v77
  %v537 = vpop.f32.mrf.mxu0
  %v538 = vadd.f32 0.0, %v537
  %v539 = vpop.f32.mrf.mxu0
  %540 = vmatprep.mubr.f32.mxu0 %v244
  %541 = vmatmul.mubr.f32.gmra.mxu0 %v79
  %v542 = vpop.f32.mrf.mxu0
  %v543 = vadd.f32 0.0, %v542
  %v544 = vpop.f32.mrf.mxu0
  %545 = vmatprep.mubr.f32.mxu0 %v247
  %546 = vmatmul.mubr.f32.gmra.mxu0 %v81
  %v547 = vpop.f32.mrf.mxu0
  %v548 = vadd.f32 0.0, %v547
  %v549 = vpop.f32.mrf.mxu0
  %550 = vmatprep.mubr.f32.mxu0 %v250
  %551 = vmatmul.mubr.f32.gmra.mxu0 %v83
  %v552 = vpop.f32.mrf.mxu0
  %v553 = vadd.f32 0.0, %v552
  %v554 = vpop.f32.mrf.mxu0
  %555 = vmatprep.mubr.f32.mxu0 %v253
  %556 = vmatmul.mubr.f32.gmra.mxu0 %v85
  %v557 = vpop.f32.mrf.mxu0
  %v558 = vadd.f32 0.0, %v557
  %v559 = vpop.f32.mrf.mxu0
  %560 = vmatprep.mubr.f32.mxu0 %v256
  %561 = vmatmul.mubr.f32.gmra.mxu0 %v87
  %v562 = vpop.f32.mrf.mxu0
  %v563 = vadd.f32 0.0, %v562
  %v564 = vpop.f32.mrf.mxu0
  %565 = vmatprep.mubr.f32.mxu0 %v259
  %566 = vmatmul.mubr.f32.gmra.mxu0 %v89
  %v567 = vpop.f32.mrf.mxu0
  %v568 = vadd.f32 0.0, %v567
  %v569 = vpop.f32.mrf.mxu0
  %570 = vmatprep.mubr.f32.mxu0 %v262
  %571 = vmatmul.mubr.f32.gmra.mxu0 %v91
  %v572 = vpop.f32.mrf.mxu0
  %v573 = vadd.f32 0.0, %v572
  %v574 = vpop.f32.mrf.mxu0
  %575 = vmatprep.mubr.f32.mxu0 %v265
  %576 = vmatmul.mubr.f32.gmra.mxu0 %v93
  %v577 = vpop.f32.mrf.mxu0
  %v578 = vadd.f32 0.0, %v577
  %v579 = vpop.f32.mrf.mxu0
  %580 = vmatprep.mubr.f32.mxu0 %v268
  %581 = vmatmul.mubr.f32.gmra.mxu0 %v95
  %v582 = vpop.f32.mrf.mxu0
  %v583 = vadd.f32 0.0, %v582
  %v584 = vpop.f32.mrf.mxu0
  %585 = vmatprep.mubr.f32.mxu0 %v271
  %586 = vmatmul.mubr.f32.gmra.mxu0 %v97
  %v587 = vpop.f32.mrf.mxu0
  %v588 = vadd.f32 0.0, %v587
  %v589 = vpop.f32.mrf.mxu0
  %590 = vmatprep.mubr.f32.mxu0 %v274
  %591 = vmatmul.mubr.f32.gmra.mxu0 %v99
  %v592 = vpop.f32.mrf.mxu0
  %v593 = vadd.f32 0.0, %v592
  %v594 = vpop.f32.mrf.mxu0
  %595 = vmatprep.mubr.f32.mxu0 %v277
  %596 = vmatmul.mubr.f32.gmra.mxu0 %v101
  %v597 = vpop.f32.mrf.mxu0
  %v598 = vadd.f32 0.0, %v597
  %v599 = vpop.f32.mrf.mxu0
  %600 = vmatprep.mubr.f32.mxu0 %v280
  %601 = vmatmul.mubr.f32.gmra.mxu0 %v103
  %v602 = vpop.f32.mrf.mxu0
  %v603 = vadd.f32 0.0, %v602
  %v604 = vpop.f32.mrf.mxu0
  %605 = vmatprep.mubr.f32.mxu0 %v283
  %606 = vmatmul.mubr.f32.gmra.mxu0 %v105
  %v607 = vpop.f32.mrf.mxu0
  %v608 = vadd.f32 0.0, %v607
  %v609 = vpop.f32.mrf.mxu0
  %610 = vmatprep.mubr.f32.mxu0 %v286
  %611 = vmatmul.mubr.f32.gmra.mxu0 %v107
  %v612 = vpop.f32.mrf.mxu0
  %v613 = vadd.f32 0.0, %v612
  %v614 = vpop.f32.mrf.mxu0
  %615 = vmatprep.mubr.f32.mxu0 %v289
  %616 = vmatmul.mubr.f32.gmra.mxu0 %v109
  %v617 = vpop.f32.mrf.mxu0
  %v618 = vadd.f32 0.0, %v617
  %v619 = vpop.f32.mrf.mxu0
  %620 = vmatprep.mubr.f32.mxu0 %v292
  %621 = vmatmul.mubr.f32.gmra.mxu0 %v111
  %v622 = vpop.f32.mrf.mxu0
  %v623 = vadd.f32 0.0, %v622
  %v624 = vpop.f32.mrf.mxu0
  %625 = vmatprep.mubr.f32.mxu0 %v295
  %626 = vmatmul.mubr.f32.gmra.mxu0 %v113
  %v627 = vpop.f32.mrf.mxu0
  %v628 = vadd.f32 0.0, %v627
  %v629 = vpop.f32.mrf.mxu0
  %630 = vmatprep.mubr.f32.mxu0 %v298
  %631 = vmatmul.mubr.f32.gmra.mxu0 %v115
  %v632 = vpop.f32.mrf.mxu0
  %v633 = vadd.f32 0.0, %v632
  %v634 = vpop.f32.mrf.mxu0
  %635 = vmatprep.mubr.f32.mxu0 %v301
  %636 = vmatmul.mubr.f32.gmra.mxu0 %v117
  %v637 = vpop.f32.mrf.mxu0
  %v638 = vadd.f32 0.0, %v637
  %v639 = vpop.f32.mrf.mxu0
  %640 = vmatprep.mubr.f32.mxu0 %v304
  %641 = vmatmul.mubr.f32.gmra.mxu0 %v119
  %v642 = vpop.f32.mrf.mxu0
  %v643 = vadd.f32 0.0, %v642
  %v644 = vpop.f32.mrf.mxu0
  %645 = vmatprep.mubr.f32.mxu0 %v307
  %646 = vmatmul.mubr.f32.gmra.mxu0 %v121
  %v647 = vpop.f32.mrf.mxu0
  %v648 = vadd.f32 0.0, %v647
  %v649 = vpop.f32.mrf.mxu0
  %650 = vmatprep.mubr.f32.mxu0 %v310
  %651 = vmatmul.mubr.f32.gmra.mxu0 %v123
  %v652 = vpop.f32.mrf.mxu0
  %v653 = vadd.f32 0.0, %v652
  %v654 = vpop.f32.mrf.mxu0
  %655 = vmatprep.mubr.f32.mxu0 %v313
  %656 = vmatmul.mubr.f32.gmra.mxu0 %v125
  %v657 = vpop.f32.mrf.mxu0
  %v658 = vadd.f32 0.0, %v657
  %v659 = vpop.f32.mrf.mxu0
  %660 = vmatprep.mubr.f32.mxu0 %v316
  %661 = vmatmul.mubr.f32.gmra.mxu0 %v127
  %v662 = vpop.f32.mrf.mxu0
  %v663 = vadd.f32 0.0, %v662
  %v664 = vpop.f32.mrf.mxu0
  %665 = vmatprep.mubr.f32.mxu0 %v319
  %666 = vmatmul.mubr.f32.gmra.mxu0 %v129
  %v667 = vpop.f32.mrf.mxu0
  %v668 = vadd.f32 0.0, %v667
  %v669 = vpop.f32.mrf.mxu0
  %670 = vdwg.mxu0
  %v671 = vld [vmem:[%s2] sm:$0xff]
  %v672 = vld [vmem:[%s2 + $0x8] sm:$0xff]
  %v673 = vld [vmem:[%s2 + $0x10] sm:$0xff]
  %v674 = vld [vmem:[%s2 + $0x18] sm:$0xff]
  %v675 = vld [vmem:[%s2 + $0x20] sm:$0xff]
  %v676 = vld [vmem:[%s2 + $0x28] sm:$0xff]
  %v677 = vld [vmem:[%s2 + $0x30] sm:$0xff]
  %v678 = vld [vmem:[%s2 + $0x38] sm:$0xff]
  %v679 = vld [vmem:[%s2 + $0x40] sm:$0xff]
  %v680 = vld [vmem:[%s2 + $0x48] sm:$0xff]
  %v681 = vld [vmem:[%s2 + $0x50] sm:$0xff]
  %v682 = vld [vmem:[%s2 + $0x58] sm:$0xff]
  %v683 = vld [vmem:[%s2 + $0x60] sm:$0xff]
  %v684 = vld [vmem:[%s2 + $0x68] sm:$0xff]
  %v685 = vld [vmem:[%s2 + $0x70] sm:$0xff]
  %v686 = vld [vmem:[%s2 + $0x78] sm:$0xff]
  %v687 = vld [vmem:[%s2 + $0x80] sm:$0xff]
  %v688 = vld [vmem:[%s2 + $0x88] sm:$0xff]
  %v689 = vld [vmem:[%s2 + $0x90] sm:$0xff]
  %v690 = vld [vmem:[%s2 + $0x98] sm:$0xff]
  %v691 = vld [vmem:[%s2 + $0xa0] sm:$0xff]
  %v692 = vld [vmem:[%s2 + $0xa8] sm:$0xff]
  %v693 = vld [vmem:[%s2 + $0xb0] sm:$0xff]
  %v694 = vld [vmem:[%s2 + $0xb8] sm:$0xff]
  %v695 = vld [vmem:[%s2 + $0xc0] sm:$0xff]
  %v696 = vld [vmem:[%s2 + $0xc8] sm:$0xff]
  %v697 = vld [vmem:[%s2 + $0xd0] sm:$0xff]
  %v698 = vld [vmem:[%s2 + $0xd8] sm:$0xff]
  %v699 = vld [vmem:[%s2 + $0xe0] sm:$0xff]
  %v700 = vld [vmem:[%s2 + $0xe8] sm:$0xff]
  %v701 = vld [vmem:[%s2 + $0xf0] sm:$0xff]
  %v702 = vld [vmem:[%s2 + $0xf8] sm:$0xff]
  %v703 = vld [vmem:[%s2 + $0x100] sm:$0xff]
  %v704 = vld [vmem:[%s2 + $0x108] sm:$0xff]
  %v705 = vld [vmem:[%s2 + $0x110] sm:$0xff]
  %v706 = vld [vmem:[%s2 + $0x118] sm:$0xff]
  %v707 = vld [vmem:[%s2 + $0x120] sm:$0xff]
  %v708 = vld [vmem:[%s2 + $0x128] sm:$0xff]
  %v709 = vld [vmem:[%s2 + $0x130] sm:$0xff]
  %v710 = vld [vmem:[%s2 + $0x138] sm:$0xff]
  %v711 = vld [vmem:[%s2 + $0x140] sm:$0xff]
  %v712 = vld [vmem:[%s2 + $0x148] sm:$0xff]
  %v713 = vld [vmem:[%s2 + $0x150] sm:$0xff]
  %v714 = vld [vmem:[%s2 + $0x158] sm:$0xff]
  %v715 = vld [vmem:[%s2 + $0x160] sm:$0xff]
  %v716 = vld [vmem:[%s2 + $0x168] sm:$0xff]
  %v717 = vld [vmem:[%s2 + $0x170] sm:$0xff]
  %v718 = vld [vmem:[%s2 + $0x178] sm:$0xff]
  %v719 = vld [vmem:[%s2 + $0x180] sm:$0xff]
  %v720 = vld [vmem:[%s2 + $0x188] sm:$0xff]
  %v721 = vld [vmem:[%s2 + $0x190] sm:$0xff]
  %v722 = vld [vmem:[%s2 + $0x198] sm:$0xff]
  %v723 = vld [vmem:[%s2 + $0x1a0] sm:$0xff]
  %v724 = vld [vmem:[%s2 + $0x1a8] sm:$0xff]
  %v725 = vld [vmem:[%s2 + $0x1b0] sm:$0xff]
  %v726 = vld [vmem:[%s2 + $0x1b8] sm:$0xff]
  %v727 = vld [vmem:[%s2 + $0x1c0] sm:$0x3]
  %v728 = vld [vmem:[%s3] sm:$0xff]
  %v730 = vcombine.high %v728, %v728
  %v732 = vunpack.c.l.s4 1983009808
  %v733 = vunpack.c.0.s8 %v732
  %v734 = vlaneseq
  %v735 = vshrl.u32 %v734, 7
  %v736 = vsub.s32 %v733, %v735
  %v737 = vrot.slane %v728, %v736
  %v739 = vunpack.c.l.s4 1983009808
  %v740 = vunpack.c.0.s8 %v739
  %v741 = vlaneseq
  %v742 = vshrl.u32 %v741, 7
  %v743 = vsub.s32 %v740, %v742
  %v744 = vrot.slane %v730, %v743
  %v745 = vcombine.high %v737, %v737
  %v746 = vcombine.high %v744, %v744
  %vm750 = vcmask 539648
  %v751 = vsel %vm750, %v746, 0
  %vm753 = vcmask 1041408
  %v755 = vsel %vm753, %v668, 0
  %757 = vmatprep.subr.mxu0 0.0
  %758 = vmatpush1.msra.mxu0 %v463
  %759 = vmatprep.subr.mxu0 0.0
  %760 = vmatpush1.msra.mxu0 %v458
  %761 = vmatprep.subr.mxu0 0.0
  %762 = vmatpush1.msra.mxu0 %v453
  %763 = vmatprep.subr.mxu0 0.0
  %764 = vmatpush1.msra.mxu0 %v448
  %765 = vmatprep.subr.mxu0 0.0
  %766 = vmatpush1.msra.mxu0 %v443
  %767 = vmatprep.subr.mxu0 0.0
  %768 = vmatpush1.msra.mxu0 %v438
  %769 = vmatprep.subr.mxu0 0.0
  %770 = vmatpush1.msra.mxu0 %v433
  %771 = vmatprep.subr.mxu0 0.0
  %772 = vmatpush1.msra.mxu0 %v428
  %773 = vmatprep.subr.mxu0 0.0
  %774 = vmatpush1.msra.mxu0 %v423
  %775 = vmatprep.subr.mxu0 0.0
  %776 = vmatpush1.msra.mxu0 %v418
  %777 = vmatprep.subr.mxu0 0.0
  %778 = vmatpush1.msra.mxu0 %v413
  %779 = vmatprep.subr.mxu0 0.0
  %780 = vmatpush1.msra.mxu0 %v408
  %781 = vmatprep.subr.mxu0 0.0
  %782 = vmatpush1.msra.mxu0 %v403
  %783 = vmatprep.subr.mxu0 0.0
  %784 = vmatpush1.msra.mxu0 %v398
  %785 = vmatprep.subr.mxu0 0.0
  %786 = vmatpush1.msra.mxu0 %v393
  %787 = vmatprep.subr.mxu0 0.0
  %788 = vmatpush1.msra.mxu0 %v388
  %789 = vmatprep.subr.mxu0 0.0
  %790 = vmatpush2.msra.mxu0 %v543
  %791 = vmatprep.subr.mxu0 0.0
  %792 = vmatpush2.msra.mxu0 %v538
  %793 = vmatprep.subr.mxu0 0.0
  %794 = vmatpush2.msra.mxu0 %v533
  %795 = vmatprep.subr.mxu0 0.0
  %796 = vmatpush2.msra.mxu0 %v528
  %797 = vmatprep.subr.mxu0 0.0
  %798 = vmatpush2.msra.mxu0 %v523
  %799 = vmatprep.subr.mxu0 0.0
  %800 = vmatpush2.msra.mxu0 %v518
  %801 = vmatprep.subr.mxu0 0.0
  %802 = vmatpush2.msra.mxu0 %v513
  %803 = vmatprep.subr.mxu0 0.0
  %804 = vmatpush2.msra.mxu0 %v508
  %805 = vmatprep.subr.mxu0 0.0
  %806 = vmatpush2.msra.mxu0 %v503
  %807 = vmatprep.subr.mxu0 0.0
  %808 = vmatpush2.msra.mxu0 %v498
  %809 = vmatprep.subr.mxu0 0.0
  %810 = vmatpush2.msra.mxu0 %v493
  %811 = vmatprep.subr.mxu0 0.0
  %812 = vmatpush2.msra.mxu0 %v488
  %813 = vmatprep.subr.mxu0 0.0
  %814 = vmatpush2.msra.mxu0 %v483
  %815 = vmatprep.subr.mxu0 0.0
  %816 = vmatpush2.msra.mxu0 %v478
  %817 = vmatprep.subr.mxu0 0.0
  %818 = vmatpush2.msra.mxu0 %v473
  %819 = vmatprep.subr.mxu0 0.0
  %820 = vmatpush2.msra.mxu0 %v468
  %821 = vmatprep.mubr.f32.mxu0 %v745
  %822 = vmatmul.mubr.f32.gmra.mxu0 %v737
  %v823 = vpop.f32.mrf.mxu0
  %v824 = vadd.f32 0.0, %v823
  %v825 = vpop.f32.mrf.mxu0
  %826 = vdwg.mxu0
  %827 = vmatprep.subr.mxu0 0.0
  %828 = vmatpush1.msra.mxu0 %v623
  %829 = vmatprep.subr.mxu0 0.0
  %830 = vmatpush1.msra.mxu0 %v618
  %831 = vmatprep.subr.mxu0 0.0
  %832 = vmatpush1.msra.mxu0 %v613
  %833 = vmatprep.subr.mxu0 0.0
  %834 = vmatpush1.msra.mxu0 %v608
  %835 = vmatprep.subr.mxu0 0.0
  %836 = vmatpush1.msra.mxu0 %v603
  %837 = vmatprep.subr.mxu0 0.0
  %838 = vmatpush1.msra.mxu0 %v598
  %839 = vmatprep.subr.mxu0 0.0
  %840 = vmatpush1.msra.mxu0 %v593
  %841 = vmatprep.subr.mxu0 0.0
  %842 = vmatpush1.msra.mxu0 %v588
  %843 = vmatprep.subr.mxu0 0.0
  %844 = vmatpush1.msra.mxu0 %v583
  %845 = vmatprep.subr.mxu0 0.0
  %846 = vmatpush1.msra.mxu0 %v578
  %847 = vmatprep.subr.mxu0 0.0
  %848 = vmatpush1.msra.mxu0 %v573
  %849 = vmatprep.subr.mxu0 0.0
  %850 = vmatpush1.msra.mxu0 %v568
  %851 = vmatprep.subr.mxu0 0.0
  %852 = vmatpush1.msra.mxu0 %v563
  %853 = vmatprep.subr.mxu0 0.0
  %854 = vmatpush1.msra.mxu0 %v558
  %855 = vmatprep.subr.mxu0 0.0
  %856 = vmatpush1.msra.mxu0 %v553
  %857 = vmatprep.subr.mxu0 0.0
  %858 = vmatpush1.msra.mxu0 %v548
  %859 = vmatprep.subr.mxu0 0.0
  %860 = vmatpush2.msra.mxu0 0.0
  %861 = vmatprep.subr.mxu0 0.0
  %862 = vmatpush2.msra.mxu0 0.0
  %863 = vmatprep.subr.mxu0 0.0
  %864 = vmatpush2.msra.mxu0 0.0
  %865 = vmatprep.subr.mxu0 0.0
  %866 = vmatpush2.msra.mxu0 0.0
  %867 = vmatprep.subr.mxu0 0.0
  %868 = vmatpush2.msra.mxu0 0.0
  %869 = vmatprep.subr.mxu0 0.0
  %870 = vmatpush2.msra.mxu0 0.0
  %871 = vmatprep.subr.mxu0 0.0
  %872 = vmatpush2.msra.mxu0 0.0
  %873 = vmatprep.subr.mxu0 0.0
  %874 = vmatpush2.msra.mxu0 %v755
  %875 = vmatprep.subr.mxu0 0.0
  %876 = vmatpush2.msra.mxu0 %v663
  %877 = vmatprep.subr.mxu0 0.0
  %878 = vmatpush2.msra.mxu0 %v658
  %879 = vmatprep.subr.mxu0 0.0
  %880 = vmatpush2.msra.mxu0 %v653
  %881 = vmatprep.subr.mxu0 0.0
  %882 = vmatpush2.msra.mxu0 %v648
  %883 = vmatprep.subr.mxu0 0.0
  %884 = vmatpush2.msra.mxu0 %v643
  %885 = vmatprep.subr.mxu0 0.0
  %886 = vmatpush2.msra.mxu0 %v638
  %887 = vmatprep.subr.mxu0 0.0
  %888 = vmatpush2.msra.mxu0 %v633
  %889 = vmatprep.subr.mxu0 0.0
  %890 = vmatpush2.msra.mxu0 %v628
  %891 = vmatprep.mubr.f32.mxu0 %v751
  %892 = vmatmul.mubr.f32.gmra.mxu0 %v744
  %v893 = vpop.f32.mrf.mxu0
  %v894 = vadd.f32 %v824, %v893
  %v895 = vpop.f32.mrf.mxu0
  %896 = vdwg.mxu0
  %vm897 = vcmask 15360
  %v899 = vsel %vm897, %v671, 0
  %v902 = vsel %vm897, %v672, 0
  %v905 = vsel %vm897, %v673, 0
  %v908 = vsel %vm897, %v674, 0
  %v911 = vsel %vm897, %v675, 0
  %v914 = vsel %vm897, %v676, 0
  %v917 = vsel %vm897, %v677, 0
  %v920 = vsel %vm897, %v678, 0
  %v923 = vsel %vm897, %v679, 0
  %v926 = vsel %vm897, %v680, 0
  %v929 = vsel %vm897, %v681, 0
  %v932 = vsel %vm897, %v682, 0
  %v935 = vsel %vm897, %v683, 0
  %v938 = vsel %vm897, %v684, 0
  %v941 = vsel %vm897, %v685, 0
  %v944 = vsel %vm897, %v686, 0
  %v947 = vsel %vm897, %v687, 0
  %v950 = vsel %vm897, %v688, 0
  %v953 = vsel %vm897, %v689, 0
  %v956 = vsel %vm897, %v690, 0
  %v959 = vsel %vm897, %v691, 0
  %v962 = vsel %vm897, %v692, 0
  %v965 = vsel %vm897, %v693, 0
  %v968 = vsel %vm897, %v694, 0
  %v971 = vsel %vm897, %v695, 0
  %v974 = vsel %vm897, %v696, 0
  %v977 = vsel %vm897, %v697, 0
  %v980 = vsel %vm897, %v698, 0
  %v983 = vsel %vm897, %v699, 0
  %v986 = vsel %vm897, %v700, 0
  %v989 = vsel %vm897, %v701, 0
  %v992 = vsel %vm897, %v702, 0
  %v995 = vsel %vm897, %v703, 0
  %v998 = vsel %vm897, %v704, 0
  %v1001 = vsel %vm897, %v705, 0
  %v1004 = vsel %vm897, %v706, 0
  %v1007 = vsel %vm897, %v707, 0
  %v1010 = vsel %vm897, %v708, 0
  %v1013 = vsel %vm897, %v709, 0
  %v1016 = vsel %vm897, %v710, 0
  %v1019 = vsel %vm897, %v711, 0
  %v1022 = vsel %vm897, %v712, 0
  %v1025 = vsel %vm897, %v713, 0
  %v1028 = vsel %vm897, %v714, 0
  %v1031 = vsel %vm897, %v715, 0
  %v1034 = vsel %vm897, %v716, 0
  %v1037 = vsel %vm897, %v717, 0
  %v1040 = vsel %vm897, %v718, 0
  %v1043 = vsel %vm897, %v719, 0
  %v1046 = vsel %vm897, %v720, 0
  %v1049 = vsel %vm897, %v721, 0
  %v1052 = vsel %vm897, %v722, 0
  %v1055 = vsel %vm897, %v723, 0
  %v1058 = vsel %vm897, %v724, 0
  %v1061 = vsel %vm897, %v725, 0
  %v1064 = vsel %vm897, %v726, 0
  %v1067 = vsel %vm897, %v727, 0
  %v1070 = vsel %vm753, %v894, 0
  %1072 = vmatprep.subr.mxu0 0.0
  %1073 = vmatpush1.msra.mxu0 0.0
  %1074 = vmatprep.subr.mxu0 0.0
  %1075 = vmatpush1.msra.mxu0 0.0
  %1076 = vmatprep.subr.mxu0 0.0
  %1077 = vmatpush1.msra.mxu0 0.0
  %1078 = vmatprep.subr.mxu0 0.0
  %1079 = vmatpush1.msra.mxu0 0.0
  %1080 = vmatprep.subr.mxu0 0.0
  %1081 = vmatpush1.msra.mxu0 0.0
  %1082 = vmatprep.subr.mxu0 0.0
  %1083 = vmatpush1.msra.mxu0 0.0
  %1084 = vmatprep.subr.mxu0 0.0
  %1085 = vmatpush1.msra.mxu0 0.0
  %1086 = vmatprep.subr.mxu0 0.0
  %1087 = vmatpush1.msra.mxu0 0.0
  %1088 = vmatprep.subr.mxu0 0.0
  %1089 = vmatpush1.msra.mxu0 0.0
  %1090 = vmatprep.subr.mxu0 0.0
  %1091 = vmatpush1.msra.mxu0 0.0
  %1092 = vmatprep.subr.mxu0 0.0
  %1093 = vmatpush1.msra.mxu0 0.0
  %1094 = vmatprep.subr.mxu0 0.0
  %1095 = vmatpush1.msra.mxu0 0.0
  %1096 = vmatprep.subr.mxu0 0.0
  %1097 = vmatpush1.msra.mxu0 0.0
  %1098 = vmatprep.subr.mxu0 0.0
  %1099 = vmatpush1.msra.mxu0 0.0
  %1100 = vmatprep.subr.mxu0 0.0
  %1101 = vmatpush1.msra.mxu0 0.0
  %1102 = vmatprep.subr.mxu0 0.0
  %1103 = vmatpush1.msra.mxu0 %v1070
  %1104 = vmatprep.subr.mxu0 0.0
  %1105 = vmatpush2.msra.mxu0 0.0
  %1106 = vmatprep.subr.mxu0 0.0
  %1107 = vmatpush2.msra.mxu0 0.0
  %1108 = vmatprep.subr.mxu0 0.0
  %1109 = vmatpush2.msra.mxu0 0.0
  %1110 = vmatprep.subr.mxu0 0.0
  %1111 = vmatpush2.msra.mxu0 0.0
  %1112 = vmatprep.subr.mxu0 0.0
  %1113 = vmatpush2.msra.mxu0 0.0
  %1114 = vmatprep.subr.mxu0 0.0
  %1115 = vmatpush2.msra.mxu0 0.0
  %1116 = vmatprep.subr.mxu0 0.0
  %1117 = vmatpush2.msra.mxu0 0.0
  %1118 = vmatprep.subr.mxu0 0.0
  %1119 = vmatpush2.msra.mxu0 0.0
  %1120 = vmatprep.subr.mxu0 0.0
  %1121 = vmatpush2.msra.mxu0 0.0
  %1122 = vmatprep.subr.mxu0 0.0
  %1123 = vmatpush2.msra.mxu0 0.0
  %1124 = vmatprep.subr.mxu0 0.0
  %1125 = vmatpush2.msra.mxu0 0.0
  %1126 = vmatprep.subr.mxu0 0.0
  %1127 = vmatpush2.msra.mxu0 0.0
  %1128 = vmatprep.subr.mxu0 0.0
  %1129 = vmatpush2.msra.mxu0 0.0
  %1130 = vmatprep.subr.mxu0 0.0
  %1131 = vmatpush2.msra.mxu0 0.0
  %1132 = vmatprep.subr.mxu0 0.0
  %1133 = vmatpush2.msra.mxu0 0.0
  %1134 = vmatprep.subr.mxu0 0.0
  %1135 = vmatpush2.msra.mxu0 0.0
  %1136 = vmatprep.mubr.f32.mxu0 0.0
  %1137 = vmatmul.mubr.f32.gmra.mxu0 %v899
  %v1138 = vpop.f32.mrf.mxu0
  %v1139 = vadd.f32 0.0, %v1138
  %v1140 = vpop.f32.mrf.mxu0
  %1141 = vmatprep.mubr.f32.mxu0 0.0
  %1142 = vmatmul.mubr.f32.gmra.mxu0 %v902
  %v1143 = vpop.f32.mrf.mxu0
  %v1144 = vadd.f32 0.0, %v1143
  %v1145 = vpop.f32.mrf.mxu0
  %1146 = vmatprep.mubr.f32.mxu0 0.0
  %1147 = vmatmul.mubr.f32.gmra.mxu0 %v905
  %v1148 = vpop.f32.mrf.mxu0
  %v1149 = vadd.f32 0.0, %v1148
  %v1150 = vpop.f32.mrf.mxu0
  %1151 = vmatprep.mubr.f32.mxu0 0.0
  %1152 = vmatmul.mubr.f32.gmra.mxu0 %v908
  %v1153 = vpop.f32.mrf.mxu0
  %v1154 = vadd.f32 0.0, %v1153
  %v1155 = vpop.f32.mrf.mxu0
  %1156 = vmatprep.mubr.f32.mxu0 0.0
  %1157 = vmatmul.mubr.f32.gmra.mxu0 %v911
  %v1158 = vpop.f32.mrf.mxu0
  %v1159 = vadd.f32 0.0, %v1158
  %v1160 = vpop.f32.mrf.mxu0
  %1161 = vmatprep.mubr.f32.mxu0 0.0
  %1162 = vmatmul.mubr.f32.gmra.mxu0 %v914
  %v1163 = vpop.f32.mrf.mxu0
  %v1164 = vadd.f32 0.0, %v1163
  %v1165 = vpop.f32.mrf.mxu0
  %1166 = vmatprep.mubr.f32.mxu0 0.0
  %1167 = vmatmul.mubr.f32.gmra.mxu0 %v917
  %v1168 = vpop.f32.mrf.mxu0
  %v1169 = vadd.f32 0.0, %v1168
  %v1170 = vpop.f32.mrf.mxu0
  %1171 = vmatprep.mubr.f32.mxu0 0.0
  %1172 = vmatmul.mubr.f32.gmra.mxu0 %v920
  %v1173 = vpop.f32.mrf.mxu0
  %v1174 = vadd.f32 0.0, %v1173
  %v1175 = vpop.f32.mrf.mxu0
  %1176 = vmatprep.mubr.f32.mxu0 0.0
  %1177 = vmatmul.mubr.f32.gmra.mxu0 %v923
  %v1178 = vpop.f32.mrf.mxu0
  %v1179 = vadd.f32 0.0, %v1178
  %v1180 = vpop.f32.mrf.mxu0
  %1181 = vmatprep.mubr.f32.mxu0 0.0
  %1182 = vmatmul.mubr.f32.gmra.mxu0 %v926
  %v1183 = vpop.f32.mrf.mxu0
  %v1184 = vadd.f32 0.0, %v1183
  %v1185 = vpop.f32.mrf.mxu0
  %1186 = vmatprep.mubr.f32.mxu0 0.0
  %1187 = vmatmul.mubr.f32.gmra.mxu0 %v929
  %v1188 = vpop.f32.mrf.mxu0
  %v1189 = vadd.f32 0.0, %v1188
  %v1190 = vpop.f32.mrf.mxu0
  %1191 = vmatprep.mubr.f32.mxu0 0.0
  %1192 = vmatmul.mubr.f32.gmra.mxu0 %v932
  %v1193 = vpop.f32.mrf.mxu0
  %v1194 = vadd.f32 0.0, %v1193
  %v1195 = vpop.f32.mrf.mxu0
  %1196 = vmatprep.mubr.f32.mxu0 0.0
  %1197 = vmatmul.mubr.f32.gmra.mxu0 %v935
  %v1198 = vpop.f32.mrf.mxu0
  %v1199 = vadd.f32 0.0, %v1198
  %v1200 = vpop.f32.mrf.mxu0
  %1201 = vmatprep.mubr.f32.mxu0 0.0
  %1202 = vmatmul.mubr.f32.gmra.mxu0 %v938
  %v1203 = vpop.f32.mrf.mxu0
  %v1204 = vadd.f32 0.0, %v1203
  %v1205 = vpop.f32.mrf.mxu0
  %1206 = vmatprep.mubr.f32.mxu0 0.0
  %1207 = vmatmul.mubr.f32.gmra.mxu0 %v941
  %v1208 = vpop.f32.mrf.mxu0
  %v1209 = vadd.f32 0.0, %v1208
  %v1210 = vpop.f32.mrf.mxu0
  %1211 = vmatprep.mubr.f32.mxu0 0.0
  %1212 = vmatmul.mubr.f32.gmra.mxu0 %v944
  %v1213 = vpop.f32.mrf.mxu0
  %v1214 = vadd.f32 0.0, %v1213
  %v1215 = vpop.f32.mrf.mxu0
  %1216 = vmatprep.mubr.f32.mxu0 0.0
  %1217 = vmatmul.mubr.f32.gmra.mxu0 %v947
  %v1218 = vpop.f32.mrf.mxu0
  %v1219 = vadd.f32 0.0, %v1218
  %v1220 = vpop.f32.mrf.mxu0
  %1221 = vmatprep.mubr.f32.mxu0 0.0
  %1222 = vmatmul.mubr.f32.gmra.mxu0 %v950
  %v1223 = vpop.f32.mrf.mxu0
  %v1224 = vadd.f32 0.0, %v1223
  %v1225 = vpop.f32.mrf.mxu0
  %1226 = vmatprep.mubr.f32.mxu0 0.0
  %1227 = vmatmul.mubr.f32.gmra.mxu0 %v953
  %v1228 = vpop.f32.mrf.mxu0
  %v1229 = vadd.f32 0.0, %v1228
  %v1230 = vpop.f32.mrf.mxu0
  %1231 = vmatprep.mubr.f32.mxu0 0.0
  %1232 = vmatmul.mubr.f32.gmra.mxu0 %v956
  %v1233 = vpop.f32.mrf.mxu0
  %v1234 = vadd.f32 0.0, %v1233
  %v1235 = vpop.f32.mrf.mxu0
  %1236 = vmatprep.mubr.f32.mxu0 0.0
  %1237 = vmatmul.mubr.f32.gmra.mxu0 %v959
  %v1238 = vpop.f32.mrf.mxu0
  %v1239 = vadd.f32 0.0, %v1238
  %v1240 = vpop.f32.mrf.mxu0
  %1241 = vmatprep.mubr.f32.mxu0 0.0
  %1242 = vmatmul.mubr.f32.gmra.mxu0 %v962
  %v1243 = vpop.f32.mrf.mxu0
  %v1244 = vadd.f32 0.0, %v1243
  %v1245 = vpop.f32.mrf.mxu0
  %1246 = vmatprep.mubr.f32.mxu0 0.0
  %1247 = vmatmul.mubr.f32.gmra.mxu0 %v965
  %v1248 = vpop.f32.mrf.mxu0
  %v1249 = vadd.f32 0.0, %v1248
  %v1250 = vpop.f32.mrf.mxu0
  %1251 = vmatprep.mubr.f32.mxu0 0.0
  %1252 = vmatmul.mubr.f32.gmra.mxu0 %v968
  %v1253 = vpop.f32.mrf.mxu0
  %v1254 = vadd.f32 0.0, %v1253
  %v1255 = vpop.f32.mrf.mxu0
  %1256 = vmatprep.mubr.f32.mxu0 0.0
  %1257 = vmatmul.mubr.f32.gmra.mxu0 %v971
  %v1258 = vpop.f32.mrf.mxu0
  %v1259 = vadd.f32 0.0, %v1258
  %v1260 = vpop.f32.mrf.mxu0
  %1261 = vmatprep.mubr.f32.mxu0 0.0
  %1262 = vmatmul.mubr.f32.gmra.mxu0 %v974
  %v1263 = vpop.f32.mrf.mxu0
  %v1264 = vadd.f32 0.0, %v1263
  %v1265 = vpop.f32.mrf.mxu0
  %1266 = vmatprep.mubr.f32.mxu0 0.0
  %1267 = vmatmul.mubr.f32.gmra.mxu0 %v977
  %v1268 = vpop.f32.mrf.mxu0
  %v1269 = vadd.f32 0.0, %v1268
  %v1270 = vpop.f32.mrf.mxu0
  %1271 = vmatprep.mubr.f32.mxu0 0.0
  %1272 = vmatmul.mubr.f32.gmra.mxu0 %v980
  %v1273 = vpop.f32.mrf.mxu0
  %v1274 = vadd.f32 0.0, %v1273
  %v1275 = vpop.f32.mrf.mxu0
  %1276 = vmatprep.mubr.f32.mxu0 0.0
  %1277 = vmatmul.mubr.f32.gmra.mxu0 %v983
  %v1278 = vpop.f32.mrf.mxu0
  %v1279 = vadd.f32 0.0, %v1278
  %v1280 = vpop.f32.mrf.mxu0
  %1281 = vmatprep.mubr.f32.mxu0 0.0
  %1282 = vmatmul.mubr.f32.gmra.mxu0 %v986
  %v1283 = vpop.f32.mrf.mxu0
  %v1284 = vadd.f32 0.0, %v1283
  %v1285 = vpop.f32.mrf.mxu0
  %1286 = vmatprep.mubr.f32.mxu0 0.0
  %1287 = vmatmul.mubr.f32.gmra.mxu0 %v989
  %v1288 = vpop.f32.mrf.mxu0
  %v1289 = vadd.f32 0.0, %v1288
  %v1290 = vpop.f32.mrf.mxu0
  %1291 = vmatprep.mubr.f32.mxu0 0.0
  %1292 = vmatmul.mubr.f32.gmra.mxu0 %v992
  %v1293 = vpop.f32.mrf.mxu0
  %v1294 = vadd.f32 0.0, %v1293
  %v1295 = vpop.f32.mrf.mxu0
  %1296 = vmatprep.mubr.f32.mxu0 0.0
  %1297 = vmatmul.mubr.f32.gmra.mxu0 %v995
  %v1298 = vpop.f32.mrf.mxu0
  %v1299 = vadd.f32 0.0, %v1298
  %v1300 = vpop.f32.mrf.mxu0
  %1301 = vmatprep.mubr.f32.mxu0 0.0
  %1302 = vmatmul.mubr.f32.gmra.mxu0 %v998
  %v1303 = vpop.f32.mrf.mxu0
  %v1304 = vadd.f32 0.0, %v1303
  %v1305 = vpop.f32.mrf.mxu0
  %1306 = vmatprep.mubr.f32.mxu0 0.0
  %1307 = vmatmul.mubr.f32.gmra.mxu0 %v1001
  %v1308 = vpop.f32.mrf.mxu0
  %v1309 = vadd.f32 0.0, %v1308
  %v1310 = vpop.f32.mrf.mxu0
  %1311 = vmatprep.mubr.f32.mxu0 0.0
  %1312 = vmatmul.mubr.f32.gmra.mxu0 %v1004
  %v1313 = vpop.f32.mrf.mxu0
  %v1314 = vadd.f32 0.0, %v1313
  %v1315 = vpop.f32.mrf.mxu0
  %1316 = vmatprep.mubr.f32.mxu0 0.0
  %1317 = vmatmul.mubr.f32.gmra.mxu0 %v1007
  %v1318 = vpop.f32.mrf.mxu0
  %v1319 = vadd.f32 0.0, %v1318
  %v1320 = vpop.f32.mrf.mxu0
  %1321 = vmatprep.mubr.f32.mxu0 0.0
  %1322 = vmatmul.mubr.f32.gmra.mxu0 %v1010
  %v1323 = vpop.f32.mrf.mxu0
  %v1324 = vadd.f32 0.0, %v1323
  %v1325 = vpop.f32.mrf.mxu0
  %1326 = vmatprep.mubr.f32.mxu0 0.0
  %1327 = vmatmul.mubr.f32.gmra.mxu0 %v1013
  %v1328 = vpop.f32.mrf.mxu0
  %v1329 = vadd.f32 0.0, %v1328
  %v1330 = vpop.f32.mrf.mxu0
  %1331 = vmatprep.mubr.f32.mxu0 0.0
  %1332 = vmatmul.mubr.f32.gmra.mxu0 %v1016
  %v1333 = vpop.f32.mrf.mxu0
  %v1334 = vadd.f32 0.0, %v1333
  %v1335 = vpop.f32.mrf.mxu0
  %1336 = vmatprep.mubr.f32.mxu0 0.0
  %1337 = vmatmul.mubr.f32.gmra.mxu0 %v1019
  %v1338 = vpop.f32.mrf.mxu0
  %v1339 = vadd.f32 0.0, %v1338
  %v1340 = vpop.f32.mrf.mxu0
  %1341 = vmatprep.mubr.f32.mxu0 0.0
  %1342 = vmatmul.mubr.f32.gmra.mxu0 %v1022
  %v1343 = vpop.f32.mrf.mxu0
  %v1344 = vadd.f32 0.0, %v1343
  %v1345 = vpop.f32.mrf.mxu0
  %1346 = vmatprep.mubr.f32.mxu0 0.0
  %1347 = vmatmul.mubr.f32.gmra.mxu0 %v1025
  %v1348 = vpop.f32.mrf.mxu0
  %v1349 = vadd.f32 0.0, %v1348
  %v1350 = vpop.f32.mrf.mxu0
  %1351 = vmatprep.mubr.f32.mxu0 0.0
  %1352 = vmatmul.mubr.f32.gmra.mxu0 %v1028
  %v1353 = vpop.f32.mrf.mxu0
  %v1354 = vadd.f32 0.0, %v1353
  %v1355 = vpop.f32.mrf.mxu0
  %1356 = vmatprep.mubr.f32.mxu0 0.0
  %1357 = vmatmul.mubr.f32.gmra.mxu0 %v1031
  %v1358 = vpop.f32.mrf.mxu0
  %v1359 = vadd.f32 0.0, %v1358
  %v1360 = vpop.f32.mrf.mxu0
  %1361 = vmatprep.mubr.f32.mxu0 0.0
  %1362 = vmatmul.mubr.f32.gmra.mxu0 %v1034
  %v1363 = vpop.f32.mrf.mxu0
  %v1364 = vadd.f32 0.0, %v1363
  %v1365 = vpop.f32.mrf.mxu0
  %1366 = vmatprep.mubr.f32.mxu0 0.0
  %1367 = vmatmul.mubr.f32.gmra.mxu0 %v1037
  %v1368 = vpop.f32.mrf.mxu0
  %v1369 = vadd.f32 0.0, %v1368
  %v1370 = vpop.f32.mrf.mxu0
  %1371 = vmatprep.mubr.f32.mxu0 0.0
  %1372 = vmatmul.mubr.f32.gmra.mxu0 %v1040
  %v1373 = vpop.f32.mrf.mxu0
  %v1374 = vadd.f32 0.0, %v1373
  %v1375 = vpop.f32.mrf.mxu0
  %1376 = vmatprep.mubr.f32.mxu0 0.0
  %1377 = vmatmul.mubr.f32.gmra.mxu0 %v1043
  %v1378 = vpop.f32.mrf.mxu0
  %v1379 = vadd.f32 0.0, %v1378
  %v1380 = vpop.f32.mrf.mxu0
  %1381 = vmatprep.mubr.f32.mxu0 0.0
  %1382 = vmatmul.mubr.f32.gmra.mxu0 %v1046
  %v1383 = vpop.f32.mrf.mxu0
  %v1384 = vadd.f32 0.0, %v1383
  %v1385 = vpop.f32.mrf.mxu0
  %1386 = vmatprep.mubr.f32.mxu0 0.0
  %1387 = vmatmul.mubr.f32.gmra.mxu0 %v1049
  %v1388 = vpop.f32.mrf.mxu0
  %v1389 = vadd.f32 0.0, %v1388
  %v1390 = vpop.f32.mrf.mxu0
  %1391 = vmatprep.mubr.f32.mxu0 0.0
  %1392 = vmatmul.mubr.f32.gmra.mxu0 %v1052
  %v1393 = vpop.f32.mrf.mxu0
  %v1394 = vadd.f32 0.0, %v1393
  %v1395 = vpop.f32.mrf.mxu0
  %1396 = vmatprep.mubr.f32.mxu0 0.0
  %1397 = vmatmul.mubr.f32.gmra.mxu0 %v1055
  %v1398 = vpop.f32.mrf.mxu0
  %v1399 = vadd.f32 0.0, %v1398
  %v1400 = vpop.f32.mrf.mxu0
  %1401 = vmatprep.mubr.f32.mxu0 0.0
  %1402 = vmatmul.mubr.f32.gmra.mxu0 %v1058
  %v1403 = vpop.f32.mrf.mxu0
  %v1404 = vadd.f32 0.0, %v1403
  %v1405 = vpop.f32.mrf.mxu0
  %1406 = vmatprep.mubr.f32.mxu0 0.0
  %1407 = vmatmul.mubr.f32.gmra.mxu0 %v1061
  %v1408 = vpop.f32.mrf.mxu0
  %v1409 = vadd.f32 0.0, %v1408
  %v1410 = vpop.f32.mrf.mxu0
  %1411 = vmatprep.mubr.f32.mxu0 0.0
  %1412 = vmatmul.mubr.f32.gmra.mxu0 %v1064
  %v1413 = vpop.f32.mrf.mxu0
  %v1414 = vadd.f32 0.0, %v1413
  %v1415 = vpop.f32.mrf.mxu0
  %1416 = vmatprep.mubr.f32.mxu0 0.0
  %1417 = vmatmul.mubr.f32.gmra.mxu0 %v1067
  %v1418 = vpop.f32.mrf.mxu0
  %v1419 = vadd.f32 0.0, %v1418
  %v1420 = vpop.f32.mrf.mxu0
  %1421 = vdwg.mxu0
  %v1422 = vsub.f32 %v388, %v1139
  %v1423 = vsub.f32 %v393, %v1144
  %v1424 = vsub.f32 %v398, %v1149
  %v1425 = vsub.f32 %v403, %v1154
  %v1426 = vsub.f32 %v408, %v1159
  %v1427 = vsub.f32 %v413, %v1164
  %v1428 = vsub.f32 %v418, %v1169
  %v1429 = vsub.f32 %v423, %v1174
  %v1430 = vsub.f32 %v428, %v1179
  %v1431 = vsub.f32 %v433, %v1184
  %v1432 = vsub.f32 %v438, %v1189
  %v1433 = vsub.f32 %v443, %v1194
  %v1434 = vsub.f32 %v448, %v1199
  %v1435 = vsub.f32 %v453, %v1204
  %v1436 = vsub.f32 %v458, %v1209
  %v1437 = vsub.f32 %v463, %v1214
  %v1438 = vsub.f32 %v468, %v1219
  %v1439 = vsub.f32 %v473, %v1224
  %v1440 = vsub.f32 %v478, %v1229
  %v1441 = vsub.f32 %v483, %v1234
  %v1442 = vsub.f32 %v488, %v1239
  %v1443 = vsub.f32 %v493, %v1244
  %v1444 = vsub.f32 %v498, %v1249
  %v1445 = vsub.f32 %v503, %v1254
  %v1446 = vsub.f32 %v508, %v1259
  %v1447 = vsub.f32 %v513, %v1264
  %v1448 = vsub.f32 %v518, %v1269
  %v1449 = vsub.f32 %v523, %v1274
  %v1450 = vsub.f32 %v528, %v1279
  %v1451 = vsub.f32 %v533, %v1284
  %v1452 = vsub.f32 %v538, %v1289
  %v1453 = vsub.f32 %v543, %v1294
  %v1454 = vsub.f32 %v548, %v1299
  %v1455 = vsub.f32 %v553, %v1304
  %v1456 = vsub.f32 %v558, %v1309
  %v1457 = vsub.f32 %v563, %v1314
  %v1458 = vsub.f32 %v568, %v1319
  %v1459 = vsub.f32 %v573, %v1324
  %v1460 = vsub.f32 %v578, %v1329
  %v1461 = vsub.f32 %v583, %v1334
  %v1462 = vsub.f32 %v588, %v1339
  %v1463 = vsub.f32 %v593, %v1344
  %v1464 = vsub.f32 %v598, %v1349
  %v1465 = vsub.f32 %v603, %v1354
  %v1466 = vsub.f32 %v608, %v1359
  %v1467 = vsub.f32 %v613, %v1364
  %v1468 = vsub.f32 %v618, %v1369
  %v1469 = vsub.f32 %v623, %v1374
  %v1470 = vsub.f32 %v628, %v1379
  %v1471 = vsub.f32 %v633, %v1384
  %v1472 = vsub.f32 %v638, %v1389
  %v1473 = vsub.f32 %v643, %v1394
  %v1474 = vsub.f32 %v648, %v1399
  %v1475 = vsub.f32 %v653, %v1404
  %v1476 = vsub.f32 %v658, %v1409
  %v1477 = vsub.f32 %v663, %v1414
  %v1478 = vsub.f32 %v668, %v1419
  %v1479 = vmul.f32 %v1422, %v1422
  %v1480 = vmul.f32 %v1423, %v1423
  %v1481 = vmul.f32 %v1424, %v1424
  %v1482 = vmul.f32 %v1425, %v1425
  %v1483 = vmul.f32 %v1426, %v1426
  %v1484 = vmul.f32 %v1427, %v1427
  %v1485 = vmul.f32 %v1428, %v1428
  %v1486 = vmul.f32 %v1429, %v1429
  %v1487 = vmul.f32 %v1430, %v1430
  %v1488 = vmul.f32 %v1431, %v1431
  %v1489 = vmul.f32 %v1432, %v1432
  %v1490 = vmul.f32 %v1433, %v1433
  %v1491 = vmul.f32 %v1434, %v1434
  %v1492 = vmul.f32 %v1435, %v1435
  %v1493 = vmul.f32 %v1436, %v1436
  %v1494 = vmul.f32 %v1437, %v1437
  %v1495 = vmul.f32 %v1438, %v1438
  %v1496 = vmul.f32 %v1439, %v1439
  %v1497 = vmul.f32 %v1440, %v1440
  %v1498 = vmul.f32 %v1441, %v1441
  %v1499 = vmul.f32 %v1442, %v1442
  %v1500 = vmul.f32 %v1443, %v1443
  %v1501 = vmul.f32 %v1444, %v1444
  %v1502 = vmul.f32 %v1445, %v1445
  %v1503 = vmul.f32 %v1446, %v1446
  %v1504 = vmul.f32 %v1447, %v1447
  %v1505 = vmul.f32 %v1448, %v1448
  %v1506 = vmul.f32 %v1449, %v1449
  %v1507 = vmul.f32 %v1450, %v1450
  %v1508 = vmul.f32 %v1451, %v1451
  %v1509 = vmul.f32 %v1452, %v1452
  %v1510 = vmul.f32 %v1453, %v1453
  %v1511 = vmul.f32 %v1454, %v1454
  %v1512 = vmul.f32 %v1455, %v1455
  %v1513 = vmul.f32 %v1456, %v1456
  %v1514 = vmul.f32 %v1457, %v1457
  %v1515 = vmul.f32 %v1458, %v1458
  %v1516 = vmul.f32 %v1459, %v1459
  %v1517 = vmul.f32 %v1460, %v1460
  %v1518 = vmul.f32 %v1461, %v1461
  %v1519 = vmul.f32 %v1462, %v1462
  %v1520 = vmul.f32 %v1463, %v1463
  %v1521 = vmul.f32 %v1464, %v1464
  %v1522 = vmul.f32 %v1465, %v1465
  %v1523 = vmul.f32 %v1466, %v1466
  %v1524 = vmul.f32 %v1467, %v1467
  %v1525 = vmul.f32 %v1468, %v1468
  %v1526 = vmul.f32 %v1469, %v1469
  %v1527 = vmul.f32 %v1470, %v1470
  %v1528 = vmul.f32 %v1471, %v1471
  %v1529 = vmul.f32 %v1472, %v1472
  %v1530 = vmul.f32 %v1473, %v1473
  %v1531 = vmul.f32 %v1474, %v1474
  %v1532 = vmul.f32 %v1475, %v1475
  %v1533 = vmul.f32 %v1476, %v1476
  %v1534 = vmul.f32 %v1477, %v1477
  %v1535 = vmul.f32 %v1478, %v1478
  %v1537 = vsel %vm753, %v1535, 0
  %1539 = vmatprep.subr.mxu0 0.0
  %1540 = vmatpush1.msra.mxu0 %v1494
  %1541 = vmatprep.subr.mxu0 0.0
  %1542 = vmatpush1.msra.mxu0 %v1493
  %1543 = vmatprep.subr.mxu0 0.0
  %1544 = vmatpush1.msra.mxu0 %v1492
  %1545 = vmatprep.subr.mxu0 0.0
  %1546 = vmatpush1.msra.mxu0 %v1491
  %1547 = vmatprep.subr.mxu0 0.0
  %1548 = vmatpush1.msra.mxu0 %v1490
  %1549 = vmatprep.subr.mxu0 0.0
  %1550 = vmatpush1.msra.mxu0 %v1489
  %1551 = vmatprep.subr.mxu0 0.0
  %1552 = vmatpush1.msra.mxu0 %v1488
  %1553 = vmatprep.subr.mxu0 0.0
  %1554 = vmatpush1.msra.mxu0 %v1487
  %1555 = vmatprep.subr.mxu0 0.0
  %1556 = vmatpush1.msra.mxu0 %v1486
  %1557 = vmatprep.subr.mxu0 0.0
  %1558 = vmatpush1.msra.mxu0 %v1485
  %1559 = vmatprep.subr.mxu0 0.0
  %1560 = vmatpush1.msra.mxu0 %v1484
  %1561 = vmatprep.subr.mxu0 0.0
  %1562 = vmatpush1.msra.mxu0 %v1483
  %1563 = vmatprep.subr.mxu0 0.0
  %1564 = vmatpush1.msra.mxu0 %v1482
  %1565 = vmatprep.subr.mxu0 0.0
  %1566 = vmatpush1.msra.mxu0 %v1481
  %1567 = vmatprep.subr.mxu0 0.0
  %1568 = vmatpush1.msra.mxu0 %v1480
  %1569 = vmatprep.subr.mxu0 0.0
  %1570 = vmatpush1.msra.mxu0 %v1479
  %1571 = vmatprep.subr.mxu0 0.0
  %1572 = vmatpush2.msra.mxu0 %v1510
  %1573 = vmatprep.subr.mxu0 0.0
  %1574 = vmatpush2.msra.mxu0 %v1509
  %1575 = vmatprep.subr.mxu0 0.0
  %1576 = vmatpush2.msra.mxu0 %v1508
  %1577 = vmatprep.subr.mxu0 0.0
  %1578 = vmatpush2.msra.mxu0 %v1507
  %1579 = vmatprep.subr.mxu0 0.0
  %1580 = vmatpush2.msra.mxu0 %v1506
  %1581 = vmatprep.subr.mxu0 0.0
  %1582 = vmatpush2.msra.mxu0 %v1505
  %1583 = vmatprep.subr.mxu0 0.0
  %1584 = vmatpush2.msra.mxu0 %v1504
  %1585 = vmatprep.subr.mxu0 0.0
  %1586 = vmatpush2.msra.mxu0 %v1503
  %1587 = vmatprep.subr.mxu0 0.0
  %1588 = vmatpush2.msra.mxu0 %v1502
  %1589 = vmatprep.subr.mxu0 0.0
  %1590 = vmatpush2.msra.mxu0 %v1501
  %1591 = vmatprep.subr.mxu0 0.0
  %1592 = vmatpush2.msra.mxu0 %v1500
  %1593 = vmatprep.subr.mxu0 0.0
  %1594 = vmatpush2.msra.mxu0 %v1499
  %1595 = vmatprep.subr.mxu0 0.0
  %1596 = vmatpush2.msra.mxu0 %v1498
  %1597 = vmatprep.subr.mxu0 0.0
  %1598 = vmatpush2.msra.mxu0 %v1497
  %1599 = vmatprep.subr.mxu0 0.0
  %1600 = vmatpush2.msra.mxu0 %v1496
  %1601 = vmatprep.subr.mxu0 0.0
  %1602 = vmatpush2.msra.mxu0 %v1495
  %1603 = vmatprep.mubr.f32.mxu0 %v745
  %1604 = vmatmul.mubr.f32.gmra.mxu0 %v737
  %v1605 = vpop.f32.mrf.mxu0
  %v1606 = vadd.f32 1e-05, %v1605
  %v1607 = vpop.f32.mrf.mxu0
  %1608 = vdwg.mxu0
  %1609 = vmatprep.subr.mxu0 0.0
  %1610 = vmatpush1.msra.mxu0 %v1526
  %1611 = vmatprep.subr.mxu0 0.0
  %1612 = vmatpush1.msra.mxu0 %v1525
  %1613 = vmatprep.subr.mxu0 0.0
  %1614 = vmatpush1.msra.mxu0 %v1524
  %1615 = vmatprep.subr.mxu0 0.0
  %1616 = vmatpush1.msra.mxu0 %v1523
  %1617 = vmatprep.subr.mxu0 0.0
  %1618 = vmatpush1.msra.mxu0 %v1522
  %1619 = vmatprep.subr.mxu0 0.0
  %1620 = vmatpush1.msra.mxu0 %v1521
  %1621 = vmatprep.subr.mxu0 0.0
  %1622 = vmatpush1.msra.mxu0 %v1520
  %1623 = vmatprep.subr.mxu0 0.0
  %1624 = vmatpush1.msra.mxu0 %v1519
  %1625 = vmatprep.subr.mxu0 0.0
  %1626 = vmatpush1.msra.mxu0 %v1518
  %1627 = vmatprep.subr.mxu0 0.0
  %1628 = vmatpush1.msra.mxu0 %v1517
  %1629 = vmatprep.subr.mxu0 0.0
  %1630 = vmatpush1.msra.mxu0 %v1516
  %1631 = vmatprep.subr.mxu0 0.0
  %1632 = vmatpush1.msra.mxu0 %v1515
  %1633 = vmatprep.subr.mxu0 0.0
  %1634 = vmatpush1.msra.mxu0 %v1514
  %1635 = vmatprep.subr.mxu0 0.0
  %1636 = vmatpush1.msra.mxu0 %v1513
  %1637 = vmatprep.subr.mxu0 0.0
  %1638 = vmatpush1.msra.mxu0 %v1512
  %1639 = vmatprep.subr.mxu0 0.0
  %1640 = vmatpush1.msra.mxu0 %v1511
  %1641 = vmatprep.subr.mxu0 0.0
  %1642 = vmatpush2.msra.mxu0 0.0
  %1643 = vmatprep.subr.mxu0 0.0
  %1644 = vmatpush2.msra.mxu0 0.0
  %1645 = vmatprep.subr.mxu0 0.0
  %1646 = vmatpush2.msra.mxu0 0.0
  %1647 = vmatprep.subr.mxu0 0.0
  %1648 = vmatpush2.msra.mxu0 0.0
  %1649 = vmatprep.subr.mxu0 0.0
  %1650 = vmatpush2.msra.mxu0 0.0
  %1651 = vmatprep.subr.mxu0 0.0
  %1652 = vmatpush2.msra.mxu0 0.0
  %1653 = vmatprep.subr.mxu0 0.0
  %1654 = vmatpush2.msra.mxu0 0.0
  %1655 = vmatprep.subr.mxu0 0.0
  %1656 = vmatpush2.msra.mxu0 %v1537
  %1657 = vmatprep.subr.mxu0 0.0
  %1658 = vmatpush2.msra.mxu0 %v1534
  %1659 = vmatprep.subr.mxu0 0.0
  %1660 = vmatpush2.msra.mxu0 %v1533
  %1661 = vmatprep.subr.mxu0 0.0
  %1662 = vmatpush2.msra.mxu0 %v1532
  %1663 = vmatprep.subr.mxu0 0.0
  %1664 = vmatpush2.msra.mxu0 %v1531
  %1665 = vmatprep.subr.mxu0 0.0
  %1666 = vmatpush2.msra.mxu0 %v1530
  %1667 = vmatprep.subr.mxu0 0.0
  %1668 = vmatpush2.msra.mxu0 %v1529
  %1669 = vmatprep.subr.mxu0 0.0
  %1670 = vmatpush2.msra.mxu0 %v1528
  %1671 = vmatprep.subr.mxu0 0.0
  %1672 = vmatpush2.msra.mxu0 %v1527
  %1673 = vmatprep.mubr.f32.mxu0 %v751
  %1674 = vmatmul.mubr.f32.gmra.mxu0 %v744
  %v1675 = vpop.f32.mrf.mxu0
  %v1676 = vadd.f32 %v1606, %v1675
  %v1677 = vpop.f32.mrf.mxu0
  %1678 = vdwg.mxu0
  %v1679 = vrsqrt.pop %v1676
  %v1681 = vsel %vm753, %v1679, 0
  %1683 = vmatprep.subr.mxu0 0.0
  %1684 = vmatpush1.msra.mxu0 0.0
  %1685 = vmatprep.subr.mxu0 0.0
  %1686 = vmatpush1.msra.mxu0 0.0
  %1687 = vmatprep.subr.mxu0 0.0
  %1688 = vmatpush1.msra.mxu0 0.0
  %1689 = vmatprep.subr.mxu0 0.0
  %1690 = vmatpush1.msra.mxu0 0.0
  %1691 = vmatprep.subr.mxu0 0.0
  %1692 = vmatpush1.msra.mxu0 0.0
  %1693 = vmatprep.subr.mxu0 0.0
  %1694 = vmatpush1.msra.mxu0 0.0
  %1695 = vmatprep.subr.mxu0 0.0
  %1696 = vmatpush1.msra.mxu0 0.0
  %1697 = vmatprep.subr.mxu0 0.0
  %1698 = vmatpush1.msra.mxu0 0.0
  %1699 = vmatprep.subr.mxu0 0.0
  %1700 = vmatpush1.msra.mxu0 0.0
  %1701 = vmatprep.subr.mxu0 0.0
  %1702 = vmatpush1.msra.mxu0 0.0
  %1703 = vmatprep.subr.mxu0 0.0
  %1704 = vmatpush1.msra.mxu0 0.0
  %1705 = vmatprep.subr.mxu0 0.0
  %1706 = vmatpush1.msra.mxu0 0.0
  %1707 = vmatprep.subr.mxu0 0.0
  %1708 = vmatpush1.msra.mxu0 0.0
  %1709 = vmatprep.subr.mxu0 0.0
  %1710 = vmatpush1.msra.mxu0 0.0
  %1711 = vmatprep.subr.mxu0 0.0
  %1712 = vmatpush1.msra.mxu0 0.0
  %1713 = vmatprep.subr.mxu0 0.0
  %1714 = vmatpush1.msra.mxu0 %v1681
  %1715 = vmatprep.subr.mxu0 0.0
  %1716 = vmatpush2.msra.mxu0 0.0
  %1717 = vmatprep.subr.mxu0 0.0
  %1718 = vmatpush2.msra.mxu0 0.0
  %1719 = vmatprep.subr.mxu0 0.0
  %1720 = vmatpush2.msra.mxu0 0.0
  %1721 = vmatprep.subr.mxu0 0.0
  %1722 = vmatpush2.msra.mxu0 0.0
  %1723 = vmatprep.subr.mxu0 0.0
  %1724 = vmatpush2.msra.mxu0 0.0
  %1725 = vmatprep.subr.mxu0 0.0
  %1726 = vmatpush2.msra.mxu0 0.0
  %1727 = vmatprep.subr.mxu0 0.0
  %1728 = vmatpush2.msra.mxu0 0.0
  %1729 = vmatprep.subr.mxu0 0.0
  %1730 = vmatpush2.msra.mxu0 0.0
  %1731 = vmatprep.subr.mxu0 0.0
  %1732 = vmatpush2.msra.mxu0 0.0
  %1733 = vmatprep.subr.mxu0 0.0
  %1734 = vmatpush2.msra.mxu0 0.0
  %1735 = vmatprep.subr.mxu0 0.0
  %1736 = vmatpush2.msra.mxu0 0.0
  %1737 = vmatprep.subr.mxu0 0.0
  %1738 = vmatpush2.msra.mxu0 0.0
  %1739 = vmatprep.subr.mxu0 0.0
  %1740 = vmatpush2.msra.mxu0 0.0
  %1741 = vmatprep.subr.mxu0 0.0
  %1742 = vmatpush2.msra.mxu0 0.0
  %1743 = vmatprep.subr.mxu0 0.0
  %1744 = vmatpush2.msra.mxu0 0.0
  %1745 = vmatprep.subr.mxu0 0.0
  %1746 = vmatpush2.msra.mxu0 0.0
  %1747 = vmatprep.mubr.f32.mxu0 0.0
  %1748 = vmatmul.mubr.f32.gmra.mxu0 %v899
  %v1749 = vpop.f32.mrf.mxu0
  %v1750 = vadd.f32 0.0, %v1749
  %v1751 = vpop.f32.mrf.mxu0
  %1752 = vmatprep.mubr.f32.mxu0 0.0
  %1753 = vmatmul.mubr.f32.gmra.mxu0 %v902
  %v1754 = vpop.f32.mrf.mxu0
  %v1755 = vadd.f32 0.0, %v1754
  %v1756 = vpop.f32.mrf.mxu0
  %1757 = vmatprep.mubr.f32.mxu0 0.0
  %1758 = vmatmul.mubr.f32.gmra.mxu0 %v905
  %v1759 = vpop.f32.mrf.mxu0
  %v1760 = vadd.f32 0.0, %v1759
  %v1761 = vpop.f32.mrf.mxu0
  %1762 = vmatprep.mubr.f32.mxu0 0.0
  %1763 = vmatmul.mubr.f32.gmra.mxu0 %v908
  %v1764 = vpop.f32.mrf.mxu0
  %v1765 = vadd.f32 0.0, %v1764
  %v1766 = vpop.f32.mrf.mxu0
  %1767 = vmatprep.mubr.f32.mxu0 0.0
  %1768 = vmatmul.mubr.f32.gmra.mxu0 %v911
  %v1769 = vpop.f32.mrf.mxu0
  %v1770 = vadd.f32 0.0, %v1769
  %v1771 = vpop.f32.mrf.mxu0
  %1772 = vmatprep.mubr.f32.mxu0 0.0
  %1773 = vmatmul.mubr.f32.gmra.mxu0 %v914
  %v1774 = vpop.f32.mrf.mxu0
  %v1775 = vadd.f32 0.0, %v1774
  %v1776 = vpop.f32.mrf.mxu0
  %1777 = vmatprep.mubr.f32.mxu0 0.0
  %1778 = vmatmul.mubr.f32.gmra.mxu0 %v917
  %v1779 = vpop.f32.mrf.mxu0
  %v1780 = vadd.f32 0.0, %v1779
  %v1781 = vpop.f32.mrf.mxu0
  %1782 = vmatprep.mubr.f32.mxu0 0.0
  %1783 = vmatmul.mubr.f32.gmra.mxu0 %v920
  %v1784 = vpop.f32.mrf.mxu0
  %v1785 = vadd.f32 0.0, %v1784
  %v1786 = vpop.f32.mrf.mxu0
  %1787 = vmatprep.mubr.f32.mxu0 0.0
  %1788 = vmatmul.mubr.f32.gmra.mxu0 %v923
  %v1789 = vpop.f32.mrf.mxu0
  %v1790 = vadd.f32 0.0, %v1789
  %v1791 = vpop.f32.mrf.mxu0
  %1792 = vmatprep.mubr.f32.mxu0 0.0
  %1793 = vmatmul.mubr.f32.gmra.mxu0 %v926
  %v1794 = vpop.f32.mrf.mxu0
  %v1795 = vadd.f32 0.0, %v1794
  %v1796 = vpop.f32.mrf.mxu0
  %1797 = vmatprep.mubr.f32.mxu0 0.0
  %1798 = vmatmul.mubr.f32.gmra.mxu0 %v929
  %v1799 = vpop.f32.mrf.mxu0
  %v1800 = vadd.f32 0.0, %v1799
  %v1801 = vpop.f32.mrf.mxu0
  %1802 = vmatprep.mubr.f32.mxu0 0.0
  %1803 = vmatmul.mubr.f32.gmra.mxu0 %v932
  %v1804 = vpop.f32.mrf.mxu0
  %v1805 = vadd.f32 0.0, %v1804
  %v1806 = vpop.f32.mrf.mxu0
  %1807 = vmatprep.mubr.f32.mxu0 0.0
  %1808 = vmatmul.mubr.f32.gmra.mxu0 %v935
  %v1809 = vpop.f32.mrf.mxu0
  %v1810 = vadd.f32 0.0, %v1809
  %v1811 = vpop.f32.mrf.mxu0
  %1812 = vmatprep.mubr.f32.mxu0 0.0
  %1813 = vmatmul.mubr.f32.gmra.mxu0 %v938
  %v1814 = vpop.f32.mrf.mxu0
  %v1815 = vadd.f32 0.0, %v1814
  %v1816 = vpop.f32.mrf.mxu0
  %1817 = vmatprep.mubr.f32.mxu0 0.0
  %1818 = vmatmul.mubr.f32.gmra.mxu0 %v941
  %v1819 = vpop.f32.mrf.mxu0
  %v1820 = vadd.f32 0.0, %v1819
  %v1821 = vpop.f32.mrf.mxu0
  %1822 = vmatprep.mubr.f32.mxu0 0.0
  %1823 = vmatmul.mubr.f32.gmra.mxu0 %v944
  %v1824 = vpop.f32.mrf.mxu0
  %v1825 = vadd.f32 0.0, %v1824
  %v1826 = vpop.f32.mrf.mxu0
  %1827 = vmatprep.mubr.f32.mxu0 0.0
  %1828 = vmatmul.mubr.f32.gmra.mxu0 %v947
  %v1829 = vpop.f32.mrf.mxu0
  %v1830 = vadd.f32 0.0, %v1829
  %v1831 = vpop.f32.mrf.mxu0
  %1832 = vmatprep.mubr.f32.mxu0 0.0
  %1833 = vmatmul.mubr.f32.gmra.mxu0 %v950
  %v1834 = vpop.f32.mrf.mxu0
  %v1835 = vadd.f32 0.0, %v1834
  %v1836 = vpop.f32.mrf.mxu0
  %1837 = vmatprep.mubr.f32.mxu0 0.0
  %1838 = vmatmul.mubr.f32.gmra.mxu0 %v953
  %v1839 = vpop.f32.mrf.mxu0
  %v1840 = vadd.f32 0.0, %v1839
  %v1841 = vpop.f32.mrf.mxu0
  %1842 = vmatprep.mubr.f32.mxu0 0.0
  %1843 = vmatmul.mubr.f32.gmra.mxu0 %v956
  %v1844 = vpop.f32.mrf.mxu0
  %v1845 = vadd.f32 0.0, %v1844
  %v1846 = vpop.f32.mrf.mxu0
  %1847 = vmatprep.mubr.f32.mxu0 0.0
  %1848 = vmatmul.mubr.f32.gmra.mxu0 %v959
  %v1849 = vpop.f32.mrf.mxu0
  %v1850 = vadd.f32 0.0, %v1849
  %v1851 = vpop.f32.mrf.mxu0
  %1852 = vmatprep.mubr.f32.mxu0 0.0
  %1853 = vmatmul.mubr.f32.gmra.mxu0 %v962
  %v1854 = vpop.f32.mrf.mxu0
  %v1855 = vadd.f32 0.0, %v1854
  %v1856 = vpop.f32.mrf.mxu0
  %1857 = vmatprep.mubr.f32.mxu0 0.0
  %1858 = vmatmul.mubr.f32.gmra.mxu0 %v965
  %v1859 = vpop.f32.mrf.mxu0
  %v1860 = vadd.f32 0.0, %v1859
  %v1861 = vpop.f32.mrf.mxu0
  %1862 = vmatprep.mubr.f32.mxu0 0.0
  %1863 = vmatmul.mubr.f32.gmra.mxu0 %v968
  %v1864 = vpop.f32.mrf.mxu0
  %v1865 = vadd.f32 0.0, %v1864
  %v1866 = vpop.f32.mrf.mxu0
  %1867 = vmatprep.mubr.f32.mxu0 0.0
  %1868 = vmatmul.mubr.f32.gmra.mxu0 %v971
  %v1869 = vpop.f32.mrf.mxu0
  %v1870 = vadd.f32 0.0, %v1869
  %v1871 = vpop.f32.mrf.mxu0
  %1872 = vmatprep.mubr.f32.mxu0 0.0
  %1873 = vmatmul.mubr.f32.gmra.mxu0 %v974
  %v1874 = vpop.f32.mrf.mxu0
  %v1875 = vadd.f32 0.0, %v1874
  %v1876 = vpop.f32.mrf.mxu0
  %1877 = vmatprep.mubr.f32.mxu0 0.0
  %1878 = vmatmul.mubr.f32.gmra.mxu0 %v977
  %v1879 = vpop.f32.mrf.mxu0
  %v1880 = vadd.f32 0.0, %v1879
  %v1881 = vpop.f32.mrf.mxu0
  %1882 = vmatprep.mubr.f32.mxu0 0.0
  %1883 = vmatmul.mubr.f32.gmra.mxu0 %v980
  %v1884 = vpop.f32.mrf.mxu0
  %v1885 = vadd.f32 0.0, %v1884
  %v1886 = vpop.f32.mrf.mxu0
  %1887 = vmatprep.mubr.f32.mxu0 0.0
  %1888 = vmatmul.mubr.f32.gmra.mxu0 %v983
  %v1889 = vpop.f32.mrf.mxu0
  %v1890 = vadd.f32 0.0, %v1889
  %v1891 = vpop.f32.mrf.mxu0
  %1892 = vmatprep.mubr.f32.mxu0 0.0
  %1893 = vmatmul.mubr.f32.gmra.mxu0 %v986
  %v1894 = vpop.f32.mrf.mxu0
  %v1895 = vadd.f32 0.0, %v1894
  %v1896 = vpop.f32.mrf.mxu0
  %1897 = vmatprep.mubr.f32.mxu0 0.0
  %1898 = vmatmul.mubr.f32.gmra.mxu0 %v989
  %v1899 = vpop.f32.mrf.mxu0
  %v1900 = vadd.f32 0.0, %v1899
  %v1901 = vpop.f32.mrf.mxu0
  %1902 = vmatprep.mubr.f32.mxu0 0.0
  %1903 = vmatmul.mubr.f32.gmra.mxu0 %v992
  %v1904 = vpop.f32.mrf.mxu0
  %v1905 = vadd.f32 0.0, %v1904
  %v1906 = vpop.f32.mrf.mxu0
  %1907 = vmatprep.mubr.f32.mxu0 0.0
  %1908 = vmatmul.mubr.f32.gmra.mxu0 %v995
  %v1909 = vpop.f32.mrf.mxu0
  %v1910 = vadd.f32 0.0, %v1909
  %v1911 = vpop.f32.mrf.mxu0
  %1912 = vmatprep.mubr.f32.mxu0 0.0
  %1913 = vmatmul.mubr.f32.gmra.mxu0 %v998
  %v1914 = vpop.f32.mrf.mxu0
  %v1915 = vadd.f32 0.0, %v1914
  %v1916 = vpop.f32.mrf.mxu0
  %1917 = vmatprep.mubr.f32.mxu0 0.0
  %1918 = vmatmul.mubr.f32.gmra.mxu0 %v1001
  %v1919 = vpop.f32.mrf.mxu0
  %v1920 = vadd.f32 0.0, %v1919
  %v1921 = vpop.f32.mrf.mxu0
  %1922 = vmatprep.mubr.f32.mxu0 0.0
  %1923 = vmatmul.mubr.f32.gmra.mxu0 %v1004
  %v1924 = vpop.f32.mrf.mxu0
  %v1925 = vadd.f32 0.0, %v1924
  %v1926 = vpop.f32.mrf.mxu0
  %1927 = vmatprep.mubr.f32.mxu0 0.0
  %1928 = vmatmul.mubr.f32.gmra.mxu0 %v1007
  %v1929 = vpop.f32.mrf.mxu0
  %v1930 = vadd.f32 0.0, %v1929
  %v1931 = vpop.f32.mrf.mxu0
  %1932 = vmatprep.mubr.f32.mxu0 0.0
  %1933 = vmatmul.mubr.f32.gmra.mxu0 %v1010
  %v1934 = vpop.f32.mrf.mxu0
  %v1935 = vadd.f32 0.0, %v1934
  %v1936 = vpop.f32.mrf.mxu0
  %1937 = vmatprep.mubr.f32.mxu0 0.0
  %1938 = vmatmul.mubr.f32.gmra.mxu0 %v1013
  %v1939 = vpop.f32.mrf.mxu0
  %v1940 = vadd.f32 0.0, %v1939
  %v1941 = vpop.f32.mrf.mxu0
  %1942 = vmatprep.mubr.f32.mxu0 0.0
  %1943 = vmatmul.mubr.f32.gmra.mxu0 %v1016
  %v1944 = vpop.f32.mrf.mxu0
  %v1945 = vadd.f32 0.0, %v1944
  %v1946 = vpop.f32.mrf.mxu0
  %1947 = vmatprep.mubr.f32.mxu0 0.0
  %1948 = vmatmul.mubr.f32.gmra.mxu0 %v1019
  %v1949 = vpop.f32.mrf.mxu0
  %v1950 = vadd.f32 0.0, %v1949
  %v1951 = vpop.f32.mrf.mxu0
  %1952 = vmatprep.mubr.f32.mxu0 0.0
  %1953 = vmatmul.mubr.f32.gmra.mxu0 %v1022
  %v1954 = vpop.f32.mrf.mxu0
  %v1955 = vadd.f32 0.0, %v1954
  %v1956 = vpop.f32.mrf.mxu0
  %1957 = vmatprep.mubr.f32.mxu0 0.0
  %1958 = vmatmul.mubr.f32.gmra.mxu0 %v1025
  %v1959 = vpop.f32.mrf.mxu0
  %v1960 = vadd.f32 0.0, %v1959
  %v1961 = vpop.f32.mrf.mxu0
  %1962 = vmatprep.mubr.f32.mxu0 0.0
  %1963 = vmatmul.mubr.f32.gmra.mxu0 %v1028
  %v1964 = vpop.f32.mrf.mxu0
  %v1965 = vadd.f32 0.0, %v1964
  %v1966 = vpop.f32.mrf.mxu0
  %1967 = vmatprep.mubr.f32.mxu0 0.0
  %1968 = vmatmul.mubr.f32.gmra.mxu0 %v1031
  %v1969 = vpop.f32.mrf.mxu0
  %v1970 = vadd.f32 0.0, %v1969
  %v1971 = vpop.f32.mrf.mxu0
  %1972 = vmatprep.mubr.f32.mxu0 0.0
  %1973 = vmatmul.mubr.f32.gmra.mxu0 %v1034
  %v1974 = vpop.f32.mrf.mxu0
  %v1975 = vadd.f32 0.0, %v1974
  %v1976 = vpop.f32.mrf.mxu0
  %1977 = vmatprep.mubr.f32.mxu0 0.0
  %1978 = vmatmul.mubr.f32.gmra.mxu0 %v1037
  %v1979 = vpop.f32.mrf.mxu0
  %v1980 = vadd.f32 0.0, %v1979
  %v1981 = vpop.f32.mrf.mxu0
  %1982 = vmatprep.mubr.f32.mxu0 0.0
  %1983 = vmatmul.mubr.f32.gmra.mxu0 %v1040
  %v1984 = vpop.f32.mrf.mxu0
  %v1985 = vadd.f32 0.0, %v1984
  %v1986 = vpop.f32.mrf.mxu0
  %1987 = vmatprep.mubr.f32.mxu0 0.0
  %1988 = vmatmul.mubr.f32.gmra.mxu0 %v1043
  %v1989 = vpop.f32.mrf.mxu0
  %v1990 = vadd.f32 0.0, %v1989
  %v1991 = vpop.f32.mrf.mxu0
  %1992 = vmatprep.mubr.f32.mxu0 0.0
  %1993 = vmatmul.mubr.f32.gmra.mxu0 %v1046
  %v1994 = vpop.f32.mrf.mxu0
  %v1995 = vadd.f32 0.0, %v1994
  %v1996 = vpop.f32.mrf.mxu0
  %1997 = vmatprep.mubr.f32.mxu0 0.0
  %1998 = vmatmul.mubr.f32.gmra.mxu0 %v1049
  %v1999 = vpop.f32.mrf.mxu0
  %v2000 = vadd.f32 0.0, %v1999
  %v2001 = vpop.f32.mrf.mxu0
  %2002 = vmatprep.mubr.f32.mxu0 0.0
  %2003 = vmatmul.mubr.f32.gmra.mxu0 %v1052
  %v2004 = vpop.f32.mrf.mxu0
  %v2005 = vadd.f32 0.0, %v2004
  %v2006 = vpop.f32.mrf.mxu0
  %2007 = vmatprep.mubr.f32.mxu0 0.0
  %2008 = vmatmul.mubr.f32.gmra.mxu0 %v1055
  %v2009 = vpop.f32.mrf.mxu0
  %v2010 = vadd.f32 0.0, %v2009
  %v2011 = vpop.f32.mrf.mxu0
  %2012 = vmatprep.mubr.f32.mxu0 0.0
  %2013 = vmatmul.mubr.f32.gmra.mxu0 %v1058
  %v2014 = vpop.f32.mrf.mxu0
  %v2015 = vadd.f32 0.0, %v2014
  %v2016 = vpop.f32.mrf.mxu0
  %2017 = vmatprep.mubr.f32.mxu0 0.0
  %2018 = vmatmul.mubr.f32.gmra.mxu0 %v1061
  %v2019 = vpop.f32.mrf.mxu0
  %v2020 = vadd.f32 0.0, %v2019
  %v2021 = vpop.f32.mrf.mxu0
  %2022 = vmatprep.mubr.f32.mxu0 0.0
  %2023 = vmatmul.mubr.f32.gmra.mxu0 %v1064
  %v2024 = vpop.f32.mrf.mxu0
  %v2025 = vadd.f32 0.0, %v2024
  %v2026 = vpop.f32.mrf.mxu0
  %2027 = vmatprep.mubr.f32.mxu0 0.0
  %2028 = vmatmul.mubr.f32.gmra.mxu0 %v1067
  %v2029 = vpop.f32.mrf.mxu0
  %v2030 = vadd.f32 0.0, %v2029
  %v2031 = vpop.f32.mrf.mxu0
  %2032 = vdwg.mxu0
  %v2033 = vmul.f32 %v1422, %v1750
  %v2034 = vmul.f32 %v1423, %v1755
  %v2035 = vmul.f32 %v1424, %v1760
  %v2036 = vmul.f32 %v1425, %v1765
  %v2037 = vmul.f32 %v1426, %v1770
  %v2038 = vmul.f32 %v1427, %v1775
  %v2039 = vmul.f32 %v1428, %v1780
  %v2040 = vmul.f32 %v1429, %v1785
  %v2041 = vmul.f32 %v1430, %v1790
  %v2042 = vmul.f32 %v1431, %v1795
  %v2043 = vmul.f32 %v1432, %v1800
  %v2044 = vmul.f32 %v1433, %v1805
  %v2045 = vmul.f32 %v1434, %v1810
  %v2046 = vmul.f32 %v1435, %v1815
  %v2047 = vmul.f32 %v1436, %v1820
  %v2048 = vmul.f32 %v1437, %v1825
  %v2049 = vmul.f32 %v1438, %v1830
  %v2050 = vmul.f32 %v1439, %v1835
  %v2051 = vmul.f32 %v1440, %v1840
  %v2052 = vmul.f32 %v1441, %v1845
  %v2053 = vmul.f32 %v1442, %v1850
  %v2054 = vmul.f32 %v1443, %v1855
  %v2055 = vmul.f32 %v1444, %v1860
  %v2056 = vmul.f32 %v1445, %v1865
  %v2057 = vmul.f32 %v1446, %v1870
  %v2058 = vmul.f32 %v1447, %v1875
  %v2059 = vmul.f32 %v1448, %v1880
  %v2060 = vmul.f32 %v1449, %v1885
  %v2061 = vmul.f32 %v1450, %v1890
  %v2062 = vmul.f32 %v1451, %v1895
  %v2063 = vmul.f32 %v1452, %v1900
  %v2064 = vmul.f32 %v1453, %v1905
  %v2065 = vmul.f32 %v1454, %v1910
  %v2066 = vmul.f32 %v1455, %v1915
  %v2067 = vmul.f32 %v1456, %v1920
  %v2068 = vmul.f32 %v1457, %v1925
  %v2069 = vmul.f32 %v1458, %v1930
  %v2070 = vmul.f32 %v1459, %v1935
  %v2071 = vmul.f32 %v1460, %v1940
  %v2072 = vmul.f32 %v1461, %v1945
  %v2073 = vmul.f32 %v1462, %v1950
  %v2074 = vmul.f32 %v1463, %v1955
  %v2075 = vmul.f32 %v1464, %v1960
  %v2076 = vmul.f32 %v1465, %v1965
  %v2077 = vmul.f32 %v1466, %v1970
  %v2078 = vmul.f32 %v1467, %v1975
  %v2079 = vmul.f32 %v1468, %v1980
  %v2080 = vmul.f32 %v1469, %v1985
  %v2081 = vmul.f32 %v1470, %v1990
  %v2082 = vmul.f32 %v1471, %v1995
  %v2083 = vmul.f32 %v1472, %v2000
  %v2084 = vmul.f32 %v1473, %v2005
  %v2085 = vmul.f32 %v1474, %v2010
  %v2086 = vmul.f32 %v1475, %v2015
  %v2087 = vmul.f32 %v1476, %v2020
  %v2088 = vmul.f32 %v1477, %v2025
  %v2089 = vmul.f32 %v1478, %v2030
  %v2090 = vmax.f32 %v2033, 0.0
  %v2091 = vmax.f32 %v2034, 0.0
  %v2092 = vmax.f32 %v2035, 0.0
  %v2093 = vmax.f32 %v2036, 0.0
  %v2094 = vmax.f32 %v2037, 0.0
  %v2095 = vmax.f32 %v2038, 0.0
  %v2096 = vmax.f32 %v2039, 0.0
  %v2097 = vmax.f32 %v2040, 0.0
  %v2098 = vmax.f32 %v2041, 0.0
  %v2099 = vmax.f32 %v2042, 0.0
  %v2100 = vmax.f32 %v2043, 0.0
  %v2101 = vmax.f32 %v2044, 0.0
  %v2102 = vmax.f32 %v2045, 0.0
  %v2103 = vmax.f32 %v2046, 0.0
  %v2104 = vmax.f32 %v2047, 0.0
  %v2105 = vmax.f32 %v2048, 0.0
  %v2106 = vmax.f32 %v2049, 0.0
  %v2107 = vmax.f32 %v2050, 0.0
  %v2108 = vmax.f32 %v2051, 0.0
  %v2109 = vmax.f32 %v2052, 0.0
  %v2110 = vmax.f32 %v2053, 0.0
  %v2111 = vmax.f32 %v2054, 0.0
  %v2112 = vmax.f32 %v2055, 0.0
  %v2113 = vmax.f32 %v2056, 0.0
  %v2114 = vmax.f32 %v2057, 0.0
  %v2115 = vmax.f32 %v2058, 0.0
  %v2116 = vmax.f32 %v2059, 0.0
  %v2117 = vmax.f32 %v2060, 0.0
  %v2118 = vmax.f32 %v2061, 0.0
  %v2119 = vmax.f32 %v2062, 0.0
  %v2120 = vmax.f32 %v2063, 0.0
  %v2121 = vmax.f32 %v2064, 0.0
  %v2122 = vmax.f32 %v2065, 0.0
  %v2123 = vmax.f32 %v2066, 0.0
  %v2124 = vmax.f32 %v2067, 0.0
  %v2125 = vmax.f32 %v2068, 0.0
  %v2126 = vmax.f32 %v2069, 0.0
  %v2127 = vmax.f32 %v2070, 0.0
  %v2128 = vmax.f32 %v2071, 0.0
  %v2129 = vmax.f32 %v2072, 0.0
  %v2130 = vmax.f32 %v2073, 0.0
  %v2131 = vmax.f32 %v2074, 0.0
  %v2132 = vmax.f32 %v2075, 0.0
  %v2133 = vmax.f32 %v2076, 0.0
  %v2134 = vmax.f32 %v2077, 0.0
  %v2135 = vmax.f32 %v2078, 0.0
  %v2136 = vmax.f32 %v2079, 0.0
  %v2137 = vmax.f32 %v2080, 0.0
  %v2138 = vmax.f32 %v2081, 0.0
  %v2139 = vmax.f32 %v2082, 0.0
  %v2140 = vmax.f32 %v2083, 0.0
  %v2141 = vmax.f32 %v2084, 0.0
  %v2142 = vmax.f32 %v2085, 0.0
  %v2143 = vmax.f32 %v2086, 0.0
  %v2144 = vmax.f32 %v2087, 0.0
  %v2145 = vmax.f32 %v2088, 0.0
  %v2146 = vmax.f32 %v2089, 0.0
  %vm2147 = vcmask 64512
  %2148 = vst.msk [vmem:[%s4] sm:$0xff] %vm2147, %v2090
  %2149 = vst.msk [vmem:[%s4 + $0x8] sm:$0xff] %vm2147, %v2091
  %2150 = vst.msk [vmem:[%s4 + $0x10] sm:$0xff] %vm2147, %v2092
  %2151 = vst.msk [vmem:[%s4 + $0x18] sm:$0xff] %vm2147, %v2093
  %2152 = vst.msk [vmem:[%s4 + $0x20] sm:$0xff] %vm2147, %v2094
  %2153 = vst.msk [vmem:[%s4 + $0x28] sm:$0xff] %vm2147, %v2095
  %2154 = vst.msk [vmem:[%s4 + $0x30] sm:$0xff] %vm2147, %v2096
  %2155 = vst.msk [vmem:[%s4 + $0x38] sm:$0xff] %vm2147, %v2097
  %2156 = vst.msk [vmem:[%s4 + $0x40] sm:$0xff] %vm2147, %v2098
  %2157 = vst.msk [vmem:[%s4 + $0x48] sm:$0xff] %vm2147, %v2099
  %2158 = vst.msk [vmem:[%s4 + $0x50] sm:$0xff] %vm2147, %v2100
  %2159 = vst.msk [vmem:[%s4 + $0x58] sm:$0xff] %vm2147, %v2101
  %2160 = vst.msk [vmem:[%s4 + $0x60] sm:$0xff] %vm2147, %v2102
  %2161 = vst.msk [vmem:[%s4 + $0x68] sm:$0xff] %vm2147, %v2103
  %2162 = vst.msk [vmem:[%s4 + $0x70] sm:$0xff] %vm2147, %v2104
  %2163 = vst.msk [vmem:[%s4 + $0x78] sm:$0xff] %vm2147, %v2105
  %2164 = vst.msk [vmem:[%s4 + $0x80] sm:$0xff] %vm2147, %v2106
  %2165 = vst.msk [vmem:[%s4 + $0x88] sm:$0xff] %vm2147, %v2107
  %2166 = vst.msk [vmem:[%s4 + $0x90] sm:$0xff] %vm2147, %v2108
  %2167 = vst.msk [vmem:[%s4 + $0x98] sm:$0xff] %vm2147, %v2109
  %2168 = vst.msk [vmem:[%s4 + $0xa0] sm:$0xff] %vm2147, %v2110
  %2169 = vst.msk [vmem:[%s4 + $0xa8] sm:$0xff] %vm2147, %v2111
  %2170 = vst.msk [vmem:[%s4 + $0xb0] sm:$0xff] %vm2147, %v2112
  %2171 = vst.msk [vmem:[%s4 + $0xb8] sm:$0xff] %vm2147, %v2113
  %2172 = vst.msk [vmem:[%s4 + $0xc0] sm:$0xff] %vm2147, %v2114
  %2173 = vst.msk [vmem:[%s4 + $0xc8] sm:$0xff] %vm2147, %v2115
  %2174 = vst.msk [vmem:[%s4 + $0xd0] sm:$0xff] %vm2147, %v2116
  %2175 = vst.msk [vmem:[%s4 + $0xd8] sm:$0xff] %vm2147, %v2117
  %2176 = vst.msk [vmem:[%s4 + $0xe0] sm:$0xff] %vm2147, %v2118
  %2177 = vst.msk [vmem:[%s4 + $0xe8] sm:$0xff] %vm2147, %v2119
  %2178 = vst.msk [vmem:[%s4 + $0xf0] sm:$0xff] %vm2147, %v2120
  %2179 = vst.msk [vmem:[%s4 + $0xf8] sm:$0xff] %vm2147, %v2121
  %2180 = vst.msk [vmem:[%s4 + $0x100] sm:$0xff] %vm2147, %v2122
  %2181 = vst.msk [vmem:[%s4 + $0x108] sm:$0xff] %vm2147, %v2123
  %2182 = vst.msk [vmem:[%s4 + $0x110] sm:$0xff] %vm2147, %v2124
  %2183 = vst.msk [vmem:[%s4 + $0x118] sm:$0xff] %vm2147, %v2125
  %2184 = vst.msk [vmem:[%s4 + $0x120] sm:$0xff] %vm2147, %v2126
  %2185 = vst.msk [vmem:[%s4 + $0x128] sm:$0xff] %vm2147, %v2127
  %2186 = vst.msk [vmem:[%s4 + $0x130] sm:$0xff] %vm2147, %v2128
  %2187 = vst.msk [vmem:[%s4 + $0x138] sm:$0xff] %vm2147, %v2129
  %2188 = vst.msk [vmem:[%s4 + $0x140] sm:$0xff] %vm2147, %v2130
  %2189 = vst.msk [vmem:[%s4 + $0x148] sm:$0xff] %vm2147, %v2131
  %2190 = vst.msk [vmem:[%s4 + $0x150] sm:$0xff] %vm2147, %v2132
  %2191 = vst.msk [vmem:[%s4 + $0x158] sm:$0xff] %vm2147, %v2133
  %2192 = vst.msk [vmem:[%s4 + $0x160] sm:$0xff] %vm2147, %v2134
  %2193 = vst.msk [vmem:[%s4 + $0x168] sm:$0xff] %vm2147, %v2135
  %2194 = vst.msk [vmem:[%s4 + $0x170] sm:$0xff] %vm2147, %v2136
  %2195 = vst.msk [vmem:[%s4 + $0x178] sm:$0xff] %vm2147, %v2137
  %2196 = vst.msk [vmem:[%s4 + $0x180] sm:$0xff] %vm2147, %v2138
  %2197 = vst.msk [vmem:[%s4 + $0x188] sm:$0xff] %vm2147, %v2139
  %2198 = vst.msk [vmem:[%s4 + $0x190] sm:$0xff] %vm2147, %v2140
  %2199 = vst.msk [vmem:[%s4 + $0x198] sm:$0xff] %vm2147, %v2141
  %2200 = vst.msk [vmem:[%s4 + $0x1a0] sm:$0xff] %vm2147, %v2142
  %2201 = vst.msk [vmem:[%s4 + $0x1a8] sm:$0xff] %vm2147, %v2143
  %2202 = vst.msk [vmem:[%s4 + $0x1b0] sm:$0xff] %vm2147, %v2144
  %2203 = vst.msk [vmem:[%s4 + $0x1b8] sm:$0xff] %vm2147, %v2145
  %vm2204 = vcmask 58368
  %2205 = vst.msk [vmem:[%s4 + $0x1c0] sm:$0x3] %vm2204, %v2146
  // Predicated region
  $region18: #{generator_forward.27} parent=0 // pred_check
    _
  $region19: #{generator_forward.27} parent=0 // pred_check_branch
    %2207 = sbr.rel (0) target = $region21
  $region20: #{generator_forward.27} parent=0 // pred_region
    _
  $region21: #{generator_forward.27} parent=0 // pred_fallthru
    _
  // Predicated region
  $region22: #{generator_forward.27} parent=0 // pred_check
    _
  $region23: #{generator_forward.27} parent=0 // pred_check_branch
    %2209 = sbr.rel (0) target = $region25
  $region24: #{generator_forward.27} parent=0 // pred_region
    _
  $region25: #{generator_forward.27} parent=0 // pred_fallthru
    _

// kernel: generator_forward.29
$region0: #{generator_forward.29}
  #allocation0 [shape = 'u32[]', space=smem, size = 0x4, offset = 0x4, fixed_abs, tag = 'smem constant byte address 0x4 - core index']
  #allocation1 [shape = 'u32[144,128]{1,0:T(1,128)}', space=vmem, size = 0x12000, scoped, tag = 'internal scratch']
  %s0 = inlined_call_operand.vmem [shape: f32[18,20], index: 0, kind: input, shape index: {}]
  %s1 = inlined_call_operand.vmem [shape: f32[20,18], index: 1, kind: input, shape index: {}]
  %s2 = inlined_call_operand.vmem [shape: f32[6,20,20], index: 2, kind: input, shape index: {}]
  %s3 = inlined_call_operand.vmem [shape: f32[6,18,18], index: 3, kind: output, shape index: {}]
  %s4 = sld [smem:[#allocation0]]
  $region45: #{generator_forward.29} parent=0
    _
  %s6 = ssub.s32 1, %s4
  %s7 = scalar_select 0, %s6, %s4
  loop: start=0, step=1, limit=8
  $region2: #{generator_forward.29} parent=0 // loop_pre_header
    _
  $region3: #{generator_forward.29} parent=0 // loop_header
    %s9 = sphi 0, %s13
    %p10 = scmp.ge.s32.totalorder %s9, 8
    %s17 = sphi 0, %s17
    %s19 = sphi 0, %s17
    %s20 = sphi 0, %s19
    %s34 = sphi 0, %s20
    %s38 = sphi 0, %s38
    %s40 = sphi 0, %s38
    %s41 = sphi 0, %s40
    %s55 = sphi 0, %s41
    %s61 = sphi 0, %s63
    %s64 = sphi 0, %s61
    %s65 = sphi 0, %s64
    %s81 = sphi 0, %s65
    %s87 = sphi 0, %s89
    %s90 = sphi 0, %s87
    %s91 = sphi 0, %s90
    %s107 = sphi 0, %s91
  $region4: #{generator_forward.29} parent=0 // loop_header_branch
    %12 = sbr.rel (%p10) target = $region8
  $region5: #{generator_forward.29} parent=0 // loop_body
    %s14 = ssub.s32 %s9, 1
    %s15 = ssub.s32 %s9, 2
    %s16 = sadd.s32 %s9, 1
    %s18 = sadd.s32 %s17, 1
    %p21 = scmp.eq.s32.totalorder %s9, 5
    %p22 = scmp.ne.s32.totalorder %s17, %s19
    %p23 = scmp.eq.s32.totalorder %s9, 0
    %p24 = por %p22, %p23
    %p25 = scmp.ne.s32.totalorder %s17, %s19
    %p26 = scmp.eq.s32.totalorder %s14, 5
    %p27 = por %p25, %p26
    %p28 = scmp.ne.s32.totalorder %s19, %s20
    %p29 = scmp.eq.s32.totalorder %s14, 0
    %p30 = por %p28, %p29
    %p31 = scmp.ne.s32.totalorder %s19, %s20
    %p32 = scmp.eq.s32.totalorder %s15, 5
    %p33 = por %p31, %p32
    %p35 = scmp.ne.s32.totalorder %s20, %s34
    %p36 = scmp.eq.s32.totalorder %s15, 0
    %p37 = por %p35, %p36
    %s39 = sadd.s32 %s38, 1
    %p42 = scmp.eq.s32.totalorder %s9, 5
    %p43 = scmp.ne.s32.totalorder %s38, %s40
    %p44 = scmp.eq.s32.totalorder %s9, 0
    %p45 = por %p43, %p44
    %p46 = scmp.ne.s32.totalorder %s38, %s40
    %p47 = scmp.eq.s32.totalorder %s14, 5
    %p48 = por %p46, %p47
    %p49 = scmp.ne.s32.totalorder %s40, %s41
    %p50 = scmp.eq.s32.totalorder %s14, 0
    %p51 = por %p49, %p50
    %p52 = scmp.ne.s32.totalorder %s40, %s41
    %p53 = scmp.eq.s32.totalorder %s15, 5
    %p54 = por %p52, %p53
    %p56 = scmp.ne.s32.totalorder %s41, %s55
    %p57 = scmp.eq.s32.totalorder %s15, 0
    %p58 = por %p56, %p57
    %s59 = ssub.s32 %s9, %s16
    %p60 = scmp.eq.s32.totalorder %s59, 0
    %s62 = sadd.s32 %s61, 1
    %s63 = scalar_select %p60, %s61, %s62
    %p66 = pneg %p60
    %p67 = scmp.eq.s32.totalorder %s9, 5
    %p68 = por %p66, %p67
    %p69 = scmp.ne.s32.totalorder %s61, %s64
    %p70 = scmp.eq.s32.totalorder %s9, 0
    %p71 = por %p69, %p70
    %p72 = scmp.ne.s32.totalorder %s61, %s64
    %p73 = scmp.eq.s32.totalorder %s14, 5
    %p74 = por %p72, %p73
    %p75 = scmp.ne.s32.totalorder %s64, %s65
    %p76 = scmp.eq.s32.totalorder %s14, 0
    %p77 = por %p75, %p76
    %p78 = scmp.ne.s32.totalorder %s64, %s65
    %p79 = scmp.eq.s32.totalorder %s15, 5
    %p80 = por %p78, %p79
    %p82 = scmp.ne.s32.totalorder %s65, %s81
    %p83 = scmp.eq.s32.totalorder %s15, 0
    %p84 = por %p82, %p83
    %s85 = ssub.s32 %s9, %s16
    %p86 = scmp.eq.s32.totalorder %s85, 0
    %s88 = sadd.s32 %s87, 1
    %s89 = scalar_select %p86, %s87, %s88
    %p92 = pneg %p86
    %p93 = scmp.eq.s32.totalorder %s9, 5
    %p94 = por %p92, %p93
    %p95 = scmp.ne.s32.totalorder %s87, %s90
    %p96 = scmp.eq.s32.totalorder %s9, 0
    %p97 = por %p95, %p96
    %p98 = scmp.ne.s32.totalorder %s87, %s90
    %p99 = scmp.eq.s32.totalorder %s14, 5
    %p100 = por %p98, %p99
    %p101 = scmp.ne.s32.totalorder %s90, %s91
    %p102 = scmp.eq.s32.totalorder %s14, 0
    %p103 = por %p101, %p102
    %p104 = scmp.ne.s32.totalorder %s90, %s91
    %p105 = scmp.eq.s32.totalorder %s15, 5
    %p106 = por %p104, %p105
    %p108 = scmp.ne.s32.totalorder %s91, %s107
    %p109 = scmp.eq.s32.totalorder %s15, 0
    %p110 = por %p108, %p109
    %p111 = scmp.le.s32.totalorder 1, %s9
    %p112 = scmp.lt.s32.totalorder %s9, 7
    %p113 = pnand %p111, %p112
    %p114 = pneg %p113
    // Predicated region
    $region9: #{generator_forward.29} parent=5 // pred_check
      _
    $region10: #{generator_forward.29} parent=5 // pred_check_branch
      %116 = sbr.rel (%p113) target = $region12
    $region11: #{generator_forward.29} parent=5 // pred_region
      %s117 = ssub.s32 %s9, 1
      // Predicated region
      $region13: #{generator_forward.29} parent=11 // pred_check
        %p118 = pneg %p30
      $region14: #{generator_forward.29} parent=11 // pred_check_branch
        %120 = sbr.rel (%p118) target = $region16
      $region15: #{generator_forward.29} parent=11 // pred_region
        _
      $region16: #{generator_forward.29} parent=11 // pred_fallthru
        _
      // Predicated region
      $region17: #{generator_forward.29} parent=11 // pred_check
        %p121 = pneg %p51
      $region18: #{generator_forward.29} parent=11 // pred_check_branch
        %123 = sbr.rel (%p121) target = $region20
      $region19: #{generator_forward.29} parent=11 // pred_region
        _
      $region20: #{generator_forward.29} parent=11 // pred_fallthru
        _
    $region12: #{generator_forward.29} parent=5 // pred_fallthru
      _
    %p124 = scmp.lt.s32.totalorder %s9, 6
    // Predicated region
    $region21: #{generator_forward.29} parent=5 // pred_check
      %p125 = pneg %p124
    $region22: #{generator_forward.29} parent=5 // pred_check_branch
      %127 = sbr.rel (%p125) target = $region24
    $region23: #{generator_forward.29} parent=5 // pred_region
      // Predicated region
      $region25: #{generator_forward.29} parent=23 // pred_check
        %p128 = pneg %p71
      $region26: #{generator_forward.29} parent=23 // pred_check_branch
        %130 = sbr.rel (%p128) target = $region28
      $region27: #{generator_forward.29} parent=23 // pred_region
        %p131 = scmp.lt.s32.totalorder %s9, 5
        %s132 = scalar_select %p131, %s9, 5
        %s133 = smul.addr %s132, 3
        %s134 = smul.addr %s133, 8
        %s135 = scalar_lea.vmem %s2, %s134
      $region28: #{generator_forward.29} parent=23 // pred_fallthru
        _
    $region24: #{generator_forward.29} parent=5 // pred_fallthru
      _
    %p136 = scmp.le.s32.totalorder 1, %s9
    %p137 = scmp.lt.s32.totalorder %s9, 7
    %p138 = pnand %p136, %p137
    %p139 = pneg %p138
    // Predicated region
    $region29: #{generator_forward.29} parent=5 // pred_check
      _
    $region30: #{generator_forward.29} parent=5 // pred_check_branch
      %141 = sbr.rel (%p138) target = $region32
    $region31: #{generator_forward.29} parent=5 // pred_region
      %s142 = ssub.s32 %s9, 1
      %p143 = pneg %p30
      %p144 = pneg %p27
      %p145 = pneg %p51
      %p146 = pneg %p48
      %p147 = scmp.lt.s32.totalorder %s14, 5
      %s148 = scalar_select %p147, %s14, 5
      %s149 = smul.addr %s148, 3
      %s150 = smul.addr %s149, 8
      %s151 = scalar_lea.vmem %s2, %s150
      %p152 = pneg %p77
      %p153 = pneg %p74
      %p154 = pneg %p103
      %p155 = pneg %p100
      %p156 = scmp.lt.s32.totalorder %s14, 5
      %s157 = scalar_select %p156, %s14, 5
      %s158 = smul.addr %s157, 3
      %s159 = smul.addr %s158, 8
      %s160 = scalar_lea.vmem %s3, %s159
      %p161 = scmp.lt.s32.totalorder %s14, 5
      %s162 = scalar_select %p161, %s14, 5
      %s163 = smul.addr %s162, 3
      %s164 = smul.addr %s163, 8
      %s165 = scalar_lea.vmem %s2, %s164
      %p166 = scmp.lt.s32.totalorder %s14, 5
      %s167 = scalar_select %p166, %s14, 5
      %s168 = smul.addr %s167, 3
      %s169 = smul.addr %s168, 8
      %s170 = scalar_lea.vmem %s3, %s169
      %v171 = vld [vmem:[%s0] sm:$0xff]
      %v172 = vld [vmem:[%s0 + $0x8] sm:$0xff]
      %v173 = vld [vmem:[%s0 + $0x10] sm:$0x3]
      %v174 = vld [vmem:[%s165] sm:$0xff]
      %v175 = vld [vmem:[%s165 + $0x8] sm:$0xff]
      %v176 = vld [vmem:[%s165 + $0x10] sm:$0xf]
      %vm177 = vcmask 162816
      %v179 = vsel %vm177, %v171, 0
      %v182 = vsel %vm177, %v172, 0
      %v185 = vsel %vm177, %v173, 0
      %vm187 = vcmask 1043456
      %v189 = vsel %vm187, %v176, 0
      %191 = vmatprep.subr.mxu0 0.0
      %192 = vmatpush1.msra.mxu0 0.0
      %193 = vmatprep.subr.mxu0 0.0
      %194 = vmatpush1.msra.mxu0 0.0
      %195 = vmatprep.subr.mxu0 0.0
      %196 = vmatpush1.msra.mxu0 0.0
      %197 = vmatprep.subr.mxu0 0.0
      %198 = vmatpush1.msra.mxu0 0.0
      %199 = vmatprep.subr.mxu0 0.0
      %200 = vmatpush1.msra.mxu0 0.0
      %201 = vmatprep.subr.mxu0 0.0
      %202 = vmatpush1.msra.mxu0 0.0
      %203 = vmatprep.subr.mxu0 0.0
      %204 = vmatpush1.msra.mxu0 0.0
      %205 = vmatprep.subr.mxu0 0.0
      %206 = vmatpush1.msra.mxu0 0.0
      %207 = vmatprep.subr.mxu0 0.0
      %208 = vmatpush1.msra.mxu0 0.0
      %209 = vmatprep.subr.mxu0 0.0
      %210 = vmatpush1.msra.mxu0 0.0
      %211 = vmatprep.subr.mxu0 0.0
      %212 = vmatpush1.msra.mxu0 0.0
      %213 = vmatprep.subr.mxu0 0.0
      %214 = vmatpush1.msra.mxu0 0.0
      %215 = vmatprep.subr.mxu0 0.0
      %216 = vmatpush1.msra.mxu0 0.0
      %217 = vmatprep.subr.mxu0 0.0
      %218 = vmatpush1.msra.mxu0 %v189
      %219 = vmatprep.subr.mxu0 0.0
      %220 = vmatpush1.msra.mxu0 %v175
      %221 = vmatprep.subr.mxu0 0.0
      %222 = vmatpush1.msra.mxu0 %v174
      %223 = vmatprep.subr.mxu0 0.0
      %224 = vmatpush2.msra.mxu0 0.0
      %225 = vmatprep.subr.mxu0 0.0
      %226 = vmatpush2.msra.mxu0 0.0
      %227 = vmatprep.subr.mxu0 0.0
      %228 = vmatpush2.msra.mxu0 0.0
      %229 = vmatprep.subr.mxu0 0.0
      %230 = vmatpush2.msra.mxu0 0.0
      %231 = vmatprep.subr.mxu0 0.0
      %232 = vmatpush2.msra.mxu0 0.0
      %233 = vmatprep.subr.mxu0 0.0
      %234 = vmatpush2.msra.mxu0 0.0
      %235 = vmatprep.subr.mxu0 0.0
      %236 = vmatpush2.msra.mxu0 0.0
      %237 = vmatprep.subr.mxu0 0.0
      %238 = vmatpush2.msra.mxu0 0.0
      %239 = vmatprep.subr.mxu0 0.0
      %240 = vmatpush2.msra.mxu0 0.0
      %241 = vmatprep.subr.mxu0 0.0
      %242 = vmatpush2.msra.mxu0 0.0
      %243 = vmatprep.subr.mxu0 0.0
      %244 = vmatpush2.msra.mxu0 0.0
      %245 = vmatprep.subr.mxu0 0.0
      %246 = vmatpush2.msra.mxu0 0.0
      %247 = vmatprep.subr.mxu0 0.0
      %248 = vmatpush2.msra.mxu0 0.0
      %249 = vmatprep.subr.mxu0 0.0
      %250 = vmatpush2.msra.mxu0 0.0
      %251 = vmatprep.subr.mxu0 0.0
      %252 = vmatpush2.msra.mxu0 0.0
      %253 = vmatprep.subr.mxu0 0.0
      %254 = vmatpush2.msra.mxu0 0.0
      %255 = vmatprep.mubr.f32.mxu0 0.0
      %256 = vmatmul.mubr.f32.gmra.mxu0 %v179
      %v257 = vpop.f32.mrf.mxu0
      %v258 = vadd.f32 0.0, %v257
      %v259 = vpop.f32.mrf.mxu0
      %260 = vmatprep.mubr.f32.mxu0 0.0
      %261 = vmatmul.mubr.f32.gmra.mxu0 %v182
      %v262 = vpop.f32.mrf.mxu0
      %v263 = vadd.f32 0.0, %v262
      %v264 = vpop.f32.mrf.mxu0
      %265 = vmatprep.mubr.f32.mxu0 0.0
      %266 = vmatmul.mubr.f32.gmra.mxu0 %v185
      %v267 = vpop.f32.mrf.mxu0
      %v268 = vadd.f32 0.0, %v267
      %v269 = vpop.f32.mrf.mxu0
      %270 = vdwg.mxu0
      %v271 = vld [vmem:[%s1] sm:$0xff]
      %v272 = vld [vmem:[%s1 + $0x8] sm:$0xff]
      %v273 = vld [vmem:[%s1 + $0x10] sm:$0xf]
      %v275 = vsel %vm177, %v258, 0
      %v278 = vsel %vm177, %v263, 0
      %v281 = vsel %vm177, %v268, 0
      %v284 = vsel %vm187, %v273, 0
      %286 = vmatprep.subr.mxu0 0.0
      %287 = vmatpush1.msra.mxu0 0.0
      %288 = vmatprep.subr.mxu0 0.0
      %289 = vmatpush1.msra.mxu0 0.0
      %290 = vmatprep.subr.mxu0 0.0
      %291 = vmatpush1.msra.mxu0 0.0
      %292 = vmatprep.subr.mxu0 0.0
      %293 = vmatpush1.msra.mxu0 0.0
      %294 = vmatprep.subr.mxu0 0.0
      %295 = vmatpush1.msra.mxu0 0.0
      %296 = vmatprep.subr.mxu0 0.0
      %297 = vmatpush1.msra.mxu0 0.0
      %298 = vmatprep.subr.mxu0 0.0
      %299 = vmatpush1.msra.mxu0 0.0
      %300 = vmatprep.subr.mxu0 0.0
      %301 = vmatpush1.msra.mxu0 0.0
      %302 = vmatprep.subr.mxu0 0.0
      %303 = vmatpush1.msra.mxu0 0.0
      %304 = vmatprep.subr.mxu0 0.0
      %305 = vmatpush1.msra.mxu0 0.0
      %306 = vmatprep.subr.mxu0 0.0
      %307 = vmatpush1.msra.mxu0 0.0
      %308 = vmatprep.subr.mxu0 0.0
      %309 = vmatpush1.msra.mxu0 0.0
      %310 = vmatprep.subr.mxu0 0.0
      %311 = vmatpush1.msra.mxu0 0.0
      %312 = vmatprep.subr.mxu0 0.0
      %313 = vmatpush1.msra.mxu0 %v284
      %314 = vmatprep.subr.mxu0 0.0
      %315 = vmatpush1.msra.mxu0 %v272
      %316 = vmatprep.subr.mxu0 0.0
      %317 = vmatpush1.msra.mxu0 %v271
      %318 = vmatprep.subr.mxu0 0.0
      %319 = vmatpush2.msra.mxu0 0.0
      %320 = vmatprep.subr.mxu0 0.0
      %321 = vmatpush2.msra.mxu0 0.0
      %322 = vmatprep.subr.mxu0 0.0
      %323 = vmatpush2.msra.mxu0 0.0
      %324 = vmatprep.subr.mxu0 0.0
      %325 = vmatpush2.msra.mxu0 0.0
      %326 = vmatprep.subr.mxu0 0.0
      %327 = vmatpush2.msra.mxu0 0.0
      %328 = vmatprep.subr.mxu0 0.0
      %329 = vmatpush2.msra.mxu0 0.0
      %330 = vmatprep.subr.mxu0 0.0
      %331 = vmatpush2.msra.mxu0 0.0
      %332 = vmatprep.subr.mxu0 0.0
      %333 = vmatpush2.msra.mxu0 0.0
      %334 = vmatprep.subr.mxu0 0.0
      %335 = vmatpush2.msra.mxu0 0.0
      %336 = vmatprep.subr.mxu0 0.0
      %337 = vmatpush2.msra.mxu0 0.0
      %338 = vmatprep.subr.mxu0 0.0
      %339 = vmatpush2.msra.mxu0 0.0
      %340 = vmatprep.subr.mxu0 0.0
      %341 = vmatpush2.msra.mxu0 0.0
      %342 = vmatprep.subr.mxu0 0.0
      %343 = vmatpush2.msra.mxu0 0.0
      %344 = vmatprep.subr.mxu0 0.0
      %345 = vmatpush2.msra.mxu0 0.0
      %346 = vmatprep.subr.mxu0 0.0
      %347 = vmatpush2.msra.mxu0 0.0
      %348 = vmatprep.subr.mxu0 0.0
      %349 = vmatpush2.msra.mxu0 0.0
      %350 = vmatprep.mubr.f32.mxu0 0.0
      %351 = vmatmul.mubr.f32.gmra.mxu0 %v275
      %v352 = vpop.f32.mrf.mxu0
      %v353 = vadd.f32 0.0, %v352
      %v354 = vpop.f32.mrf.mxu0
      %355 = vmatprep.mubr.f32.mxu0 0.0
      %356 = vmatmul.mubr.f32.gmra.mxu0 %v278
      %v357 = vpop.f32.mrf.mxu0
      %v358 = vadd.f32 0.0, %v357
      %v359 = vpop.f32.mrf.mxu0
      %360 = vmatprep.mubr.f32.mxu0 0.0
      %361 = vmatmul.mubr.f32.gmra.mxu0 %v281
      %v362 = vpop.f32.mrf.mxu0
      %v363 = vadd.f32 0.0, %v362
      %v364 = vpop.f32.mrf.mxu0
      %365 = vdwg.mxu0
      %vm366 = vcmask 146432
      %367 = vst.msk [vmem:[%s170] sm:$0xff] %vm366, %v353
      %368 = vst.msk [vmem:[%s170 + $0x8] sm:$0xff] %vm366, %v358
      %vm369 = vcmask 140288
      %370 = vst.msk [vmem:[%s170 + $0x10] sm:$0x3] %vm369, %v363
      %p371 = scmp.lt.s32.totalorder %s14, 5
      %s372 = scalar_select %p371, %s14, 5
      %s373 = smul.addr %s372, 3
      %s374 = smul.addr %s373, 8
      %s375 = scalar_lea.vmem %s3, %s374
      // Predicated region
      $region33: #{generator_forward.29} parent=31 // pred_check
        %p376 = pneg %p100
      $region34: #{generator_forward.29} parent=31 // pred_check_branch
        %378 = sbr.rel (%p376) target = $region36
      $region35: #{generator_forward.29} parent=31 // pred_region
        _
      $region36: #{generator_forward.29} parent=31 // pred_fallthru
        _
    $region32: #{generator_forward.29} parent=5 // pred_fallthru
      _
    %p379 = scmp.le.s32.totalorder 2, %s9
    // Predicated region
    $region37: #{generator_forward.29} parent=5 // pred_check
      %p380 = pneg %p379
    $region38: #{generator_forward.29} parent=5 // pred_check_branch
      %382 = sbr.rel (%p380) target = $region40
    $region39: #{generator_forward.29} parent=5 // pred_region
      %s383 = ssub.s32 %s9, 2
      // Predicated region
      $region41: #{generator_forward.29} parent=39 // pred_check
        %p384 = pneg %p106
      $region42: #{generator_forward.29} parent=39 // pred_check_branch
        %386 = sbr.rel (%p384) target = $region44
      $region43: #{generator_forward.29} parent=39 // pred_region
        %p387 = scmp.lt.s32.totalorder %s15, 5
        %s388 = scalar_select %p387, %s15, 5
        %s389 = smul.addr %s388, 3
        %s390 = smul.addr %s389, 8
        %s391 = scalar_lea.vmem %s3, %s390
      $region44: #{generator_forward.29} parent=39 // pred_fallthru
        _
    $region40: #{generator_forward.29} parent=5 // pred_fallthru
      _
  $region6: #{generator_forward.29} parent=0 // loop_footer
    %s13 = sadd.s32 1, %s9
  $region7: #{generator_forward.29} parent=0 // loop_footer_branch
    %8 = sbr.rel target = $region3
  $region8: #{generator_forward.29} parent=0 // loop_exit
    _

// kernel: generator_forward.28
$region0: #{generator_forward.28}
  #allocation0 [shape = 'u32[]', space=smem, size = 0x4, offset = 0x4, fixed_abs, tag = 'smem constant byte address 0x4 - core index']
  #allocation1 [shape = 'u32[144,128]{1,0:T(1,128)}', space=vmem, size = 0x12000, scoped, tag = 'internal scratch']
  %s0 = inlined_call_operand.vmem [shape: f32[800,288], index: 0, kind: input, shape index: {}]
  %s1 = inlined_call_operand.vmem [shape: f32[288,3], index: 1, kind: input, shape index: {}]
  %s2 = inlined_call_operand.vmem [shape: f32[800,3], index: 2, kind: output, shape index: {}]
  %s3 = sld [smem:[#allocation0]]
  $region18: #{generator_forward.28} parent=0
    _
  %s5 = ssub.s32 1, %s3
  %s6 = scalar_select 0, %s5, %s3
  // Predicated region
  $region2: #{generator_forward.28} parent=0 // pred_check
    _
  $region3: #{generator_forward.28} parent=0 // pred_check_branch
    %8 = sbr.rel (0) target = $region5
  $region4: #{generator_forward.28} parent=0 // pred_region
    _
  $region5: #{generator_forward.28} parent=0 // pred_fallthru
    _
  // Predicated region
  $region6: #{generator_forward.28} parent=0 // pred_check
    _
  $region7: #{generator_forward.28} parent=0 // pred_check_branch
    %10 = sbr.rel (0) target = $region9
  $region8: #{generator_forward.28} parent=0 // pred_region
    _
  $region9: #{generator_forward.28} parent=0 // pred_fallthru
    _
  %v11 = vld [vmem:[%s0] sm:$0xff]
  %v12 = vld [vmem:[%s0 + $0x8] sm:$0xff]
  %v13 = vld [vmem:[%s0 + $0x10] sm:$0xff]
  %v14 = vld [vmem:[%s0 + $0x18] sm:$0xff]
  %v15 = vld [vmem:[%s0 + $0x20] sm:$0xff]
  %v16 = vld [vmem:[%s0 + $0x28] sm:$0xff]
  %v17 = vld [vmem:[%s0 + $0x30] sm:$0xff]
  %v18 = vld [vmem:[%s0 + $0x38] sm:$0xff]
  %v19 = vld [vmem:[%s0 + $0x40] sm:$0xff]
  %v20 = vld [vmem:[%s0 + $0x48] sm:$0xff]
  %v21 = vld [vmem:[%s0 + $0x50] sm:$0xff]
  %v22 = vld [vmem:[%s0 + $0x58] sm:$0xff]
  %v23 = vld [vmem:[%s0 + $0x60] sm:$0xff]
  %v24 = vld [vmem:[%s0 + $0x68] sm:$0xff]
  %v25 = vld [vmem:[%s0 + $0x70] sm:$0xff]
  %v26 = vld [vmem:[%s0 + $0x78] sm:$0xff]
  %v27 = vld [vmem:[%s0 + $0x80] sm:$0xff]
  %v28 = vld [vmem:[%s0 + $0x88] sm:$0xff]
  %v29 = vld [vmem:[%s0 + $0x90] sm:$0xff]
  %v30 = vld [vmem:[%s0 + $0x98] sm:$0xff]
  %v31 = vld [vmem:[%s0 + $0xa0] sm:$0xff]
  %v32 = vld [vmem:[%s0 + $0xa8] sm:$0xff]
  %v33 = vld [vmem:[%s0 + $0xb0] sm:$0xff]
  %v34 = vld [vmem:[%s0 + $0xb8] sm:$0xff]
  %v35 = vld [vmem:[%s0 + $0xc0] sm:$0xff]
  %v36 = vld [vmem:[%s0 + $0xc8] sm:$0xff]
  %v37 = vld [vmem:[%s0 + $0xd0] sm:$0xff]
  %v38 = vld [vmem:[%s0 + $0xd8] sm:$0xff]
  %v39 = vld [vmem:[%s0 + $0xe0] sm:$0xff]
  %v40 = vld [vmem:[%s0 + $0xe8] sm:$0xff]
  %v41 = vld [vmem:[%s0 + $0xf0] sm:$0xff]
  %v42 = vld [vmem:[%s0 + $0xf8] sm:$0xff]
  %v43 = vld [vmem:[%s0 + $0x100] sm:$0xff]
  %v44 = vld [vmem:[%s0 + $0x108] sm:$0xff]
  %v45 = vld [vmem:[%s0 + $0x110] sm:$0xff]
  %v46 = vld [vmem:[%s0 + $0x118] sm:$0xff]
  %v47 = vld [vmem:[%s0 + $0x120] sm:$0xff]
  %v48 = vld [vmem:[%s0 + $0x128] sm:$0xff]
  %v49 = vld [vmem:[%s0 + $0x130] sm:$0xff]
  %v50 = vld [vmem:[%s0 + $0x138] sm:$0xff]
  %v51 = vld [vmem:[%s0 + $0x140] sm:$0xff]
  %v52 = vld [vmem:[%s0 + $0x148] sm:$0xff]
  %v53 = vld [vmem:[%s0 + $0x150] sm:$0xff]
  %v54 = vld [vmem:[%s0 + $0x158] sm:$0xff]
  %v55 = vld [vmem:[%s0 + $0x160] sm:$0xff]
  %v56 = vld [vmem:[%s0 + $0x168] sm:$0xff]
  %v57 = vld [vmem:[%s0 + $0x170] sm:$0xff]
  %v58 = vld [vmem:[%s0 + $0x178] sm:$0xff]
  %v59 = vld [vmem:[%s0 + $0x180] sm:$0xff]
  %v60 = vld [vmem:[%s0 + $0x188] sm:$0xff]
  %v61 = vld [vmem:[%s0 + $0x190] sm:$0xff]
  %v62 = vld [vmem:[%s0 + $0x198] sm:$0xff]
  %v63 = vld [vmem:[%s0 + $0x1a0] sm:$0xff]
  %v64 = vld [vmem:[%s0 + $0x1a8] sm:$0xff]
  %v65 = vld [vmem:[%s0 + $0x1b0] sm:$0xff]
  %v66 = vld [vmem:[%s0 + $0x1b8] sm:$0xff]
  %v67 = vld [vmem:[%s0 + $0x1c0] sm:$0xff]
  %v68 = vld [vmem:[%s0 + $0x1c8] sm:$0xff]
  %v69 = vld [vmem:[%s0 + $0x1d0] sm:$0xff]
  %v70 = vld [vmem:[%s0 + $0x1d8] sm:$0xff]
  %v71 = vld [vmem:[%s0 + $0x1e0] sm:$0xff]
  %v72 = vld [vmem:[%s0 + $0x1e8] sm:$0xff]
  %v73 = vld [vmem:[%s0 + $0x1f0] sm:$0xff]
  %v74 = vld [vmem:[%s0 + $0x1f8] sm:$0xff]
  %v75 = vld [vmem:[%s0 + $0x200] sm:$0xff]
  %v76 = vld [vmem:[%s0 + $0x208] sm:$0xff]
  %v77 = vld [vmem:[%s0 + $0x210] sm:$0xff]
  %v78 = vld [vmem:[%s0 + $0x218] sm:$0xff]
  %v79 = vld [vmem:[%s0 + $0x220] sm:$0xff]
  %v80 = vld [vmem:[%s0 + $0x228] sm:$0xff]
  %v81 = vld [vmem:[%s0 + $0x230] sm:$0xff]
  %v82 = vld [vmem:[%s0 + $0x238] sm:$0xff]
  %v83 = vld [vmem:[%s0 + $0x240] sm:$0xff]
  %v84 = vld [vmem:[%s0 + $0x248] sm:$0xff]
  %v85 = vld [vmem:[%s0 + $0x250] sm:$0xff]
  %v86 = vld [vmem:[%s0 + $0x258] sm:$0xff]
  %v87 = vld [vmem:[%s0 + $0x260] sm:$0xff]
  %v88 = vld [vmem:[%s0 + $0x268] sm:$0xff]
  %v89 = vld [vmem:[%s0 + $0x270] sm:$0xff]
  %v90 = vld [vmem:[%s0 + $0x278] sm:$0xff]
  %v91 = vld [vmem:[%s0 + $0x280] sm:$0xff]
  %v92 = vld [vmem:[%s0 + $0x288] sm:$0xff]
  %v93 = vld [vmem:[%s0 + $0x290] sm:$0xff]
  %v94 = vld [vmem:[%s0 + $0x298] sm:$0xff]
  %v95 = vld [vmem:[%s0 + $0x2a0] sm:$0xff]
  %v96 = vld [vmem:[%s0 + $0x2a8] sm:$0xff]
  %v97 = vld [vmem:[%s0 + $0x2b0] sm:$0xff]
  %v98 = vld [vmem:[%s0 + $0x2b8] sm:$0xff]
  %v99 = vld [vmem:[%s0 + $0x2c0] sm:$0xff]
  %v100 = vld [vmem:[%s0 + $0x2c8] sm:$0xff]
  %v101 = vld [vmem:[%s0 + $0x2d0] sm:$0xff]
  %v102 = vld [vmem:[%s0 + $0x2d8] sm:$0xff]
  %v103 = vld [vmem:[%s0 + $0x2e0] sm:$0xff]
  %v104 = vld [vmem:[%s0 + $0x2e8] sm:$0xff]
  %v105 = vld [vmem:[%s0 + $0x2f0] sm:$0xff]
  %v106 = vld [vmem:[%s0 + $0x2f8] sm:$0xff]
  %v107 = vld [vmem:[%s0 + $0x300] sm:$0xff]
  %v108 = vld [vmem:[%s0 + $0x308] sm:$0xff]
  %v109 = vld [vmem:[%s0 + $0x310] sm:$0xff]
  %v110 = vld [vmem:[%s0 + $0x318] sm:$0xff]
  %v111 = vld [vmem:[%s0 + $0x320] sm:$0xff]
  %v112 = vld [vmem:[%s0 + $0x328] sm:$0xff]
  %v113 = vld [vmem:[%s0 + $0x330] sm:$0xff]
  %v114 = vld [vmem:[%s0 + $0x338] sm:$0xff]
  %v115 = vld [vmem:[%s0 + $0x340] sm:$0xff]
  %v116 = vld [vmem:[%s0 + $0x348] sm:$0xff]
  %v117 = vld [vmem:[%s0 + $0x350] sm:$0xff]
  %v118 = vld [vmem:[%s0 + $0x358] sm:$0xff]
  %v119 = vld [vmem:[%s0 + $0x360] sm:$0xff]
  %v120 = vld [vmem:[%s0 + $0x368] sm:$0xff]
  %v121 = vld [vmem:[%s0 + $0x370] sm:$0xff]
  %v122 = vld [vmem:[%s0 + $0x378] sm:$0xff]
  %v123 = vld [vmem:[%s0 + $0x380] sm:$0xff]
  %v124 = vld [vmem:[%s0 + $0x388] sm:$0xff]
  %v125 = vld [vmem:[%s0 + $0x390] sm:$0xff]
  %v126 = vld [vmem:[%s0 + $0x398] sm:$0xff]
  %v127 = vld [vmem:[%s0 + $0x3a0] sm:$0xff]
  %v128 = vld [vmem:[%s0 + $0x3a8] sm:$0xff]
  %v129 = vld [vmem:[%s0 + $0x3b0] sm:$0xff]
  %v130 = vld [vmem:[%s0 + $0x3b8] sm:$0xff]
  %v131 = vld [vmem:[%s0 + $0x3c0] sm:$0xff]
  %v132 = vld [vmem:[%s0 + $0x3c8] sm:$0xff]
  %v133 = vld [vmem:[%s0 + $0x3d0] sm:$0xff]
  %v134 = vld [vmem:[%s0 + $0x3d8] sm:$0xff]
  %v135 = vld [vmem:[%s0 + $0x3e0] sm:$0xff]
  %v136 = vld [vmem:[%s0 + $0x3e8] sm:$0xff]
  %v137 = vld [vmem:[%s0 + $0x3f0] sm:$0xff]
  %v138 = vld [vmem:[%s0 + $0x3f8] sm:$0xff]
  %v139 = vld [vmem:[%s0 + $0x400] sm:$0xff]
  %v140 = vld [vmem:[%s0 + $0x408] sm:$0xff]
  %v141 = vld [vmem:[%s0 + $0x410] sm:$0xff]
  %v142 = vld [vmem:[%s0 + $0x418] sm:$0xff]
  %v143 = vld [vmem:[%s0 + $0x420] sm:$0xff]
  %v144 = vld [vmem:[%s0 + $0x428] sm:$0xff]
  %v145 = vld [vmem:[%s0 + $0x430] sm:$0xff]
  %v146 = vld [vmem:[%s0 + $0x438] sm:$0xff]
  %v147 = vld [vmem:[%s0 + $0x440] sm:$0xff]
  %v148 = vld [vmem:[%s0 + $0x448] sm:$0xff]
  %v149 = vld [vmem:[%s0 + $0x450] sm:$0xff]
  %v150 = vld [vmem:[%s0 + $0x458] sm:$0xff]
  %v151 = vld [vmem:[%s0 + $0x460] sm:$0xff]
  %v152 = vld [vmem:[%s0 + $0x468] sm:$0xff]
  %v153 = vld [vmem:[%s0 + $0x470] sm:$0xff]
  %v154 = vld [vmem:[%s0 + $0x478] sm:$0xff]
  %v155 = vld [vmem:[%s0 + $0x480] sm:$0xff]
  %v156 = vld [vmem:[%s0 + $0x488] sm:$0xff]
  %v157 = vld [vmem:[%s0 + $0x490] sm:$0xff]
  %v158 = vld [vmem:[%s0 + $0x498] sm:$0xff]
  %v159 = vld [vmem:[%s0 + $0x4a0] sm:$0xff]
  %v160 = vld [vmem:[%s0 + $0x4a8] sm:$0xff]
  %v161 = vld [vmem:[%s0 + $0x4b0] sm:$0xff]
  %v162 = vld [vmem:[%s0 + $0x4b8] sm:$0xff]
  %v163 = vld [vmem:[%s0 + $0x4c0] sm:$0xff]
  %v164 = vld [vmem:[%s0 + $0x4c8] sm:$0xff]
  %v165 = vld [vmem:[%s0 + $0x4d0] sm:$0xff]
  %v166 = vld [vmem:[%s0 + $0x4d8] sm:$0xff]
  %v167 = vld [vmem:[%s0 + $0x4e0] sm:$0xff]
  %v168 = vld [vmem:[%s0 + $0x4e8] sm:$0xff]
  %v169 = vld [vmem:[%s0 + $0x4f0] sm:$0xff]
  %v170 = vld [vmem:[%s0 + $0x4f8] sm:$0xff]
  %v171 = vld [vmem:[%s0 + $0x500] sm:$0xff]
  %v172 = vld [vmem:[%s0 + $0x508] sm:$0xff]
  %v173 = vld [vmem:[%s0 + $0x510] sm:$0xff]
  %v174 = vld [vmem:[%s0 + $0x518] sm:$0xff]
  %v175 = vld [vmem:[%s0 + $0x520] sm:$0xff]
  %v176 = vld [vmem:[%s0 + $0x528] sm:$0xff]
  %v177 = vld [vmem:[%s0 + $0x530] sm:$0xff]
  %v178 = vld [vmem:[%s0 + $0x538] sm:$0xff]
  %v179 = vld [vmem:[%s0 + $0x540] sm:$0xff]
  %v180 = vld [vmem:[%s0 + $0x548] sm:$0xff]
  %v181 = vld [vmem:[%s0 + $0x550] sm:$0xff]
  %v182 = vld [vmem:[%s0 + $0x558] sm:$0xff]
  %v183 = vld [vmem:[%s0 + $0x560] sm:$0xff]
  %v184 = vld [vmem:[%s0 + $0x568] sm:$0xff]
  %v185 = vld [vmem:[%s0 + $0x570] sm:$0xff]
  %v186 = vld [vmem:[%s0 + $0x578] sm:$0xff]
  %v187 = vld [vmem:[%s0 + $0x580] sm:$0xff]
  %v188 = vld [vmem:[%s0 + $0x588] sm:$0xff]
  %v189 = vld [vmem:[%s0 + $0x590] sm:$0xff]
  %v190 = vld [vmem:[%s0 + $0x598] sm:$0xff]
  %v191 = vld [vmem:[%s0 + $0x5a0] sm:$0xff]
  %v192 = vld [vmem:[%s0 + $0x5a8] sm:$0xff]
  %v193 = vld [vmem:[%s0 + $0x5b0] sm:$0xff]
  %v194 = vld [vmem:[%s0 + $0x5b8] sm:$0xff]
  %v195 = vld [vmem:[%s0 + $0x5c0] sm:$0xff]
  %v196 = vld [vmem:[%s0 + $0x5c8] sm:$0xff]
  %v197 = vld [vmem:[%s0 + $0x5d0] sm:$0xff]
  %v198 = vld [vmem:[%s0 + $0x5d8] sm:$0xff]
  %v199 = vld [vmem:[%s0 + $0x5e0] sm:$0xff]
  %v200 = vld [vmem:[%s0 + $0x5e8] sm:$0xff]
  %v201 = vld [vmem:[%s0 + $0x5f0] sm:$0xff]
  %v202 = vld [vmem:[%s0 + $0x5f8] sm:$0xff]
  %v203 = vld [vmem:[%s0 + $0x600] sm:$0xff]
  %v204 = vld [vmem:[%s0 + $0x608] sm:$0xff]
  %v205 = vld [vmem:[%s0 + $0x610] sm:$0xff]
  %v206 = vld [vmem:[%s0 + $0x618] sm:$0xff]
  %v207 = vld [vmem:[%s0 + $0x620] sm:$0xff]
  %v208 = vld [vmem:[%s0 + $0x628] sm:$0xff]
  %v209 = vld [vmem:[%s0 + $0x630] sm:$0xff]
  %v210 = vld [vmem:[%s0 + $0x638] sm:$0xff]
  %v211 = vld [vmem:[%s0 + $0x640] sm:$0xff]
  %v212 = vld [vmem:[%s0 + $0x648] sm:$0xff]
  %v213 = vld [vmem:[%s0 + $0x650] sm:$0xff]
  %v214 = vld [vmem:[%s0 + $0x658] sm:$0xff]
  %v215 = vld [vmem:[%s0 + $0x660] sm:$0xff]
  %v216 = vld [vmem:[%s0 + $0x668] sm:$0xff]
  %v217 = vld [vmem:[%s0 + $0x670] sm:$0xff]
  %v218 = vld [vmem:[%s0 + $0x678] sm:$0xff]
  %v219 = vld [vmem:[%s0 + $0x680] sm:$0xff]
  %v220 = vld [vmem:[%s0 + $0x688] sm:$0xff]
  %v221 = vld [vmem:[%s0 + $0x690] sm:$0xff]
  %v222 = vld [vmem:[%s0 + $0x698] sm:$0xff]
  %v223 = vld [vmem:[%s0 + $0x6a0] sm:$0xff]
  %v224 = vld [vmem:[%s0 + $0x6a8] sm:$0xff]
  %v225 = vld [vmem:[%s0 + $0x6b0] sm:$0xff]
  %v226 = vld [vmem:[%s0 + $0x6b8] sm:$0xff]
  %v227 = vld [vmem:[%s0 + $0x6c0] sm:$0xff]
  %v228 = vld [vmem:[%s0 + $0x6c8] sm:$0xff]
  %v229 = vld [vmem:[%s0 + $0x6d0] sm:$0xff]
  %v230 = vld [vmem:[%s0 + $0x6d8] sm:$0xff]
  %v231 = vld [vmem:[%s0 + $0x6e0] sm:$0xff]
  %v232 = vld [vmem:[%s0 + $0x6e8] sm:$0xff]
  %v233 = vld [vmem:[%s0 + $0x6f0] sm:$0xff]
  %v234 = vld [vmem:[%s0 + $0x6f8] sm:$0xff]
  %v235 = vld [vmem:[%s0 + $0x700] sm:$0xff]
  %v236 = vld [vmem:[%s0 + $0x708] sm:$0xff]
  %v237 = vld [vmem:[%s0 + $0x710] sm:$0xff]
  %v238 = vld [vmem:[%s0 + $0x718] sm:$0xff]
  %v239 = vld [vmem:[%s0 + $0x720] sm:$0xff]
  %v240 = vld [vmem:[%s0 + $0x728] sm:$0xff]
  %v241 = vld [vmem:[%s0 + $0x730] sm:$0xff]
  %v242 = vld [vmem:[%s0 + $0x738] sm:$0xff]
  %v243 = vld [vmem:[%s0 + $0x740] sm:$0xff]
  %v244 = vld [vmem:[%s0 + $0x748] sm:$0xff]
  %v245 = vld [vmem:[%s0 + $0x750] sm:$0xff]
  %v246 = vld [vmem:[%s0 + $0x758] sm:$0xff]
  %v247 = vld [vmem:[%s0 + $0x760] sm:$0xff]
  %v248 = vld [vmem:[%s0 + $0x768] sm:$0xff]
  %v249 = vld [vmem:[%s0 + $0x770] sm:$0xff]
  %v250 = vld [vmem:[%s0 + $0x778] sm:$0xff]
  %v251 = vld [vmem:[%s0 + $0x780] sm:$0xff]
  %v252 = vld [vmem:[%s0 + $0x788] sm:$0xff]
  %v253 = vld [vmem:[%s0 + $0x790] sm:$0xff]
  %v254 = vld [vmem:[%s0 + $0x798] sm:$0xff]
  %v255 = vld [vmem:[%s0 + $0x7a0] sm:$0xff]
  %v256 = vld [vmem:[%s0 + $0x7a8] sm:$0xff]
  %v257 = vld [vmem:[%s0 + $0x7b0] sm:$0xff]
  %v258 = vld [vmem:[%s0 + $0x7b8] sm:$0xff]
  %v259 = vld [vmem:[%s0 + $0x7c0] sm:$0xff]
  %v260 = vld [vmem:[%s0 + $0x7c8] sm:$0xff]
  %v261 = vld [vmem:[%s0 + $0x7d0] sm:$0xff]
  %v262 = vld [vmem:[%s0 + $0x7d8] sm:$0xff]
  %v263 = vld [vmem:[%s0 + $0x7e0] sm:$0xff]
  %v264 = vld [vmem:[%s0 + $0x7e8] sm:$0xff]
  %v265 = vld [vmem:[%s0 + $0x7f0] sm:$0xff]
  %v266 = vld [vmem:[%s0 + $0x7f8] sm:$0xff]
  %v267 = vld [vmem:[%s0 + $0x800] sm:$0xff]
  %v268 = vld [vmem:[%s0 + $0x808] sm:$0xff]
  %v269 = vld [vmem:[%s0 + $0x810] sm:$0xff]
  %v270 = vld [vmem:[%s0 + $0x818] sm:$0xff]
  %v271 = vld [vmem:[%s0 + $0x820] sm:$0xff]
  %v272 = vld [vmem:[%s0 + $0x828] sm:$0xff]
  %v273 = vld [vmem:[%s0 + $0x830] sm:$0xff]
  %v274 = vld [vmem:[%s0 + $0x838] sm:$0xff]
  %v275 = vld [vmem:[%s0 + $0x840] sm:$0xff]
  %v276 = vld [vmem:[%s0 + $0x848] sm:$0xff]
  %v277 = vld [vmem:[%s0 + $0x850] sm:$0xff]
  %v278 = vld [vmem:[%s0 + $0x858] sm:$0xff]
  %v279 = vld [vmem:[%s0 + $0x860] sm:$0xff]
  %v280 = vld [vmem:[%s0 + $0x868] sm:$0xff]
  %v281 = vld [vmem:[%s0 + $0x870] sm:$0xff]
  %v282 = vld [vmem:[%s0 + $0x878] sm:$0xff]
  %v283 = vld [vmem:[%s0 + $0x880] sm:$0xff]
  %v284 = vld [vmem:[%s0 + $0x888] sm:$0xff]
  %v285 = vld [vmem:[%s0 + $0x890] sm:$0xff]
  %v286 = vld [vmem:[%s0 + $0x898] sm:$0xff]
  %v287 = vld [vmem:[%s0 + $0x8a0] sm:$0xff]
  %v288 = vld [vmem:[%s0 + $0x8a8] sm:$0xff]
  %v289 = vld [vmem:[%s0 + $0x8b0] sm:$0xff]
  %v290 = vld [vmem:[%s0 + $0x8b8] sm:$0xff]
  %v291 = vld [vmem:[%s0 + $0x8c0] sm:$0xff]
  %v292 = vld [vmem:[%s0 + $0x8c8] sm:$0xff]
  %v293 = vld [vmem:[%s0 + $0x8d0] sm:$0xff]
  %v294 = vld [vmem:[%s0 + $0x8d8] sm:$0xff]
  %v295 = vld [vmem:[%s0 + $0x8e0] sm:$0xff]
  %v296 = vld [vmem:[%s0 + $0x8e8] sm:$0xff]
  %v297 = vld [vmem:[%s0 + $0x8f0] sm:$0xff]
  %v298 = vld [vmem:[%s0 + $0x8f8] sm:$0xff]
  %v299 = vld [vmem:[%s0 + $0x900] sm:$0xff]
  %v300 = vld [vmem:[%s0 + $0x908] sm:$0xff]
  %v301 = vld [vmem:[%s0 + $0x910] sm:$0xff]
  %v302 = vld [vmem:[%s0 + $0x918] sm:$0xff]
  %v303 = vld [vmem:[%s0 + $0x920] sm:$0xff]
  %v304 = vld [vmem:[%s0 + $0x928] sm:$0xff]
  %v305 = vld [vmem:[%s0 + $0x930] sm:$0xff]
  %v306 = vld [vmem:[%s0 + $0x938] sm:$0xff]
  %v307 = vld [vmem:[%s0 + $0x940] sm:$0xff]
  %v308 = vld [vmem:[%s0 + $0x948] sm:$0xff]
  %v309 = vld [vmem:[%s0 + $0x950] sm:$0xff]
  %v310 = vld [vmem:[%s0 + $0x958] sm:$0xff]
  %v311 = vld [vmem:[%s1] sm:$0xff]
  %v312 = vld [vmem:[%s1 + $0x8] sm:$0xff]
  %v313 = vld [vmem:[%s1 + $0x10] sm:$0xff]
  %v314 = vld [vmem:[%s1 + $0x18] sm:$0xff]
  %v315 = vld [vmem:[%s1 + $0x20] sm:$0xff]
  %v316 = vld [vmem:[%s1 + $0x28] sm:$0xff]
  %v317 = vld [vmem:[%s1 + $0x30] sm:$0xff]
  %v318 = vld [vmem:[%s1 + $0x38] sm:$0xff]
  %v319 = vld [vmem:[%s1 + $0x40] sm:$0xff]
  %v320 = vld [vmem:[%s1 + $0x48] sm:$0xff]
  %v321 = vld [vmem:[%s1 + $0x50] sm:$0xff]
  %v322 = vld [vmem:[%s1 + $0x58] sm:$0xff]
  %v323 = vld [vmem:[%s1 + $0x60] sm:$0xff]
  %v324 = vld [vmem:[%s1 + $0x68] sm:$0xff]
  %v325 = vld [vmem:[%s1 + $0x70] sm:$0xff]
  %v326 = vld [vmem:[%s1 + $0x78] sm:$0xff]
  %v327 = vld [vmem:[%s1 + $0x80] sm:$0xff]
  %v328 = vld [vmem:[%s1 + $0x88] sm:$0xff]
  %v329 = vld [vmem:[%s1 + $0x90] sm:$0xff]
  %v330 = vld [vmem:[%s1 + $0x98] sm:$0xff]
  %v331 = vld [vmem:[%s1 + $0xa0] sm:$0xff]
  %v332 = vld [vmem:[%s1 + $0xa8] sm:$0xff]
  %v333 = vld [vmem:[%s1 + $0xb0] sm:$0xff]
  %v334 = vld [vmem:[%s1 + $0xb8] sm:$0xff]
  %v335 = vld [vmem:[%s1 + $0xc0] sm:$0xff]
  %v336 = vld [vmem:[%s1 + $0xc8] sm:$0xff]
  %v337 = vld [vmem:[%s1 + $0xd0] sm:$0xff]
  %v338 = vld [vmem:[%s1 + $0xd8] sm:$0xff]
  %v339 = vld [vmem:[%s1 + $0xe0] sm:$0xff]
  %v340 = vld [vmem:[%s1 + $0xe8] sm:$0xff]
  %v341 = vld [vmem:[%s1 + $0xf0] sm:$0xff]
  %v342 = vld [vmem:[%s1 + $0xf8] sm:$0xff]
  %v343 = vld [vmem:[%s1 + $0x100] sm:$0xff]
  %v344 = vld [vmem:[%s1 + $0x108] sm:$0xff]
  %v345 = vld [vmem:[%s1 + $0x110] sm:$0xff]
  %v346 = vld [vmem:[%s1 + $0x118] sm:$0xff]
  %vm347 = vcmask 261120
  %v349 = vsel %vm347, %v13, 0
  %v352 = vsel %vm347, %v16, 0
  %v355 = vsel %vm347, %v19, 0
  %v358 = vsel %vm347, %v22, 0
  %v361 = vsel %vm347, %v25, 0
  %v364 = vsel %vm347, %v28, 0
  %v367 = vsel %vm347, %v31, 0
  %v370 = vsel %vm347, %v34, 0
  %v373 = vsel %vm347, %v37, 0
  %v376 = vsel %vm347, %v40, 0
  %v379 = vsel %vm347, %v43, 0
  %v382 = vsel %vm347, %v46, 0
  %v385 = vsel %vm347, %v49, 0
  %v388 = vsel %vm347, %v52, 0
  %v391 = vsel %vm347, %v55, 0
  %v394 = vsel %vm347, %v58, 0
  %v397 = vsel %vm347, %v61, 0
  %v400 = vsel %vm347, %v64, 0
  %v403 = vsel %vm347, %v67, 0
  %v406 = vsel %vm347, %v70, 0
  %v409 = vsel %vm347, %v73, 0
  %v412 = vsel %vm347, %v76, 0
  %v415 = vsel %vm347, %v79, 0
  %v418 = vsel %vm347, %v82, 0
  %v421 = vsel %vm347, %v85, 0
  %v424 = vsel %vm347, %v88, 0
  %v427 = vsel %vm347, %v91, 0
  %v430 = vsel %vm347, %v94, 0
  %v433 = vsel %vm347, %v97, 0
  %v436 = vsel %vm347, %v100, 0
  %v439 = vsel %vm347, %v103, 0
  %v442 = vsel %vm347, %v106, 0
  %v445 = vsel %vm347, %v109, 0
  %v448 = vsel %vm347, %v112, 0
  %v451 = vsel %vm347, %v115, 0
  %v454 = vsel %vm347, %v118, 0
  %v457 = vsel %vm347, %v121, 0
  %v460 = vsel %vm347, %v124, 0
  %v463 = vsel %vm347, %v127, 0
  %v466 = vsel %vm347, %v130, 0
  %v469 = vsel %vm347, %v133, 0
  %v472 = vsel %vm347, %v136, 0
  %v475 = vsel %vm347, %v139, 0
  %v478 = vsel %vm347, %v142, 0
  %v481 = vsel %vm347, %v145, 0
  %v484 = vsel %vm347, %v148, 0
  %v487 = vsel %vm347, %v151, 0
  %v490 = vsel %vm347, %v154, 0
  %v493 = vsel %vm347, %v157, 0
  %v496 = vsel %vm347, %v160, 0
  %v499 = vsel %vm347, %v163, 0
  %v502 = vsel %vm347, %v166, 0
  %v505 = vsel %vm347, %v169, 0
  %v508 = vsel %vm347, %v172, 0
  %v511 = vsel %vm347, %v175, 0
  %v514 = vsel %vm347, %v178, 0
  %v517 = vsel %vm347, %v181, 0
  %v520 = vsel %vm347, %v184, 0
  %v523 = vsel %vm347, %v187, 0
  %v526 = vsel %vm347, %v190, 0
  %v529 = vsel %vm347, %v193, 0
  %v532 = vsel %vm347, %v196, 0
  %v535 = vsel %vm347, %v199, 0
  %v538 = vsel %vm347, %v202, 0
  %v541 = vsel %vm347, %v205, 0
  %v544 = vsel %vm347, %v208, 0
  %v547 = vsel %vm347, %v211, 0
  %v550 = vsel %vm347, %v214, 0
  %v553 = vsel %vm347, %v217, 0
  %v556 = vsel %vm347, %v220, 0
  %v559 = vsel %vm347, %v223, 0
  %v562 = vsel %vm347, %v226, 0
  %v565 = vsel %vm347, %v229, 0
  %v568 = vsel %vm347, %v232, 0
  %v571 = vsel %vm347, %v235, 0
  %v574 = vsel %vm347, %v238, 0
  %v577 = vsel %vm347, %v241, 0
  %v580 = vsel %vm347, %v244, 0
  %v583 = vsel %vm347, %v247, 0
  %v586 = vsel %vm347, %v250, 0
  %v589 = vsel %vm347, %v253, 0
  %v592 = vsel %vm347, %v256, 0
  %v595 = vsel %vm347, %v259, 0
  %v598 = vsel %vm347, %v262, 0
  %v601 = vsel %vm347, %v265, 0
  %v604 = vsel %vm347, %v268, 0
  %v607 = vsel %vm347, %v271, 0
  %v610 = vsel %vm347, %v274, 0
  %v613 = vsel %vm347, %v277, 0
  %v616 = vsel %vm347, %v280, 0
  %v619 = vsel %vm347, %v283, 0
  %v622 = vsel %vm347, %v286, 0
  %v625 = vsel %vm347, %v289, 0
  %v628 = vsel %vm347, %v292, 0
  %v631 = vsel %vm347, %v295, 0
  %v634 = vsel %vm347, %v298, 0
  %v637 = vsel %vm347, %v301, 0
  %v640 = vsel %vm347, %v304, 0
  %v643 = vsel %vm347, %v307, 0
  %v646 = vsel %vm347, %v310, 0
  %648 = vmatprep.subr.mxu0 0.0
  %649 = vmatpush1.msra.mxu0 %v326
  %650 = vmatprep.subr.mxu0 0.0
  %651 = vmatpush1.msra.mxu0 %v325
  %652 = vmatprep.subr.mxu0 0.0
  %653 = vmatpush1.msra.mxu0 %v324
  %654 = vmatprep.subr.mxu0 0.0
  %655 = vmatpush1.msra.mxu0 %v323
  %656 = vmatprep.subr.mxu0 0.0
  %657 = vmatpush1.msra.mxu0 %v322
  %658 = vmatprep.subr.mxu0 0.0
  %659 = vmatpush1.msra.mxu0 %v321
  %660 = vmatprep.subr.mxu0 0.0
  %661 = vmatpush1.msra.mxu0 %v320
  %662 = vmatprep.subr.mxu0 0.0
  %663 = vmatpush1.msra.mxu0 %v319
  %664 = vmatprep.subr.mxu0 0.0
  %665 = vmatpush1.msra.mxu0 %v318
  %666 = vmatprep.subr.mxu0 0.0
  %667 = vmatpush1.msra.mxu0 %v317
  %668 = vmatprep.subr.mxu0 0.0
  %669 = vmatpush1.msra.mxu0 %v316
  %670 = vmatprep.subr.mxu0 0.0
  %671 = vmatpush1.msra.mxu0 %v315
  %672 = vmatprep.subr.mxu0 0.0
  %673 = vmatpush1.msra.mxu0 %v314
  %674 = vmatprep.subr.mxu0 0.0
  %675 = vmatpush1.msra.mxu0 %v313
  %676 = vmatprep.subr.mxu0 0.0
  %677 = vmatpush1.msra.mxu0 %v312
  %678 = vmatprep.subr.mxu0 0.0
  %679 = vmatpush1.msra.mxu0 %v311
  %680 = vmatprep.subr.mxu0 0.0
  %681 = vmatpush2.msra.mxu0 %v342
  %682 = vmatprep.subr.mxu0 0.0
  %683 = vmatpush2.msra.mxu0 %v341
  %684 = vmatprep.subr.mxu0 0.0
  %685 = vmatpush2.msra.mxu0 %v340
  %686 = vmatprep.subr.mxu0 0.0
  %687 = vmatpush2.msra.mxu0 %v339
  %688 = vmatprep.subr.mxu0 0.0
  %689 = vmatpush2.msra.mxu0 %v338
  %690 = vmatprep.subr.mxu0 0.0
  %691 = vmatpush2.msra.mxu0 %v337
  %692 = vmatprep.subr.mxu0 0.0
  %693 = vmatpush2.msra.mxu0 %v336
  %694 = vmatprep.subr.mxu0 0.0
  %695 = vmatpush2.msra.mxu0 %v335
  %696 = vmatprep.subr.mxu0 0.0
  %697 = vmatpush2.msra.mxu0 %v334
  %698 = vmatprep.subr.mxu0 0.0
  %699 = vmatpush2.msra.mxu0 %v333
  %700 = vmatprep.subr.mxu0 0.0
  %701 = vmatpush2.msra.mxu0 %v332
  %702 = vmatprep.subr.mxu0 0.0
  %703 = vmatpush2.msra.mxu0 %v331
  %704 = vmatprep.subr.mxu0 0.0
  %705 = vmatpush2.msra.mxu0 %v330
  %706 = vmatprep.subr.mxu0 0.0
  %707 = vmatpush2.msra.mxu0 %v329
  %708 = vmatprep.subr.mxu0 0.0
  %709 = vmatpush2.msra.mxu0 %v328
  %710 = vmatprep.subr.mxu0 0.0
  %711 = vmatpush2.msra.mxu0 %v327
  %712 = vmatprep.mubr.f32.mxu0 %v12
  %713 = vmatmul.mubr.f32.gmra.mxu0 %v11
  %v714 = vpop.f32.mrf.mxu0
  %v715 = vadd.f32 0.0, %v714
  %v716 = vpop.f32.mrf.mxu0
  %717 = vmatprep.mubr.f32.mxu0 %v15
  %718 = vmatmul.mubr.f32.gmra.mxu0 %v14
  %v719 = vpop.f32.mrf.mxu0
  %v720 = vadd.f32 0.0, %v719
  %v721 = vpop.f32.mrf.mxu0
  %722 = vmatprep.mubr.f32.mxu0 %v18
  %723 = vmatmul.mubr.f32.gmra.mxu0 %v17
  %v724 = vpop.f32.mrf.mxu0
  %v725 = vadd.f32 0.0, %v724
  %v726 = vpop.f32.mrf.mxu0
  %727 = vmatprep.mubr.f32.mxu0 %v21
  %728 = vmatmul.mubr.f32.gmra.mxu0 %v20
  %v729 = vpop.f32.mrf.mxu0
  %v730 = vadd.f32 0.0, %v729
  %v731 = vpop.f32.mrf.mxu0
  %732 = vmatprep.mubr.f32.mxu0 %v24
  %733 = vmatmul.mubr.f32.gmra.mxu0 %v23
  %v734 = vpop.f32.mrf.mxu0
  %v735 = vadd.f32 0.0, %v734
  %v736 = vpop.f32.mrf.mxu0
  %737 = vmatprep.mubr.f32.mxu0 %v27
  %738 = vmatmul.mubr.f32.gmra.mxu0 %v26
  %v739 = vpop.f32.mrf.mxu0
  %v740 = vadd.f32 0.0, %v739
  %v741 = vpop.f32.mrf.mxu0
  %742 = vmatprep.mubr.f32.mxu0 %v30
  %743 = vmatmul.mubr.f32.gmra.mxu0 %v29
  %v744 = vpop.f32.mrf.mxu0
  %v745 = vadd.f32 0.0, %v744
  %v746 = vpop.f32.mrf.mxu0
  %747 = vmatprep.mubr.f32.mxu0 %v33
  %748 = vmatmul.mubr.f32.gmra.mxu0 %v32
  %v749 = vpop.f32.mrf.mxu0
  %v750 = vadd.f32 0.0, %v749
  %v751 = vpop.f32.mrf.mxu0
  %752 = vmatprep.mubr.f32.mxu0 %v36
  %753 = vmatmul.mubr.f32.gmra.mxu0 %v35
  %v754 = vpop.f32.mrf.mxu0
  %v755 = vadd.f32 0.0, %v754
  %v756 = vpop.f32.mrf.mxu0
  %757 = vmatprep.mubr.f32.mxu0 %v39
  %758 = vmatmul.mubr.f32.gmra.mxu0 %v38
  %v759 = vpop.f32.mrf.mxu0
  %v760 = vadd.f32 0.0, %v759
  %v761 = vpop.f32.mrf.mxu0
  %762 = vmatprep.mubr.f32.mxu0 %v42
  %763 = vmatmul.mubr.f32.gmra.mxu0 %v41
  %v764 = vpop.f32.mrf.mxu0
  %v765 = vadd.f32 0.0, %v764
  %v766 = vpop.f32.mrf.mxu0
  %767 = vmatprep.mubr.f32.mxu0 %v45
  %768 = vmatmul.mubr.f32.gmra.mxu0 %v44
  %v769 = vpop.f32.mrf.mxu0
  %v770 = vadd.f32 0.0, %v769
  %v771 = vpop.f32.mrf.mxu0
  %772 = vmatprep.mubr.f32.mxu0 %v48
  %773 = vmatmul.mubr.f32.gmra.mxu0 %v47
  %v774 = vpop.f32.mrf.mxu0
  %v775 = vadd.f32 0.0, %v774
  %v776 = vpop.f32.mrf.mxu0
  %777 = vmatprep.mubr.f32.mxu0 %v51
  %778 = vmatmul.mubr.f32.gmra.mxu0 %v50
  %v779 = vpop.f32.mrf.mxu0
  %v780 = vadd.f32 0.0, %v779
  %v781 = vpop.f32.mrf.mxu0
  %782 = vmatprep.mubr.f32.mxu0 %v54
  %783 = vmatmul.mubr.f32.gmra.mxu0 %v53
  %v784 = vpop.f32.mrf.mxu0
  %v785 = vadd.f32 0.0, %v784
  %v786 = vpop.f32.mrf.mxu0
  %787 = vmatprep.mubr.f32.mxu0 %v57
  %788 = vmatmul.mubr.f32.gmra.mxu0 %v56
  %v789 = vpop.f32.mrf.mxu0
  %v790 = vadd.f32 0.0, %v789
  %v791 = vpop.f32.mrf.mxu0
  %792 = vmatprep.mubr.f32.mxu0 %v60
  %793 = vmatmul.mubr.f32.gmra.mxu0 %v59
  %v794 = vpop.f32.mrf.mxu0
  %v795 = vadd.f32 0.0, %v794
  %v796 = vpop.f32.mrf.mxu0
  %797 = vmatprep.mubr.f32.mxu0 %v63
  %798 = vmatmul.mubr.f32.gmra.mxu0 %v62
  %v799 = vpop.f32.mrf.mxu0
  %v800 = vadd.f32 0.0, %v799
  %v801 = vpop.f32.mrf.mxu0
  %802 = vmatprep.mubr.f32.mxu0 %v66
  %803 = vmatmul.mubr.f32.gmra.mxu0 %v65
  %v804 = vpop.f32.mrf.mxu0
  %v805 = vadd.f32 0.0, %v804
  %v806 = vpop.f32.mrf.mxu0
  %807 = vmatprep.mubr.f32.mxu0 %v69
  %808 = vmatmul.mubr.f32.gmra.mxu0 %v68
  %v809 = vpop.f32.mrf.mxu0
  %v810 = vadd.f32 0.0, %v809
  %v811 = vpop.f32.mrf.mxu0
  %812 = vmatprep.mubr.f32.mxu0 %v72
  %813 = vmatmul.mubr.f32.gmra.mxu0 %v71
  %v814 = vpop.f32.mrf.mxu0
  %v815 = vadd.f32 0.0, %v814
  %v816 = vpop.f32.mrf.mxu0
  %817 = vmatprep.mubr.f32.mxu0 %v75
  %818 = vmatmul.mubr.f32.gmra.mxu0 %v74
  %v819 = vpop.f32.mrf.mxu0
  %v820 = vadd.f32 0.0, %v819
  %v821 = vpop.f32.mrf.mxu0
  %822 = vmatprep.mubr.f32.mxu0 %v78
  %823 = vmatmul.mubr.f32.gmra.mxu0 %v77
  %v824 = vpop.f32.mrf.mxu0
  %v825 = vadd.f32 0.0, %v824
  %v826 = vpop.f32.mrf.mxu0
  %827 = vmatprep.mubr.f32.mxu0 %v81
  %828 = vmatmul.mubr.f32.gmra.mxu0 %v80
  %v829 = vpop.f32.mrf.mxu0
  %v830 = vadd.f32 0.0, %v829
  %v831 = vpop.f32.mrf.mxu0
  %832 = vmatprep.mubr.f32.mxu0 %v84
  %833 = vmatmul.mubr.f32.gmra.mxu0 %v83
  %v834 = vpop.f32.mrf.mxu0
  %v835 = vadd.f32 0.0, %v834
  %v836 = vpop.f32.mrf.mxu0
  %837 = vmatprep.mubr.f32.mxu0 %v87
  %838 = vmatmul.mubr.f32.gmra.mxu0 %v86
  %v839 = vpop.f32.mrf.mxu0
  %v840 = vadd.f32 0.0, %v839
  %v841 = vpop.f32.mrf.mxu0
  %842 = vmatprep.mubr.f32.mxu0 %v90
  %843 = vmatmul.mubr.f32.gmra.mxu0 %v89
  %v844 = vpop.f32.mrf.mxu0
  %v845 = vadd.f32 0.0, %v844
  %v846 = vpop.f32.mrf.mxu0
  %847 = vmatprep.mubr.f32.mxu0 %v93
  %848 = vmatmul.mubr.f32.gmra.mxu0 %v92
  %v849 = vpop.f32.mrf.mxu0
  %v850 = vadd.f32 0.0, %v849
  %v851 = vpop.f32.mrf.mxu0
  %852 = vmatprep.mubr.f32.mxu0 %v96
  %853 = vmatmul.mubr.f32.gmra.mxu0 %v95
  %v854 = vpop.f32.mrf.mxu0
  %v855 = vadd.f32 0.0, %v854
  %v856 = vpop.f32.mrf.mxu0
  %857 = vmatprep.mubr.f32.mxu0 %v99
  %858 = vmatmul.mubr.f32.gmra.mxu0 %v98
  %v859 = vpop.f32.mrf.mxu0
  %v860 = vadd.f32 0.0, %v859
  %v861 = vpop.f32.mrf.mxu0
  %862 = vmatprep.mubr.f32.mxu0 %v102
  %863 = vmatmul.mubr.f32.gmra.mxu0 %v101
  %v864 = vpop.f32.mrf.mxu0
  %v865 = vadd.f32 0.0, %v864
  %v866 = vpop.f32.mrf.mxu0
  %867 = vmatprep.mubr.f32.mxu0 %v105
  %868 = vmatmul.mubr.f32.gmra.mxu0 %v104
  %v869 = vpop.f32.mrf.mxu0
  %v870 = vadd.f32 0.0, %v869
  %v871 = vpop.f32.mrf.mxu0
  %872 = vmatprep.mubr.f32.mxu0 %v108
  %873 = vmatmul.mubr.f32.gmra.mxu0 %v107
  %v874 = vpop.f32.mrf.mxu0
  %v875 = vadd.f32 0.0, %v874
  %v876 = vpop.f32.mrf.mxu0
  %877 = vmatprep.mubr.f32.mxu0 %v111
  %878 = vmatmul.mubr.f32.gmra.mxu0 %v110
  %v879 = vpop.f32.mrf.mxu0
  %v880 = vadd.f32 0.0, %v879
  %v881 = vpop.f32.mrf.mxu0
  %882 = vmatprep.mubr.f32.mxu0 %v114
  %883 = vmatmul.mubr.f32.gmra.mxu0 %v113
  %v884 = vpop.f32.mrf.mxu0
  %v885 = vadd.f32 0.0, %v884
  %v886 = vpop.f32.mrf.mxu0
  %887 = vmatprep.mubr.f32.mxu0 %v117
  %888 = vmatmul.mubr.f32.gmra.mxu0 %v116
  %v889 = vpop.f32.mrf.mxu0
  %v890 = vadd.f32 0.0, %v889
  %v891 = vpop.f32.mrf.mxu0
  %892 = vmatprep.mubr.f32.mxu0 %v120
  %893 = vmatmul.mubr.f32.gmra.mxu0 %v119
  %v894 = vpop.f32.mrf.mxu0
  %v895 = vadd.f32 0.0, %v894
  %v896 = vpop.f32.mrf.mxu0
  %897 = vmatprep.mubr.f32.mxu0 %v123
  %898 = vmatmul.mubr.f32.gmra.mxu0 %v122
  %v899 = vpop.f32.mrf.mxu0
  %v900 = vadd.f32 0.0, %v899
  %v901 = vpop.f32.mrf.mxu0
  %902 = vmatprep.mubr.f32.mxu0 %v126
  %903 = vmatmul.mubr.f32.gmra.mxu0 %v125
  %v904 = vpop.f32.mrf.mxu0
  %v905 = vadd.f32 0.0, %v904
  %v906 = vpop.f32.mrf.mxu0
  %907 = vmatprep.mubr.f32.mxu0 %v129
  %908 = vmatmul.mubr.f32.gmra.mxu0 %v128
  %v909 = vpop.f32.mrf.mxu0
  %v910 = vadd.f32 0.0, %v909
  %v911 = vpop.f32.mrf.mxu0
  %912 = vmatprep.mubr.f32.mxu0 %v132
  %913 = vmatmul.mubr.f32.gmra.mxu0 %v131
  %v914 = vpop.f32.mrf.mxu0
  %v915 = vadd.f32 0.0, %v914
  %v916 = vpop.f32.mrf.mxu0
  %917 = vmatprep.mubr.f32.mxu0 %v135
  %918 = vmatmul.mubr.f32.gmra.mxu0 %v134
  %v919 = vpop.f32.mrf.mxu0
  %v920 = vadd.f32 0.0, %v919
  %v921 = vpop.f32.mrf.mxu0
  %922 = vmatprep.mubr.f32.mxu0 %v138
  %923 = vmatmul.mubr.f32.gmra.mxu0 %v137
  %v924 = vpop.f32.mrf.mxu0
  %v925 = vadd.f32 0.0, %v924
  %v926 = vpop.f32.mrf.mxu0
  %927 = vmatprep.mubr.f32.mxu0 %v141
  %928 = vmatmul.mubr.f32.gmra.mxu0 %v140
  %v929 = vpop.f32.mrf.mxu0
  %v930 = vadd.f32 0.0, %v929
  %v931 = vpop.f32.mrf.mxu0
  %932 = vmatprep.mubr.f32.mxu0 %v144
  %933 = vmatmul.mubr.f32.gmra.mxu0 %v143
  %v934 = vpop.f32.mrf.mxu0
  %v935 = vadd.f32 0.0, %v934
  %v936 = vpop.f32.mrf.mxu0
  %937 = vmatprep.mubr.f32.mxu0 %v147
  %938 = vmatmul.mubr.f32.gmra.mxu0 %v146
  %v939 = vpop.f32.mrf.mxu0
  %v940 = vadd.f32 0.0, %v939
  %v941 = vpop.f32.mrf.mxu0
  %942 = vmatprep.mubr.f32.mxu0 %v150
  %943 = vmatmul.mubr.f32.gmra.mxu0 %v149
  %v944 = vpop.f32.mrf.mxu0
  %v945 = vadd.f32 0.0, %v944
  %v946 = vpop.f32.mrf.mxu0
  %947 = vmatprep.mubr.f32.mxu0 %v153
  %948 = vmatmul.mubr.f32.gmra.mxu0 %v152
  %v949 = vpop.f32.mrf.mxu0
  %v950 = vadd.f32 0.0, %v949
  %v951 = vpop.f32.mrf.mxu0
  %952 = vmatprep.mubr.f32.mxu0 %v156
  %953 = vmatmul.mubr.f32.gmra.mxu0 %v155
  %v954 = vpop.f32.mrf.mxu0
  %v955 = vadd.f32 0.0, %v954
  %v956 = vpop.f32.mrf.mxu0
  %957 = vmatprep.mubr.f32.mxu0 %v159
  %958 = vmatmul.mubr.f32.gmra.mxu0 %v158
  %v959 = vpop.f32.mrf.mxu0
  %v960 = vadd.f32 0.0, %v959
  %v961 = vpop.f32.mrf.mxu0
  %962 = vmatprep.mubr.f32.mxu0 %v162
  %963 = vmatmul.mubr.f32.gmra.mxu0 %v161
  %v964 = vpop.f32.mrf.mxu0
  %v965 = vadd.f32 0.0, %v964
  %v966 = vpop.f32.mrf.mxu0
  %967 = vmatprep.mubr.f32.mxu0 %v165
  %968 = vmatmul.mubr.f32.gmra.mxu0 %v164
  %v969 = vpop.f32.mrf.mxu0
  %v970 = vadd.f32 0.0, %v969
  %v971 = vpop.f32.mrf.mxu0
  %972 = vmatprep.mubr.f32.mxu0 %v168
  %973 = vmatmul.mubr.f32.gmra.mxu0 %v167
  %v974 = vpop.f32.mrf.mxu0
  %v975 = vadd.f32 0.0, %v974
  %v976 = vpop.f32.mrf.mxu0
  %977 = vmatprep.mubr.f32.mxu0 %v171
  %978 = vmatmul.mubr.f32.gmra.mxu0 %v170
  %v979 = vpop.f32.mrf.mxu0
  %v980 = vadd.f32 0.0, %v979
  %v981 = vpop.f32.mrf.mxu0
  %982 = vmatprep.mubr.f32.mxu0 %v174
  %983 = vmatmul.mubr.f32.gmra.mxu0 %v173
  %v984 = vpop.f32.mrf.mxu0
  %v985 = vadd.f32 0.0, %v984
  %v986 = vpop.f32.mrf.mxu0
  %987 = vmatprep.mubr.f32.mxu0 %v177
  %988 = vmatmul.mubr.f32.gmra.mxu0 %v176
  %v989 = vpop.f32.mrf.mxu0
  %v990 = vadd.f32 0.0, %v989
  %v991 = vpop.f32.mrf.mxu0
  %992 = vmatprep.mubr.f32.mxu0 %v180
  %993 = vmatmul.mubr.f32.gmra.mxu0 %v179
  %v994 = vpop.f32.mrf.mxu0
  %v995 = vadd.f32 0.0, %v994
  %v996 = vpop.f32.mrf.mxu0
  %997 = vmatprep.mubr.f32.mxu0 %v183
  %998 = vmatmul.mubr.f32.gmra.mxu0 %v182
  %v999 = vpop.f32.mrf.mxu0
  %v1000 = vadd.f32 0.0, %v999
  %v1001 = vpop.f32.mrf.mxu0
  %1002 = vmatprep.mubr.f32.mxu0 %v186
  %1003 = vmatmul.mubr.f32.gmra.mxu0 %v185
  %v1004 = vpop.f32.mrf.mxu0
  %v1005 = vadd.f32 0.0, %v1004
  %v1006 = vpop.f32.mrf.mxu0
  %1007 = vmatprep.mubr.f32.mxu0 %v189
  %1008 = vmatmul.mubr.f32.gmra.mxu0 %v188
  %v1009 = vpop.f32.mrf.mxu0
  %v1010 = vadd.f32 0.0, %v1009
  %v1011 = vpop.f32.mrf.mxu0
  %1012 = vmatprep.mubr.f32.mxu0 %v192
  %1013 = vmatmul.mubr.f32.gmra.mxu0 %v191
  %v1014 = vpop.f32.mrf.mxu0
  %v1015 = vadd.f32 0.0, %v1014
  %v1016 = vpop.f32.mrf.mxu0
  %1017 = vmatprep.mubr.f32.mxu0 %v195
  %1018 = vmatmul.mubr.f32.gmra.mxu0 %v194
  %v1019 = vpop.f32.mrf.mxu0
  %v1020 = vadd.f32 0.0, %v1019
  %v1021 = vpop.f32.mrf.mxu0
  %1022 = vmatprep.mubr.f32.mxu0 %v198
  %1023 = vmatmul.mubr.f32.gmra.mxu0 %v197
  %v1024 = vpop.f32.mrf.mxu0
  %v1025 = vadd.f32 0.0, %v1024
  %v1026 = vpop.f32.mrf.mxu0
  %1027 = vmatprep.mubr.f32.mxu0 %v201
  %1028 = vmatmul.mubr.f32.gmra.mxu0 %v200
  %v1029 = vpop.f32.mrf.mxu0
  %v1030 = vadd.f32 0.0, %v1029
  %v1031 = vpop.f32.mrf.mxu0
  %1032 = vmatprep.mubr.f32.mxu0 %v204
  %1033 = vmatmul.mubr.f32.gmra.mxu0 %v203
  %v1034 = vpop.f32.mrf.mxu0
  %v1035 = vadd.f32 0.0, %v1034
  %v1036 = vpop.f32.mrf.mxu0
  %1037 = vmatprep.mubr.f32.mxu0 %v207
  %1038 = vmatmul.mubr.f32.gmra.mxu0 %v206
  %v1039 = vpop.f32.mrf.mxu0
  %v1040 = vadd.f32 0.0, %v1039
  %v1041 = vpop.f32.mrf.mxu0
  %1042 = vmatprep.mubr.f32.mxu0 %v210
  %1043 = vmatmul.mubr.f32.gmra.mxu0 %v209
  %v1044 = vpop.f32.mrf.mxu0
  %v1045 = vadd.f32 0.0, %v1044
  %v1046 = vpop.f32.mrf.mxu0
  %1047 = vmatprep.mubr.f32.mxu0 %v213
  %1048 = vmatmul.mubr.f32.gmra.mxu0 %v212
  %v1049 = vpop.f32.mrf.mxu0
  %v1050 = vadd.f32 0.0, %v1049
  %v1051 = vpop.f32.mrf.mxu0
  %1052 = vmatprep.mubr.f32.mxu0 %v216
  %1053 = vmatmul.mubr.f32.gmra.mxu0 %v215
  %v1054 = vpop.f32.mrf.mxu0
  %v1055 = vadd.f32 0.0, %v1054
  %v1056 = vpop.f32.mrf.mxu0
  %1057 = vmatprep.mubr.f32.mxu0 %v219
  %1058 = vmatmul.mubr.f32.gmra.mxu0 %v218
  %v1059 = vpop.f32.mrf.mxu0
  %v1060 = vadd.f32 0.0, %v1059
  %v1061 = vpop.f32.mrf.mxu0
  %1062 = vmatprep.mubr.f32.mxu0 %v222
  %1063 = vmatmul.mubr.f32.gmra.mxu0 %v221
  %v1064 = vpop.f32.mrf.mxu0
  %v1065 = vadd.f32 0.0, %v1064
  %v1066 = vpop.f32.mrf.mxu0
  %1067 = vmatprep.mubr.f32.mxu0 %v225
  %1068 = vmatmul.mubr.f32.gmra.mxu0 %v224
  %v1069 = vpop.f32.mrf.mxu0
  %v1070 = vadd.f32 0.0, %v1069
  %v1071 = vpop.f32.mrf.mxu0
  %1072 = vmatprep.mubr.f32.mxu0 %v228
  %1073 = vmatmul.mubr.f32.gmra.mxu0 %v227
  %v1074 = vpop.f32.mrf.mxu0
  %v1075 = vadd.f32 0.0, %v1074
  %v1076 = vpop.f32.mrf.mxu0
  %1077 = vmatprep.mubr.f32.mxu0 %v231
  %1078 = vmatmul.mubr.f32.gmra.mxu0 %v230
  %v1079 = vpop.f32.mrf.mxu0
  %v1080 = vadd.f32 0.0, %v1079
  %v1081 = vpop.f32.mrf.mxu0
  %1082 = vmatprep.mubr.f32.mxu0 %v234
  %1083 = vmatmul.mubr.f32.gmra.mxu0 %v233
  %v1084 = vpop.f32.mrf.mxu0
  %v1085 = vadd.f32 0.0, %v1084
  %v1086 = vpop.f32.mrf.mxu0
  %1087 = vmatprep.mubr.f32.mxu0 %v237
  %1088 = vmatmul.mubr.f32.gmra.mxu0 %v236
  %v1089 = vpop.f32.mrf.mxu0
  %v1090 = vadd.f32 0.0, %v1089
  %v1091 = vpop.f32.mrf.mxu0
  %1092 = vmatprep.mubr.f32.mxu0 %v240
  %1093 = vmatmul.mubr.f32.gmra.mxu0 %v239
  %v1094 = vpop.f32.mrf.mxu0
  %v1095 = vadd.f32 0.0, %v1094
  %v1096 = vpop.f32.mrf.mxu0
  %1097 = vmatprep.mubr.f32.mxu0 %v243
  %1098 = vmatmul.mubr.f32.gmra.mxu0 %v242
  %v1099 = vpop.f32.mrf.mxu0
  %v1100 = vadd.f32 0.0, %v1099
  %v1101 = vpop.f32.mrf.mxu0
  %1102 = vmatprep.mubr.f32.mxu0 %v246
  %1103 = vmatmul.mubr.f32.gmra.mxu0 %v245
  %v1104 = vpop.f32.mrf.mxu0
  %v1105 = vadd.f32 0.0, %v1104
  %v1106 = vpop.f32.mrf.mxu0
  %1107 = vmatprep.mubr.f32.mxu0 %v249
  %1108 = vmatmul.mubr.f32.gmra.mxu0 %v248
  %v1109 = vpop.f32.mrf.mxu0
  %v1110 = vadd.f32 0.0, %v1109
  %v1111 = vpop.f32.mrf.mxu0
  %1112 = vmatprep.mubr.f32.mxu0 %v252
  %1113 = vmatmul.mubr.f32.gmra.mxu0 %v251
  %v1114 = vpop.f32.mrf.mxu0
  %v1115 = vadd.f32 0.0, %v1114
  %v1116 = vpop.f32.mrf.mxu0
  %1117 = vmatprep.mubr.f32.mxu0 %v255
  %1118 = vmatmul.mubr.f32.gmra.mxu0 %v254
  %v1119 = vpop.f32.mrf.mxu0
  %v1120 = vadd.f32 0.0, %v1119
  %v1121 = vpop.f32.mrf.mxu0
  %1122 = vmatprep.mubr.f32.mxu0 %v258
  %1123 = vmatmul.mubr.f32.gmra.mxu0 %v257
  %v1124 = vpop.f32.mrf.mxu0
  %v1125 = vadd.f32 0.0, %v1124
  %v1126 = vpop.f32.mrf.mxu0
  %1127 = vmatprep.mubr.f32.mxu0 %v261
  %1128 = vmatmul.mubr.f32.gmra.mxu0 %v260
  %v1129 = vpop.f32.mrf.mxu0
  %v1130 = vadd.f32 0.0, %v1129
  %v1131 = vpop.f32.mrf.mxu0
  %1132 = vmatprep.mubr.f32.mxu0 %v264
  %1133 = vmatmul.mubr.f32.gmra.mxu0 %v263
  %v1134 = vpop.f32.mrf.mxu0
  %v1135 = vadd.f32 0.0, %v1134
  %v1136 = vpop.f32.mrf.mxu0
  %1137 = vmatprep.mubr.f32.mxu0 %v267
  %1138 = vmatmul.mubr.f32.gmra.mxu0 %v266
  %v1139 = vpop.f32.mrf.mxu0
  %v1140 = vadd.f32 0.0, %v1139
  %v1141 = vpop.f32.mrf.mxu0
  %1142 = vmatprep.mubr.f32.mxu0 %v270
  %1143 = vmatmul.mubr.f32.gmra.mxu0 %v269
  %v1144 = vpop.f32.mrf.mxu0
  %v1145 = vadd.f32 0.0, %v1144
  %v1146 = vpop.f32.mrf.mxu0
  %1147 = vmatprep.mubr.f32.mxu0 %v273
  %1148 = vmatmul.mubr.f32.gmra.mxu0 %v272
  %v1149 = vpop.f32.mrf.mxu0
  %v1150 = vadd.f32 0.0, %v1149
  %v1151 = vpop.f32.mrf.mxu0
  %1152 = vmatprep.mubr.f32.mxu0 %v276
  %1153 = vmatmul.mubr.f32.gmra.mxu0 %v275
  %v1154 = vpop.f32.mrf.mxu0
  %v1155 = vadd.f32 0.0, %v1154
  %v1156 = vpop.f32.mrf.mxu0
  %1157 = vmatprep.mubr.f32.mxu0 %v279
  %1158 = vmatmul.mubr.f32.gmra.mxu0 %v278
  %v1159 = vpop.f32.mrf.mxu0
  %v1160 = vadd.f32 0.0, %v1159
  %v1161 = vpop.f32.mrf.mxu0
  %1162 = vmatprep.mubr.f32.mxu0 %v282
  %1163 = vmatmul.mubr.f32.gmra.mxu0 %v281
  %v1164 = vpop.f32.mrf.mxu0
  %v1165 = vadd.f32 0.0, %v1164
  %v1166 = vpop.f32.mrf.mxu0
  %1167 = vmatprep.mubr.f32.mxu0 %v285
  %1168 = vmatmul.mubr.f32.gmra.mxu0 %v284
  %v1169 = vpop.f32.mrf.mxu0
  %v1170 = vadd.f32 0.0, %v1169
  %v1171 = vpop.f32.mrf.mxu0
  %1172 = vmatprep.mubr.f32.mxu0 %v288
  %1173 = vmatmul.mubr.f32.gmra.mxu0 %v287
  %v1174 = vpop.f32.mrf.mxu0
  %v1175 = vadd.f32 0.0, %v1174
  %v1176 = vpop.f32.mrf.mxu0
  %1177 = vmatprep.mubr.f32.mxu0 %v291
  %1178 = vmatmul.mubr.f32.gmra.mxu0 %v290
  %v1179 = vpop.f32.mrf.mxu0
  %v1180 = vadd.f32 0.0, %v1179
  %v1181 = vpop.f32.mrf.mxu0
  %1182 = vmatprep.mubr.f32.mxu0 %v294
  %1183 = vmatmul.mubr.f32.gmra.mxu0 %v293
  %v1184 = vpop.f32.mrf.mxu0
  %v1185 = vadd.f32 0.0, %v1184
  %v1186 = vpop.f32.mrf.mxu0
  %1187 = vmatprep.mubr.f32.mxu0 %v297
  %1188 = vmatmul.mubr.f32.gmra.mxu0 %v296
  %v1189 = vpop.f32.mrf.mxu0
  %v1190 = vadd.f32 0.0, %v1189
  %v1191 = vpop.f32.mrf.mxu0
  %1192 = vmatprep.mubr.f32.mxu0 %v300
  %1193 = vmatmul.mubr.f32.gmra.mxu0 %v299
  %v1194 = vpop.f32.mrf.mxu0
  %v1195 = vadd.f32 0.0, %v1194
  %v1196 = vpop.f32.mrf.mxu0
  %1197 = vmatprep.mubr.f32.mxu0 %v303
  %1198 = vmatmul.mubr.f32.gmra.mxu0 %v302
  %v1199 = vpop.f32.mrf.mxu0
  %v1200 = vadd.f32 0.0, %v1199
  %v1201 = vpop.f32.mrf.mxu0
  %1202 = vmatprep.mubr.f32.mxu0 %v306
  %1203 = vmatmul.mubr.f32.gmra.mxu0 %v305
  %v1204 = vpop.f32.mrf.mxu0
  %v1205 = vadd.f32 0.0, %v1204
  %v1206 = vpop.f32.mrf.mxu0
  %1207 = vmatprep.mubr.f32.mxu0 %v309
  %1208 = vmatmul.mubr.f32.gmra.mxu0 %v308
  %v1209 = vpop.f32.mrf.mxu0
  %v1210 = vadd.f32 0.0, %v1209
  %v1211 = vpop.f32.mrf.mxu0
  %1212 = vdwg.mxu0
  %1213 = vmatprep.subr.mxu0 0.0
  %1214 = vmatpush1.msra.mxu0 0.0
  %1215 = vmatprep.subr.mxu0 0.0
  %1216 = vmatpush1.msra.mxu0 0.0
  %1217 = vmatprep.subr.mxu0 0.0
  %1218 = vmatpush1.msra.mxu0 0.0
  %1219 = vmatprep.subr.mxu0 0.0
  %1220 = vmatpush1.msra.mxu0 0.0
  %1221 = vmatprep.subr.mxu0 0.0
  %1222 = vmatpush1.msra.mxu0 0.0
  %1223 = vmatprep.subr.mxu0 0.0
  %1224 = vmatpush1.msra.mxu0 0.0
  %1225 = vmatprep.subr.mxu0 0.0
  %1226 = vmatpush1.msra.mxu0 0.0
  %1227 = vmatprep.subr.mxu0 0.0
  %1228 = vmatpush1.msra.mxu0 0.0
  %1229 = vmatprep.subr.mxu0 0.0
  %1230 = vmatpush1.msra.mxu0 0.0
  %1231 = vmatprep.subr.mxu0 0.0
  %1232 = vmatpush1.msra.mxu0 0.0
  %1233 = vmatprep.subr.mxu0 0.0
  %1234 = vmatpush1.msra.mxu0 0.0
  %1235 = vmatprep.subr.mxu0 0.0
  %1236 = vmatpush1.msra.mxu0 0.0
  %1237 = vmatprep.subr.mxu0 0.0
  %1238 = vmatpush1.msra.mxu0 %v346
  %1239 = vmatprep.subr.mxu0 0.0
  %1240 = vmatpush1.msra.mxu0 %v345
  %1241 = vmatprep.subr.mxu0 0.0
  %1242 = vmatpush1.msra.mxu0 %v344
  %1243 = vmatprep.subr.mxu0 0.0
  %1244 = vmatpush1.msra.mxu0 %v343
  %1245 = vmatprep.subr.mxu0 0.0
  %1246 = vmatpush2.msra.mxu0 0.0
  %1247 = vmatprep.subr.mxu0 0.0
  %1248 = vmatpush2.msra.mxu0 0.0
  %1249 = vmatprep.subr.mxu0 0.0
  %1250 = vmatpush2.msra.mxu0 0.0
  %1251 = vmatprep.subr.mxu0 0.0
  %1252 = vmatpush2.msra.mxu0 0.0
  %1253 = vmatprep.subr.mxu0 0.0
  %1254 = vmatpush2.msra.mxu0 0.0
  %1255 = vmatprep.subr.mxu0 0.0
  %1256 = vmatpush2.msra.mxu0 0.0
  %1257 = vmatprep.subr.mxu0 0.0
  %1258 = vmatpush2.msra.mxu0 0.0
  %1259 = vmatprep.subr.mxu0 0.0
  %1260 = vmatpush2.msra.mxu0 0.0
  %1261 = vmatprep.subr.mxu0 0.0
  %1262 = vmatpush2.msra.mxu0 0.0
  %1263 = vmatprep.subr.mxu0 0.0
  %1264 = vmatpush2.msra.mxu0 0.0
  %1265 = vmatprep.subr.mxu0 0.0
  %1266 = vmatpush2.msra.mxu0 0.0
  %1267 = vmatprep.subr.mxu0 0.0
  %1268 = vmatpush2.msra.mxu0 0.0
  %1269 = vmatprep.subr.mxu0 0.0
  %1270 = vmatpush2.msra.mxu0 0.0
  %1271 = vmatprep.subr.mxu0 0.0
  %1272 = vmatpush2.msra.mxu0 0.0
  %1273 = vmatprep.subr.mxu0 0.0
  %1274 = vmatpush2.msra.mxu0 0.0
  %1275 = vmatprep.subr.mxu0 0.0
  %1276 = vmatpush2.msra.mxu0 0.0
  %1277 = vmatprep.mubr.f32.mxu0 0.0
  %1278 = vmatmul.mubr.f32.gmra.mxu0 %v349
  %v1279 = vpop.f32.mrf.mxu0
  %v1280 = vadd.f32 %v715, %v1279
  %v1281 = vpop.f32.mrf.mxu0
  %1282 = vmatprep.mubr.f32.mxu0 0.0
  %1283 = vmatmul.mubr.f32.gmra.mxu0 %v352
  %v1284 = vpop.f32.mrf.mxu0
  %v1285 = vadd.f32 %v720, %v1284
  %v1286 = vpop.f32.mrf.mxu0
  %1287 = vmatprep.mubr.f32.mxu0 0.0
  %1288 = vmatmul.mubr.f32.gmra.mxu0 %v355
  %v1289 = vpop.f32.mrf.mxu0
  %v1290 = vadd.f32 %v725, %v1289
  %v1291 = vpop.f32.mrf.mxu0
  %1292 = vmatprep.mubr.f32.mxu0 0.0
  %1293 = vmatmul.mubr.f32.gmra.mxu0 %v358
  %v1294 = vpop.f32.mrf.mxu0
  %v1295 = vadd.f32 %v730, %v1294
  %v1296 = vpop.f32.mrf.mxu0
  %1297 = vmatprep.mubr.f32.mxu0 0.0
  %1298 = vmatmul.mubr.f32.gmra.mxu0 %v361
  %v1299 = vpop.f32.mrf.mxu0
  %v1300 = vadd.f32 %v735, %v1299
  %v1301 = vpop.f32.mrf.mxu0
  %1302 = vmatprep.mubr.f32.mxu0 0.0
  %1303 = vmatmul.mubr.f32.gmra.mxu0 %v364
  %v1304 = vpop.f32.mrf.mxu0
  %v1305 = vadd.f32 %v740, %v1304
  %v1306 = vpop.f32.mrf.mxu0
  %1307 = vmatprep.mubr.f32.mxu0 0.0
  %1308 = vmatmul.mubr.f32.gmra.mxu0 %v367
  %v1309 = vpop.f32.mrf.mxu0
  %v1310 = vadd.f32 %v745, %v1309
  %v1311 = vpop.f32.mrf.mxu0
  %1312 = vmatprep.mubr.f32.mxu0 0.0
  %1313 = vmatmul.mubr.f32.gmra.mxu0 %v370
  %v1314 = vpop.f32.mrf.mxu0
  %v1315 = vadd.f32 %v750, %v1314
  %v1316 = vpop.f32.mrf.mxu0
  %1317 = vmatprep.mubr.f32.mxu0 0.0
  %1318 = vmatmul.mubr.f32.gmra.mxu0 %v373
  %v1319 = vpop.f32.mrf.mxu0
  %v1320 = vadd.f32 %v755, %v1319
  %v1321 = vpop.f32.mrf.mxu0
  %1322 = vmatprep.mubr.f32.mxu0 0.0
  %1323 = vmatmul.mubr.f32.gmra.mxu0 %v376
  %v1324 = vpop.f32.mrf.mxu0
  %v1325 = vadd.f32 %v760, %v1324
  %v1326 = vpop.f32.mrf.mxu0
  %1327 = vmatprep.mubr.f32.mxu0 0.0
  %1328 = vmatmul.mubr.f32.gmra.mxu0 %v379
  %v1329 = vpop.f32.mrf.mxu0
  %v1330 = vadd.f32 %v765, %v1329
  %v1331 = vpop.f32.mrf.mxu0
  %1332 = vmatprep.mubr.f32.mxu0 0.0
  %1333 = vmatmul.mubr.f32.gmra.mxu0 %v382
  %v1334 = vpop.f32.mrf.mxu0
  %v1335 = vadd.f32 %v770, %v1334
  %v1336 = vpop.f32.mrf.mxu0
  %1337 = vmatprep.mubr.f32.mxu0 0.0
  %1338 = vmatmul.mubr.f32.gmra.mxu0 %v385
  %v1339 = vpop.f32.mrf.mxu0
  %v1340 = vadd.f32 %v775, %v1339
  %v1341 = vpop.f32.mrf.mxu0
  %1342 = vmatprep.mubr.f32.mxu0 0.0
  %1343 = vmatmul.mubr.f32.gmra.mxu0 %v388
  %v1344 = vpop.f32.mrf.mxu0
  %v1345 = vadd.f32 %v780, %v1344
  %v1346 = vpop.f32.mrf.mxu0
  %1347 = vmatprep.mubr.f32.mxu0 0.0
  %1348 = vmatmul.mubr.f32.gmra.mxu0 %v391
  %v1349 = vpop.f32.mrf.mxu0
  %v1350 = vadd.f32 %v785, %v1349
  %v1351 = vpop.f32.mrf.mxu0
  %1352 = vmatprep.mubr.f32.mxu0 0.0
  %1353 = vmatmul.mubr.f32.gmra.mxu0 %v394
  %v1354 = vpop.f32.mrf.mxu0
  %v1355 = vadd.f32 %v790, %v1354
  %v1356 = vpop.f32.mrf.mxu0
  %1357 = vmatprep.mubr.f32.mxu0 0.0
  %1358 = vmatmul.mubr.f32.gmra.mxu0 %v397
  %v1359 = vpop.f32.mrf.mxu0
  %v1360 = vadd.f32 %v795, %v1359
  %v1361 = vpop.f32.mrf.mxu0
  %1362 = vmatprep.mubr.f32.mxu0 0.0
  %1363 = vmatmul.mubr.f32.gmra.mxu0 %v400
  %v1364 = vpop.f32.mrf.mxu0
  %v1365 = vadd.f32 %v800, %v1364
  %v1366 = vpop.f32.mrf.mxu0
  %1367 = vmatprep.mubr.f32.mxu0 0.0
  %1368 = vmatmul.mubr.f32.gmra.mxu0 %v403
  %v1369 = vpop.f32.mrf.mxu0
  %v1370 = vadd.f32 %v805, %v1369
  %v1371 = vpop.f32.mrf.mxu0
  %1372 = vmatprep.mubr.f32.mxu0 0.0
  %1373 = vmatmul.mubr.f32.gmra.mxu0 %v406
  %v1374 = vpop.f32.mrf.mxu0
  %v1375 = vadd.f32 %v810, %v1374
  %v1376 = vpop.f32.mrf.mxu0
  %1377 = vmatprep.mubr.f32.mxu0 0.0
  %1378 = vmatmul.mubr.f32.gmra.mxu0 %v409
  %v1379 = vpop.f32.mrf.mxu0
  %v1380 = vadd.f32 %v815, %v1379
  %v1381 = vpop.f32.mrf.mxu0
  %1382 = vmatprep.mubr.f32.mxu0 0.0
  %1383 = vmatmul.mubr.f32.gmra.mxu0 %v412
  %v1384 = vpop.f32.mrf.mxu0
  %v1385 = vadd.f32 %v820, %v1384
  %v1386 = vpop.f32.mrf.mxu0
  %1387 = vmatprep.mubr.f32.mxu0 0.0
  %1388 = vmatmul.mubr.f32.gmra.mxu0 %v415
  %v1389 = vpop.f32.mrf.mxu0
  %v1390 = vadd.f32 %v825, %v1389
  %v1391 = vpop.f32.mrf.mxu0
  %1392 = vmatprep.mubr.f32.mxu0 0.0
  %1393 = vmatmul.mubr.f32.gmra.mxu0 %v418
  %v1394 = vpop.f32.mrf.mxu0
  %v1395 = vadd.f32 %v830, %v1394
  %v1396 = vpop.f32.mrf.mxu0
  %1397 = vmatprep.mubr.f32.mxu0 0.0
  %1398 = vmatmul.mubr.f32.gmra.mxu0 %v421
  %v1399 = vpop.f32.mrf.mxu0
  %v1400 = vadd.f32 %v835, %v1399
  %v1401 = vpop.f32.mrf.mxu0
  %1402 = vmatprep.mubr.f32.mxu0 0.0
  %1403 = vmatmul.mubr.f32.gmra.mxu0 %v424
  %v1404 = vpop.f32.mrf.mxu0
  %v1405 = vadd.f32 %v840, %v1404
  %v1406 = vpop.f32.mrf.mxu0
  %1407 = vmatprep.mubr.f32.mxu0 0.0
  %1408 = vmatmul.mubr.f32.gmra.mxu0 %v427
  %v1409 = vpop.f32.mrf.mxu0
  %v1410 = vadd.f32 %v845, %v1409
  %v1411 = vpop.f32.mrf.mxu0
  %1412 = vmatprep.mubr.f32.mxu0 0.0
  %1413 = vmatmul.mubr.f32.gmra.mxu0 %v430
  %v1414 = vpop.f32.mrf.mxu0
  %v1415 = vadd.f32 %v850, %v1414
  %v1416 = vpop.f32.mrf.mxu0
  %1417 = vmatprep.mubr.f32.mxu0 0.0
  %1418 = vmatmul.mubr.f32.gmra.mxu0 %v433
  %v1419 = vpop.f32.mrf.mxu0
  %v1420 = vadd.f32 %v855, %v1419
  %v1421 = vpop.f32.mrf.mxu0
  %1422 = vmatprep.mubr.f32.mxu0 0.0
  %1423 = vmatmul.mubr.f32.gmra.mxu0 %v436
  %v1424 = vpop.f32.mrf.mxu0
  %v1425 = vadd.f32 %v860, %v1424
  %v1426 = vpop.f32.mrf.mxu0
  %1427 = vmatprep.mubr.f32.mxu0 0.0
  %1428 = vmatmul.mubr.f32.gmra.mxu0 %v439
  %v1429 = vpop.f32.mrf.mxu0
  %v1430 = vadd.f32 %v865, %v1429
  %v1431 = vpop.f32.mrf.mxu0
  %1432 = vmatprep.mubr.f32.mxu0 0.0
  %1433 = vmatmul.mubr.f32.gmra.mxu0 %v442
  %v1434 = vpop.f32.mrf.mxu0
  %v1435 = vadd.f32 %v870, %v1434
  %v1436 = vpop.f32.mrf.mxu0
  %1437 = vmatprep.mubr.f32.mxu0 0.0
  %1438 = vmatmul.mubr.f32.gmra.mxu0 %v445
  %v1439 = vpop.f32.mrf.mxu0
  %v1440 = vadd.f32 %v875, %v1439
  %v1441 = vpop.f32.mrf.mxu0
  %1442 = vmatprep.mubr.f32.mxu0 0.0
  %1443 = vmatmul.mubr.f32.gmra.mxu0 %v448
  %v1444 = vpop.f32.mrf.mxu0
  %v1445 = vadd.f32 %v880, %v1444
  %v1446 = vpop.f32.mrf.mxu0
  %1447 = vmatprep.mubr.f32.mxu0 0.0
  %1448 = vmatmul.mubr.f32.gmra.mxu0 %v451
  %v1449 = vpop.f32.mrf.mxu0
  %v1450 = vadd.f32 %v885, %v1449
  %v1451 = vpop.f32.mrf.mxu0
  %1452 = vmatprep.mubr.f32.mxu0 0.0
  %1453 = vmatmul.mubr.f32.gmra.mxu0 %v454
  %v1454 = vpop.f32.mrf.mxu0
  %v1455 = vadd.f32 %v890, %v1454
  %v1456 = vpop.f32.mrf.mxu0
  %1457 = vmatprep.mubr.f32.mxu0 0.0
  %1458 = vmatmul.mubr.f32.gmra.mxu0 %v457
  %v1459 = vpop.f32.mrf.mxu0
  %v1460 = vadd.f32 %v895, %v1459
  %v1461 = vpop.f32.mrf.mxu0
  %1462 = vmatprep.mubr.f32.mxu0 0.0
  %1463 = vmatmul.mubr.f32.gmra.mxu0 %v460
  %v1464 = vpop.f32.mrf.mxu0
  %v1465 = vadd.f32 %v900, %v1464
  %v1466 = vpop.f32.mrf.mxu0
  %1467 = vmatprep.mubr.f32.mxu0 0.0
  %1468 = vmatmul.mubr.f32.gmra.mxu0 %v463
  %v1469 = vpop.f32.mrf.mxu0
  %v1470 = vadd.f32 %v905, %v1469
  %v1471 = vpop.f32.mrf.mxu0
  %1472 = vmatprep.mubr.f32.mxu0 0.0
  %1473 = vmatmul.mubr.f32.gmra.mxu0 %v466
  %v1474 = vpop.f32.mrf.mxu0
  %v1475 = vadd.f32 %v910, %v1474
  %v1476 = vpop.f32.mrf.mxu0
  %1477 = vmatprep.mubr.f32.mxu0 0.0
  %1478 = vmatmul.mubr.f32.gmra.mxu0 %v469
  %v1479 = vpop.f32.mrf.mxu0
  %v1480 = vadd.f32 %v915, %v1479
  %v1481 = vpop.f32.mrf.mxu0
  %1482 = vmatprep.mubr.f32.mxu0 0.0
  %1483 = vmatmul.mubr.f32.gmra.mxu0 %v472
  %v1484 = vpop.f32.mrf.mxu0
  %v1485 = vadd.f32 %v920, %v1484
  %v1486 = vpop.f32.mrf.mxu0
  %1487 = vmatprep.mubr.f32.mxu0 0.0
  %1488 = vmatmul.mubr.f32.gmra.mxu0 %v475
  %v1489 = vpop.f32.mrf.mxu0
  %v1490 = vadd.f32 %v925, %v1489
  %v1491 = vpop.f32.mrf.mxu0
  %1492 = vmatprep.mubr.f32.mxu0 0.0
  %1493 = vmatmul.mubr.f32.gmra.mxu0 %v478
  %v1494 = vpop.f32.mrf.mxu0
  %v1495 = vadd.f32 %v930, %v1494
  %v1496 = vpop.f32.mrf.mxu0
  %1497 = vmatprep.mubr.f32.mxu0 0.0
  %1498 = vmatmul.mubr.f32.gmra.mxu0 %v481
  %v1499 = vpop.f32.mrf.mxu0
  %v1500 = vadd.f32 %v935, %v1499
  %v1501 = vpop.f32.mrf.mxu0
  %1502 = vmatprep.mubr.f32.mxu0 0.0
  %1503 = vmatmul.mubr.f32.gmra.mxu0 %v484
  %v1504 = vpop.f32.mrf.mxu0
  %v1505 = vadd.f32 %v940, %v1504
  %v1506 = vpop.f32.mrf.mxu0
  %1507 = vmatprep.mubr.f32.mxu0 0.0
  %1508 = vmatmul.mubr.f32.gmra.mxu0 %v487
  %v1509 = vpop.f32.mrf.mxu0
  %v1510 = vadd.f32 %v945, %v1509
  %v1511 = vpop.f32.mrf.mxu0
  %1512 = vmatprep.mubr.f32.mxu0 0.0
  %1513 = vmatmul.mubr.f32.gmra.mxu0 %v490
  %v1514 = vpop.f32.mrf.mxu0
  %v1515 = vadd.f32 %v950, %v1514
  %v1516 = vpop.f32.mrf.mxu0
  %1517 = vmatprep.mubr.f32.mxu0 0.0
  %1518 = vmatmul.mubr.f32.gmra.mxu0 %v493
  %v1519 = vpop.f32.mrf.mxu0
  %v1520 = vadd.f32 %v955, %v1519
  %v1521 = vpop.f32.mrf.mxu0
  %1522 = vmatprep.mubr.f32.mxu0 0.0
  %1523 = vmatmul.mubr.f32.gmra.mxu0 %v496
  %v1524 = vpop.f32.mrf.mxu0
  %v1525 = vadd.f32 %v960, %v1524
  %v1526 = vpop.f32.mrf.mxu0
  %1527 = vmatprep.mubr.f32.mxu0 0.0
  %1528 = vmatmul.mubr.f32.gmra.mxu0 %v499
  %v1529 = vpop.f32.mrf.mxu0
  %v1530 = vadd.f32 %v965, %v1529
  %v1531 = vpop.f32.mrf.mxu0
  %1532 = vmatprep.mubr.f32.mxu0 0.0
  %1533 = vmatmul.mubr.f32.gmra.mxu0 %v502
  %v1534 = vpop.f32.mrf.mxu0
  %v1535 = vadd.f32 %v970, %v1534
  %v1536 = vpop.f32.mrf.mxu0
  %1537 = vmatprep.mubr.f32.mxu0 0.0
  %1538 = vmatmul.mubr.f32.gmra.mxu0 %v505
  %v1539 = vpop.f32.mrf.mxu0
  %v1540 = vadd.f32 %v975, %v1539
  %v1541 = vpop.f32.mrf.mxu0
  %1542 = vmatprep.mubr.f32.mxu0 0.0
  %1543 = vmatmul.mubr.f32.gmra.mxu0 %v508
  %v1544 = vpop.f32.mrf.mxu0
  %v1545 = vadd.f32 %v980, %v1544
  %v1546 = vpop.f32.mrf.mxu0
  %1547 = vmatprep.mubr.f32.mxu0 0.0
  %1548 = vmatmul.mubr.f32.gmra.mxu0 %v511
  %v1549 = vpop.f32.mrf.mxu0
  %v1550 = vadd.f32 %v985, %v1549
  %v1551 = vpop.f32.mrf.mxu0
  %1552 = vmatprep.mubr.f32.mxu0 0.0
  %1553 = vmatmul.mubr.f32.gmra.mxu0 %v514
  %v1554 = vpop.f32.mrf.mxu0
  %v1555 = vadd.f32 %v990, %v1554
  %v1556 = vpop.f32.mrf.mxu0
  %1557 = vmatprep.mubr.f32.mxu0 0.0
  %1558 = vmatmul.mubr.f32.gmra.mxu0 %v517
  %v1559 = vpop.f32.mrf.mxu0
  %v1560 = vadd.f32 %v995, %v1559
  %v1561 = vpop.f32.mrf.mxu0
  %1562 = vmatprep.mubr.f32.mxu0 0.0
  %1563 = vmatmul.mubr.f32.gmra.mxu0 %v520
  %v1564 = vpop.f32.mrf.mxu0
  %v1565 = vadd.f32 %v1000, %v1564
  %v1566 = vpop.f32.mrf.mxu0
  %1567 = vmatprep.mubr.f32.mxu0 0.0
  %1568 = vmatmul.mubr.f32.gmra.mxu0 %v523
  %v1569 = vpop.f32.mrf.mxu0
  %v1570 = vadd.f32 %v1005, %v1569
  %v1571 = vpop.f32.mrf.mxu0
  %1572 = vmatprep.mubr.f32.mxu0 0.0
  %1573 = vmatmul.mubr.f32.gmra.mxu0 %v526
  %v1574 = vpop.f32.mrf.mxu0
  %v1575 = vadd.f32 %v1010, %v1574
  %v1576 = vpop.f32.mrf.mxu0
  %1577 = vmatprep.mubr.f32.mxu0 0.0
  %1578 = vmatmul.mubr.f32.gmra.mxu0 %v529
  %v1579 = vpop.f32.mrf.mxu0
  %v1580 = vadd.f32 %v1015, %v1579
  %v1581 = vpop.f32.mrf.mxu0
  %1582 = vmatprep.mubr.f32.mxu0 0.0
  %1583 = vmatmul.mubr.f32.gmra.mxu0 %v532
  %v1584 = vpop.f32.mrf.mxu0
  %v1585 = vadd.f32 %v1020, %v1584
  %v1586 = vpop.f32.mrf.mxu0
  %1587 = vmatprep.mubr.f32.mxu0 0.0
  %1588 = vmatmul.mubr.f32.gmra.mxu0 %v535
  %v1589 = vpop.f32.mrf.mxu0
  %v1590 = vadd.f32 %v1025, %v1589
  %v1591 = vpop.f32.mrf.mxu0
  %1592 = vmatprep.mubr.f32.mxu0 0.0
  %1593 = vmatmul.mubr.f32.gmra.mxu0 %v538
  %v1594 = vpop.f32.mrf.mxu0
  %v1595 = vadd.f32 %v1030, %v1594
  %v1596 = vpop.f32.mrf.mxu0
  %1597 = vmatprep.mubr.f32.mxu0 0.0
  %1598 = vmatmul.mubr.f32.gmra.mxu0 %v541
  %v1599 = vpop.f32.mrf.mxu0
  %v1600 = vadd.f32 %v1035, %v1599
  %v1601 = vpop.f32.mrf.mxu0
  %1602 = vmatprep.mubr.f32.mxu0 0.0
  %1603 = vmatmul.mubr.f32.gmra.mxu0 %v544
  %v1604 = vpop.f32.mrf.mxu0
  %v1605 = vadd.f32 %v1040, %v1604
  %v1606 = vpop.f32.mrf.mxu0
  %1607 = vmatprep.mubr.f32.mxu0 0.0
  %1608 = vmatmul.mubr.f32.gmra.mxu0 %v547
  %v1609 = vpop.f32.mrf.mxu0
  %v1610 = vadd.f32 %v1045, %v1609
  %v1611 = vpop.f32.mrf.mxu0
  %1612 = vmatprep.mubr.f32.mxu0 0.0
  %1613 = vmatmul.mubr.f32.gmra.mxu0 %v550
  %v1614 = vpop.f32.mrf.mxu0
  %v1615 = vadd.f32 %v1050, %v1614
  %v1616 = vpop.f32.mrf.mxu0
  %1617 = vmatprep.mubr.f32.mxu0 0.0
  %1618 = vmatmul.mubr.f32.gmra.mxu0 %v553
  %v1619 = vpop.f32.mrf.mxu0
  %v1620 = vadd.f32 %v1055, %v1619
  %v1621 = vpop.f32.mrf.mxu0
  %1622 = vmatprep.mubr.f32.mxu0 0.0
  %1623 = vmatmul.mubr.f32.gmra.mxu0 %v556
  %v1624 = vpop.f32.mrf.mxu0
  %v1625 = vadd.f32 %v1060, %v1624
  %v1626 = vpop.f32.mrf.mxu0
  %1627 = vmatprep.mubr.f32.mxu0 0.0
  %1628 = vmatmul.mubr.f32.gmra.mxu0 %v559
  %v1629 = vpop.f32.mrf.mxu0
  %v1630 = vadd.f32 %v1065, %v1629
  %v1631 = vpop.f32.mrf.mxu0
  %1632 = vmatprep.mubr.f32.mxu0 0.0
  %1633 = vmatmul.mubr.f32.gmra.mxu0 %v562
  %v1634 = vpop.f32.mrf.mxu0
  %v1635 = vadd.f32 %v1070, %v1634
  %v1636 = vpop.f32.mrf.mxu0
  %1637 = vmatprep.mubr.f32.mxu0 0.0
  %1638 = vmatmul.mubr.f32.gmra.mxu0 %v565
  %v1639 = vpop.f32.mrf.mxu0
  %v1640 = vadd.f32 %v1075, %v1639
  %v1641 = vpop.f32.mrf.mxu0
  %1642 = vmatprep.mubr.f32.mxu0 0.0
  %1643 = vmatmul.mubr.f32.gmra.mxu0 %v568
  %v1644 = vpop.f32.mrf.mxu0
  %v1645 = vadd.f32 %v1080, %v1644
  %v1646 = vpop.f32.mrf.mxu0
  %1647 = vmatprep.mubr.f32.mxu0 0.0
  %1648 = vmatmul.mubr.f32.gmra.mxu0 %v571
  %v1649 = vpop.f32.mrf.mxu0
  %v1650 = vadd.f32 %v1085, %v1649
  %v1651 = vpop.f32.mrf.mxu0
  %1652 = vmatprep.mubr.f32.mxu0 0.0
  %1653 = vmatmul.mubr.f32.gmra.mxu0 %v574
  %v1654 = vpop.f32.mrf.mxu0
  %v1655 = vadd.f32 %v1090, %v1654
  %v1656 = vpop.f32.mrf.mxu0
  %1657 = vmatprep.mubr.f32.mxu0 0.0
  %1658 = vmatmul.mubr.f32.gmra.mxu0 %v577
  %v1659 = vpop.f32.mrf.mxu0
  %v1660 = vadd.f32 %v1095, %v1659
  %v1661 = vpop.f32.mrf.mxu0
  %1662 = vmatprep.mubr.f32.mxu0 0.0
  %1663 = vmatmul.mubr.f32.gmra.mxu0 %v580
  %v1664 = vpop.f32.mrf.mxu0
  %v1665 = vadd.f32 %v1100, %v1664
  %v1666 = vpop.f32.mrf.mxu0
  %1667 = vmatprep.mubr.f32.mxu0 0.0
  %1668 = vmatmul.mubr.f32.gmra.mxu0 %v583
  %v1669 = vpop.f32.mrf.mxu0
  %v1670 = vadd.f32 %v1105, %v1669
  %v1671 = vpop.f32.mrf.mxu0
  %1672 = vmatprep.mubr.f32.mxu0 0.0
  %1673 = vmatmul.mubr.f32.gmra.mxu0 %v586
  %v1674 = vpop.f32.mrf.mxu0
  %v1675 = vadd.f32 %v1110, %v1674
  %v1676 = vpop.f32.mrf.mxu0
  %1677 = vmatprep.mubr.f32.mxu0 0.0
  %1678 = vmatmul.mubr.f32.gmra.mxu0 %v589
  %v1679 = vpop.f32.mrf.mxu0
  %v1680 = vadd.f32 %v1115, %v1679
  %v1681 = vpop.f32.mrf.mxu0
  %1682 = vmatprep.mubr.f32.mxu0 0.0
  %1683 = vmatmul.mubr.f32.gmra.mxu0 %v592
  %v1684 = vpop.f32.mrf.mxu0
  %v1685 = vadd.f32 %v1120, %v1684
  %v1686 = vpop.f32.mrf.mxu0
  %1687 = vmatprep.mubr.f32.mxu0 0.0
  %1688 = vmatmul.mubr.f32.gmra.mxu0 %v595
  %v1689 = vpop.f32.mrf.mxu0
  %v1690 = vadd.f32 %v1125, %v1689
  %v1691 = vpop.f32.mrf.mxu0
  %1692 = vmatprep.mubr.f32.mxu0 0.0
  %1693 = vmatmul.mubr.f32.gmra.mxu0 %v598
  %v1694 = vpop.f32.mrf.mxu0
  %v1695 = vadd.f32 %v1130, %v1694
  %v1696 = vpop.f32.mrf.mxu0
  %1697 = vmatprep.mubr.f32.mxu0 0.0
  %1698 = vmatmul.mubr.f32.gmra.mxu0 %v601
  %v1699 = vpop.f32.mrf.mxu0
  %v1700 = vadd.f32 %v1135, %v1699
  %v1701 = vpop.f32.mrf.mxu0
  %1702 = vmatprep.mubr.f32.mxu0 0.0
  %1703 = vmatmul.mubr.f32.gmra.mxu0 %v604
  %v1704 = vpop.f32.mrf.mxu0
  %v1705 = vadd.f32 %v1140, %v1704
  %v1706 = vpop.f32.mrf.mxu0
  %1707 = vmatprep.mubr.f32.mxu0 0.0
  %1708 = vmatmul.mubr.f32.gmra.mxu0 %v607
  %v1709 = vpop.f32.mrf.mxu0
  %v1710 = vadd.f32 %v1145, %v1709
  %v1711 = vpop.f32.mrf.mxu0
  %1712 = vmatprep.mubr.f32.mxu0 0.0
  %1713 = vmatmul.mubr.f32.gmra.mxu0 %v610
  %v1714 = vpop.f32.mrf.mxu0
  %v1715 = vadd.f32 %v1150, %v1714
  %v1716 = vpop.f32.mrf.mxu0
  %1717 = vmatprep.mubr.f32.mxu0 0.0
  %1718 = vmatmul.mubr.f32.gmra.mxu0 %v613
  %v1719 = vpop.f32.mrf.mxu0
  %v1720 = vadd.f32 %v1155, %v1719
  %v1721 = vpop.f32.mrf.mxu0
  %1722 = vmatprep.mubr.f32.mxu0 0.0
  %1723 = vmatmul.mubr.f32.gmra.mxu0 %v616
  %v1724 = vpop.f32.mrf.mxu0
  %v1725 = vadd.f32 %v1160, %v1724
  %v1726 = vpop.f32.mrf.mxu0
  %1727 = vmatprep.mubr.f32.mxu0 0.0
  %1728 = vmatmul.mubr.f32.gmra.mxu0 %v619
  %v1729 = vpop.f32.mrf.mxu0
  %v1730 = vadd.f32 %v1165, %v1729
  %v1731 = vpop.f32.mrf.mxu0
  %1732 = vmatprep.mubr.f32.mxu0 0.0
  %1733 = vmatmul.mubr.f32.gmra.mxu0 %v622
  %v1734 = vpop.f32.mrf.mxu0
  %v1735 = vadd.f32 %v1170, %v1734
  %v1736 = vpop.f32.mrf.mxu0
  %1737 = vmatprep.mubr.f32.mxu0 0.0
  %1738 = vmatmul.mubr.f32.gmra.mxu0 %v625
  %v1739 = vpop.f32.mrf.mxu0
  %v1740 = vadd.f32 %v1175, %v1739
  %v1741 = vpop.f32.mrf.mxu0
  %1742 = vmatprep.mubr.f32.mxu0 0.0
  %1743 = vmatmul.mubr.f32.gmra.mxu0 %v628
  %v1744 = vpop.f32.mrf.mxu0
  %v1745 = vadd.f32 %v1180, %v1744
  %v1746 = vpop.f32.mrf.mxu0
  %1747 = vmatprep.mubr.f32.mxu0 0.0
  %1748 = vmatmul.mubr.f32.gmra.mxu0 %v631
  %v1749 = vpop.f32.mrf.mxu0
  %v1750 = vadd.f32 %v1185, %v1749
  %v1751 = vpop.f32.mrf.mxu0
  %1752 = vmatprep.mubr.f32.mxu0 0.0
  %1753 = vmatmul.mubr.f32.gmra.mxu0 %v634
  %v1754 = vpop.f32.mrf.mxu0
  %v1755 = vadd.f32 %v1190, %v1754
  %v1756 = vpop.f32.mrf.mxu0
  %1757 = vmatprep.mubr.f32.mxu0 0.0
  %1758 = vmatmul.mubr.f32.gmra.mxu0 %v637
  %v1759 = vpop.f32.mrf.mxu0
  %v1760 = vadd.f32 %v1195, %v1759
  %v1761 = vpop.f32.mrf.mxu0
  %1762 = vmatprep.mubr.f32.mxu0 0.0
  %1763 = vmatmul.mubr.f32.gmra.mxu0 %v640
  %v1764 = vpop.f32.mrf.mxu0
  %v1765 = vadd.f32 %v1200, %v1764
  %v1766 = vpop.f32.mrf.mxu0
  %1767 = vmatprep.mubr.f32.mxu0 0.0
  %1768 = vmatmul.mubr.f32.gmra.mxu0 %v643
  %v1769 = vpop.f32.mrf.mxu0
  %v1770 = vadd.f32 %v1205, %v1769
  %v1771 = vpop.f32.mrf.mxu0
  %1772 = vmatprep.mubr.f32.mxu0 0.0
  %1773 = vmatmul.mubr.f32.gmra.mxu0 %v646
  %v1774 = vpop.f32.mrf.mxu0
  %v1775 = vadd.f32 %v1210, %v1774
  %v1776 = vpop.f32.mrf.mxu0
  %1777 = vdwg.mxu0
  %v1778 = vtanh.pop %v1280
  %v1779 = vtanh.pop %v1285
  %v1780 = vtanh.pop %v1290
  %v1781 = vtanh.pop %v1295
  %v1782 = vtanh.pop %v1300
  %v1783 = vtanh.pop %v1305
  %v1784 = vtanh.pop %v1310
  %v1785 = vtanh.pop %v1315
  %v1786 = vtanh.pop %v1320
  %v1787 = vtanh.pop %v1325
  %v1788 = vtanh.pop %v1330
  %v1789 = vtanh.pop %v1335
  %v1790 = vtanh.pop %v1340
  %v1791 = vtanh.pop %v1345
  %v1792 = vtanh.pop %v1350
  %v1793 = vtanh.pop %v1355
  %v1794 = vtanh.pop %v1360
  %v1795 = vtanh.pop %v1365
  %v1796 = vtanh.pop %v1370
  %v1797 = vtanh.pop %v1375
  %v1798 = vtanh.pop %v1380
  %v1799 = vtanh.pop %v1385
  %v1800 = vtanh.pop %v1390
  %v1801 = vtanh.pop %v1395
  %v1802 = vtanh.pop %v1400
  %v1803 = vtanh.pop %v1405
  %v1804 = vtanh.pop %v1410
  %v1805 = vtanh.pop %v1415
  %v1806 = vtanh.pop %v1420
  %v1807 = vtanh.pop %v1425
  %v1808 = vtanh.pop %v1430
  %v1809 = vtanh.pop %v1435
  %v1810 = vtanh.pop %v1440
  %v1811 = vtanh.pop %v1445
  %v1812 = vtanh.pop %v1450
  %v1813 = vtanh.pop %v1455
  %v1814 = vtanh.pop %v1460
  %v1815 = vtanh.pop %v1465
  %v1816 = vtanh.pop %v1470
  %v1817 = vtanh.pop %v1475
  %v1818 = vtanh.pop %v1480
  %v1819 = vtanh.pop %v1485
  %v1820 = vtanh.pop %v1490
  %v1821 = vtanh.pop %v1495
  %v1822 = vtanh.pop %v1500
  %v1823 = vtanh.pop %v1505
  %v1824 = vtanh.pop %v1510
  %v1825 = vtanh.pop %v1515
  %v1826 = vtanh.pop %v1520
  %v1827 = vtanh.pop %v1525
  %v1828 = vtanh.pop %v1530
  %v1829 = vtanh.pop %v1535
  %v1830 = vtanh.pop %v1540
  %v1831 = vtanh.pop %v1545
  %v1832 = vtanh.pop %v1550
  %v1833 = vtanh.pop %v1555
  %v1834 = vtanh.pop %v1560
  %v1835 = vtanh.pop %v1565
  %v1836 = vtanh.pop %v1570
  %v1837 = vtanh.pop %v1575
  %v1838 = vtanh.pop %v1580
  %v1839 = vtanh.pop %v1585
  %v1840 = vtanh.pop %v1590
  %v1841 = vtanh.pop %v1595
  %v1842 = vtanh.pop %v1600
  %v1843 = vtanh.pop %v1605
  %v1844 = vtanh.pop %v1610
  %v1845 = vtanh.pop %v1615
  %v1846 = vtanh.pop %v1620
  %v1847 = vtanh.pop %v1625
  %v1848 = vtanh.pop %v1630
  %v1849 = vtanh.pop %v1635
  %v1850 = vtanh.pop %v1640
  %v1851 = vtanh.pop %v1645
  %v1852 = vtanh.pop %v1650
  %v1853 = vtanh.pop %v1655
  %v1854 = vtanh.pop %v1660
  %v1855 = vtanh.pop %v1665
  %v1856 = vtanh.pop %v1670
  %v1857 = vtanh.pop %v1675
  %v1858 = vtanh.pop %v1680
  %v1859 = vtanh.pop %v1685
  %v1860 = vtanh.pop %v1690
  %v1861 = vtanh.pop %v1695
  %v1862 = vtanh.pop %v1700
  %v1863 = vtanh.pop %v1705
  %v1864 = vtanh.pop %v1710
  %v1865 = vtanh.pop %v1715
  %v1866 = vtanh.pop %v1720
  %v1867 = vtanh.pop %v1725
  %v1868 = vtanh.pop %v1730
  %v1869 = vtanh.pop %v1735
  %v1870 = vtanh.pop %v1740
  %v1871 = vtanh.pop %v1745
  %v1872 = vtanh.pop %v1750
  %v1873 = vtanh.pop %v1755
  %v1874 = vtanh.pop %v1760
  %v1875 = vtanh.pop %v1765
  %v1876 = vtanh.pop %v1770
  %v1877 = vtanh.pop %v1775
  %vm1878 = vcmask 23552
  %1879 = vst.msk [vmem:[%s2] sm:$0xff] %vm1878, %v1778
  %1880 = vst.msk [vmem:[%s2 + $0x8] sm:$0xff] %vm1878, %v1779
  %1881 = vst.msk [vmem:[%s2 + $0x10] sm:$0xff] %vm1878, %v1780
  %1882 = vst.msk [vmem:[%s2 + $0x18] sm:$0xff] %vm1878, %v1781
  %1883 = vst.msk [vmem:[%s2 + $0x20] sm:$0xff] %vm1878, %v1782
  %1884 = vst.msk [vmem:[%s2 + $0x28] sm:$0xff] %vm1878, %v1783
  %1885 = vst.msk [vmem:[%s2 + $0x30] sm:$0xff] %vm1878, %v1784
  %1886 = vst.msk [vmem:[%s2 + $0x38] sm:$0xff] %vm1878, %v1785
  %1887 = vst.msk [vmem:[%s2 + $0x40] sm:$0xff] %vm1878, %v1786
  %1888 = vst.msk [vmem:[%s2 + $0x48] sm:$0xff] %vm1878, %v1787
  %1889 = vst.msk [vmem:[%s2 + $0x50] sm:$0xff] %vm1878, %v1788
  %1890 = vst.msk [vmem:[%s2 + $0x58] sm:$0xff] %vm1878, %v1789
  %1891 = vst.msk [vmem:[%s2 + $0x60] sm:$0xff] %vm1878, %v1790
  %1892 = vst.msk [vmem:[%s2 + $0x68] sm:$0xff] %vm1878, %v1791
  %1893 = vst.msk [vmem:[%s2 + $0x70] sm:$0xff] %vm1878, %v1792
  %1894 = vst.msk [vmem:[%s2 + $0x78] sm:$0xff] %vm1878, %v1793
  %1895 = vst.msk [vmem:[%s2 + $0x80] sm:$0xff] %vm1878, %v1794
  %1896 = vst.msk [vmem:[%s2 + $0x88] sm:$0xff] %vm1878, %v1795
  %1897 = vst.msk [vmem:[%s2 + $0x90] sm:$0xff] %vm1878, %v1796
  %1898 = vst.msk [vmem:[%s2 + $0x98] sm:$0xff] %vm1878, %v1797
  %1899 = vst.msk [vmem:[%s2 + $0xa0] sm:$0xff] %vm1878, %v1798
  %1900 = vst.msk [vmem:[%s2 + $0xa8] sm:$0xff] %vm1878, %v1799
  %1901 = vst.msk [vmem:[%s2 + $0xb0] sm:$0xff] %vm1878, %v1800
  %1902 = vst.msk [vmem:[%s2 + $0xb8] sm:$0xff] %vm1878, %v1801
  %1903 = vst.msk [vmem:[%s2 + $0xc0] sm:$0xff] %vm1878, %v1802
  %1904 = vst.msk [vmem:[%s2 + $0xc8] sm:$0xff] %vm1878, %v1803
  %1905 = vst.msk [vmem:[%s2 + $0xd0] sm:$0xff] %vm1878, %v1804
  %1906 = vst.msk [vmem:[%s2 + $0xd8] sm:$0xff] %vm1878, %v1805
  %1907 = vst.msk [vmem:[%s2 + $0xe0] sm:$0xff] %vm1878, %v1806
  %1908 = vst.msk [vmem:[%s2 + $0xe8] sm:$0xff] %vm1878, %v1807
  %1909 = vst.msk [vmem:[%s2 + $0xf0] sm:$0xff] %vm1878, %v1808
  %1910 = vst.msk [vmem:[%s2 + $0xf8] sm:$0xff] %vm1878, %v1809
  %1911 = vst.msk [vmem:[%s2 + $0x100] sm:$0xff] %vm1878, %v1810
  %1912 = vst.msk [vmem:[%s2 + $0x108] sm:$0xff] %vm1878, %v1811
  %1913 = vst.msk [vmem:[%s2 + $0x110] sm:$0xff] %vm1878, %v1812
  %1914 = vst.msk [vmem:[%s2 + $0x118] sm:$0xff] %vm1878, %v1813
  %1915 = vst.msk [vmem:[%s2 + $0x120] sm:$0xff] %vm1878, %v1814
  %1916 = vst.msk [vmem:[%s2 + $0x128] sm:$0xff] %vm1878, %v1815
  %1917 = vst.msk [vmem:[%s2 + $0x130] sm:$0xff] %vm1878, %v1816
  %1918 = vst.msk [vmem:[%s2 + $0x138] sm:$0xff] %vm1878, %v1817
  %1919 = vst.msk [vmem:[%s2 + $0x140] sm:$0xff] %vm1878, %v1818
  %1920 = vst.msk [vmem:[%s2 + $0x148] sm:$0xff] %vm1878, %v1819
  %1921 = vst.msk [vmem:[%s2 + $0x150] sm:$0xff] %vm1878, %v1820
  %1922 = vst.msk [vmem:[%s2 + $0x158] sm:$0xff] %vm1878, %v1821
  %1923 = vst.msk [vmem:[%s2 + $0x160] sm:$0xff] %vm1878, %v1822
  %1924 = vst.msk [vmem:[%s2 + $0x168] sm:$0xff] %vm1878, %v1823
  %1925 = vst.msk [vmem:[%s2 + $0x170] sm:$0xff] %vm1878, %v1824
  %1926 = vst.msk [vmem:[%s2 + $0x178] sm:$0xff] %vm1878, %v1825
  %1927 = vst.msk [vmem:[%s2 + $0x180] sm:$0xff] %vm1878, %v1826
  %1928 = vst.msk [vmem:[%s2 + $0x188] sm:$0xff] %vm1878, %v1827
  %1929 = vst.msk [vmem:[%s2 + $0x190] sm:$0xff] %vm1878, %v1828
  %1930 = vst.msk [vmem:[%s2 + $0x198] sm:$0xff] %vm1878, %v1829
  %1931 = vst.msk [vmem:[%s2 + $0x1a0] sm:$0xff] %vm1878, %v1830
  %1932 = vst.msk [vmem:[%s2 + $0x1a8] sm:$0xff] %vm1878, %v1831
  %1933 = vst.msk [vmem:[%s2 + $0x1b0] sm:$0xff] %vm1878, %v1832
  %1934 = vst.msk [vmem:[%s2 + $0x1b8] sm:$0xff] %vm1878, %v1833
  %1935 = vst.msk [vmem:[%s2 + $0x1c0] sm:$0xff] %vm1878, %v1834
  %1936 = vst.msk [vmem:[%s2 + $0x1c8] sm:$0xff] %vm1878, %v1835
  %1937 = vst.msk [vmem:[%s2 + $0x1d0] sm:$0xff] %vm1878, %v1836
  %1938 = vst.msk [vmem:[%s2 + $0x1d8] sm:$0xff] %vm1878, %v1837
  %1939 = vst.msk [vmem:[%s2 + $0x1e0] sm:$0xff] %vm1878, %v1838
  %1940 = vst.msk [vmem:[%s2 + $0x1e8] sm:$0xff] %vm1878, %v1839
  %1941 = vst.msk [vmem:[%s2 + $0x1f0] sm:$0xff] %vm1878, %v1840
  %1942 = vst.msk [vmem:[%s2 + $0x1f8] sm:$0xff] %vm1878, %v1841
  %1943 = vst.msk [vmem:[%s2 + $0x200] sm:$0xff] %vm1878, %v1842
  %1944 = vst.msk [vmem:[%s2 + $0x208] sm:$0xff] %vm1878, %v1843
  %1945 = vst.msk [vmem:[%s2 + $0x210] sm:$0xff] %vm1878, %v1844
  %1946 = vst.msk [vmem:[%s2 + $0x218] sm:$0xff] %vm1878, %v1845
  %1947 = vst.msk [vmem:[%s2 + $0x220] sm:$0xff] %vm1878, %v1846
  %1948 = vst.msk [vmem:[%s2 + $0x228] sm:$0xff] %vm1878, %v1847
  %1949 = vst.msk [vmem:[%s2 + $0x230] sm:$0xff] %vm1878, %v1848
  %1950 = vst.msk [vmem:[%s2 + $0x238] sm:$0xff] %vm1878, %v1849
  %1951 = vst.msk [vmem:[%s2 + $0x240] sm:$0xff] %vm1878, %v1850
  %1952 = vst.msk [vmem:[%s2 + $0x248] sm:$0xff] %vm1878, %v1851
  %1953 = vst.msk [vmem:[%s2 + $0x250] sm:$0xff] %vm1878, %v1852
  %1954 = vst.msk [vmem:[%s2 + $0x258] sm:$0xff] %vm1878, %v1853
  %1955 = vst.msk [vmem:[%s2 + $0x260] sm:$0xff] %vm1878, %v1854
  %1956 = vst.msk [vmem:[%s2 + $0x268] sm:$0xff] %vm1878, %v1855
  %1957 = vst.msk [vmem:[%s2 + $0x270] sm:$0xff] %vm1878, %v1856
  %1958 = vst.msk [vmem:[%s2 + $0x278] sm:$0xff] %vm1878, %v1857
  %1959 = vst.msk [vmem:[%s2 + $0x280] sm:$0xff] %vm1878, %v1858
  %1960 = vst.msk [vmem:[%s2 + $0x288] sm:$0xff] %vm1878, %v1859
  %1961 = vst.msk [vmem:[%s2 + $0x290] sm:$0xff] %vm1878, %v1860
  %1962 = vst.msk [vmem:[%s2 + $0x298] sm:$0xff] %vm1878, %v1861
  %1963 = vst.msk [vmem:[%s2 + $0x2a0] sm:$0xff] %vm1878, %v1862
  %1964 = vst.msk [vmem:[%s2 + $0x2a8] sm:$0xff] %vm1878, %v1863
  %1965 = vst.msk [vmem:[%s2 + $0x2b0] sm:$0xff] %vm1878, %v1864
  %1966 = vst.msk [vmem:[%s2 + $0x2b8] sm:$0xff] %vm1878, %v1865
  %1967 = vst.msk [vmem:[%s2 + $0x2c0] sm:$0xff] %vm1878, %v1866
  %1968 = vst.msk [vmem:[%s2 + $0x2c8] sm:$0xff] %vm1878, %v1867
  %1969 = vst.msk [vmem:[%s2 + $0x2d0] sm:$0xff] %vm1878, %v1868
  %1970 = vst.msk [vmem:[%s2 + $0x2d8] sm:$0xff] %vm1878, %v1869
  %1971 = vst.msk [vmem:[%s2 + $0x2e0] sm:$0xff] %vm1878, %v1870
  %1972 = vst.msk [vmem:[%s2 + $0x2e8] sm:$0xff] %vm1878, %v1871
  %1973 = vst.msk [vmem:[%s2 + $0x2f0] sm:$0xff] %vm1878, %v1872
  %1974 = vst.msk [vmem:[%s2 + $0x2f8] sm:$0xff] %vm1878, %v1873
  %1975 = vst.msk [vmem:[%s2 + $0x300] sm:$0xff] %vm1878, %v1874
  %1976 = vst.msk [vmem:[%s2 + $0x308] sm:$0xff] %vm1878, %v1875
  %1977 = vst.msk [vmem:[%s2 + $0x310] sm:$0xff] %vm1878, %v1876
  %1978 = vst.msk [vmem:[%s2 + $0x318] sm:$0xff] %vm1878, %v1877
  // Predicated region
  $region10: #{generator_forward.28} parent=0 // pred_check
    _
  $region11: #{generator_forward.28} parent=0 // pred_check_branch
    %1980 = sbr.rel (0) target = $region13
  $region12: #{generator_forward.28} parent=0 // pred_region
    _
  $region13: #{generator_forward.28} parent=0 // pred_fallthru
    _
  // Predicated region
  $region14: #{generator_forward.28} parent=0 // pred_check
    _
  $region15: #{generator_forward.28} parent=0 // pred_check_branch
    %1982 = sbr.rel (0) target = $region17
  $region16: #{generator_forward.28} parent=0 // pred_region
    _
  $region17: #{generator_forward.28} parent=0 // pred_fallthru
    _

</llo_original>
